<compile_context>
chip_gen: v7x
topology: tpu7x:2x2x1
jax: 0.10.0
libtpu: 0.0.40
codegen_flags: <defaults>
</compile_context>

<pallas_src>
import math

import jax
import jax.numpy as jnp
import numpy as np
from jax.experimental import pallas as pl
from jax.experimental.pallas import tpu as pltpu

# ----------------------------- configuration --------------------------------
BATCH = 2
HIDDEN_DIM = 32
K = 1
ARCH = {
    "img_size": (16, 16),
    "first_fmap_size": (4, 4),
    "in_channels": [64, 32],
    "out_channels": [32, 16],
    "upsample": [2, 2],
    "resolution": [8, 16],
    "attention": {8: False, 16: True},
}
MXU_DTYPE = jnp.bfloat16   # matmul operands; accumulation + elementwise are f32


# --------------------------- in-kernel primitives ----------------------------
def _conv3x3_cm(x, w_ref, b_ref, height, width, relu_in=False):
    """'same' 3x3 conv of a channel-major (Cin, H*W) tile -> (Cout, H*W).

    w_ref is tap-major (9, Cout, Cin).  Each tap is a pltpu.roll lane shift of
    x with an iota border mask, feeding one accumulating MXU dot (no im2col
    staging buffer, no masked VMEM stores)."""
    cin, hw = x.shape
    xin = jnp.maximum(x, 0.0) if relu_in else x
    lane = jax.lax.broadcasted_iota(jnp.int32, (1, hw), 1)
    col = lane & (width - 1)                       # width is a power of two
    row = lane >> (width.bit_length() - 1)
    acc = None
    t = 0
    for oy in (-1, 0, 1):
        for ox in (-1, 0, 1):
            shift = oy * width + ox
            tap = xin if shift == 0 else pltpu.roll(xin, (-shift) % hw, axis=1)
            conds = []
            if ox == -1:
                conds.append(col >= 1)
            elif ox == 1:
                conds.append(col < width - 1)
            if oy == -1:
                conds.append(row >= 1)
            elif oy == 1:
                conds.append(row < height - 1)
            if conds:
                valid = conds[0]
                for extra in conds[1:]:
                    valid = valid & extra
                tap = jnp.where(valid, tap, 0.0)
            part = jnp.dot(w_ref[t], tap.astype(MXU_DTYPE),
                           preferred_element_type=jnp.float32)
            acc = part if acc is None else acc + part
            t += 1
    return acc + b_ref[...]                        # (Cout, H*W) + (Cout, 1)


def _res_block(x, up_ref, w1, b1, w2, b2, wsc, bsc, height, width):
    # TODO(synk): REResBlock's source is not provided; assumed BigGAN-style
    # up-residual block (act -> up -> conv3x3 -> act -> conv3x3; shortcut =
    # up -> 1x1 conv), no conditional batch-norm.  relu(up(x)) == up(relu(x))
    # so the leading activation is fused into the first conv.
    xu = jnp.dot(x.astype(MXU_DTYPE), up_ref[...],
                 preferred_element_type=jnp.float32)             # (Cin, 4*HW)
    sc = jnp.dot(wsc[...], xu.astype(MXU_DTYPE),
                 preferred_element_type=jnp.float32) + bsc[...]  # (Cout, 4*HW)
    y = _conv3x3_cm(xu, w1, b1, height, width, relu_in=True)
    y = _conv3x3_cm(y, w2, b2, height, width, relu_in=True)
    return y + sc


def _sa_block(x, w_tpg, w_o, poolsel, gamma_ref, width):
    # TODO(synk): SA's source is not provided; assumed SAGAN self-attention
    # (1x1 projections, 2x2 maxpool on phi/g, softmax attention, gamma*o + x
    # with gamma initialised to 0).
    _, hw = x.shape
    proj = jnp.dot(w_tpg[...], x.astype(MXU_DTYPE),
                   preferred_element_type=jnp.float32)           # (24, HW)
    theta = proj[0:8]        # rows 2..7 structurally zero (padded weights)
    phi = proj[8:16]         # rows 2..7 structurally zero
    g = proj[16:24]          # (C/2 = 8, HW)

    def pool_pair(z):
        # 2x2 window max placed at the (even, even) lanes (rolls + max)
        z = jnp.maximum(z, pltpu.roll(z, hw - 1, axis=1))        # pair in x
        return jnp.maximum(z, pltpu.roll(z, hw - width, axis=1))  # pair in y

    phi_m = pool_pair(phi)
    g_m = pool_pair(g)
    # lane compaction HW -> HW/4 via the constant 0/1 selection matmul.
    phi_pt = jax.lax.dot_general(                                # (KV, 8)
        poolsel[...], phi_m.astype(MXU_DTYPE),
        (((1,), (1,)), ((), ())), preferred_element_type=jnp.float32)
    g_p = jax.lax.dot_general(                                   # (8, KV)
        g_m.astype(MXU_DTYPE), poolsel[...],
        (((1,), (1,)), ((), ())), preferred_element_type=jnp.float32)

    # attention logits (KV, HW); softmax over the KV (sublane) axis.
    s = jnp.dot(phi_pt.astype(MXU_DTYPE), theta.astype(MXU_DTYPE),
                preferred_element_type=jnp.float32)              # (KV, HW)
    s = s - jnp.max(s, axis=0, keepdims=True)
    p = jnp.exp(s)
    p = p / jnp.sum(p, axis=0, keepdims=True)                    # exact softmax
    o = jnp.dot(g_p.astype(MXU_DTYPE), p.astype(MXU_DTYPE),
                preferred_element_type=jnp.float32)              # (C/2, HW)
    o = jnp.dot(w_o[...], o.astype(MXU_DTYPE),
                preferred_element_type=jnp.float32)              # (C, HW)
    return x + gamma_ref[0, 0] * o


# --------------------------------- kernel ------------------------------------
def _render_kernel(fmap_ref,
                   up1, w1a, b1a, w1b, b1b, w1s, b1s,
                   up2, w2a, b2a, w2b, b2b, w2s, b2s,
                   w_tpg, w_o, poolsel, gamma_ref,
                   w_out, b_out,
                   out_ref):
    img_h, img_w = ARCH["img_size"]
    res = ARCH["resolution"]

    x = fmap_ref[0]                                              # (C0, fh*fw)
    x = _res_block(x, up1, w1a, b1a, w1b, b1b, w1s, b1s, res[0], res[0])
    x = _res_block(x, up2, w2a, b2a, w2b, b2b, w2s, b2s, res[1], res[1])
    x = _sa_block(x, w_tpg, w_o, poolsel, gamma_ref, img_w)
    # final: ReLU -> SN 3x3 conv (Cout=3) -> tanh, as a lane-dense (3, H*W) tile
    y = _conv3x3_cm(x, w_out, b_out, img_h, img_w, relu_in=True)
    out_ref[...] = jnp.tanh(y)[None]                             # (1, 3, H*W)


# ------------------------------ host wrapper ---------------------------------
_PARAM_ORDER = (
    "up1", "b1_w1", "b1_b1", "b1_w2", "b1_b2", "b1_wsc", "b1_bsc",
    "up2", "b2_w1", "b2_b1", "b2_w2", "b2_b2", "b2_wsc", "b2_bsc",
    "w_tpg", "w_o", "poolsel", "gamma", "out_w", "out_b",
)


def rendering_engine_forward(params, components):
    """K == 1 forward of RenderingEngine: SN linear (tiny XLA dot) + one fused
    Pallas kernel for the two REResBlocks, self-attention and output conv."""
    bsz = components.shape[0]
    img_h, img_w = ARCH["img_size"]
    hw = img_h * img_w
    fh, fw = ARCH["first_fmap_size"]
    c0 = ARCH["in_channels"][0]

    # SN Linear + unflatten (torch: h.view(B, C, fh, fw)) -> channel-major
    # (B, C0, fh*fw).  Kept outside the kernel: the lane->sublane unflatten has
    # no cheap in-kernel form, and the dot itself is negligible.
    h = components @ params["lin_w"] + params["lin_b"]
    fmap0 = h.reshape(bsz, c0, fh * fw)

    weights = [params[name] for name in _PARAM_ORDER]
    in_specs = [pl.BlockSpec((1, c0, fh * fw), lambda b: (b, 0, 0))]
    for name, wgt in zip(_PARAM_ORDER, weights):
        if name == "gamma":
            in_specs.append(pl.BlockSpec(memory_space=pltpu.MemorySpace.SMEM))
        else:
            nd = wgt.ndim
            in_specs.append(pl.BlockSpec(wgt.shape, lambda b, _nd=nd: (0,) * _nd))

    out = pl.pallas_call(
        _render_kernel,
        out_shape=jax.ShapeDtypeStruct((bsz, 3, hw), jnp.float32),
        grid=(bsz,),
        in_specs=in_specs,
        out_specs=pl.BlockSpec((1, 3, hw), lambda b: (b, 0, 0)),
        compiler_params=pltpu.CompilerParams(
            dimension_semantics=("parallel",)),
        cost_estimate=pl.CostEstimate(
            flops=21_000_000, transcendentals=35_000, bytes_accessed=170_000),
    )(fmap0, *weights)

    rendering_img = out.reshape(bsz, 3, img_h, img_w)            # NCHW
    # TODO(synk): the K != 1 branch of the reference returns MagicMock
    # placeholders; not implemented here.
    return rendering_img, [], [], []


# --------------------------- deterministic init ------------------------------
def orthogonal(key, shape):
    # Mirrors torch.nn.init.orthogonal_ (flatten to (rows, prod(rest)), QR).
    rows = shape[0]
    cols = math.prod(shape[1:])
    n, m = max(rows, cols), min(rows, cols)
    a = jax.random.normal(key, (n, m), dtype=jnp.float32)
    q, r = jnp.linalg.qr(a)
    d = jnp.diagonal(r)
    q = q * jnp.where(d >= 0, 1.0, -1.0)[None, :]
    if rows < cols:
        q = q.T
    return q.reshape(shape)


def spectral_normalize(w, n_iter=20):
    # TODO(synk): torch re-estimates sigma every forward with persistent u/v
    # buffers; folded into the weights once at init (sigma ~= 1 for orthogonal
    # init, so t=0 behaviour matches).
    w2 = w.reshape(w.shape[0], -1)
    u = jnp.ones((w2.shape[0],), jnp.float32)
    v = jnp.ones((w2.shape[1],), jnp.float32)
    for _ in range(n_iter):
        v = w2.T @ u
        v = v / (jnp.linalg.norm(v) + 1e-12)
        u = w2 @ v
        u = u / (jnp.linalg.norm(u) + 1e-12)
    sigma = u @ (w2 @ v)
    return w / sigma


def _conv3x3_tapmajor_w(key, cout, cin):
    # OIHW -> tap-major (9, Cout, Cin); tap index = ky*3 + kx (kernel loop order)
    w = spectral_normalize(orthogonal(key, (cout, cin, 3, 3)))
    return jnp.transpose(w, (2, 3, 0, 1)).reshape(9, cout, cin).astype(MXU_DTYPE)


def _conv1x1_w(key, cout, cin):
    w = spectral_normalize(orthogonal(key, (cout, cin, 1, 1)))[:, :, 0, 0]
    return w.astype(MXU_DTYPE)                                   # (Cout, Cin)


def _upsample_perm(h, w):
    # 0/1 matrix (h*w, 4*h*w): nearest-neighbour 2x upsample as x @ P (MXU).
    p = np.zeros((h * w, 4 * h * w), np.float32)
    for y in range(h):
        for x in range(w):
            for ry in range(2):
                for rx in range(2):
                    p[y * w + x, (2 * y + ry) * (2 * w) + (2 * x + rx)] = 1.0
    return jnp.asarray(p, dtype=MXU_DTYPE)


def _pool_select(h, w):
    # 0/1 matrix (h*w/4, h*w): picks the (even, even) lane of each 2x2 window.
    p = np.zeros(((h // 2) * (w // 2), h * w), np.float32)
    for y in range(h // 2):
        for x in range(w // 2):
            p[y * (w // 2) + x, (2 * y) * w + 2 * x] = 1.0
    return jnp.asarray(p, dtype=MXU_DTYPE)


def init_params(key):
    fh, fw = ARCH["first_fmap_size"]
    img_h, img_w = ARCH["img_size"]
    c0 = ARCH["in_channels"][0]
    keys = iter(jax.random.split(key, 16))
    params = {}

    # SN Linear(hidden -> c0*fh*fw); applied in the wrapper as a plain XLA dot.
    lin_w = spectral_normalize(orthogonal(next(keys), (c0 * fh * fw, HIDDEN_DIM)))
    params["lin_w"] = lin_w.T                                     # (hidden, 1024)
    params["lin_b"] = jnp.zeros((c0 * fh * fw,), jnp.float32)

    # constant 0/1 layout matrices (nearest-up, maxpool lane compaction)
    params["up1"] = _upsample_perm(fh, fw)                        # (16, 64)
    params["up2"] = _upsample_perm(2 * fh, 2 * fw)                # (64, 256)
    params["poolsel"] = _pool_select(img_h, img_w)                # (64, 256)

    # two REResBlocks: 64->32 (up2, res 8) and 32->16 (up2, res 16)
    for idx in range(len(ARCH["out_channels"])):
        cin = ARCH["in_channels"][0] if idx == 0 else ARCH["in_channels"][idx]
        cout = ARCH["out_channels"][idx]
        tag = f"b{idx + 1}"
        params[f"{tag}_w1"] = _conv3x3_tapmajor_w(next(keys), cout, cin)
        params[f"{tag}_b1"] = jnp.zeros((cout, 1), jnp.float32)
        params[f"{tag}_w2"] = _conv3x3_tapmajor_w(next(keys), cout, cout)
        params[f"{tag}_b2"] = jnp.zeros((cout, 1), jnp.float32)
        params[f"{tag}_wsc"] = _conv1x1_w(next(keys), cout, cin)
        params[f"{tag}_bsc"] = jnp.zeros((cout, 1), jnp.float32)

    # SAGAN self-attention at resolution 16 (attention[16] == True, K == 1);
    # theta/phi zero-padded to 8 rows so all in-kernel slices are 8-aligned.
    c = ARCH["out_channels"][-1]
    c8, c2 = max(c // 8, 1), max(c // 2, 1)
    w_th = _conv1x1_w(next(keys), c8, c)
    w_ph = _conv1x1_w(next(keys), c8, c)
    w_g = _conv1x1_w(next(keys), c2, c)
    pad = jnp.zeros((8 - c8, c), MXU_DTYPE)
    params["w_tpg"] = jnp.concatenate([w_th, pad, w_ph, pad, w_g], axis=0)
    params["w_o"] = _conv1x1_w(next(keys), c, c2)                 # (16, 8)
    params["gamma"] = jnp.zeros((1, 1), jnp.float32)              # SAGAN gamma = 0

    # final SN conv(out_ch[-1] -> 3, 3x3, pad 1), tap-major (9, 3, Cin)
    params["out_w"] = _conv3x3_tapmajor_w(next(keys), 3, c)
    params["out_b"] = jnp.zeros((3, 1), jnp.float32)
    return params


# ---------------------------------- main --------------------------------------
if __name__ == "__main__":
    key = jax.random.PRNGKey(0)
    pkey, xkey = jax.random.split(key)
    params = init_params(pkey)
    components = jax.random.normal(xkey, (BATCH, HIDDEN_DIM), dtype=jnp.float32)

    fwd = jax.jit(rendering_engine_forward)
    rendering_img, fine_masks, maps, unmasked_base_imgs = fwd(params, components)
    rendering_img = jax.block_until_ready(rendering_img)

    assert rendering_img.shape == (BATCH, 3, *ARCH["img_size"])
    assert bool(jnp.all(jnp.isfinite(rendering_img)))
    assert bool(jnp.all(jnp.abs(rendering_img) <= 1.0))  # tanh range
    print("KERNEL_OK")
</pallas_src>

<mosaic_0001>
module attributes {stable_mosaic.version = 11 : i64} {
  func.func @_render_kernel(%arg0: i32, %arg1: memref<1x64x16xf32, #tpu.memory_space<vmem>>, %arg2: memref<16x64xbf16, #tpu.memory_space<vmem>>, %arg3: memref<9x32x64xbf16, #tpu.memory_space<vmem>>, %arg4: memref<32x1xf32, #tpu.memory_space<vmem>>, %arg5: memref<9x32x32xbf16, #tpu.memory_space<vmem>>, %arg6: memref<32x1xf32, #tpu.memory_space<vmem>>, %arg7: memref<32x64xbf16, #tpu.memory_space<vmem>>, %arg8: memref<32x1xf32, #tpu.memory_space<vmem>>, %arg9: memref<64x256xbf16, #tpu.memory_space<vmem>>, %arg10: memref<9x16x32xbf16, #tpu.memory_space<vmem>>, %arg11: memref<16x1xf32, #tpu.memory_space<vmem>>, %arg12: memref<9x16x16xbf16, #tpu.memory_space<vmem>>, %arg13: memref<16x1xf32, #tpu.memory_space<vmem>>, %arg14: memref<16x32xbf16, #tpu.memory_space<vmem>>, %arg15: memref<16x1xf32, #tpu.memory_space<vmem>>, %arg16: memref<24x16xbf16, #tpu.memory_space<vmem>>, %arg17: memref<16x8xbf16, #tpu.memory_space<vmem>>, %arg18: memref<64x256xbf16, #tpu.memory_space<vmem>>, %arg19: memref<1x1xf32, #tpu.memory_space<smem>>, %arg20: memref<9x3x16xbf16, #tpu.memory_space<vmem>>, %arg21: memref<3x1xf32, #tpu.memory_space<vmem>>, %arg22: memref<1x3x256xf32, #tpu.memory_space<vmem>>) attributes {dimension_semantics = [#tpu.dimension_semantics<parallel>], iteration_bounds = array<i64: 2>, scalar_prefetch = 0 : i64, scratch_operands = 0 : i64, tpu.core_type = #tpu.core_type<tc>, window_params = [{transform_indices = @transform_0, window_bounds = array<i64: 1, 64, 16>}, {pipeline_mode = #tpu.pipeline_mode<synchronous>, transform_indices = @transform_1, window_bounds = array<i64: 16, 64>}, {pipeline_mode = #tpu.pipeline_mode<synchronous>, transform_indices = @transform_2, window_bounds = array<i64: 9, 32, 64>}, {pipeline_mode = #tpu.pipeline_mode<synchronous>, transform_indices = @transform_3, window_bounds = array<i64: 32, 1>}, {pipeline_mode = #tpu.pipeline_mode<synchronous>, transform_indices = @transform_4, window_bounds = array<i64: 9, 32, 32>}, {pipeline_mode = #tpu.pipeline_mode<synchronous>, transform_indices = @transform_5, window_bounds = array<i64: 32, 1>}, {pipeline_mode = #tpu.pipeline_mode<synchronous>, transform_indices = @transform_6, window_bounds = array<i64: 32, 64>}, {pipeline_mode = #tpu.pipeline_mode<synchronous>, transform_indices = @transform_7, window_bounds = array<i64: 32, 1>}, {pipeline_mode = #tpu.pipeline_mode<synchronous>, transform_indices = @transform_8, window_bounds = array<i64: 64, 256>}, {pipeline_mode = #tpu.pipeline_mode<synchronous>, transform_indices = @transform_9, window_bounds = array<i64: 9, 16, 32>}, {pipeline_mode = #tpu.pipeline_mode<synchronous>, transform_indices = @transform_10, window_bounds = array<i64: 16, 1>}, {pipeline_mode = #tpu.pipeline_mode<synchronous>, transform_indices = @transform_11, window_bounds = array<i64: 9, 16, 16>}, {pipeline_mode = #tpu.pipeline_mode<synchronous>, transform_indices = @transform_12, window_bounds = array<i64: 16, 1>}, {pipeline_mode = #tpu.pipeline_mode<synchronous>, transform_indices = @transform_13, window_bounds = array<i64: 16, 32>}, {pipeline_mode = #tpu.pipeline_mode<synchronous>, transform_indices = @transform_14, window_bounds = array<i64: 16, 1>}, {pipeline_mode = #tpu.pipeline_mode<synchronous>, transform_indices = @transform_15, window_bounds = array<i64: 24, 16>}, {pipeline_mode = #tpu.pipeline_mode<synchronous>, transform_indices = @transform_16, window_bounds = array<i64: 16, 8>}, {pipeline_mode = #tpu.pipeline_mode<synchronous>, transform_indices = @transform_17, window_bounds = array<i64: 64, 256>}, {transform_indices = @transform_18, window_bounds = array<i64: 1, 1>}, {pipeline_mode = #tpu.pipeline_mode<synchronous>, transform_indices = @transform_19, window_bounds = array<i64: 9, 3, 16>}, {pipeline_mode = #tpu.pipeline_mode<synchronous>, transform_indices = @transform_20, window_bounds = array<i64: 3, 1>}, {transform_indices = @transform_21, window_bounds = array<i64: 1, 3, 256>}]} {
    %c0 = arith.constant 0 : index
    %c0_0 = arith.constant 0 : index
    %c0_1 = arith.constant 0 : index
    %0 = vector.load %arg1[%c0, %c0_0, %c0_1] : memref<1x64x16xf32, #tpu.memory_space<vmem>>, vector<1x64x16xf32>
    %1 = vector.shape_cast %0 : vector<1x64x16xf32> to vector<64x16xf32>
    %2 = arith.truncf %1 : vector<64x16xf32> to vector<64x16xbf16>
    %c0_2 = arith.constant 0 : index
    %c0_3 = arith.constant 0 : index
    %3 = vector.load %arg2[%c0_2, %c0_3] : memref<16x64xbf16, #tpu.memory_space<vmem>>, vector<16x64xbf16>
    %cst = arith.constant dense<0.000000e+00> : vector<64x64xf32>
    %4 = tpu.matmul %2, %3, %cst {dimension_numbers = #tpu.dot_dimension_numbers<[1], [0], [0], [1], [0, 0, 1, 1], [], []>} : vector<64x16xbf16>, vector<16x64xbf16>, vector<64x64xf32> -> vector<64x64xf32>
    %c0_4 = arith.constant 0 : index
    %c0_5 = arith.constant 0 : index
    %5 = vector.load %arg7[%c0_4, %c0_5] : memref<32x64xbf16, #tpu.memory_space<vmem>>, vector<32x64xbf16>
    %6 = arith.truncf %4 : vector<64x64xf32> to vector<64x64xbf16>
    %cst_6 = arith.constant dense<0.000000e+00> : vector<32x64xf32>
    %7 = tpu.matmul %5, %6, %cst_6 {dimension_numbers = #tpu.dot_dimension_numbers<[1], [0], [0], [1], [0, 0, 1, 1], [], []>} : vector<32x64xbf16>, vector<64x64xbf16>, vector<32x64xf32> -> vector<32x64xf32>
    %c0_7 = arith.constant 0 : index
    %c0_8 = arith.constant 0 : index
    %8 = vector.load %arg8[%c0_7, %c0_8] : memref<32x1xf32, #tpu.memory_space<vmem>>, vector<32x1xf32>
    %9 = vector.broadcast %8 : vector<32x1xf32> to vector<32x64xf32>
    %10 = arith.addf %7, %9 : vector<32x64xf32>
    %cst_9 = arith.constant 0.000000e+00 : f32
    %11 = vector.broadcast %cst_9 : f32 to vector<64x64xf32>
    %12 = arith.maximumf %4, %11 : vector<64x64xf32>
    %13 = tpu.iota {dimensions = array<i32: 1>} : vector<1x64xi32>
    %c7_i32 = arith.constant 7 : i32
    %14 = vector.broadcast %c7_i32 : i32 to vector<1x64xi32>
    %15 = arith.andi %13, %14 : vector<1x64xi32>
    %c3_i32 = arith.constant 3 : i32
    %16 = vector.broadcast %c3_i32 : i32 to vector<1x64xi32>
    %17 = arith.shrsi %13, %16 : vector<1x64xi32>
    %c9_i32 = arith.constant 9 : i32
    %18 = tpu.dynamic_rotate %12 by %c9_i32 dim 1 : vector<64x64xf32>, i32 -> vector<64x64xf32>
    %c1_i32 = arith.constant 1 : i32
    %19 = vector.broadcast %c1_i32 : i32 to vector<1x64xi32>
    %20 = arith.cmpi sge, %15, %19 : vector<1x64xi32>
    %c1_i32_10 = arith.constant 1 : i32
    %21 = vector.broadcast %c1_i32_10 : i32 to vector<1x64xi32>
    %22 = arith.cmpi sge, %17, %21 : vector<1x64xi32>
    %23 = arith.andi %20, %22 : vector<1x64xi1>
    %cst_11 = arith.constant 0.000000e+00 : f32
    %24 = vector.shape_cast %23 : vector<1x64xi1> to vector<1x64xi1>
    %25 = vector.broadcast %24 : vector<1x64xi1> to vector<64x64xi1>
    %26 = vector.broadcast %cst_11 : f32 to vector<64x64xf32>
    %27 = arith.select %25, %18, %26 : vector<64x64xi1>, vector<64x64xf32>
    %c0_12 = arith.constant 0 : index
    %c0_13 = arith.constant 0 : index
    %c0_14 = arith.constant 0 : index
    %28 = vector.load %arg3[%c0_12, %c0_13, %c0_14] : memref<9x32x64xbf16, #tpu.memory_space<vmem>>, vector<1x32x64xbf16>
    %29 = vector.shape_cast %28 : vector<1x32x64xbf16> to vector<32x64xbf16>
    %30 = arith.truncf %27 : vector<64x64xf32> to vector<64x64xbf16>
    %cst_15 = arith.constant dense<0.000000e+00> : vector<32x64xf32>
    %31 = tpu.matmul %29, %30, %cst_15 {dimension_numbers = #tpu.dot_dimension_numbers<[1], [0], [0], [1], [0, 0, 1, 1], [], []>} : vector<32x64xbf16>, vector<64x64xbf16>, vector<32x64xf32> -> vector<32x64xf32>
    %c8_i32 = arith.constant 8 : i32
    %32 = tpu.dynamic_rotate %12 by %c8_i32 dim 1 : vector<64x64xf32>, i32 -> vector<64x64xf32>
    %c1_i32_16 = arith.constant 1 : i32
    %33 = vector.broadcast %c1_i32_16 : i32 to vector<1x64xi32>
    %34 = arith.cmpi sge, %17, %33 : vector<1x64xi32>
    %cst_17 = arith.constant 0.000000e+00 : f32
    %35 = vector.shape_cast %34 : vector<1x64xi1> to vector<1x64xi1>
    %36 = vector.broadcast %35 : vector<1x64xi1> to vector<64x64xi1>
    %37 = vector.broadcast %cst_17 : f32 to vector<64x64xf32>
    %38 = arith.select %36, %32, %37 : vector<64x64xi1>, vector<64x64xf32>
    %c1 = arith.constant 1 : index
    %c0_18 = arith.constant 0 : index
    %c0_19 = arith.constant 0 : index
    %39 = vector.load %arg3[%c1, %c0_18, %c0_19] : memref<9x32x64xbf16, #tpu.memory_space<vmem>>, vector<1x32x64xbf16>
    %40 = vector.shape_cast %39 : vector<1x32x64xbf16> to vector<32x64xbf16>
    %41 = arith.truncf %38 : vector<64x64xf32> to vector<64x64xbf16>
    %cst_20 = arith.constant dense<0.000000e+00> : vector<32x64xf32>
    %42 = tpu.matmul %40, %41, %cst_20 {dimension_numbers = #tpu.dot_dimension_numbers<[1], [0], [0], [1], [0, 0, 1, 1], [], []>} : vector<32x64xbf16>, vector<64x64xbf16>, vector<32x64xf32> -> vector<32x64xf32>
    %43 = arith.addf %31, %42 : vector<32x64xf32>
    %c7_i32_21 = arith.constant 7 : i32
    %44 = tpu.dynamic_rotate %12 by %c7_i32_21 dim 1 : vector<64x64xf32>, i32 -> vector<64x64xf32>
    %c7_i32_22 = arith.constant 7 : i32
    %45 = vector.broadcast %c7_i32_22 : i32 to vector<1x64xi32>
    %46 = arith.cmpi slt, %15, %45 : vector<1x64xi32>
    %c1_i32_23 = arith.constant 1 : i32
    %47 = vector.broadcast %c1_i32_23 : i32 to vector<1x64xi32>
    %48 = arith.cmpi sge, %17, %47 : vector<1x64xi32>
    %49 = arith.andi %46, %48 : vector<1x64xi1>
    %cst_24 = arith.constant 0.000000e+00 : f32
    %50 = vector.shape_cast %49 : vector<1x64xi1> to vector<1x64xi1>
    %51 = vector.broadcast %50 : vector<1x64xi1> to vector<64x64xi1>
    %52 = vector.broadcast %cst_24 : f32 to vector<64x64xf32>
    %53 = arith.select %51, %44, %52 : vector<64x64xi1>, vector<64x64xf32>
    %c2 = arith.constant 2 : index
    %c0_25 = arith.constant 0 : index
    %c0_26 = arith.constant 0 : index
    %54 = vector.load %arg3[%c2, %c0_25, %c0_26] : memref<9x32x64xbf16, #tpu.memory_space<vmem>>, vector<1x32x64xbf16>
    %55 = vector.shape_cast %54 : vector<1x32x64xbf16> to vector<32x64xbf16>
    %56 = arith.truncf %53 : vector<64x64xf32> to vector<64x64xbf16>
    %cst_27 = arith.constant dense<0.000000e+00> : vector<32x64xf32>
    %57 = tpu.matmul %55, %56, %cst_27 {dimension_numbers = #tpu.dot_dimension_numbers<[1], [0], [0], [1], [0, 0, 1, 1], [], []>} : vector<32x64xbf16>, vector<64x64xbf16>, vector<32x64xf32> -> vector<32x64xf32>
    %58 = arith.addf %43, %57 : vector<32x64xf32>
    %c1_i32_28 = arith.constant 1 : i32
    %59 = tpu.dynamic_rotate %12 by %c1_i32_28 dim 1 : vector<64x64xf32>, i32 -> vector<64x64xf32>
    %c1_i32_29 = arith.constant 1 : i32
    %60 = vector.broadcast %c1_i32_29 : i32 to vector<1x64xi32>
    %61 = arith.cmpi sge, %15, %60 : vector<1x64xi32>
    %cst_30 = arith.constant 0.000000e+00 : f32
    %62 = vector.shape_cast %61 : vector<1x64xi1> to vector<1x64xi1>
    %63 = vector.broadcast %62 : vector<1x64xi1> to vector<64x64xi1>
    %64 = vector.broadcast %cst_30 : f32 to vector<64x64xf32>
    %65 = arith.select %63, %59, %64 : vector<64x64xi1>, vector<64x64xf32>
    %c3 = arith.constant 3 : index
    %c0_31 = arith.constant 0 : index
    %c0_32 = arith.constant 0 : index
    %66 = vector.load %arg3[%c3, %c0_31, %c0_32] : memref<9x32x64xbf16, #tpu.memory_space<vmem>>, vector<1x32x64xbf16>
    %67 = vector.shape_cast %66 : vector<1x32x64xbf16> to vector<32x64xbf16>
    %68 = arith.truncf %65 : vector<64x64xf32> to vector<64x64xbf16>
    %cst_33 = arith.constant dense<0.000000e+00> : vector<32x64xf32>
    %69 = tpu.matmul %67, %68, %cst_33 {dimension_numbers = #tpu.dot_dimension_numbers<[1], [0], [0], [1], [0, 0, 1, 1], [], []>} : vector<32x64xbf16>, vector<64x64xbf16>, vector<32x64xf32> -> vector<32x64xf32>
    %70 = arith.addf %58, %69 : vector<32x64xf32>
    %c4 = arith.constant 4 : index
    %c0_34 = arith.constant 0 : index
    %c0_35 = arith.constant 0 : index
    %71 = vector.load %arg3[%c4, %c0_34, %c0_35] : memref<9x32x64xbf16, #tpu.memory_space<vmem>>, vector<1x32x64xbf16>
    %72 = vector.shape_cast %71 : vector<1x32x64xbf16> to vector<32x64xbf16>
    %73 = arith.truncf %12 : vector<64x64xf32> to vector<64x64xbf16>
    %cst_36 = arith.constant dense<0.000000e+00> : vector<32x64xf32>
    %74 = tpu.matmul %72, %73, %cst_36 {dimension_numbers = #tpu.dot_dimension_numbers<[1], [0], [0], [1], [0, 0, 1, 1], [], []>} : vector<32x64xbf16>, vector<64x64xbf16>, vector<32x64xf32> -> vector<32x64xf32>
    %75 = arith.addf %70, %74 : vector<32x64xf32>
    %c63_i32 = arith.constant 63 : i32
    %76 = tpu.dynamic_rotate %12 by %c63_i32 dim 1 : vector<64x64xf32>, i32 -> vector<64x64xf32>
    %c7_i32_37 = arith.constant 7 : i32
    %77 = vector.broadcast %c7_i32_37 : i32 to vector<1x64xi32>
    %78 = arith.cmpi slt, %15, %77 : vector<1x64xi32>
    %cst_38 = arith.constant 0.000000e+00 : f32
    %79 = vector.shape_cast %78 : vector<1x64xi1> to vector<1x64xi1>
    %80 = vector.broadcast %79 : vector<1x64xi1> to vector<64x64xi1>
    %81 = vector.broadcast %cst_38 : f32 to vector<64x64xf32>
    %82 = arith.select %80, %76, %81 : vector<64x64xi1>, vector<64x64xf32>
    %c5 = arith.constant 5 : index
    %c0_39 = arith.constant 0 : index
    %c0_40 = arith.constant 0 : index
    %83 = vector.load %arg3[%c5, %c0_39, %c0_40] : memref<9x32x64xbf16, #tpu.memory_space<vmem>>, vector<1x32x64xbf16>
    %84 = vector.shape_cast %83 : vector<1x32x64xbf16> to vector<32x64xbf16>
    %85 = arith.truncf %82 : vector<64x64xf32> to vector<64x64xbf16>
    %cst_41 = arith.constant dense<0.000000e+00> : vector<32x64xf32>
    %86 = tpu.matmul %84, %85, %cst_41 {dimension_numbers = #tpu.dot_dimension_numbers<[1], [0], [0], [1], [0, 0, 1, 1], [], []>} : vector<32x64xbf16>, vector<64x64xbf16>, vector<32x64xf32> -> vector<32x64xf32>
    %87 = arith.addf %75, %86 : vector<32x64xf32>
    %c57_i32 = arith.constant 57 : i32
    %88 = tpu.dynamic_rotate %12 by %c57_i32 dim 1 : vector<64x64xf32>, i32 -> vector<64x64xf32>
    %c1_i32_42 = arith.constant 1 : i32
    %89 = vector.broadcast %c1_i32_42 : i32 to vector<1x64xi32>
    %90 = arith.cmpi sge, %15, %89 : vector<1x64xi32>
    %c7_i32_43 = arith.constant 7 : i32
    %91 = vector.broadcast %c7_i32_43 : i32 to vector<1x64xi32>
    %92 = arith.cmpi slt, %17, %91 : vector<1x64xi32>
    %93 = arith.andi %90, %92 : vector<1x64xi1>
    %cst_44 = arith.constant 0.000000e+00 : f32
    %94 = vector.shape_cast %93 : vector<1x64xi1> to vector<1x64xi1>
    %95 = vector.broadcast %94 : vector<1x64xi1> to vector<64x64xi1>
    %96 = vector.broadcast %cst_44 : f32 to vector<64x64xf32>
    %97 = arith.select %95, %88, %96 : vector<64x64xi1>, vector<64x64xf32>
    %c6 = arith.constant 6 : index
    %c0_45 = arith.constant 0 : index
    %c0_46 = arith.constant 0 : index
    %98 = vector.load %arg3[%c6, %c0_45, %c0_46] : memref<9x32x64xbf16, #tpu.memory_space<vmem>>, vector<1x32x64xbf16>
    %99 = vector.shape_cast %98 : vector<1x32x64xbf16> to vector<32x64xbf16>
    %100 = arith.truncf %97 : vector<64x64xf32> to vector<64x64xbf16>
    %cst_47 = arith.constant dense<0.000000e+00> : vector<32x64xf32>
    %101 = tpu.matmul %99, %100, %cst_47 {dimension_numbers = #tpu.dot_dimension_numbers<[1], [0], [0], [1], [0, 0, 1, 1], [], []>} : vector<32x64xbf16>, vector<64x64xbf16>, vector<32x64xf32> -> vector<32x64xf32>
    %102 = arith.addf %87, %101 : vector<32x64xf32>
    %c56_i32 = arith.constant 56 : i32
    %103 = tpu.dynamic_rotate %12 by %c56_i32 dim 1 : vector<64x64xf32>, i32 -> vector<64x64xf32>
    %c7_i32_48 = arith.constant 7 : i32
    %104 = vector.broadcast %c7_i32_48 : i32 to vector<1x64xi32>
    %105 = arith.cmpi slt, %17, %104 : vector<1x64xi32>
    %cst_49 = arith.constant 0.000000e+00 : f32
    %106 = vector.shape_cast %105 : vector<1x64xi1> to vector<1x64xi1>
    %107 = vector.broadcast %106 : vector<1x64xi1> to vector<64x64xi1>
    %108 = vector.broadcast %cst_49 : f32 to vector<64x64xf32>
    %109 = arith.select %107, %103, %108 : vector<64x64xi1>, vector<64x64xf32>
    %c7 = arith.constant 7 : index
    %c0_50 = arith.constant 0 : index
    %c0_51 = arith.constant 0 : index
    %110 = vector.load %arg3[%c7, %c0_50, %c0_51] : memref<9x32x64xbf16, #tpu.memory_space<vmem>>, vector<1x32x64xbf16>
    %111 = vector.shape_cast %110 : vector<1x32x64xbf16> to vector<32x64xbf16>
    %112 = arith.truncf %109 : vector<64x64xf32> to vector<64x64xbf16>
    %cst_52 = arith.constant dense<0.000000e+00> : vector<32x64xf32>
    %113 = tpu.matmul %111, %112, %cst_52 {dimension_numbers = #tpu.dot_dimension_numbers<[1], [0], [0], [1], [0, 0, 1, 1], [], []>} : vector<32x64xbf16>, vector<64x64xbf16>, vector<32x64xf32> -> vector<32x64xf32>
    %114 = arith.addf %102, %113 : vector<32x64xf32>
    %c55_i32 = arith.constant 55 : i32
    %115 = tpu.dynamic_rotate %12 by %c55_i32 dim 1 : vector<64x64xf32>, i32 -> vector<64x64xf32>
    %c7_i32_53 = arith.constant 7 : i32
    %116 = vector.broadcast %c7_i32_53 : i32 to vector<1x64xi32>
    %117 = arith.cmpi slt, %15, %116 : vector<1x64xi32>
    %c7_i32_54 = arith.constant 7 : i32
    %118 = vector.broadcast %c7_i32_54 : i32 to vector<1x64xi32>
    %119 = arith.cmpi slt, %17, %118 : vector<1x64xi32>
    %120 = arith.andi %117, %119 : vector<1x64xi1>
    %cst_55 = arith.constant 0.000000e+00 : f32
    %121 = vector.shape_cast %120 : vector<1x64xi1> to vector<1x64xi1>
    %122 = vector.broadcast %121 : vector<1x64xi1> to vector<64x64xi1>
    %123 = vector.broadcast %cst_55 : f32 to vector<64x64xf32>
    %124 = arith.select %122, %115, %123 : vector<64x64xi1>, vector<64x64xf32>
    %c8 = arith.constant 8 : index
    %c0_56 = arith.constant 0 : index
    %c0_57 = arith.constant 0 : index
    %125 = vector.load %arg3[%c8, %c0_56, %c0_57] : memref<9x32x64xbf16, #tpu.memory_space<vmem>>, vector<1x32x64xbf16>
    %126 = vector.shape_cast %125 : vector<1x32x64xbf16> to vector<32x64xbf16>
    %127 = arith.truncf %124 : vector<64x64xf32> to vector<64x64xbf16>
    %cst_58 = arith.constant dense<0.000000e+00> : vector<32x64xf32>
    %128 = tpu.matmul %126, %127, %cst_58 {dimension_numbers = #tpu.dot_dimension_numbers<[1], [0], [0], [1], [0, 0, 1, 1], [], []>} : vector<32x64xbf16>, vector<64x64xbf16>, vector<32x64xf32> -> vector<32x64xf32>
    %129 = arith.addf %114, %128 : vector<32x64xf32>
    %c0_59 = arith.constant 0 : index
    %c0_60 = arith.constant 0 : index
    %130 = vector.load %arg4[%c0_59, %c0_60] : memref<32x1xf32, #tpu.memory_space<vmem>>, vector<32x1xf32>
    %131 = vector.broadcast %130 : vector<32x1xf32> to vector<32x64xf32>
    %132 = arith.addf %129, %131 : vector<32x64xf32>
    %cst_61 = arith.constant 0.000000e+00 : f32
    %133 = vector.broadcast %cst_61 : f32 to vector<32x64xf32>
    %134 = arith.maximumf %132, %133 : vector<32x64xf32>
    %135 = tpu.iota {dimensions = array<i32: 1>} : vector<1x64xi32>
    %c7_i32_62 = arith.constant 7 : i32
    %136 = vector.broadcast %c7_i32_62 : i32 to vector<1x64xi32>
    %137 = arith.andi %135, %136 : vector<1x64xi32>
    %c3_i32_63 = arith.constant 3 : i32
    %138 = vector.broadcast %c3_i32_63 : i32 to vector<1x64xi32>
    %139 = arith.shrsi %135, %138 : vector<1x64xi32>
    %c9_i32_64 = arith.constant 9 : i32
    %140 = tpu.dynamic_rotate %134 by %c9_i32_64 dim 1 : vector<32x64xf32>, i32 -> vector<32x64xf32>
    %c1_i32_65 = arith.constant 1 : i32
    %141 = vector.broadcast %c1_i32_65 : i32 to vector<1x64xi32>
    %142 = arith.cmpi sge, %137, %141 : vector<1x64xi32>
    %c1_i32_66 = arith.constant 1 : i32
    %143 = vector.broadcast %c1_i32_66 : i32 to vector<1x64xi32>
    %144 = arith.cmpi sge, %139, %143 : vector<1x64xi32>
    %145 = arith.andi %142, %144 : vector<1x64xi1>
    %cst_67 = arith.constant 0.000000e+00 : f32
    %146 = vector.shape_cast %145 : vector<1x64xi1> to vector<1x64xi1>
    %147 = vector.broadcast %146 : vector<1x64xi1> to vector<32x64xi1>
    %148 = vector.broadcast %cst_67 : f32 to vector<32x64xf32>
    %149 = arith.select %147, %140, %148 : vector<32x64xi1>, vector<32x64xf32>
    %c0_68 = arith.constant 0 : index
    %c0_69 = arith.constant 0 : index
    %c0_70 = arith.constant 0 : index
    %150 = vector.load %arg5[%c0_68, %c0_69, %c0_70] : memref<9x32x32xbf16, #tpu.memory_space<vmem>>, vector<1x32x32xbf16>
    %151 = vector.shape_cast %150 : vector<1x32x32xbf16> to vector<32x32xbf16>
    %152 = arith.truncf %149 : vector<32x64xf32> to vector<32x64xbf16>
    %cst_71 = arith.constant dense<0.000000e+00> : vector<32x64xf32>
    %153 = tpu.matmul %151, %152, %cst_71 {dimension_numbers = #tpu.dot_dimension_numbers<[1], [0], [0], [1], [0, 0, 1, 1], [], []>} : vector<32x32xbf16>, vector<32x64xbf16>, vector<32x64xf32> -> vector<32x64xf32>
    %c8_i32_72 = arith.constant 8 : i32
    %154 = tpu.dynamic_rotate %134 by %c8_i32_72 dim 1 : vector<32x64xf32>, i32 -> vector<32x64xf32>
    %c1_i32_73 = arith.constant 1 : i32
    %155 = vector.broadcast %c1_i32_73 : i32 to vector<1x64xi32>
    %156 = arith.cmpi sge, %139, %155 : vector<1x64xi32>
    %cst_74 = arith.constant 0.000000e+00 : f32
    %157 = vector.shape_cast %156 : vector<1x64xi1> to vector<1x64xi1>
    %158 = vector.broadcast %157 : vector<1x64xi1> to vector<32x64xi1>
    %159 = vector.broadcast %cst_74 : f32 to vector<32x64xf32>
    %160 = arith.select %158, %154, %159 : vector<32x64xi1>, vector<32x64xf32>
    %c1_75 = arith.constant 1 : index
    %c0_76 = arith.constant 0 : index
    %c0_77 = arith.constant 0 : index
    %161 = vector.load %arg5[%c1_75, %c0_76, %c0_77] : memref<9x32x32xbf16, #tpu.memory_space<vmem>>, vector<1x32x32xbf16>
    %162 = vector.shape_cast %161 : vector<1x32x32xbf16> to vector<32x32xbf16>
    %163 = arith.truncf %160 : vector<32x64xf32> to vector<32x64xbf16>
    %cst_78 = arith.constant dense<0.000000e+00> : vector<32x64xf32>
    %164 = tpu.matmul %162, %163, %cst_78 {dimension_numbers = #tpu.dot_dimension_numbers<[1], [0], [0], [1], [0, 0, 1, 1], [], []>} : vector<32x32xbf16>, vector<32x64xbf16>, vector<32x64xf32> -> vector<32x64xf32>
    %165 = arith.addf %153, %164 : vector<32x64xf32>
    %c7_i32_79 = arith.constant 7 : i32
    %166 = tpu.dynamic_rotate %134 by %c7_i32_79 dim 1 : vector<32x64xf32>, i32 -> vector<32x64xf32>
    %c7_i32_80 = arith.constant 7 : i32
    %167 = vector.broadcast %c7_i32_80 : i32 to vector<1x64xi32>
    %168 = arith.cmpi slt, %137, %167 : vector<1x64xi32>
    %c1_i32_81 = arith.constant 1 : i32
    %169 = vector.broadcast %c1_i32_81 : i32 to vector<1x64xi32>
    %170 = arith.cmpi sge, %139, %169 : vector<1x64xi32>
    %171 = arith.andi %168, %170 : vector<1x64xi1>
    %cst_82 = arith.constant 0.000000e+00 : f32
    %172 = vector.shape_cast %171 : vector<1x64xi1> to vector<1x64xi1>
    %173 = vector.broadcast %172 : vector<1x64xi1> to vector<32x64xi1>
    %174 = vector.broadcast %cst_82 : f32 to vector<32x64xf32>
    %175 = arith.select %173, %166, %174 : vector<32x64xi1>, vector<32x64xf32>
    %c2_83 = arith.constant 2 : index
    %c0_84 = arith.constant 0 : index
    %c0_85 = arith.constant 0 : index
    %176 = vector.load %arg5[%c2_83, %c0_84, %c0_85] : memref<9x32x32xbf16, #tpu.memory_space<vmem>>, vector<1x32x32xbf16>
    %177 = vector.shape_cast %176 : vector<1x32x32xbf16> to vector<32x32xbf16>
    %178 = arith.truncf %175 : vector<32x64xf32> to vector<32x64xbf16>
    %cst_86 = arith.constant dense<0.000000e+00> : vector<32x64xf32>
    %179 = tpu.matmul %177, %178, %cst_86 {dimension_numbers = #tpu.dot_dimension_numbers<[1], [0], [0], [1], [0, 0, 1, 1], [], []>} : vector<32x32xbf16>, vector<32x64xbf16>, vector<32x64xf32> -> vector<32x64xf32>
    %180 = arith.addf %165, %179 : vector<32x64xf32>
    %c1_i32_87 = arith.constant 1 : i32
    %181 = tpu.dynamic_rotate %134 by %c1_i32_87 dim 1 : vector<32x64xf32>, i32 -> vector<32x64xf32>
    %c1_i32_88 = arith.constant 1 : i32
    %182 = vector.broadcast %c1_i32_88 : i32 to vector<1x64xi32>
    %183 = arith.cmpi sge, %137, %182 : vector<1x64xi32>
    %cst_89 = arith.constant 0.000000e+00 : f32
    %184 = vector.shape_cast %183 : vector<1x64xi1> to vector<1x64xi1>
    %185 = vector.broadcast %184 : vector<1x64xi1> to vector<32x64xi1>
    %186 = vector.broadcast %cst_89 : f32 to vector<32x64xf32>
    %187 = arith.select %185, %181, %186 : vector<32x64xi1>, vector<32x64xf32>
    %c3_90 = arith.constant 3 : index
    %c0_91 = arith.constant 0 : index
    %c0_92 = arith.constant 0 : index
    %188 = vector.load %arg5[%c3_90, %c0_91, %c0_92] : memref<9x32x32xbf16, #tpu.memory_space<vmem>>, vector<1x32x32xbf16>
    %189 = vector.shape_cast %188 : vector<1x32x32xbf16> to vector<32x32xbf16>
    %190 = arith.truncf %187 : vector<32x64xf32> to vector<32x64xbf16>
    %cst_93 = arith.constant dense<0.000000e+00> : vector<32x64xf32>
    %191 = tpu.matmul %189, %190, %cst_93 {dimension_numbers = #tpu.dot_dimension_numbers<[1], [0], [0], [1], [0, 0, 1, 1], [], []>} : vector<32x32xbf16>, vector<32x64xbf16>, vector<32x64xf32> -> vector<32x64xf32>
    %192 = arith.addf %180, %191 : vector<32x64xf32>
    %c4_94 = arith.constant 4 : index
    %c0_95 = arith.constant 0 : index
    %c0_96 = arith.constant 0 : index
    %193 = vector.load %arg5[%c4_94, %c0_95, %c0_96] : memref<9x32x32xbf16, #tpu.memory_space<vmem>>, vector<1x32x32xbf16>
    %194 = vector.shape_cast %193 : vector<1x32x32xbf16> to vector<32x32xbf16>
    %195 = arith.truncf %134 : vector<32x64xf32> to vector<32x64xbf16>
    %cst_97 = arith.constant dense<0.000000e+00> : vector<32x64xf32>
    %196 = tpu.matmul %194, %195, %cst_97 {dimension_numbers = #tpu.dot_dimension_numbers<[1], [0], [0], [1], [0, 0, 1, 1], [], []>} : vector<32x32xbf16>, vector<32x64xbf16>, vector<32x64xf32> -> vector<32x64xf32>
    %197 = arith.addf %192, %196 : vector<32x64xf32>
    %c63_i32_98 = arith.constant 63 : i32
    %198 = tpu.dynamic_rotate %134 by %c63_i32_98 dim 1 : vector<32x64xf32>, i32 -> vector<32x64xf32>
    %c7_i32_99 = arith.constant 7 : i32
    %199 = vector.broadcast %c7_i32_99 : i32 to vector<1x64xi32>
    %200 = arith.cmpi slt, %137, %199 : vector<1x64xi32>
    %cst_100 = arith.constant 0.000000e+00 : f32
    %201 = vector.shape_cast %200 : vector<1x64xi1> to vector<1x64xi1>
    %202 = vector.broadcast %201 : vector<1x64xi1> to vector<32x64xi1>
    %203 = vector.broadcast %cst_100 : f32 to vector<32x64xf32>
    %204 = arith.select %202, %198, %203 : vector<32x64xi1>, vector<32x64xf32>
    %c5_101 = arith.constant 5 : index
    %c0_102 = arith.constant 0 : index
    %c0_103 = arith.constant 0 : index
    %205 = vector.load %arg5[%c5_101, %c0_102, %c0_103] : memref<9x32x32xbf16, #tpu.memory_space<vmem>>, vector<1x32x32xbf16>
    %206 = vector.shape_cast %205 : vector<1x32x32xbf16> to vector<32x32xbf16>
    %207 = arith.truncf %204 : vector<32x64xf32> to vector<32x64xbf16>
    %cst_104 = arith.constant dense<0.000000e+00> : vector<32x64xf32>
    %208 = tpu.matmul %206, %207, %cst_104 {dimension_numbers = #tpu.dot_dimension_numbers<[1], [0], [0], [1], [0, 0, 1, 1], [], []>} : vector<32x32xbf16>, vector<32x64xbf16>, vector<32x64xf32> -> vector<32x64xf32>
    %209 = arith.addf %197, %208 : vector<32x64xf32>
    %c57_i32_105 = arith.constant 57 : i32
    %210 = tpu.dynamic_rotate %134 by %c57_i32_105 dim 1 : vector<32x64xf32>, i32 -> vector<32x64xf32>
    %c1_i32_106 = arith.constant 1 : i32
    %211 = vector.broadcast %c1_i32_106 : i32 to vector<1x64xi32>
    %212 = arith.cmpi sge, %137, %211 : vector<1x64xi32>
    %c7_i32_107 = arith.constant 7 : i32
    %213 = vector.broadcast %c7_i32_107 : i32 to vector<1x64xi32>
    %214 = arith.cmpi slt, %139, %213 : vector<1x64xi32>
    %215 = arith.andi %212, %214 : vector<1x64xi1>
    %cst_108 = arith.constant 0.000000e+00 : f32
    %216 = vector.shape_cast %215 : vector<1x64xi1> to vector<1x64xi1>
    %217 = vector.broadcast %216 : vector<1x64xi1> to vector<32x64xi1>
    %218 = vector.broadcast %cst_108 : f32 to vector<32x64xf32>
    %219 = arith.select %217, %210, %218 : vector<32x64xi1>, vector<32x64xf32>
    %c6_109 = arith.constant 6 : index
    %c0_110 = arith.constant 0 : index
    %c0_111 = arith.constant 0 : index
    %220 = vector.load %arg5[%c6_109, %c0_110, %c0_111] : memref<9x32x32xbf16, #tpu.memory_space<vmem>>, vector<1x32x32xbf16>
    %221 = vector.shape_cast %220 : vector<1x32x32xbf16> to vector<32x32xbf16>
    %222 = arith.truncf %219 : vector<32x64xf32> to vector<32x64xbf16>
    %cst_112 = arith.constant dense<0.000000e+00> : vector<32x64xf32>
    %223 = tpu.matmul %221, %222, %cst_112 {dimension_numbers = #tpu.dot_dimension_numbers<[1], [0], [0], [1], [0, 0, 1, 1], [], []>} : vector<32x32xbf16>, vector<32x64xbf16>, vector<32x64xf32> -> vector<32x64xf32>
    %224 = arith.addf %209, %223 : vector<32x64xf32>
    %c56_i32_113 = arith.constant 56 : i32
    %225 = tpu.dynamic_rotate %134 by %c56_i32_113 dim 1 : vector<32x64xf32>, i32 -> vector<32x64xf32>
    %c7_i32_114 = arith.constant 7 : i32
    %226 = vector.broadcast %c7_i32_114 : i32 to vector<1x64xi32>
    %227 = arith.cmpi slt, %139, %226 : vector<1x64xi32>
    %cst_115 = arith.constant 0.000000e+00 : f32
    %228 = vector.shape_cast %227 : vector<1x64xi1> to vector<1x64xi1>
    %229 = vector.broadcast %228 : vector<1x64xi1> to vector<32x64xi1>
    %230 = vector.broadcast %cst_115 : f32 to vector<32x64xf32>
    %231 = arith.select %229, %225, %230 : vector<32x64xi1>, vector<32x64xf32>
    %c7_116 = arith.constant 7 : index
    %c0_117 = arith.constant 0 : index
    %c0_118 = arith.constant 0 : index
    %232 = vector.load %arg5[%c7_116, %c0_117, %c0_118] : memref<9x32x32xbf16, #tpu.memory_space<vmem>>, vector<1x32x32xbf16>
    %233 = vector.shape_cast %232 : vector<1x32x32xbf16> to vector<32x32xbf16>
    %234 = arith.truncf %231 : vector<32x64xf32> to vector<32x64xbf16>
    %cst_119 = arith.constant dense<0.000000e+00> : vector<32x64xf32>
    %235 = tpu.matmul %233, %234, %cst_119 {dimension_numbers = #tpu.dot_dimension_numbers<[1], [0], [0], [1], [0, 0, 1, 1], [], []>} : vector<32x32xbf16>, vector<32x64xbf16>, vector<32x64xf32> -> vector<32x64xf32>
    %236 = arith.addf %224, %235 : vector<32x64xf32>
    %c55_i32_120 = arith.constant 55 : i32
    %237 = tpu.dynamic_rotate %134 by %c55_i32_120 dim 1 : vector<32x64xf32>, i32 -> vector<32x64xf32>
    %c7_i32_121 = arith.constant 7 : i32
    %238 = vector.broadcast %c7_i32_121 : i32 to vector<1x64xi32>
    %239 = arith.cmpi slt, %137, %238 : vector<1x64xi32>
    %c7_i32_122 = arith.constant 7 : i32
    %240 = vector.broadcast %c7_i32_122 : i32 to vector<1x64xi32>
    %241 = arith.cmpi slt, %139, %240 : vector<1x64xi32>
    %242 = arith.andi %239, %241 : vector<1x64xi1>
    %cst_123 = arith.constant 0.000000e+00 : f32
    %243 = vector.shape_cast %242 : vector<1x64xi1> to vector<1x64xi1>
    %244 = vector.broadcast %243 : vector<1x64xi1> to vector<32x64xi1>
    %245 = vector.broadcast %cst_123 : f32 to vector<32x64xf32>
    %246 = arith.select %244, %237, %245 : vector<32x64xi1>, vector<32x64xf32>
    %c8_124 = arith.constant 8 : index
    %c0_125 = arith.constant 0 : index
    %c0_126 = arith.constant 0 : index
    %247 = vector.load %arg5[%c8_124, %c0_125, %c0_126] : memref<9x32x32xbf16, #tpu.memory_space<vmem>>, vector<1x32x32xbf16>
    %248 = vector.shape_cast %247 : vector<1x32x32xbf16> to vector<32x32xbf16>
    %249 = arith.truncf %246 : vector<32x64xf32> to vector<32x64xbf16>
    %cst_127 = arith.constant dense<0.000000e+00> : vector<32x64xf32>
    %250 = tpu.matmul %248, %249, %cst_127 {dimension_numbers = #tpu.dot_dimension_numbers<[1], [0], [0], [1], [0, 0, 1, 1], [], []>} : vector<32x32xbf16>, vector<32x64xbf16>, vector<32x64xf32> -> vector<32x64xf32>
    %251 = arith.addf %236, %250 : vector<32x64xf32>
    %c0_128 = arith.constant 0 : index
    %c0_129 = arith.constant 0 : index
    %252 = vector.load %arg6[%c0_128, %c0_129] : memref<32x1xf32, #tpu.memory_space<vmem>>, vector<32x1xf32>
    %253 = vector.broadcast %252 : vector<32x1xf32> to vector<32x64xf32>
    %254 = arith.addf %251, %253 : vector<32x64xf32>
    %255 = arith.addf %254, %10 : vector<32x64xf32>
    %256 = arith.truncf %255 : vector<32x64xf32> to vector<32x64xbf16>
    %c0_130 = arith.constant 0 : index
    %c0_131 = arith.constant 0 : index
    %257 = vector.load %arg9[%c0_130, %c0_131] : memref<64x256xbf16, #tpu.memory_space<vmem>>, vector<64x256xbf16>
    %cst_132 = arith.constant dense<0.000000e+00> : vector<32x256xf32>
    %258 = tpu.matmul %256, %257, %cst_132 {dimension_numbers = #tpu.dot_dimension_numbers<[1], [0], [0], [1], [0, 0, 1, 1], [], []>} : vector<32x64xbf16>, vector<64x256xbf16>, vector<32x256xf32> -> vector<32x256xf32>
    %c0_133 = arith.constant 0 : index
    %c0_134 = arith.constant 0 : index
    %259 = vector.load %arg14[%c0_133, %c0_134] : memref<16x32xbf16, #tpu.memory_space<vmem>>, vector<16x32xbf16>
    %260 = arith.truncf %258 : vector<32x256xf32> to vector<32x256xbf16>
    %cst_135 = arith.constant dense<0.000000e+00> : vector<16x256xf32>
    %261 = tpu.matmul %259, %260, %cst_135 {dimension_numbers = #tpu.dot_dimension_numbers<[1], [0], [0], [1], [0, 0, 1, 1], [], []>} : vector<16x32xbf16>, vector<32x256xbf16>, vector<16x256xf32> -> vector<16x256xf32>
    %c0_136 = arith.constant 0 : index
    %c0_137 = arith.constant 0 : index
    %262 = vector.load %arg15[%c0_136, %c0_137] : memref<16x1xf32, #tpu.memory_space<vmem>>, vector<16x1xf32>
    %263 = vector.broadcast %262 : vector<16x1xf32> to vector<16x256xf32>
    %264 = arith.addf %261, %263 : vector<16x256xf32>
    %cst_138 = arith.constant 0.000000e+00 : f32
    %265 = vector.broadcast %cst_138 : f32 to vector<32x256xf32>
    %266 = arith.maximumf %258, %265 : vector<32x256xf32>
    %267 = tpu.iota {dimensions = array<i32: 1>} : vector<1x256xi32>
    %c15_i32 = arith.constant 15 : i32
    %268 = vector.broadcast %c15_i32 : i32 to vector<1x256xi32>
    %269 = arith.andi %267, %268 : vector<1x256xi32>
    %c4_i32 = arith.constant 4 : i32
    %270 = vector.broadcast %c4_i32 : i32 to vector<1x256xi32>
    %271 = arith.shrsi %267, %270 : vector<1x256xi32>
    %c17_i32 = arith.constant 17 : i32
    %272 = tpu.dynamic_rotate %266 by %c17_i32 dim 1 : vector<32x256xf32>, i32 -> vector<32x256xf32>
    %c1_i32_139 = arith.constant 1 : i32
    %273 = vector.broadcast %c1_i32_139 : i32 to vector<1x256xi32>
    %274 = arith.cmpi sge, %269, %273 : vector<1x256xi32>
    %c1_i32_140 = arith.constant 1 : i32
    %275 = vector.broadcast %c1_i32_140 : i32 to vector<1x256xi32>
    %276 = arith.cmpi sge, %271, %275 : vector<1x256xi32>
    %277 = arith.andi %274, %276 : vector<1x256xi1>
    %cst_141 = arith.constant 0.000000e+00 : f32
    %278 = vector.shape_cast %277 : vector<1x256xi1> to vector<1x256xi1>
    %279 = vector.broadcast %278 : vector<1x256xi1> to vector<32x256xi1>
    %280 = vector.broadcast %cst_141 : f32 to vector<32x256xf32>
    %281 = arith.select %279, %272, %280 : vector<32x256xi1>, vector<32x256xf32>
    %c0_142 = arith.constant 0 : index
    %c0_143 = arith.constant 0 : index
    %c0_144 = arith.constant 0 : index
    %282 = vector.load %arg10[%c0_142, %c0_143, %c0_144] : memref<9x16x32xbf16, #tpu.memory_space<vmem>>, vector<1x16x32xbf16>
    %283 = vector.shape_cast %282 : vector<1x16x32xbf16> to vector<16x32xbf16>
    %284 = arith.truncf %281 : vector<32x256xf32> to vector<32x256xbf16>
    %cst_145 = arith.constant dense<0.000000e+00> : vector<16x256xf32>
    %285 = tpu.matmul %283, %284, %cst_145 {dimension_numbers = #tpu.dot_dimension_numbers<[1], [0], [0], [1], [0, 0, 1, 1], [], []>} : vector<16x32xbf16>, vector<32x256xbf16>, vector<16x256xf32> -> vector<16x256xf32>
    %c16_i32 = arith.constant 16 : i32
    %286 = tpu.dynamic_rotate %266 by %c16_i32 dim 1 : vector<32x256xf32>, i32 -> vector<32x256xf32>
    %c1_i32_146 = arith.constant 1 : i32
    %287 = vector.broadcast %c1_i32_146 : i32 to vector<1x256xi32>
    %288 = arith.cmpi sge, %271, %287 : vector<1x256xi32>
    %cst_147 = arith.constant 0.000000e+00 : f32
    %289 = vector.shape_cast %288 : vector<1x256xi1> to vector<1x256xi1>
    %290 = vector.broadcast %289 : vector<1x256xi1> to vector<32x256xi1>
    %291 = vector.broadcast %cst_147 : f32 to vector<32x256xf32>
    %292 = arith.select %290, %286, %291 : vector<32x256xi1>, vector<32x256xf32>
    %c1_148 = arith.constant 1 : index
    %c0_149 = arith.constant 0 : index
    %c0_150 = arith.constant 0 : index
    %293 = vector.load %arg10[%c1_148, %c0_149, %c0_150] : memref<9x16x32xbf16, #tpu.memory_space<vmem>>, vector<1x16x32xbf16>
    %294 = vector.shape_cast %293 : vector<1x16x32xbf16> to vector<16x32xbf16>
    %295 = arith.truncf %292 : vector<32x256xf32> to vector<32x256xbf16>
    %cst_151 = arith.constant dense<0.000000e+00> : vector<16x256xf32>
    %296 = tpu.matmul %294, %295, %cst_151 {dimension_numbers = #tpu.dot_dimension_numbers<[1], [0], [0], [1], [0, 0, 1, 1], [], []>} : vector<16x32xbf16>, vector<32x256xbf16>, vector<16x256xf32> -> vector<16x256xf32>
    %297 = arith.addf %285, %296 : vector<16x256xf32>
    %c15_i32_152 = arith.constant 15 : i32
    %298 = tpu.dynamic_rotate %266 by %c15_i32_152 dim 1 : vector<32x256xf32>, i32 -> vector<32x256xf32>
    %c15_i32_153 = arith.constant 15 : i32
    %299 = vector.broadcast %c15_i32_153 : i32 to vector<1x256xi32>
    %300 = arith.cmpi slt, %269, %299 : vector<1x256xi32>
    %c1_i32_154 = arith.constant 1 : i32
    %301 = vector.broadcast %c1_i32_154 : i32 to vector<1x256xi32>
    %302 = arith.cmpi sge, %271, %301 : vector<1x256xi32>
    %303 = arith.andi %300, %302 : vector<1x256xi1>
    %cst_155 = arith.constant 0.000000e+00 : f32
    %304 = vector.shape_cast %303 : vector<1x256xi1> to vector<1x256xi1>
    %305 = vector.broadcast %304 : vector<1x256xi1> to vector<32x256xi1>
    %306 = vector.broadcast %cst_155 : f32 to vector<32x256xf32>
    %307 = arith.select %305, %298, %306 : vector<32x256xi1>, vector<32x256xf32>
    %c2_156 = arith.constant 2 : index
    %c0_157 = arith.constant 0 : index
    %c0_158 = arith.constant 0 : index
    %308 = vector.load %arg10[%c2_156, %c0_157, %c0_158] : memref<9x16x32xbf16, #tpu.memory_space<vmem>>, vector<1x16x32xbf16>
    %309 = vector.shape_cast %308 : vector<1x16x32xbf16> to vector<16x32xbf16>
    %310 = arith.truncf %307 : vector<32x256xf32> to vector<32x256xbf16>
    %cst_159 = arith.constant dense<0.000000e+00> : vector<16x256xf32>
    %311 = tpu.matmul %309, %310, %cst_159 {dimension_numbers = #tpu.dot_dimension_numbers<[1], [0], [0], [1], [0, 0, 1, 1], [], []>} : vector<16x32xbf16>, vector<32x256xbf16>, vector<16x256xf32> -> vector<16x256xf32>
    %312 = arith.addf %297, %311 : vector<16x256xf32>
    %c1_i32_160 = arith.constant 1 : i32
    %313 = tpu.dynamic_rotate %266 by %c1_i32_160 dim 1 : vector<32x256xf32>, i32 -> vector<32x256xf32>
    %c1_i32_161 = arith.constant 1 : i32
    %314 = vector.broadcast %c1_i32_161 : i32 to vector<1x256xi32>
    %315 = arith.cmpi sge, %269, %314 : vector<1x256xi32>
    %cst_162 = arith.constant 0.000000e+00 : f32
    %316 = vector.shape_cast %315 : vector<1x256xi1> to vector<1x256xi1>
    %317 = vector.broadcast %316 : vector<1x256xi1> to vector<32x256xi1>
    %318 = vector.broadcast %cst_162 : f32 to vector<32x256xf32>
    %319 = arith.select %317, %313, %318 : vector<32x256xi1>, vector<32x256xf32>
    %c3_163 = arith.constant 3 : index
    %c0_164 = arith.constant 0 : index
    %c0_165 = arith.constant 0 : index
    %320 = vector.load %arg10[%c3_163, %c0_164, %c0_165] : memref<9x16x32xbf16, #tpu.memory_space<vmem>>, vector<1x16x32xbf16>
    %321 = vector.shape_cast %320 : vector<1x16x32xbf16> to vector<16x32xbf16>
    %322 = arith.truncf %319 : vector<32x256xf32> to vector<32x256xbf16>
    %cst_166 = arith.constant dense<0.000000e+00> : vector<16x256xf32>
    %323 = tpu.matmul %321, %322, %cst_166 {dimension_numbers = #tpu.dot_dimension_numbers<[1], [0], [0], [1], [0, 0, 1, 1], [], []>} : vector<16x32xbf16>, vector<32x256xbf16>, vector<16x256xf32> -> vector<16x256xf32>
    %324 = arith.addf %312, %323 : vector<16x256xf32>
    %c4_167 = arith.constant 4 : index
    %c0_168 = arith.constant 0 : index
    %c0_169 = arith.constant 0 : index
    %325 = vector.load %arg10[%c4_167, %c0_168, %c0_169] : memref<9x16x32xbf16, #tpu.memory_space<vmem>>, vector<1x16x32xbf16>
    %326 = vector.shape_cast %325 : vector<1x16x32xbf16> to vector<16x32xbf16>
    %327 = arith.truncf %266 : vector<32x256xf32> to vector<32x256xbf16>
    %cst_170 = arith.constant dense<0.000000e+00> : vector<16x256xf32>
    %328 = tpu.matmul %326, %327, %cst_170 {dimension_numbers = #tpu.dot_dimension_numbers<[1], [0], [0], [1], [0, 0, 1, 1], [], []>} : vector<16x32xbf16>, vector<32x256xbf16>, vector<16x256xf32> -> vector<16x256xf32>
    %329 = arith.addf %324, %328 : vector<16x256xf32>
    %c255_i32 = arith.constant 255 : i32
    %330 = tpu.dynamic_rotate %266 by %c255_i32 dim 1 : vector<32x256xf32>, i32 -> vector<32x256xf32>
    %c15_i32_171 = arith.constant 15 : i32
    %331 = vector.broadcast %c15_i32_171 : i32 to vector<1x256xi32>
    %332 = arith.cmpi slt, %269, %331 : vector<1x256xi32>
    %cst_172 = arith.constant 0.000000e+00 : f32
    %333 = vector.shape_cast %332 : vector<1x256xi1> to vector<1x256xi1>
    %334 = vector.broadcast %333 : vector<1x256xi1> to vector<32x256xi1>
    %335 = vector.broadcast %cst_172 : f32 to vector<32x256xf32>
    %336 = arith.select %334, %330, %335 : vector<32x256xi1>, vector<32x256xf32>
    %c5_173 = arith.constant 5 : index
    %c0_174 = arith.constant 0 : index
    %c0_175 = arith.constant 0 : index
    %337 = vector.load %arg10[%c5_173, %c0_174, %c0_175] : memref<9x16x32xbf16, #tpu.memory_space<vmem>>, vector<1x16x32xbf16>
    %338 = vector.shape_cast %337 : vector<1x16x32xbf16> to vector<16x32xbf16>
    %339 = arith.truncf %336 : vector<32x256xf32> to vector<32x256xbf16>
    %cst_176 = arith.constant dense<0.000000e+00> : vector<16x256xf32>
    %340 = tpu.matmul %338, %339, %cst_176 {dimension_numbers = #tpu.dot_dimension_numbers<[1], [0], [0], [1], [0, 0, 1, 1], [], []>} : vector<16x32xbf16>, vector<32x256xbf16>, vector<16x256xf32> -> vector<16x256xf32>
    %341 = arith.addf %329, %340 : vector<16x256xf32>
    %c241_i32 = arith.constant 241 : i32
    %342 = tpu.dynamic_rotate %266 by %c241_i32 dim 1 : vector<32x256xf32>, i32 -> vector<32x256xf32>
    %c1_i32_177 = arith.constant 1 : i32
    %343 = vector.broadcast %c1_i32_177 : i32 to vector<1x256xi32>
    %344 = arith.cmpi sge, %269, %343 : vector<1x256xi32>
    %c15_i32_178 = arith.constant 15 : i32
    %345 = vector.broadcast %c15_i32_178 : i32 to vector<1x256xi32>
    %346 = arith.cmpi slt, %271, %345 : vector<1x256xi32>
    %347 = arith.andi %344, %346 : vector<1x256xi1>
    %cst_179 = arith.constant 0.000000e+00 : f32
    %348 = vector.shape_cast %347 : vector<1x256xi1> to vector<1x256xi1>
    %349 = vector.broadcast %348 : vector<1x256xi1> to vector<32x256xi1>
    %350 = vector.broadcast %cst_179 : f32 to vector<32x256xf32>
    %351 = arith.select %349, %342, %350 : vector<32x256xi1>, vector<32x256xf32>
    %c6_180 = arith.constant 6 : index
    %c0_181 = arith.constant 0 : index
    %c0_182 = arith.constant 0 : index
    %352 = vector.load %arg10[%c6_180, %c0_181, %c0_182] : memref<9x16x32xbf16, #tpu.memory_space<vmem>>, vector<1x16x32xbf16>
    %353 = vector.shape_cast %352 : vector<1x16x32xbf16> to vector<16x32xbf16>
    %354 = arith.truncf %351 : vector<32x256xf32> to vector<32x256xbf16>
    %cst_183 = arith.constant dense<0.000000e+00> : vector<16x256xf32>
    %355 = tpu.matmul %353, %354, %cst_183 {dimension_numbers = #tpu.dot_dimension_numbers<[1], [0], [0], [1], [0, 0, 1, 1], [], []>} : vector<16x32xbf16>, vector<32x256xbf16>, vector<16x256xf32> -> vector<16x256xf32>
    %356 = arith.addf %341, %355 : vector<16x256xf32>
    %c240_i32 = arith.constant 240 : i32
    %357 = tpu.dynamic_rotate %266 by %c240_i32 dim 1 : vector<32x256xf32>, i32 -> vector<32x256xf32>
    %c15_i32_184 = arith.constant 15 : i32
    %358 = vector.broadcast %c15_i32_184 : i32 to vector<1x256xi32>
    %359 = arith.cmpi slt, %271, %358 : vector<1x256xi32>
    %cst_185 = arith.constant 0.000000e+00 : f32
    %360 = vector.shape_cast %359 : vector<1x256xi1> to vector<1x256xi1>
    %361 = vector.broadcast %360 : vector<1x256xi1> to vector<32x256xi1>
    %362 = vector.broadcast %cst_185 : f32 to vector<32x256xf32>
    %363 = arith.select %361, %357, %362 : vector<32x256xi1>, vector<32x256xf32>
    %c7_186 = arith.constant 7 : index
    %c0_187 = arith.constant 0 : index
    %c0_188 = arith.constant 0 : index
    %364 = vector.load %arg10[%c7_186, %c0_187, %c0_188] : memref<9x16x32xbf16, #tpu.memory_space<vmem>>, vector<1x16x32xbf16>
    %365 = vector.shape_cast %364 : vector<1x16x32xbf16> to vector<16x32xbf16>
    %366 = arith.truncf %363 : vector<32x256xf32> to vector<32x256xbf16>
    %cst_189 = arith.constant dense<0.000000e+00> : vector<16x256xf32>
    %367 = tpu.matmul %365, %366, %cst_189 {dimension_numbers = #tpu.dot_dimension_numbers<[1], [0], [0], [1], [0, 0, 1, 1], [], []>} : vector<16x32xbf16>, vector<32x256xbf16>, vector<16x256xf32> -> vector<16x256xf32>
    %368 = arith.addf %356, %367 : vector<16x256xf32>
    %c239_i32 = arith.constant 239 : i32
    %369 = tpu.dynamic_rotate %266 by %c239_i32 dim 1 : vector<32x256xf32>, i32 -> vector<32x256xf32>
    %c15_i32_190 = arith.constant 15 : i32
    %370 = vector.broadcast %c15_i32_190 : i32 to vector<1x256xi32>
    %371 = arith.cmpi slt, %269, %370 : vector<1x256xi32>
    %c15_i32_191 = arith.constant 15 : i32
    %372 = vector.broadcast %c15_i32_191 : i32 to vector<1x256xi32>
    %373 = arith.cmpi slt, %271, %372 : vector<1x256xi32>
    %374 = arith.andi %371, %373 : vector<1x256xi1>
    %cst_192 = arith.constant 0.000000e+00 : f32
    %375 = vector.shape_cast %374 : vector<1x256xi1> to vector<1x256xi1>
    %376 = vector.broadcast %375 : vector<1x256xi1> to vector<32x256xi1>
    %377 = vector.broadcast %cst_192 : f32 to vector<32x256xf32>
    %378 = arith.select %376, %369, %377 : vector<32x256xi1>, vector<32x256xf32>
    %c8_193 = arith.constant 8 : index
    %c0_194 = arith.constant 0 : index
    %c0_195 = arith.constant 0 : index
    %379 = vector.load %arg10[%c8_193, %c0_194, %c0_195] : memref<9x16x32xbf16, #tpu.memory_space<vmem>>, vector<1x16x32xbf16>
    %380 = vector.shape_cast %379 : vector<1x16x32xbf16> to vector<16x32xbf16>
    %381 = arith.truncf %378 : vector<32x256xf32> to vector<32x256xbf16>
    %cst_196 = arith.constant dense<0.000000e+00> : vector<16x256xf32>
    %382 = tpu.matmul %380, %381, %cst_196 {dimension_numbers = #tpu.dot_dimension_numbers<[1], [0], [0], [1], [0, 0, 1, 1], [], []>} : vector<16x32xbf16>, vector<32x256xbf16>, vector<16x256xf32> -> vector<16x256xf32>
    %383 = arith.addf %368, %382 : vector<16x256xf32>
    %c0_197 = arith.constant 0 : index
    %c0_198 = arith.constant 0 : index
    %384 = vector.load %arg11[%c0_197, %c0_198] : memref<16x1xf32, #tpu.memory_space<vmem>>, vector<16x1xf32>
    %385 = vector.broadcast %384 : vector<16x1xf32> to vector<16x256xf32>
    %386 = arith.addf %383, %385 : vector<16x256xf32>
    %cst_199 = arith.constant 0.000000e+00 : f32
    %387 = vector.broadcast %cst_199 : f32 to vector<16x256xf32>
    %388 = arith.maximumf %386, %387 : vector<16x256xf32>
    %389 = tpu.iota {dimensions = array<i32: 1>} : vector<1x256xi32>
    %c15_i32_200 = arith.constant 15 : i32
    %390 = vector.broadcast %c15_i32_200 : i32 to vector<1x256xi32>
    %391 = arith.andi %389, %390 : vector<1x256xi32>
    %c4_i32_201 = arith.constant 4 : i32
    %392 = vector.broadcast %c4_i32_201 : i32 to vector<1x256xi32>
    %393 = arith.shrsi %389, %392 : vector<1x256xi32>
    %c17_i32_202 = arith.constant 17 : i32
    %394 = tpu.dynamic_rotate %388 by %c17_i32_202 dim 1 : vector<16x256xf32>, i32 -> vector<16x256xf32>
    %c1_i32_203 = arith.constant 1 : i32
    %395 = vector.broadcast %c1_i32_203 : i32 to vector<1x256xi32>
    %396 = arith.cmpi sge, %391, %395 : vector<1x256xi32>
    %c1_i32_204 = arith.constant 1 : i32
    %397 = vector.broadcast %c1_i32_204 : i32 to vector<1x256xi32>
    %398 = arith.cmpi sge, %393, %397 : vector<1x256xi32>
    %399 = arith.andi %396, %398 : vector<1x256xi1>
    %cst_205 = arith.constant 0.000000e+00 : f32
    %400 = vector.shape_cast %399 : vector<1x256xi1> to vector<1x256xi1>
    %401 = vector.broadcast %400 : vector<1x256xi1> to vector<16x256xi1>
    %402 = vector.broadcast %cst_205 : f32 to vector<16x256xf32>
    %403 = arith.select %401, %394, %402 : vector<16x256xi1>, vector<16x256xf32>
    %c0_206 = arith.constant 0 : index
    %c0_207 = arith.constant 0 : index
    %c0_208 = arith.constant 0 : index
    %404 = vector.load %arg12[%c0_206, %c0_207, %c0_208] : memref<9x16x16xbf16, #tpu.memory_space<vmem>>, vector<1x16x16xbf16>
    %405 = vector.shape_cast %404 : vector<1x16x16xbf16> to vector<16x16xbf16>
    %406 = arith.truncf %403 : vector<16x256xf32> to vector<16x256xbf16>
    %cst_209 = arith.constant dense<0.000000e+00> : vector<16x256xf32>
    %407 = tpu.matmul %405, %406, %cst_209 {dimension_numbers = #tpu.dot_dimension_numbers<[1], [0], [0], [1], [0, 0, 1, 1], [], []>} : vector<16x16xbf16>, vector<16x256xbf16>, vector<16x256xf32> -> vector<16x256xf32>
    %c16_i32_210 = arith.constant 16 : i32
    %408 = tpu.dynamic_rotate %388 by %c16_i32_210 dim 1 : vector<16x256xf32>, i32 -> vector<16x256xf32>
    %c1_i32_211 = arith.constant 1 : i32
    %409 = vector.broadcast %c1_i32_211 : i32 to vector<1x256xi32>
    %410 = arith.cmpi sge, %393, %409 : vector<1x256xi32>
    %cst_212 = arith.constant 0.000000e+00 : f32
    %411 = vector.shape_cast %410 : vector<1x256xi1> to vector<1x256xi1>
    %412 = vector.broadcast %411 : vector<1x256xi1> to vector<16x256xi1>
    %413 = vector.broadcast %cst_212 : f32 to vector<16x256xf32>
    %414 = arith.select %412, %408, %413 : vector<16x256xi1>, vector<16x256xf32>
    %c1_213 = arith.constant 1 : index
    %c0_214 = arith.constant 0 : index
    %c0_215 = arith.constant 0 : index
    %415 = vector.load %arg12[%c1_213, %c0_214, %c0_215] : memref<9x16x16xbf16, #tpu.memory_space<vmem>>, vector<1x16x16xbf16>
    %416 = vector.shape_cast %415 : vector<1x16x16xbf16> to vector<16x16xbf16>
    %417 = arith.truncf %414 : vector<16x256xf32> to vector<16x256xbf16>
    %cst_216 = arith.constant dense<0.000000e+00> : vector<16x256xf32>
    %418 = tpu.matmul %416, %417, %cst_216 {dimension_numbers = #tpu.dot_dimension_numbers<[1], [0], [0], [1], [0, 0, 1, 1], [], []>} : vector<16x16xbf16>, vector<16x256xbf16>, vector<16x256xf32> -> vector<16x256xf32>
    %419 = arith.addf %407, %418 : vector<16x256xf32>
    %c15_i32_217 = arith.constant 15 : i32
    %420 = tpu.dynamic_rotate %388 by %c15_i32_217 dim 1 : vector<16x256xf32>, i32 -> vector<16x256xf32>
    %c15_i32_218 = arith.constant 15 : i32
    %421 = vector.broadcast %c15_i32_218 : i32 to vector<1x256xi32>
    %422 = arith.cmpi slt, %391, %421 : vector<1x256xi32>
    %c1_i32_219 = arith.constant 1 : i32
    %423 = vector.broadcast %c1_i32_219 : i32 to vector<1x256xi32>
    %424 = arith.cmpi sge, %393, %423 : vector<1x256xi32>
    %425 = arith.andi %422, %424 : vector<1x256xi1>
    %cst_220 = arith.constant 0.000000e+00 : f32
    %426 = vector.shape_cast %425 : vector<1x256xi1> to vector<1x256xi1>
    %427 = vector.broadcast %426 : vector<1x256xi1> to vector<16x256xi1>
    %428 = vector.broadcast %cst_220 : f32 to vector<16x256xf32>
    %429 = arith.select %427, %420, %428 : vector<16x256xi1>, vector<16x256xf32>
    %c2_221 = arith.constant 2 : index
    %c0_222 = arith.constant 0 : index
    %c0_223 = arith.constant 0 : index
    %430 = vector.load %arg12[%c2_221, %c0_222, %c0_223] : memref<9x16x16xbf16, #tpu.memory_space<vmem>>, vector<1x16x16xbf16>
    %431 = vector.shape_cast %430 : vector<1x16x16xbf16> to vector<16x16xbf16>
    %432 = arith.truncf %429 : vector<16x256xf32> to vector<16x256xbf16>
    %cst_224 = arith.constant dense<0.000000e+00> : vector<16x256xf32>
    %433 = tpu.matmul %431, %432, %cst_224 {dimension_numbers = #tpu.dot_dimension_numbers<[1], [0], [0], [1], [0, 0, 1, 1], [], []>} : vector<16x16xbf16>, vector<16x256xbf16>, vector<16x256xf32> -> vector<16x256xf32>
    %434 = arith.addf %419, %433 : vector<16x256xf32>
    %c1_i32_225 = arith.constant 1 : i32
    %435 = tpu.dynamic_rotate %388 by %c1_i32_225 dim 1 : vector<16x256xf32>, i32 -> vector<16x256xf32>
    %c1_i32_226 = arith.constant 1 : i32
    %436 = vector.broadcast %c1_i32_226 : i32 to vector<1x256xi32>
    %437 = arith.cmpi sge, %391, %436 : vector<1x256xi32>
    %cst_227 = arith.constant 0.000000e+00 : f32
    %438 = vector.shape_cast %437 : vector<1x256xi1> to vector<1x256xi1>
    %439 = vector.broadcast %438 : vector<1x256xi1> to vector<16x256xi1>
    %440 = vector.broadcast %cst_227 : f32 to vector<16x256xf32>
    %441 = arith.select %439, %435, %440 : vector<16x256xi1>, vector<16x256xf32>
    %c3_228 = arith.constant 3 : index
    %c0_229 = arith.constant 0 : index
    %c0_230 = arith.constant 0 : index
    %442 = vector.load %arg12[%c3_228, %c0_229, %c0_230] : memref<9x16x16xbf16, #tpu.memory_space<vmem>>, vector<1x16x16xbf16>
    %443 = vector.shape_cast %442 : vector<1x16x16xbf16> to vector<16x16xbf16>
    %444 = arith.truncf %441 : vector<16x256xf32> to vector<16x256xbf16>
    %cst_231 = arith.constant dense<0.000000e+00> : vector<16x256xf32>
    %445 = tpu.matmul %443, %444, %cst_231 {dimension_numbers = #tpu.dot_dimension_numbers<[1], [0], [0], [1], [0, 0, 1, 1], [], []>} : vector<16x16xbf16>, vector<16x256xbf16>, vector<16x256xf32> -> vector<16x256xf32>
    %446 = arith.addf %434, %445 : vector<16x256xf32>
    %c4_232 = arith.constant 4 : index
    %c0_233 = arith.constant 0 : index
    %c0_234 = arith.constant 0 : index
    %447 = vector.load %arg12[%c4_232, %c0_233, %c0_234] : memref<9x16x16xbf16, #tpu.memory_space<vmem>>, vector<1x16x16xbf16>
    %448 = vector.shape_cast %447 : vector<1x16x16xbf16> to vector<16x16xbf16>
    %449 = arith.truncf %388 : vector<16x256xf32> to vector<16x256xbf16>
    %cst_235 = arith.constant dense<0.000000e+00> : vector<16x256xf32>
    %450 = tpu.matmul %448, %449, %cst_235 {dimension_numbers = #tpu.dot_dimension_numbers<[1], [0], [0], [1], [0, 0, 1, 1], [], []>} : vector<16x16xbf16>, vector<16x256xbf16>, vector<16x256xf32> -> vector<16x256xf32>
    %451 = arith.addf %446, %450 : vector<16x256xf32>
    %c255_i32_236 = arith.constant 255 : i32
    %452 = tpu.dynamic_rotate %388 by %c255_i32_236 dim 1 : vector<16x256xf32>, i32 -> vector<16x256xf32>
    %c15_i32_237 = arith.constant 15 : i32
    %453 = vector.broadcast %c15_i32_237 : i32 to vector<1x256xi32>
    %454 = arith.cmpi slt, %391, %453 : vector<1x256xi32>
    %cst_238 = arith.constant 0.000000e+00 : f32
    %455 = vector.shape_cast %454 : vector<1x256xi1> to vector<1x256xi1>
    %456 = vector.broadcast %455 : vector<1x256xi1> to vector<16x256xi1>
    %457 = vector.broadcast %cst_238 : f32 to vector<16x256xf32>
    %458 = arith.select %456, %452, %457 : vector<16x256xi1>, vector<16x256xf32>
    %c5_239 = arith.constant 5 : index
    %c0_240 = arith.constant 0 : index
    %c0_241 = arith.constant 0 : index
    %459 = vector.load %arg12[%c5_239, %c0_240, %c0_241] : memref<9x16x16xbf16, #tpu.memory_space<vmem>>, vector<1x16x16xbf16>
    %460 = vector.shape_cast %459 : vector<1x16x16xbf16> to vector<16x16xbf16>
    %461 = arith.truncf %458 : vector<16x256xf32> to vector<16x256xbf16>
    %cst_242 = arith.constant dense<0.000000e+00> : vector<16x256xf32>
    %462 = tpu.matmul %460, %461, %cst_242 {dimension_numbers = #tpu.dot_dimension_numbers<[1], [0], [0], [1], [0, 0, 1, 1], [], []>} : vector<16x16xbf16>, vector<16x256xbf16>, vector<16x256xf32> -> vector<16x256xf32>
    %463 = arith.addf %451, %462 : vector<16x256xf32>
    %c241_i32_243 = arith.constant 241 : i32
    %464 = tpu.dynamic_rotate %388 by %c241_i32_243 dim 1 : vector<16x256xf32>, i32 -> vector<16x256xf32>
    %c1_i32_244 = arith.constant 1 : i32
    %465 = vector.broadcast %c1_i32_244 : i32 to vector<1x256xi32>
    %466 = arith.cmpi sge, %391, %465 : vector<1x256xi32>
    %c15_i32_245 = arith.constant 15 : i32
    %467 = vector.broadcast %c15_i32_245 : i32 to vector<1x256xi32>
    %468 = arith.cmpi slt, %393, %467 : vector<1x256xi32>
    %469 = arith.andi %466, %468 : vector<1x256xi1>
    %cst_246 = arith.constant 0.000000e+00 : f32
    %470 = vector.shape_cast %469 : vector<1x256xi1> to vector<1x256xi1>
    %471 = vector.broadcast %470 : vector<1x256xi1> to vector<16x256xi1>
    %472 = vector.broadcast %cst_246 : f32 to vector<16x256xf32>
    %473 = arith.select %471, %464, %472 : vector<16x256xi1>, vector<16x256xf32>
    %c6_247 = arith.constant 6 : index
    %c0_248 = arith.constant 0 : index
    %c0_249 = arith.constant 0 : index
    %474 = vector.load %arg12[%c6_247, %c0_248, %c0_249] : memref<9x16x16xbf16, #tpu.memory_space<vmem>>, vector<1x16x16xbf16>
    %475 = vector.shape_cast %474 : vector<1x16x16xbf16> to vector<16x16xbf16>
    %476 = arith.truncf %473 : vector<16x256xf32> to vector<16x256xbf16>
    %cst_250 = arith.constant dense<0.000000e+00> : vector<16x256xf32>
    %477 = tpu.matmul %475, %476, %cst_250 {dimension_numbers = #tpu.dot_dimension_numbers<[1], [0], [0], [1], [0, 0, 1, 1], [], []>} : vector<16x16xbf16>, vector<16x256xbf16>, vector<16x256xf32> -> vector<16x256xf32>
    %478 = arith.addf %463, %477 : vector<16x256xf32>
    %c240_i32_251 = arith.constant 240 : i32
    %479 = tpu.dynamic_rotate %388 by %c240_i32_251 dim 1 : vector<16x256xf32>, i32 -> vector<16x256xf32>
    %c15_i32_252 = arith.constant 15 : i32
    %480 = vector.broadcast %c15_i32_252 : i32 to vector<1x256xi32>
    %481 = arith.cmpi slt, %393, %480 : vector<1x256xi32>
    %cst_253 = arith.constant 0.000000e+00 : f32
    %482 = vector.shape_cast %481 : vector<1x256xi1> to vector<1x256xi1>
    %483 = vector.broadcast %482 : vector<1x256xi1> to vector<16x256xi1>
    %484 = vector.broadcast %cst_253 : f32 to vector<16x256xf32>
    %485 = arith.select %483, %479, %484 : vector<16x256xi1>, vector<16x256xf32>
    %c7_254 = arith.constant 7 : index
    %c0_255 = arith.constant 0 : index
    %c0_256 = arith.constant 0 : index
    %486 = vector.load %arg12[%c7_254, %c0_255, %c0_256] : memref<9x16x16xbf16, #tpu.memory_space<vmem>>, vector<1x16x16xbf16>
    %487 = vector.shape_cast %486 : vector<1x16x16xbf16> to vector<16x16xbf16>
    %488 = arith.truncf %485 : vector<16x256xf32> to vector<16x256xbf16>
    %cst_257 = arith.constant dense<0.000000e+00> : vector<16x256xf32>
    %489 = tpu.matmul %487, %488, %cst_257 {dimension_numbers = #tpu.dot_dimension_numbers<[1], [0], [0], [1], [0, 0, 1, 1], [], []>} : vector<16x16xbf16>, vector<16x256xbf16>, vector<16x256xf32> -> vector<16x256xf32>
    %490 = arith.addf %478, %489 : vector<16x256xf32>
    %c239_i32_258 = arith.constant 239 : i32
    %491 = tpu.dynamic_rotate %388 by %c239_i32_258 dim 1 : vector<16x256xf32>, i32 -> vector<16x256xf32>
    %c15_i32_259 = arith.constant 15 : i32
    %492 = vector.broadcast %c15_i32_259 : i32 to vector<1x256xi32>
    %493 = arith.cmpi slt, %391, %492 : vector<1x256xi32>
    %c15_i32_260 = arith.constant 15 : i32
    %494 = vector.broadcast %c15_i32_260 : i32 to vector<1x256xi32>
    %495 = arith.cmpi slt, %393, %494 : vector<1x256xi32>
    %496 = arith.andi %493, %495 : vector<1x256xi1>
    %cst_261 = arith.constant 0.000000e+00 : f32
    %497 = vector.shape_cast %496 : vector<1x256xi1> to vector<1x256xi1>
    %498 = vector.broadcast %497 : vector<1x256xi1> to vector<16x256xi1>
    %499 = vector.broadcast %cst_261 : f32 to vector<16x256xf32>
    %500 = arith.select %498, %491, %499 : vector<16x256xi1>, vector<16x256xf32>
    %c8_262 = arith.constant 8 : index
    %c0_263 = arith.constant 0 : index
    %c0_264 = arith.constant 0 : index
    %501 = vector.load %arg12[%c8_262, %c0_263, %c0_264] : memref<9x16x16xbf16, #tpu.memory_space<vmem>>, vector<1x16x16xbf16>
    %502 = vector.shape_cast %501 : vector<1x16x16xbf16> to vector<16x16xbf16>
    %503 = arith.truncf %500 : vector<16x256xf32> to vector<16x256xbf16>
    %cst_265 = arith.constant dense<0.000000e+00> : vector<16x256xf32>
    %504 = tpu.matmul %502, %503, %cst_265 {dimension_numbers = #tpu.dot_dimension_numbers<[1], [0], [0], [1], [0, 0, 1, 1], [], []>} : vector<16x16xbf16>, vector<16x256xbf16>, vector<16x256xf32> -> vector<16x256xf32>
    %505 = arith.addf %490, %504 : vector<16x256xf32>
    %c0_266 = arith.constant 0 : index
    %c0_267 = arith.constant 0 : index
    %506 = vector.load %arg13[%c0_266, %c0_267] : memref<16x1xf32, #tpu.memory_space<vmem>>, vector<16x1xf32>
    %507 = vector.broadcast %506 : vector<16x1xf32> to vector<16x256xf32>
    %508 = arith.addf %505, %507 : vector<16x256xf32>
    %509 = arith.addf %508, %264 : vector<16x256xf32>
    %c0_268 = arith.constant 0 : index
    %c0_269 = arith.constant 0 : index
    %510 = vector.load %arg16[%c0_268, %c0_269] : memref<24x16xbf16, #tpu.memory_space<vmem>>, vector<24x16xbf16>
    %511 = arith.truncf %509 : vector<16x256xf32> to vector<16x256xbf16>
    %cst_270 = arith.constant dense<0.000000e+00> : vector<24x256xf32>
    %512 = tpu.matmul %510, %511, %cst_270 {dimension_numbers = #tpu.dot_dimension_numbers<[1], [0], [0], [1], [0, 0, 1, 1], [], []>} : vector<24x16xbf16>, vector<16x256xbf16>, vector<24x256xf32> -> vector<24x256xf32>
    %513 = vector.extract_strided_slice %512 {offsets = [0, 0], sizes = [8, 256], strides = [1, 1]} : vector<24x256xf32> to vector<8x256xf32>
    %514 = vector.extract_strided_slice %512 {offsets = [8, 0], sizes = [8, 256], strides = [1, 1]} : vector<24x256xf32> to vector<8x256xf32>
    %515 = vector.extract_strided_slice %512 {offsets = [16, 0], sizes = [8, 256], strides = [1, 1]} : vector<24x256xf32> to vector<8x256xf32>
    %c255_i32_271 = arith.constant 255 : i32
    %516 = tpu.dynamic_rotate %514 by %c255_i32_271 dim 1 : vector<8x256xf32>, i32 -> vector<8x256xf32>
    %517 = arith.maximumf %514, %516 : vector<8x256xf32>
    %c240_i32_272 = arith.constant 240 : i32
    %518 = tpu.dynamic_rotate %517 by %c240_i32_272 dim 1 : vector<8x256xf32>, i32 -> vector<8x256xf32>
    %519 = arith.maximumf %517, %518 : vector<8x256xf32>
    %c255_i32_273 = arith.constant 255 : i32
    %520 = tpu.dynamic_rotate %515 by %c255_i32_273 dim 1 : vector<8x256xf32>, i32 -> vector<8x256xf32>
    %521 = arith.maximumf %515, %520 : vector<8x256xf32>
    %c240_i32_274 = arith.constant 240 : i32
    %522 = tpu.dynamic_rotate %521 by %c240_i32_274 dim 1 : vector<8x256xf32>, i32 -> vector<8x256xf32>
    %523 = arith.maximumf %521, %522 : vector<8x256xf32>
    %c0_275 = arith.constant 0 : index
    %c0_276 = arith.constant 0 : index
    %524 = vector.load %arg18[%c0_275, %c0_276] : memref<64x256xbf16, #tpu.memory_space<vmem>>, vector<64x256xbf16>
    %525 = arith.truncf %519 : vector<8x256xf32> to vector<8x256xbf16>
    %cst_277 = arith.constant dense<0.000000e+00> : vector<64x8xf32>
    %526 = tpu.matmul %524, %525, %cst_277 {dimension_numbers = #tpu.dot_dimension_numbers<[1], [1], [0], [0], [0, 0, 1, 0], [], []>} : vector<64x256xbf16>, vector<8x256xbf16>, vector<64x8xf32> -> vector<64x8xf32>
    %527 = arith.truncf %523 : vector<8x256xf32> to vector<8x256xbf16>
    %c0_278 = arith.constant 0 : index
    %c0_279 = arith.constant 0 : index
    %528 = vector.load %arg18[%c0_278, %c0_279] : memref<64x256xbf16, #tpu.memory_space<vmem>>, vector<64x256xbf16>
    %cst_280 = arith.constant dense<0.000000e+00> : vector<8x64xf32>
    %529 = tpu.matmul %527, %528, %cst_280 {dimension_numbers = #tpu.dot_dimension_numbers<[1], [1], [0], [0], [0, 0, 1, 0], [], []>} : vector<8x256xbf16>, vector<64x256xbf16>, vector<8x64xf32> -> vector<8x64xf32>
    %530 = arith.truncf %526 : vector<64x8xf32> to vector<64x8xbf16>
    %531 = arith.truncf %513 : vector<8x256xf32> to vector<8x256xbf16>
    %cst_281 = arith.constant dense<0.000000e+00> : vector<64x256xf32>
    %532 = tpu.matmul %530, %531, %cst_281 {dimension_numbers = #tpu.dot_dimension_numbers<[1], [0], [0], [1], [0, 0, 1, 1], [], []>} : vector<64x8xbf16>, vector<8x256xbf16>, vector<64x256xf32> -> vector<64x256xf32>
    %cst_282 = arith.constant dense<0xFF800000> : vector<256xf32>
    %533 = vector.multi_reduction <maximumf>, %532, %cst_282 [0] : vector<64x256xf32> to vector<256xf32>
    %534 = vector.shape_cast %533 : vector<256xf32> to vector<1x256xf32>
    %535 = vector.broadcast %534 : vector<1x256xf32> to vector<64x256xf32>
    %536 = arith.subf %532, %535 : vector<64x256xf32>
    %537 = math.exp %536 : vector<64x256xf32>
    %cst_283 = arith.constant dense<0.000000e+00> : vector<256xf32>
    %538 = vector.multi_reduction <add>, %537, %cst_283 [0] : vector<64x256xf32> to vector<256xf32>
    %539 = vector.shape_cast %538 : vector<256xf32> to vector<1x256xf32>
    %540 = vector.broadcast %539 : vector<1x256xf32> to vector<64x256xf32>
    %541 = arith.divf %537, %540 : vector<64x256xf32>
    %542 = arith.truncf %529 : vector<8x64xf32> to vector<8x64xbf16>
    %543 = arith.truncf %541 : vector<64x256xf32> to vector<64x256xbf16>
    %cst_284 = arith.constant dense<0.000000e+00> : vector<8x256xf32>
    %544 = tpu.matmul %542, %543, %cst_284 {dimension_numbers = #tpu.dot_dimension_numbers<[1], [0], [0], [1], [0, 0, 1, 1], [], []>} : vector<8x64xbf16>, vector<64x256xbf16>, vector<8x256xf32> -> vector<8x256xf32>
    %c0_285 = arith.constant 0 : index
    %c0_286 = arith.constant 0 : index
    %545 = vector.load %arg17[%c0_285, %c0_286] : memref<16x8xbf16, #tpu.memory_space<vmem>>, vector<16x8xbf16>
    %546 = arith.truncf %544 : vector<8x256xf32> to vector<8x256xbf16>
    %cst_287 = arith.constant dense<0.000000e+00> : vector<16x256xf32>
    %547 = tpu.matmul %545, %546, %cst_287 {dimension_numbers = #tpu.dot_dimension_numbers<[1], [0], [0], [1], [0, 0, 1, 1], [], []>} : vector<16x8xbf16>, vector<8x256xbf16>, vector<16x256xf32> -> vector<16x256xf32>
    %c0_288 = arith.constant 0 : index
    %c0_289 = arith.constant 0 : index
    %548 = memref.load %arg19[%c0_288, %c0_289] : memref<1x1xf32, #tpu.memory_space<smem>>
    %549 = vector.broadcast %548 : f32 to vector<16x256xf32>
    %550 = arith.mulf %549, %547 : vector<16x256xf32>
    %551 = arith.addf %509, %550 : vector<16x256xf32>
    %cst_290 = arith.constant 0.000000e+00 : f32
    %552 = vector.broadcast %cst_290 : f32 to vector<16x256xf32>
    %553 = arith.maximumf %551, %552 : vector<16x256xf32>
    %554 = tpu.iota {dimensions = array<i32: 1>} : vector<1x256xi32>
    %c15_i32_291 = arith.constant 15 : i32
    %555 = vector.broadcast %c15_i32_291 : i32 to vector<1x256xi32>
    %556 = arith.andi %554, %555 : vector<1x256xi32>
    %c4_i32_292 = arith.constant 4 : i32
    %557 = vector.broadcast %c4_i32_292 : i32 to vector<1x256xi32>
    %558 = arith.shrsi %554, %557 : vector<1x256xi32>
    %c17_i32_293 = arith.constant 17 : i32
    %559 = tpu.dynamic_rotate %553 by %c17_i32_293 dim 1 : vector<16x256xf32>, i32 -> vector<16x256xf32>
    %c1_i32_294 = arith.constant 1 : i32
    %560 = vector.broadcast %c1_i32_294 : i32 to vector<1x256xi32>
    %561 = arith.cmpi sge, %556, %560 : vector<1x256xi32>
    %c1_i32_295 = arith.constant 1 : i32
    %562 = vector.broadcast %c1_i32_295 : i32 to vector<1x256xi32>
    %563 = arith.cmpi sge, %558, %562 : vector<1x256xi32>
    %564 = arith.andi %561, %563 : vector<1x256xi1>
    %cst_296 = arith.constant 0.000000e+00 : f32
    %565 = vector.shape_cast %564 : vector<1x256xi1> to vector<1x256xi1>
    %566 = vector.broadcast %565 : vector<1x256xi1> to vector<16x256xi1>
    %567 = vector.broadcast %cst_296 : f32 to vector<16x256xf32>
    %568 = arith.select %566, %559, %567 : vector<16x256xi1>, vector<16x256xf32>
    %c0_297 = arith.constant 0 : index
    %c0_298 = arith.constant 0 : index
    %c0_299 = arith.constant 0 : index
    %569 = vector.load %arg20[%c0_297, %c0_298, %c0_299] : memref<9x3x16xbf16, #tpu.memory_space<vmem>>, vector<1x3x16xbf16>
    %570 = vector.shape_cast %569 : vector<1x3x16xbf16> to vector<3x16xbf16>
    %571 = arith.truncf %568 : vector<16x256xf32> to vector<16x256xbf16>
    %cst_300 = arith.constant dense<0.000000e+00> : vector<3x256xf32>
    %572 = tpu.matmul %570, %571, %cst_300 {dimension_numbers = #tpu.dot_dimension_numbers<[1], [0], [0], [1], [0, 0, 1, 1], [], []>} : vector<3x16xbf16>, vector<16x256xbf16>, vector<3x256xf32> -> vector<3x256xf32>
    %c16_i32_301 = arith.constant 16 : i32
    %573 = tpu.dynamic_rotate %553 by %c16_i32_301 dim 1 : vector<16x256xf32>, i32 -> vector<16x256xf32>
    %c1_i32_302 = arith.constant 1 : i32
    %574 = vector.broadcast %c1_i32_302 : i32 to vector<1x256xi32>
    %575 = arith.cmpi sge, %558, %574 : vector<1x256xi32>
    %cst_303 = arith.constant 0.000000e+00 : f32
    %576 = vector.shape_cast %575 : vector<1x256xi1> to vector<1x256xi1>
    %577 = vector.broadcast %576 : vector<1x256xi1> to vector<16x256xi1>
    %578 = vector.broadcast %cst_303 : f32 to vector<16x256xf32>
    %579 = arith.select %577, %573, %578 : vector<16x256xi1>, vector<16x256xf32>
    %c1_304 = arith.constant 1 : index
    %c0_305 = arith.constant 0 : index
    %c0_306 = arith.constant 0 : index
    %580 = vector.load %arg20[%c1_304, %c0_305, %c0_306] : memref<9x3x16xbf16, #tpu.memory_space<vmem>>, vector<1x3x16xbf16>
    %581 = vector.shape_cast %580 : vector<1x3x16xbf16> to vector<3x16xbf16>
    %582 = arith.truncf %579 : vector<16x256xf32> to vector<16x256xbf16>
    %cst_307 = arith.constant dense<0.000000e+00> : vector<3x256xf32>
    %583 = tpu.matmul %581, %582, %cst_307 {dimension_numbers = #tpu.dot_dimension_numbers<[1], [0], [0], [1], [0, 0, 1, 1], [], []>} : vector<3x16xbf16>, vector<16x256xbf16>, vector<3x256xf32> -> vector<3x256xf32>
    %584 = arith.addf %572, %583 : vector<3x256xf32>
    %c15_i32_308 = arith.constant 15 : i32
    %585 = tpu.dynamic_rotate %553 by %c15_i32_308 dim 1 : vector<16x256xf32>, i32 -> vector<16x256xf32>
    %c15_i32_309 = arith.constant 15 : i32
    %586 = vector.broadcast %c15_i32_309 : i32 to vector<1x256xi32>
    %587 = arith.cmpi slt, %556, %586 : vector<1x256xi32>
    %c1_i32_310 = arith.constant 1 : i32
    %588 = vector.broadcast %c1_i32_310 : i32 to vector<1x256xi32>
    %589 = arith.cmpi sge, %558, %588 : vector<1x256xi32>
    %590 = arith.andi %587, %589 : vector<1x256xi1>
    %cst_311 = arith.constant 0.000000e+00 : f32
    %591 = vector.shape_cast %590 : vector<1x256xi1> to vector<1x256xi1>
    %592 = vector.broadcast %591 : vector<1x256xi1> to vector<16x256xi1>
    %593 = vector.broadcast %cst_311 : f32 to vector<16x256xf32>
    %594 = arith.select %592, %585, %593 : vector<16x256xi1>, vector<16x256xf32>
    %c2_312 = arith.constant 2 : index
    %c0_313 = arith.constant 0 : index
    %c0_314 = arith.constant 0 : index
    %595 = vector.load %arg20[%c2_312, %c0_313, %c0_314] : memref<9x3x16xbf16, #tpu.memory_space<vmem>>, vector<1x3x16xbf16>
    %596 = vector.shape_cast %595 : vector<1x3x16xbf16> to vector<3x16xbf16>
    %597 = arith.truncf %594 : vector<16x256xf32> to vector<16x256xbf16>
    %cst_315 = arith.constant dense<0.000000e+00> : vector<3x256xf32>
    %598 = tpu.matmul %596, %597, %cst_315 {dimension_numbers = #tpu.dot_dimension_numbers<[1], [0], [0], [1], [0, 0, 1, 1], [], []>} : vector<3x16xbf16>, vector<16x256xbf16>, vector<3x256xf32> -> vector<3x256xf32>
    %599 = arith.addf %584, %598 : vector<3x256xf32>
    %c1_i32_316 = arith.constant 1 : i32
    %600 = tpu.dynamic_rotate %553 by %c1_i32_316 dim 1 : vector<16x256xf32>, i32 -> vector<16x256xf32>
    %c1_i32_317 = arith.constant 1 : i32
    %601 = vector.broadcast %c1_i32_317 : i32 to vector<1x256xi32>
    %602 = arith.cmpi sge, %556, %601 : vector<1x256xi32>
    %cst_318 = arith.constant 0.000000e+00 : f32
    %603 = vector.shape_cast %602 : vector<1x256xi1> to vector<1x256xi1>
    %604 = vector.broadcast %603 : vector<1x256xi1> to vector<16x256xi1>
    %605 = vector.broadcast %cst_318 : f32 to vector<16x256xf32>
    %606 = arith.select %604, %600, %605 : vector<16x256xi1>, vector<16x256xf32>
    %c3_319 = arith.constant 3 : index
    %c0_320 = arith.constant 0 : index
    %c0_321 = arith.constant 0 : index
    %607 = vector.load %arg20[%c3_319, %c0_320, %c0_321] : memref<9x3x16xbf16, #tpu.memory_space<vmem>>, vector<1x3x16xbf16>
    %608 = vector.shape_cast %607 : vector<1x3x16xbf16> to vector<3x16xbf16>
    %609 = arith.truncf %606 : vector<16x256xf32> to vector<16x256xbf16>
    %cst_322 = arith.constant dense<0.000000e+00> : vector<3x256xf32>
    %610 = tpu.matmul %608, %609, %cst_322 {dimension_numbers = #tpu.dot_dimension_numbers<[1], [0], [0], [1], [0, 0, 1, 1], [], []>} : vector<3x16xbf16>, vector<16x256xbf16>, vector<3x256xf32> -> vector<3x256xf32>
    %611 = arith.addf %599, %610 : vector<3x256xf32>
    %c4_323 = arith.constant 4 : index
    %c0_324 = arith.constant 0 : index
    %c0_325 = arith.constant 0 : index
    %612 = vector.load %arg20[%c4_323, %c0_324, %c0_325] : memref<9x3x16xbf16, #tpu.memory_space<vmem>>, vector<1x3x16xbf16>
    %613 = vector.shape_cast %612 : vector<1x3x16xbf16> to vector<3x16xbf16>
    %614 = arith.truncf %553 : vector<16x256xf32> to vector<16x256xbf16>
    %cst_326 = arith.constant dense<0.000000e+00> : vector<3x256xf32>
    %615 = tpu.matmul %613, %614, %cst_326 {dimension_numbers = #tpu.dot_dimension_numbers<[1], [0], [0], [1], [0, 0, 1, 1], [], []>} : vector<3x16xbf16>, vector<16x256xbf16>, vector<3x256xf32> -> vector<3x256xf32>
    %616 = arith.addf %611, %615 : vector<3x256xf32>
    %c255_i32_327 = arith.constant 255 : i32
    %617 = tpu.dynamic_rotate %553 by %c255_i32_327 dim 1 : vector<16x256xf32>, i32 -> vector<16x256xf32>
    %c15_i32_328 = arith.constant 15 : i32
    %618 = vector.broadcast %c15_i32_328 : i32 to vector<1x256xi32>
    %619 = arith.cmpi slt, %556, %618 : vector<1x256xi32>
    %cst_329 = arith.constant 0.000000e+00 : f32
    %620 = vector.shape_cast %619 : vector<1x256xi1> to vector<1x256xi1>
    %621 = vector.broadcast %620 : vector<1x256xi1> to vector<16x256xi1>
    %622 = vector.broadcast %cst_329 : f32 to vector<16x256xf32>
    %623 = arith.select %621, %617, %622 : vector<16x256xi1>, vector<16x256xf32>
    %c5_330 = arith.constant 5 : index
    %c0_331 = arith.constant 0 : index
    %c0_332 = arith.constant 0 : index
    %624 = vector.load %arg20[%c5_330, %c0_331, %c0_332] : memref<9x3x16xbf16, #tpu.memory_space<vmem>>, vector<1x3x16xbf16>
    %625 = vector.shape_cast %624 : vector<1x3x16xbf16> to vector<3x16xbf16>
    %626 = arith.truncf %623 : vector<16x256xf32> to vector<16x256xbf16>
    %cst_333 = arith.constant dense<0.000000e+00> : vector<3x256xf32>
    %627 = tpu.matmul %625, %626, %cst_333 {dimension_numbers = #tpu.dot_dimension_numbers<[1], [0], [0], [1], [0, 0, 1, 1], [], []>} : vector<3x16xbf16>, vector<16x256xbf16>, vector<3x256xf32> -> vector<3x256xf32>
    %628 = arith.addf %616, %627 : vector<3x256xf32>
    %c241_i32_334 = arith.constant 241 : i32
    %629 = tpu.dynamic_rotate %553 by %c241_i32_334 dim 1 : vector<16x256xf32>, i32 -> vector<16x256xf32>
    %c1_i32_335 = arith.constant 1 : i32
    %630 = vector.broadcast %c1_i32_335 : i32 to vector<1x256xi32>
    %631 = arith.cmpi sge, %556, %630 : vector<1x256xi32>
    %c15_i32_336 = arith.constant 15 : i32
    %632 = vector.broadcast %c15_i32_336 : i32 to vector<1x256xi32>
    %633 = arith.cmpi slt, %558, %632 : vector<1x256xi32>
    %634 = arith.andi %631, %633 : vector<1x256xi1>
    %cst_337 = arith.constant 0.000000e+00 : f32
    %635 = vector.shape_cast %634 : vector<1x256xi1> to vector<1x256xi1>
    %636 = vector.broadcast %635 : vector<1x256xi1> to vector<16x256xi1>
    %637 = vector.broadcast %cst_337 : f32 to vector<16x256xf32>
    %638 = arith.select %636, %629, %637 : vector<16x256xi1>, vector<16x256xf32>
    %c6_338 = arith.constant 6 : index
    %c0_339 = arith.constant 0 : index
    %c0_340 = arith.constant 0 : index
    %639 = vector.load %arg20[%c6_338, %c0_339, %c0_340] : memref<9x3x16xbf16, #tpu.memory_space<vmem>>, vector<1x3x16xbf16>
    %640 = vector.shape_cast %639 : vector<1x3x16xbf16> to vector<3x16xbf16>
    %641 = arith.truncf %638 : vector<16x256xf32> to vector<16x256xbf16>
    %cst_341 = arith.constant dense<0.000000e+00> : vector<3x256xf32>
    %642 = tpu.matmul %640, %641, %cst_341 {dimension_numbers = #tpu.dot_dimension_numbers<[1], [0], [0], [1], [0, 0, 1, 1], [], []>} : vector<3x16xbf16>, vector<16x256xbf16>, vector<3x256xf32> -> vector<3x256xf32>
    %643 = arith.addf %628, %642 : vector<3x256xf32>
    %c240_i32_342 = arith.constant 240 : i32
    %644 = tpu.dynamic_rotate %553 by %c240_i32_342 dim 1 : vector<16x256xf32>, i32 -> vector<16x256xf32>
    %c15_i32_343 = arith.constant 15 : i32
    %645 = vector.broadcast %c15_i32_343 : i32 to vector<1x256xi32>
    %646 = arith.cmpi slt, %558, %645 : vector<1x256xi32>
    %cst_344 = arith.constant 0.000000e+00 : f32
    %647 = vector.shape_cast %646 : vector<1x256xi1> to vector<1x256xi1>
    %648 = vector.broadcast %647 : vector<1x256xi1> to vector<16x256xi1>
    %649 = vector.broadcast %cst_344 : f32 to vector<16x256xf32>
    %650 = arith.select %648, %644, %649 : vector<16x256xi1>, vector<16x256xf32>
    %c7_345 = arith.constant 7 : index
    %c0_346 = arith.constant 0 : index
    %c0_347 = arith.constant 0 : index
    %651 = vector.load %arg20[%c7_345, %c0_346, %c0_347] : memref<9x3x16xbf16, #tpu.memory_space<vmem>>, vector<1x3x16xbf16>
    %652 = vector.shape_cast %651 : vector<1x3x16xbf16> to vector<3x16xbf16>
    %653 = arith.truncf %650 : vector<16x256xf32> to vector<16x256xbf16>
    %cst_348 = arith.constant dense<0.000000e+00> : vector<3x256xf32>
    %654 = tpu.matmul %652, %653, %cst_348 {dimension_numbers = #tpu.dot_dimension_numbers<[1], [0], [0], [1], [0, 0, 1, 1], [], []>} : vector<3x16xbf16>, vector<16x256xbf16>, vector<3x256xf32> -> vector<3x256xf32>
    %655 = arith.addf %643, %654 : vector<3x256xf32>
    %c239_i32_349 = arith.constant 239 : i32
    %656 = tpu.dynamic_rotate %553 by %c239_i32_349 dim 1 : vector<16x256xf32>, i32 -> vector<16x256xf32>
    %c15_i32_350 = arith.constant 15 : i32
    %657 = vector.broadcast %c15_i32_350 : i32 to vector<1x256xi32>
    %658 = arith.cmpi slt, %556, %657 : vector<1x256xi32>
    %c15_i32_351 = arith.constant 15 : i32
    %659 = vector.broadcast %c15_i32_351 : i32 to vector<1x256xi32>
    %660 = arith.cmpi slt, %558, %659 : vector<1x256xi32>
    %661 = arith.andi %658, %660 : vector<1x256xi1>
    %cst_352 = arith.constant 0.000000e+00 : f32
    %662 = vector.shape_cast %661 : vector<1x256xi1> to vector<1x256xi1>
    %663 = vector.broadcast %662 : vector<1x256xi1> to vector<16x256xi1>
    %664 = vector.broadcast %cst_352 : f32 to vector<16x256xf32>
    %665 = arith.select %663, %656, %664 : vector<16x256xi1>, vector<16x256xf32>
    %c8_353 = arith.constant 8 : index
    %c0_354 = arith.constant 0 : index
    %c0_355 = arith.constant 0 : index
    %666 = vector.load %arg20[%c8_353, %c0_354, %c0_355] : memref<9x3x16xbf16, #tpu.memory_space<vmem>>, vector<1x3x16xbf16>
    %667 = vector.shape_cast %666 : vector<1x3x16xbf16> to vector<3x16xbf16>
    %668 = arith.truncf %665 : vector<16x256xf32> to vector<16x256xbf16>
    %cst_356 = arith.constant dense<0.000000e+00> : vector<3x256xf32>
    %669 = tpu.matmul %667, %668, %cst_356 {dimension_numbers = #tpu.dot_dimension_numbers<[1], [0], [0], [1], [0, 0, 1, 1], [], []>} : vector<3x16xbf16>, vector<16x256xbf16>, vector<3x256xf32> -> vector<3x256xf32>
    %670 = arith.addf %655, %669 : vector<3x256xf32>
    %c0_357 = arith.constant 0 : index
    %c0_358 = arith.constant 0 : index
    %671 = vector.load %arg21[%c0_357, %c0_358] : memref<3x1xf32, #tpu.memory_space<vmem>>, vector<3x1xf32>
    %672 = vector.broadcast %671 : vector<3x1xf32> to vector<3x256xf32>
    %673 = arith.addf %670, %672 : vector<3x256xf32>
    %674 = math.tanh %673 : vector<3x256xf32>
    %675 = vector.shape_cast %674 : vector<3x256xf32> to vector<1x3x256xf32>
    %c0_359 = arith.constant 0 : index
    %c0_360 = arith.constant 0 : index
    %c0_361 = arith.constant 0 : index
    %676 = vector.load %arg22[%c0_359, %c0_360, %c0_361] : memref<1x3x256xf32, #tpu.memory_space<vmem>>, vector<1x3x256xf32>
    tpu.vector_store %arg22[%c0_359, %c0_360, %c0_361], %675 {strides = array<i32>} : memref<1x3x256xf32, #tpu.memory_space<vmem>>, vector<1x3x256xf32>,
    return
  }
  func.func @transform_0(%arg0: i32) -> (i32, i32, i32) {
    %c0_i32 = arith.constant 0 : i32
    %c0_i32_0 = arith.constant 0 : i32
    %c0_i32_1 = arith.constant 0 : i32
    return %arg0, %c0_i32, %c0_i32_0 : i32, i32, i32
  }
  func.func @transform_1(%arg0: i32) -> (i32, i32) {
    %c0_i32 = arith.constant 0 : i32
    %c0_i32_0 = arith.constant 0 : i32
    %c0_i32_1 = arith.constant 0 : i32
    return %c0_i32, %c0_i32_0 : i32, i32
  }
  func.func @transform_2(%arg0: i32) -> (i32, i32, i32) {
    %c0_i32 = arith.constant 0 : i32
    %c0_i32_0 = arith.constant 0 : i32
    %c0_i32_1 = arith.constant 0 : i32
    %c0_i32_2 = arith.constant 0 : i32
    return %c0_i32, %c0_i32_0, %c0_i32_1 : i32, i32, i32
  }
  func.func @transform_3(%arg0: i32) -> (i32, i32) {
    %c0_i32 = arith.constant 0 : i32
    %c0_i32_0 = arith.constant 0 : i32
    %c0_i32_1 = arith.constant 0 : i32
    return %c0_i32, %c0_i32_0 : i32, i32
  }
  func.func @transform_4(%arg0: i32) -> (i32, i32, i32) {
    %c0_i32 = arith.constant 0 : i32
    %c0_i32_0 = arith.constant 0 : i32
    %c0_i32_1 = arith.constant 0 : i32
    %c0_i32_2 = arith.constant 0 : i32
    return %c0_i32, %c0_i32_0, %c0_i32_1 : i32, i32, i32
  }
  func.func @transform_5(%arg0: i32) -> (i32, i32) {
    %c0_i32 = arith.constant 0 : i32
    %c0_i32_0 = arith.constant 0 : i32
    %c0_i32_1 = arith.constant 0 : i32
    return %c0_i32, %c0_i32_0 : i32, i32
  }
  func.func @transform_6(%arg0: i32) -> (i32, i32) {
    %c0_i32 = arith.constant 0 : i32
    %c0_i32_0 = arith.constant 0 : i32
    %c0_i32_1 = arith.constant 0 : i32
    return %c0_i32, %c0_i32_0 : i32, i32
  }
  func.func @transform_7(%arg0: i32) -> (i32, i32) {
    %c0_i32 = arith.constant 0 : i32
    %c0_i32_0 = arith.constant 0 : i32
    %c0_i32_1 = arith.constant 0 : i32
    return %c0_i32, %c0_i32_0 : i32, i32
  }
  func.func @transform_8(%arg0: i32) -> (i32, i32) {
    %c0_i32 = arith.constant 0 : i32
    %c0_i32_0 = arith.constant 0 : i32
    %c0_i32_1 = arith.constant 0 : i32
    return %c0_i32, %c0_i32_0 : i32, i32
  }
  func.func @transform_9(%arg0: i32) -> (i32, i32, i32) {
    %c0_i32 = arith.constant 0 : i32
    %c0_i32_0 = arith.constant 0 : i32
    %c0_i32_1 = arith.constant 0 : i32
    %c0_i32_2 = arith.constant 0 : i32
    return %c0_i32, %c0_i32_0, %c0_i32_1 : i32, i32, i32
  }
  func.func @transform_10(%arg0: i32) -> (i32, i32) {
    %c0_i32 = arith.constant 0 : i32
    %c0_i32_0 = arith.constant 0 : i32
    %c0_i32_1 = arith.constant 0 : i32
    return %c0_i32, %c0_i32_0 : i32, i32
  }
  func.func @transform_11(%arg0: i32) -> (i32, i32, i32) {
    %c0_i32 = arith.constant 0 : i32
    %c0_i32_0 = arith.constant 0 : i32
    %c0_i32_1 = arith.constant 0 : i32
    %c0_i32_2 = arith.constant 0 : i32
    return %c0_i32, %c0_i32_0, %c0_i32_1 : i32, i32, i32
  }
  func.func @transform_12(%arg0: i32) -> (i32, i32) {
    %c0_i32 = arith.constant 0 : i32
    %c0_i32_0 = arith.constant 0 : i32
    %c0_i32_1 = arith.constant 0 : i32
    return %c0_i32, %c0_i32_0 : i32, i32
  }
  func.func @transform_13(%arg0: i32) -> (i32, i32) {
    %c0_i32 = arith.constant 0 : i32
    %c0_i32_0 = arith.constant 0 : i32
    %c0_i32_1 = arith.constant 0 : i32
    return %c0_i32, %c0_i32_0 : i32, i32
  }
  func.func @transform_14(%arg0: i32) -> (i32, i32) {
    %c0_i32 = arith.constant 0 : i32
    %c0_i32_0 = arith.constant 0 : i32
    %c0_i32_1 = arith.constant 0 : i32
    return %c0_i32, %c0_i32_0 : i32, i32
  }
  func.func @transform_15(%arg0: i32) -> (i32, i32) {
    %c0_i32 = arith.constant 0 : i32
    %c0_i32_0 = arith.constant 0 : i32
    %c0_i32_1 = arith.constant 0 : i32
    return %c0_i32, %c0_i32_0 : i32, i32
  }
  func.func @transform_16(%arg0: i32) -> (i32, i32) {
    %c0_i32 = arith.constant 0 : i32
    %c0_i32_0 = arith.constant 0 : i32
    %c0_i32_1 = arith.constant 0 : i32
    return %c0_i32, %c0_i32_0 : i32, i32
  }
  func.func @transform_17(%arg0: i32) -> (i32, i32) {
    %c0_i32 = arith.constant 0 : i32
    %c0_i32_0 = arith.constant 0 : i32
    %c0_i32_1 = arith.constant 0 : i32
    return %c0_i32, %c0_i32_0 : i32, i32
  }
  func.func @transform_18(%arg0: i32) -> (i32, i32) {
    %c0_i32 = arith.constant 0 : i32
    %c0_i32_0 = arith.constant 0 : i32
    %c0_i32_1 = arith.constant 0 : i32
    return %c0_i32, %c0_i32_0 : i32, i32
  }
  func.func @transform_19(%arg0: i32) -> (i32, i32, i32) {
    %c0_i32 = arith.constant 0 : i32
    %c0_i32_0 = arith.constant 0 : i32
    %c0_i32_1 = arith.constant 0 : i32
    %c0_i32_2 = arith.constant 0 : i32
    return %c0_i32, %c0_i32_0, %c0_i32_1 : i32, i32, i32
  }
  func.func @transform_20(%arg0: i32) -> (i32, i32) {
    %c0_i32 = arith.constant 0 : i32
    %c0_i32_0 = arith.constant 0 : i32
    %c0_i32_1 = arith.constant 0 : i32
    return %c0_i32, %c0_i32_0 : i32, i32
  }
  func.func @transform_21(%arg0: i32) -> (i32, i32, i32) {
    %c0_i32 = arith.constant 0 : i32
    %c0_i32_0 = arith.constant 0 : i32
    %c0_i32_1 = arith.constant 0 : i32
    return %arg0, %c0_i32, %c0_i32_0 : i32, i32, i32
  }
}

</mosaic_0001>

<llo_original>
// kernel: rendering_engine_forward.1
$region0: #{rendering_engine_forward.1}
  #allocation0 [shape = 'u32[]', space=smem, size = 0x4, offset = 0x4, fixed_abs, tag = 'smem constant byte address 0x4 - core index']
  #allocation1 [shape = 'u32[144,128]{1,0:T(1,128)}', space=vmem, size = 0x12000, scoped, tag = 'internal scratch']
  #allocation2 [shape = 'f32[1,1]{1,0:T(1,128)S(6)}', space=smem, size = 0x200, scoped, tag = 'scoped memory for rendering_engine_forward.1']
  %s0 = inlined_call_operand.vmem [shape: f32[2,64,16], index: 0, kind: input, shape index: {}]
  %s1 = inlined_call_operand.vmem [shape: bf16[16,64], index: 1, kind: input, shape index: {}]
  %s2 = inlined_call_operand.vmem [shape: bf16[9,32,64], index: 2, kind: input, shape index: {}]
  %s3 = inlined_call_operand.vmem [shape: f32[32,1], index: 3, kind: input, shape index: {}]
  %s4 = inlined_call_operand.vmem [shape: bf16[9,32,32], index: 4, kind: input, shape index: {}]
  %s5 = inlined_call_operand.vmem [shape: f32[32,1], index: 5, kind: input, shape index: {}]
  %s6 = inlined_call_operand.vmem [shape: bf16[32,64], index: 6, kind: input, shape index: {}]
  %s7 = inlined_call_operand.vmem [shape: f32[32,1], index: 7, kind: input, shape index: {}]
  %s8 = inlined_call_operand.vmem [shape: bf16[64,256], index: 8, kind: input, shape index: {}]
  %s9 = inlined_call_operand.vmem [shape: bf16[9,16,32], index: 9, kind: input, shape index: {}]
  %s10 = inlined_call_operand.vmem [shape: f32[16,1], index: 10, kind: input, shape index: {}]
  %s11 = inlined_call_operand.vmem [shape: bf16[9,16,16], index: 11, kind: input, shape index: {}]
  %s12 = inlined_call_operand.vmem [shape: f32[16,1], index: 12, kind: input, shape index: {}]
  %s13 = inlined_call_operand.vmem [shape: bf16[16,32], index: 13, kind: input, shape index: {}]
  %s14 = inlined_call_operand.vmem [shape: f32[16,1], index: 14, kind: input, shape index: {}]
  %s15 = inlined_call_operand.vmem [shape: bf16[24,16], index: 15, kind: input, shape index: {}]
  %s16 = inlined_call_operand.vmem [shape: bf16[16,8], index: 16, kind: input, shape index: {}]
  %s17 = inlined_call_operand.vmem [shape: bf16[64,256], index: 17, kind: input, shape index: {}]
  %s18 = inlined_call_operand.<no memory space> [shape: f32[1,1], index: 18, kind: input, shape index: {}]
  %s19 = inlined_call_operand.vmem [shape: bf16[9,3,16], index: 19, kind: input, shape index: {}]
  %s20 = inlined_call_operand.vmem [shape: f32[3,1], index: 20, kind: input, shape index: {}]
  %s21 = inlined_call_operand.vmem [shape: f32[2,3,256], index: 21, kind: output, shape index: {}]
  %s22 = sld [smem:[#allocation0]]
  $region117: #{rendering_engine_forward.1} parent=0
    _
  %s24 = ssub.s32 1, %s22
  %s25 = scalar_select 0, %s24, %s22
  %26 = sst [smem:[#allocation2]] %s18
  loop: start=0, step=1, limit=4
  $region2: #{rendering_engine_forward.1} parent=0 // loop_pre_header
    _
  $region3: #{rendering_engine_forward.1} parent=0 // loop_header
    %s28 = sphi 0, %s32
    %p29 = scmp.ge.s32.totalorder %s28, 4
    %s38 = sphi 0, %s40
    %s41 = sphi 0, %s38
    %s42 = sphi 0, %s41
    %s58 = sphi 0, %s42
    %s62 = sphi 0, %s62
    %s64 = sphi 0, %s62
    %s65 = sphi 0, %s64
    %s79 = sphi 0, %s65
    %s83 = sphi 0, %s83
    %s85 = sphi 0, %s83
    %s86 = sphi 0, %s85
    %s100 = sphi 0, %s86
    %s104 = sphi 0, %s104
    %s106 = sphi 0, %s104
    %s107 = sphi 0, %s106
    %s121 = sphi 0, %s107
    %s125 = sphi 0, %s125
    %s127 = sphi 0, %s125
    %s128 = sphi 0, %s127
    %s142 = sphi 0, %s128
    %s146 = sphi 0, %s146
    %s148 = sphi 0, %s146
    %s149 = sphi 0, %s148
    %s163 = sphi 0, %s149
    %s167 = sphi 0, %s167
    %s169 = sphi 0, %s167
    %s170 = sphi 0, %s169
    %s184 = sphi 0, %s170
    %s188 = sphi 0, %s188
    %s190 = sphi 0, %s188
    %s191 = sphi 0, %s190
    %s205 = sphi 0, %s191
    %s209 = sphi 0, %s209
    %s211 = sphi 0, %s209
    %s212 = sphi 0, %s211
    %s226 = sphi 0, %s212
    %s230 = sphi 0, %s230
    %s232 = sphi 0, %s230
    %s233 = sphi 0, %s232
    %s247 = sphi 0, %s233
    %s251 = sphi 0, %s251
    %s253 = sphi 0, %s251
    %s254 = sphi 0, %s253
    %s268 = sphi 0, %s254
    %s272 = sphi 0, %s272
    %s274 = sphi 0, %s272
    %s275 = sphi 0, %s274
    %s289 = sphi 0, %s275
    %s293 = sphi 0, %s293
    %s295 = sphi 0, %s293
    %s296 = sphi 0, %s295
    %s310 = sphi 0, %s296
    %s314 = sphi 0, %s314
    %s316 = sphi 0, %s314
    %s317 = sphi 0, %s316
    %s331 = sphi 0, %s317
    %s335 = sphi 0, %s335
    %s337 = sphi 0, %s335
    %s338 = sphi 0, %s337
    %s352 = sphi 0, %s338
    %s356 = sphi 0, %s356
    %s358 = sphi 0, %s356
    %s359 = sphi 0, %s358
    %s373 = sphi 0, %s359
    %s377 = sphi 0, %s377
    %s379 = sphi 0, %s377
    %s380 = sphi 0, %s379
    %s394 = sphi 0, %s380
    %s398 = sphi 0, %s398
    %s400 = sphi 0, %s398
    %s401 = sphi 0, %s400
    %s415 = sphi 0, %s401
    %s419 = sphi 0, %s419
    %s421 = sphi 0, %s419
    %s422 = sphi 0, %s421
    %s436 = sphi 0, %s422
    %s440 = sphi 0, %s440
    %s442 = sphi 0, %s440
    %s443 = sphi 0, %s442
    %s457 = sphi 0, %s443
    %s461 = sphi 0, %s461
    %s463 = sphi 0, %s461
    %s464 = sphi 0, %s463
    %s478 = sphi 0, %s464
    %s484 = sphi 0, %s486
    %s487 = sphi 0, %s484
    %s488 = sphi 0, %s487
    %s504 = sphi 0, %s488
  $region4: #{rendering_engine_forward.1} parent=0 // loop_header_branch
    %31 = sbr.rel (%p29) target = $region8
  $region5: #{rendering_engine_forward.1} parent=0 // loop_body
    %s33 = ssub.s32 %s28, 1
    %s34 = ssub.s32 %s28, 2
    %s35 = sadd.s32 %s28, 1
    %s36 = ssub.s32 %s28, %s35
    %p37 = scmp.eq.s32.totalorder %s36, 0
    %s39 = sadd.s32 %s38, 1
    %s40 = scalar_select %p37, %s38, %s39
    %p43 = pneg %p37
    %p44 = scmp.eq.s32.totalorder %s28, 1
    %p45 = por %p43, %p44
    %p46 = scmp.ne.s32.totalorder %s38, %s41
    %p47 = scmp.eq.s32.totalorder %s28, 0
    %p48 = por %p46, %p47
    %p49 = scmp.ne.s32.totalorder %s38, %s41
    %p50 = scmp.eq.s32.totalorder %s33, 1
    %p51 = por %p49, %p50
    %p52 = scmp.ne.s32.totalorder %s41, %s42
    %p53 = scmp.eq.s32.totalorder %s33, 0
    %p54 = por %p52, %p53
    %p55 = scmp.ne.s32.totalorder %s41, %s42
    %p56 = scmp.eq.s32.totalorder %s34, 1
    %p57 = por %p55, %p56
    %p59 = scmp.ne.s32.totalorder %s42, %s58
    %p60 = scmp.eq.s32.totalorder %s34, 0
    %p61 = por %p59, %p60
    %s63 = sadd.s32 %s62, 1
    %p66 = scmp.eq.s32.totalorder %s28, 1
    %p67 = scmp.ne.s32.totalorder %s62, %s64
    %p68 = scmp.eq.s32.totalorder %s28, 0
    %p69 = por %p67, %p68
    %p70 = scmp.ne.s32.totalorder %s62, %s64
    %p71 = scmp.eq.s32.totalorder %s33, 1
    %p72 = por %p70, %p71
    %p73 = scmp.ne.s32.totalorder %s64, %s65
    %p74 = scmp.eq.s32.totalorder %s33, 0
    %p75 = por %p73, %p74
    %p76 = scmp.ne.s32.totalorder %s64, %s65
    %p77 = scmp.eq.s32.totalorder %s34, 1
    %p78 = por %p76, %p77
    %p80 = scmp.ne.s32.totalorder %s65, %s79
    %p81 = scmp.eq.s32.totalorder %s34, 0
    %p82 = por %p80, %p81
    %s84 = sadd.s32 %s83, 1
    %p87 = scmp.eq.s32.totalorder %s28, 1
    %p88 = scmp.ne.s32.totalorder %s83, %s85
    %p89 = scmp.eq.s32.totalorder %s28, 0
    %p90 = por %p88, %p89
    %p91 = scmp.ne.s32.totalorder %s83, %s85
    %p92 = scmp.eq.s32.totalorder %s33, 1
    %p93 = por %p91, %p92
    %p94 = scmp.ne.s32.totalorder %s85, %s86
    %p95 = scmp.eq.s32.totalorder %s33, 0
    %p96 = por %p94, %p95
    %p97 = scmp.ne.s32.totalorder %s85, %s86
    %p98 = scmp.eq.s32.totalorder %s34, 1
    %p99 = por %p97, %p98
    %p101 = scmp.ne.s32.totalorder %s86, %s100
    %p102 = scmp.eq.s32.totalorder %s34, 0
    %p103 = por %p101, %p102
    %s105 = sadd.s32 %s104, 1
    %p108 = scmp.eq.s32.totalorder %s28, 1
    %p109 = scmp.ne.s32.totalorder %s104, %s106
    %p110 = scmp.eq.s32.totalorder %s28, 0
    %p111 = por %p109, %p110
    %p112 = scmp.ne.s32.totalorder %s104, %s106
    %p113 = scmp.eq.s32.totalorder %s33, 1
    %p114 = por %p112, %p113
    %p115 = scmp.ne.s32.totalorder %s106, %s107
    %p116 = scmp.eq.s32.totalorder %s33, 0
    %p117 = por %p115, %p116
    %p118 = scmp.ne.s32.totalorder %s106, %s107
    %p119 = scmp.eq.s32.totalorder %s34, 1
    %p120 = por %p118, %p119
    %p122 = scmp.ne.s32.totalorder %s107, %s121
    %p123 = scmp.eq.s32.totalorder %s34, 0
    %p124 = por %p122, %p123
    %s126 = sadd.s32 %s125, 1
    %p129 = scmp.eq.s32.totalorder %s28, 1
    %p130 = scmp.ne.s32.totalorder %s125, %s127
    %p131 = scmp.eq.s32.totalorder %s28, 0
    %p132 = por %p130, %p131
    %p133 = scmp.ne.s32.totalorder %s125, %s127
    %p134 = scmp.eq.s32.totalorder %s33, 1
    %p135 = por %p133, %p134
    %p136 = scmp.ne.s32.totalorder %s127, %s128
    %p137 = scmp.eq.s32.totalorder %s33, 0
    %p138 = por %p136, %p137
    %p139 = scmp.ne.s32.totalorder %s127, %s128
    %p140 = scmp.eq.s32.totalorder %s34, 1
    %p141 = por %p139, %p140
    %p143 = scmp.ne.s32.totalorder %s128, %s142
    %p144 = scmp.eq.s32.totalorder %s34, 0
    %p145 = por %p143, %p144
    %s147 = sadd.s32 %s146, 1
    %p150 = scmp.eq.s32.totalorder %s28, 1
    %p151 = scmp.ne.s32.totalorder %s146, %s148
    %p152 = scmp.eq.s32.totalorder %s28, 0
    %p153 = por %p151, %p152
    %p154 = scmp.ne.s32.totalorder %s146, %s148
    %p155 = scmp.eq.s32.totalorder %s33, 1
    %p156 = por %p154, %p155
    %p157 = scmp.ne.s32.totalorder %s148, %s149
    %p158 = scmp.eq.s32.totalorder %s33, 0
    %p159 = por %p157, %p158
    %p160 = scmp.ne.s32.totalorder %s148, %s149
    %p161 = scmp.eq.s32.totalorder %s34, 1
    %p162 = por %p160, %p161
    %p164 = scmp.ne.s32.totalorder %s149, %s163
    %p165 = scmp.eq.s32.totalorder %s34, 0
    %p166 = por %p164, %p165
    %s168 = sadd.s32 %s167, 1
    %p171 = scmp.eq.s32.totalorder %s28, 1
    %p172 = scmp.ne.s32.totalorder %s167, %s169
    %p173 = scmp.eq.s32.totalorder %s28, 0
    %p174 = por %p172, %p173
    %p175 = scmp.ne.s32.totalorder %s167, %s169
    %p176 = scmp.eq.s32.totalorder %s33, 1
    %p177 = por %p175, %p176
    %p178 = scmp.ne.s32.totalorder %s169, %s170
    %p179 = scmp.eq.s32.totalorder %s33, 0
    %p180 = por %p178, %p179
    %p181 = scmp.ne.s32.totalorder %s169, %s170
    %p182 = scmp.eq.s32.totalorder %s34, 1
    %p183 = por %p181, %p182
    %p185 = scmp.ne.s32.totalorder %s170, %s184
    %p186 = scmp.eq.s32.totalorder %s34, 0
    %p187 = por %p185, %p186
    %s189 = sadd.s32 %s188, 1
    %p192 = scmp.eq.s32.totalorder %s28, 1
    %p193 = scmp.ne.s32.totalorder %s188, %s190
    %p194 = scmp.eq.s32.totalorder %s28, 0
    %p195 = por %p193, %p194
    %p196 = scmp.ne.s32.totalorder %s188, %s190
    %p197 = scmp.eq.s32.totalorder %s33, 1
    %p198 = por %p196, %p197
    %p199 = scmp.ne.s32.totalorder %s190, %s191
    %p200 = scmp.eq.s32.totalorder %s33, 0
    %p201 = por %p199, %p200
    %p202 = scmp.ne.s32.totalorder %s190, %s191
    %p203 = scmp.eq.s32.totalorder %s34, 1
    %p204 = por %p202, %p203
    %p206 = scmp.ne.s32.totalorder %s191, %s205
    %p207 = scmp.eq.s32.totalorder %s34, 0
    %p208 = por %p206, %p207
    %s210 = sadd.s32 %s209, 1
    %p213 = scmp.eq.s32.totalorder %s28, 1
    %p214 = scmp.ne.s32.totalorder %s209, %s211
    %p215 = scmp.eq.s32.totalorder %s28, 0
    %p216 = por %p214, %p215
    %p217 = scmp.ne.s32.totalorder %s209, %s211
    %p218 = scmp.eq.s32.totalorder %s33, 1
    %p219 = por %p217, %p218
    %p220 = scmp.ne.s32.totalorder %s211, %s212
    %p221 = scmp.eq.s32.totalorder %s33, 0
    %p222 = por %p220, %p221
    %p223 = scmp.ne.s32.totalorder %s211, %s212
    %p224 = scmp.eq.s32.totalorder %s34, 1
    %p225 = por %p223, %p224
    %p227 = scmp.ne.s32.totalorder %s212, %s226
    %p228 = scmp.eq.s32.totalorder %s34, 0
    %p229 = por %p227, %p228
    %s231 = sadd.s32 %s230, 1
    %p234 = scmp.eq.s32.totalorder %s28, 1
    %p235 = scmp.ne.s32.totalorder %s230, %s232
    %p236 = scmp.eq.s32.totalorder %s28, 0
    %p237 = por %p235, %p236
    %p238 = scmp.ne.s32.totalorder %s230, %s232
    %p239 = scmp.eq.s32.totalorder %s33, 1
    %p240 = por %p238, %p239
    %p241 = scmp.ne.s32.totalorder %s232, %s233
    %p242 = scmp.eq.s32.totalorder %s33, 0
    %p243 = por %p241, %p242
    %p244 = scmp.ne.s32.totalorder %s232, %s233
    %p245 = scmp.eq.s32.totalorder %s34, 1
    %p246 = por %p244, %p245
    %p248 = scmp.ne.s32.totalorder %s233, %s247
    %p249 = scmp.eq.s32.totalorder %s34, 0
    %p250 = por %p248, %p249
    %s252 = sadd.s32 %s251, 1
    %p255 = scmp.eq.s32.totalorder %s28, 1
    %p256 = scmp.ne.s32.totalorder %s251, %s253
    %p257 = scmp.eq.s32.totalorder %s28, 0
    %p258 = por %p256, %p257
    %p259 = scmp.ne.s32.totalorder %s251, %s253
    %p260 = scmp.eq.s32.totalorder %s33, 1
    %p261 = por %p259, %p260
    %p262 = scmp.ne.s32.totalorder %s253, %s254
    %p263 = scmp.eq.s32.totalorder %s33, 0
    %p264 = por %p262, %p263
    %p265 = scmp.ne.s32.totalorder %s253, %s254
    %p266 = scmp.eq.s32.totalorder %s34, 1
    %p267 = por %p265, %p266
    %p269 = scmp.ne.s32.totalorder %s254, %s268
    %p270 = scmp.eq.s32.totalorder %s34, 0
    %p271 = por %p269, %p270
    %s273 = sadd.s32 %s272, 1
    %p276 = scmp.eq.s32.totalorder %s28, 1
    %p277 = scmp.ne.s32.totalorder %s272, %s274
    %p278 = scmp.eq.s32.totalorder %s28, 0
    %p279 = por %p277, %p278
    %p280 = scmp.ne.s32.totalorder %s272, %s274
    %p281 = scmp.eq.s32.totalorder %s33, 1
    %p282 = por %p280, %p281
    %p283 = scmp.ne.s32.totalorder %s274, %s275
    %p284 = scmp.eq.s32.totalorder %s33, 0
    %p285 = por %p283, %p284
    %p286 = scmp.ne.s32.totalorder %s274, %s275
    %p287 = scmp.eq.s32.totalorder %s34, 1
    %p288 = por %p286, %p287
    %p290 = scmp.ne.s32.totalorder %s275, %s289
    %p291 = scmp.eq.s32.totalorder %s34, 0
    %p292 = por %p290, %p291
    %s294 = sadd.s32 %s293, 1
    %p297 = scmp.eq.s32.totalorder %s28, 1
    %p298 = scmp.ne.s32.totalorder %s293, %s295
    %p299 = scmp.eq.s32.totalorder %s28, 0
    %p300 = por %p298, %p299
    %p301 = scmp.ne.s32.totalorder %s293, %s295
    %p302 = scmp.eq.s32.totalorder %s33, 1
    %p303 = por %p301, %p302
    %p304 = scmp.ne.s32.totalorder %s295, %s296
    %p305 = scmp.eq.s32.totalorder %s33, 0
    %p306 = por %p304, %p305
    %p307 = scmp.ne.s32.totalorder %s295, %s296
    %p308 = scmp.eq.s32.totalorder %s34, 1
    %p309 = por %p307, %p308
    %p311 = scmp.ne.s32.totalorder %s296, %s310
    %p312 = scmp.eq.s32.totalorder %s34, 0
    %p313 = por %p311, %p312
    %s315 = sadd.s32 %s314, 1
    %p318 = scmp.eq.s32.totalorder %s28, 1
    %p319 = scmp.ne.s32.totalorder %s314, %s316
    %p320 = scmp.eq.s32.totalorder %s28, 0
    %p321 = por %p319, %p320
    %p322 = scmp.ne.s32.totalorder %s314, %s316
    %p323 = scmp.eq.s32.totalorder %s33, 1
    %p324 = por %p322, %p323
    %p325 = scmp.ne.s32.totalorder %s316, %s317
    %p326 = scmp.eq.s32.totalorder %s33, 0
    %p327 = por %p325, %p326
    %p328 = scmp.ne.s32.totalorder %s316, %s317
    %p329 = scmp.eq.s32.totalorder %s34, 1
    %p330 = por %p328, %p329
    %p332 = scmp.ne.s32.totalorder %s317, %s331
    %p333 = scmp.eq.s32.totalorder %s34, 0
    %p334 = por %p332, %p333
    %s336 = sadd.s32 %s335, 1
    %p339 = scmp.eq.s32.totalorder %s28, 1
    %p340 = scmp.ne.s32.totalorder %s335, %s337
    %p341 = scmp.eq.s32.totalorder %s28, 0
    %p342 = por %p340, %p341
    %p343 = scmp.ne.s32.totalorder %s335, %s337
    %p344 = scmp.eq.s32.totalorder %s33, 1
    %p345 = por %p343, %p344
    %p346 = scmp.ne.s32.totalorder %s337, %s338
    %p347 = scmp.eq.s32.totalorder %s33, 0
    %p348 = por %p346, %p347
    %p349 = scmp.ne.s32.totalorder %s337, %s338
    %p350 = scmp.eq.s32.totalorder %s34, 1
    %p351 = por %p349, %p350
    %p353 = scmp.ne.s32.totalorder %s338, %s352
    %p354 = scmp.eq.s32.totalorder %s34, 0
    %p355 = por %p353, %p354
    %s357 = sadd.s32 %s356, 1
    %p360 = scmp.eq.s32.totalorder %s28, 1
    %p361 = scmp.ne.s32.totalorder %s356, %s358
    %p362 = scmp.eq.s32.totalorder %s28, 0
    %p363 = por %p361, %p362
    %p364 = scmp.ne.s32.totalorder %s356, %s358
    %p365 = scmp.eq.s32.totalorder %s33, 1
    %p366 = por %p364, %p365
    %p367 = scmp.ne.s32.totalorder %s358, %s359
    %p368 = scmp.eq.s32.totalorder %s33, 0
    %p369 = por %p367, %p368
    %p370 = scmp.ne.s32.totalorder %s358, %s359
    %p371 = scmp.eq.s32.totalorder %s34, 1
    %p372 = por %p370, %p371
    %p374 = scmp.ne.s32.totalorder %s359, %s373
    %p375 = scmp.eq.s32.totalorder %s34, 0
    %p376 = por %p374, %p375
    %s378 = sadd.s32 %s377, 1
    %p381 = scmp.eq.s32.totalorder %s28, 1
    %p382 = scmp.ne.s32.totalorder %s377, %s379
    %p383 = scmp.eq.s32.totalorder %s28, 0
    %p384 = por %p382, %p383
    %p385 = scmp.ne.s32.totalorder %s377, %s379
    %p386 = scmp.eq.s32.totalorder %s33, 1
    %p387 = por %p385, %p386
    %p388 = scmp.ne.s32.totalorder %s379, %s380
    %p389 = scmp.eq.s32.totalorder %s33, 0
    %p390 = por %p388, %p389
    %p391 = scmp.ne.s32.totalorder %s379, %s380
    %p392 = scmp.eq.s32.totalorder %s34, 1
    %p393 = por %p391, %p392
    %p395 = scmp.ne.s32.totalorder %s380, %s394
    %p396 = scmp.eq.s32.totalorder %s34, 0
    %p397 = por %p395, %p396
    %s399 = sadd.s32 %s398, 1
    %p402 = scmp.eq.s32.totalorder %s28, 1
    %p403 = scmp.ne.s32.totalorder %s398, %s400
    %p404 = scmp.eq.s32.totalorder %s28, 0
    %p405 = por %p403, %p404
    %p406 = scmp.ne.s32.totalorder %s398, %s400
    %p407 = scmp.eq.s32.totalorder %s33, 1
    %p408 = por %p406, %p407
    %p409 = scmp.ne.s32.totalorder %s400, %s401
    %p410 = scmp.eq.s32.totalorder %s33, 0
    %p411 = por %p409, %p410
    %p412 = scmp.ne.s32.totalorder %s400, %s401
    %p413 = scmp.eq.s32.totalorder %s34, 1
    %p414 = por %p412, %p413
    %p416 = scmp.ne.s32.totalorder %s401, %s415
    %p417 = scmp.eq.s32.totalorder %s34, 0
    %p418 = por %p416, %p417
    %s420 = sadd.s32 %s419, 1
    %p423 = scmp.eq.s32.totalorder %s28, 1
    %p424 = scmp.ne.s32.totalorder %s419, %s421
    %p425 = scmp.eq.s32.totalorder %s28, 0
    %p426 = por %p424, %p425
    %p427 = scmp.ne.s32.totalorder %s419, %s421
    %p428 = scmp.eq.s32.totalorder %s33, 1
    %p429 = por %p427, %p428
    %p430 = scmp.ne.s32.totalorder %s421, %s422
    %p431 = scmp.eq.s32.totalorder %s33, 0
    %p432 = por %p430, %p431
    %p433 = scmp.ne.s32.totalorder %s421, %s422
    %p434 = scmp.eq.s32.totalorder %s34, 1
    %p435 = por %p433, %p434
    %p437 = scmp.ne.s32.totalorder %s422, %s436
    %p438 = scmp.eq.s32.totalorder %s34, 0
    %p439 = por %p437, %p438
    %s441 = sadd.s32 %s440, 1
    %p444 = scmp.eq.s32.totalorder %s28, 1
    %p445 = scmp.ne.s32.totalorder %s440, %s442
    %p446 = scmp.eq.s32.totalorder %s28, 0
    %p447 = por %p445, %p446
    %p448 = scmp.ne.s32.totalorder %s440, %s442
    %p449 = scmp.eq.s32.totalorder %s33, 1
    %p450 = por %p448, %p449
    %p451 = scmp.ne.s32.totalorder %s442, %s443
    %p452 = scmp.eq.s32.totalorder %s33, 0
    %p453 = por %p451, %p452
    %p454 = scmp.ne.s32.totalorder %s442, %s443
    %p455 = scmp.eq.s32.totalorder %s34, 1
    %p456 = por %p454, %p455
    %p458 = scmp.ne.s32.totalorder %s443, %s457
    %p459 = scmp.eq.s32.totalorder %s34, 0
    %p460 = por %p458, %p459
    %s462 = sadd.s32 %s461, 1
    %p465 = scmp.eq.s32.totalorder %s28, 1
    %p466 = scmp.ne.s32.totalorder %s461, %s463
    %p467 = scmp.eq.s32.totalorder %s28, 0
    %p468 = por %p466, %p467
    %p469 = scmp.ne.s32.totalorder %s461, %s463
    %p470 = scmp.eq.s32.totalorder %s33, 1
    %p471 = por %p469, %p470
    %p472 = scmp.ne.s32.totalorder %s463, %s464
    %p473 = scmp.eq.s32.totalorder %s33, 0
    %p474 = por %p472, %p473
    %p475 = scmp.ne.s32.totalorder %s463, %s464
    %p476 = scmp.eq.s32.totalorder %s34, 1
    %p477 = por %p475, %p476
    %p479 = scmp.ne.s32.totalorder %s464, %s478
    %p480 = scmp.eq.s32.totalorder %s34, 0
    %p481 = por %p479, %p480
    %s482 = ssub.s32 %s28, %s35
    %p483 = scmp.eq.s32.totalorder %s482, 0
    %s485 = sadd.s32 %s484, 1
    %s486 = scalar_select %p483, %s484, %s485
    %p489 = pneg %p483
    %p490 = scmp.eq.s32.totalorder %s28, 1
    %p491 = por %p489, %p490
    %p492 = scmp.ne.s32.totalorder %s484, %s487
    %p493 = scmp.eq.s32.totalorder %s28, 0
    %p494 = por %p492, %p493
    %p495 = scmp.ne.s32.totalorder %s484, %s487
    %p496 = scmp.eq.s32.totalorder %s33, 1
    %p497 = por %p495, %p496
    %p498 = scmp.ne.s32.totalorder %s487, %s488
    %p499 = scmp.eq.s32.totalorder %s33, 0
    %p500 = por %p498, %p499
    %p501 = scmp.ne.s32.totalorder %s487, %s488
    %p502 = scmp.eq.s32.totalorder %s34, 1
    %p503 = por %p501, %p502
    %p505 = scmp.ne.s32.totalorder %s488, %s504
    %p506 = scmp.eq.s32.totalorder %s34, 0
    %p507 = por %p505, %p506
    %p508 = scmp.le.s32.totalorder 1, %s28
    %p509 = scmp.lt.s32.totalorder %s28, 3
    %p510 = pnand %p508, %p509
    %p511 = pneg %p510
    // Predicated region
    $region9: #{rendering_engine_forward.1} parent=5 // pred_check
      _
    $region10: #{rendering_engine_forward.1} parent=5 // pred_check_branch
      %513 = sbr.rel (%p510) target = $region12
    $region11: #{rendering_engine_forward.1} parent=5 // pred_region
      %s514 = ssub.s32 %s28, 1
      // Predicated region
      $region13: #{rendering_engine_forward.1} parent=11 // pred_check
        %p515 = pneg %p75
      $region14: #{rendering_engine_forward.1} parent=11 // pred_check_branch
        %517 = sbr.rel (%p515) target = $region16
      $region15: #{rendering_engine_forward.1} parent=11 // pred_region
        _
      $region16: #{rendering_engine_forward.1} parent=11 // pred_fallthru
        _
      // Predicated region
      $region17: #{rendering_engine_forward.1} parent=11 // pred_check
        %p518 = pneg %p96
      $region18: #{rendering_engine_forward.1} parent=11 // pred_check_branch
        %520 = sbr.rel (%p518) target = $region20
      $region19: #{rendering_engine_forward.1} parent=11 // pred_region
        _
      $region20: #{rendering_engine_forward.1} parent=11 // pred_fallthru
        _
      // Predicated region
      $region21: #{rendering_engine_forward.1} parent=11 // pred_check
        %p521 = pneg %p117
      $region22: #{rendering_engine_forward.1} parent=11 // pred_check_branch
        %523 = sbr.rel (%p521) target = $region24
      $region23: #{rendering_engine_forward.1} parent=11 // pred_region
        _
      $region24: #{rendering_engine_forward.1} parent=11 // pred_fallthru
        _
      // Predicated region
      $region25: #{rendering_engine_forward.1} parent=11 // pred_check
        %p524 = pneg %p138
      $region26: #{rendering_engine_forward.1} parent=11 // pred_check_branch
        %526 = sbr.rel (%p524) target = $region28
      $region27: #{rendering_engine_forward.1} parent=11 // pred_region
        _
      $region28: #{rendering_engine_forward.1} parent=11 // pred_fallthru
        _
      // Predicated region
      $region29: #{rendering_engine_forward.1} parent=11 // pred_check
        %p527 = pneg %p159
      $region30: #{rendering_engine_forward.1} parent=11 // pred_check_branch
        %529 = sbr.rel (%p527) target = $region32
      $region31: #{rendering_engine_forward.1} parent=11 // pred_region
        _
      $region32: #{rendering_engine_forward.1} parent=11 // pred_fallthru
        _
      // Predicated region
      $region33: #{rendering_engine_forward.1} parent=11 // pred_check
        %p530 = pneg %p180
      $region34: #{rendering_engine_forward.1} parent=11 // pred_check_branch
        %532 = sbr.rel (%p530) target = $region36
      $region35: #{rendering_engine_forward.1} parent=11 // pred_region
        _
      $region36: #{rendering_engine_forward.1} parent=11 // pred_fallthru
        _
      // Predicated region
      $region37: #{rendering_engine_forward.1} parent=11 // pred_check
        %p533 = pneg %p201
      $region38: #{rendering_engine_forward.1} parent=11 // pred_check_branch
        %535 = sbr.rel (%p533) target = $region40
      $region39: #{rendering_engine_forward.1} parent=11 // pred_region
        _
      $region40: #{rendering_engine_forward.1} parent=11 // pred_fallthru
        _
      // Predicated region
      $region41: #{rendering_engine_forward.1} parent=11 // pred_check
        %p536 = pneg %p222
      $region42: #{rendering_engine_forward.1} parent=11 // pred_check_branch
        %538 = sbr.rel (%p536) target = $region44
      $region43: #{rendering_engine_forward.1} parent=11 // pred_region
        _
      $region44: #{rendering_engine_forward.1} parent=11 // pred_fallthru
        _
      // Predicated region
      $region45: #{rendering_engine_forward.1} parent=11 // pred_check
        %p539 = pneg %p243
      $region46: #{rendering_engine_forward.1} parent=11 // pred_check_branch
        %541 = sbr.rel (%p539) target = $region48
      $region47: #{rendering_engine_forward.1} parent=11 // pred_region
        _
      $region48: #{rendering_engine_forward.1} parent=11 // pred_fallthru
        _
      // Predicated region
      $region49: #{rendering_engine_forward.1} parent=11 // pred_check
        %p542 = pneg %p264
      $region50: #{rendering_engine_forward.1} parent=11 // pred_check_branch
        %544 = sbr.rel (%p542) target = $region52
      $region51: #{rendering_engine_forward.1} parent=11 // pred_region
        _
      $region52: #{rendering_engine_forward.1} parent=11 // pred_fallthru
        _
      // Predicated region
      $region53: #{rendering_engine_forward.1} parent=11 // pred_check
        %p545 = pneg %p285
      $region54: #{rendering_engine_forward.1} parent=11 // pred_check_branch
        %547 = sbr.rel (%p545) target = $region56
      $region55: #{rendering_engine_forward.1} parent=11 // pred_region
        _
      $region56: #{rendering_engine_forward.1} parent=11 // pred_fallthru
        _
      // Predicated region
      $region57: #{rendering_engine_forward.1} parent=11 // pred_check
        %p548 = pneg %p306
      $region58: #{rendering_engine_forward.1} parent=11 // pred_check_branch
        %550 = sbr.rel (%p548) target = $region60
      $region59: #{rendering_engine_forward.1} parent=11 // pred_region
        _
      $region60: #{rendering_engine_forward.1} parent=11 // pred_fallthru
        _
      // Predicated region
      $region61: #{rendering_engine_forward.1} parent=11 // pred_check
        %p551 = pneg %p327
      $region62: #{rendering_engine_forward.1} parent=11 // pred_check_branch
        %553 = sbr.rel (%p551) target = $region64
      $region63: #{rendering_engine_forward.1} parent=11 // pred_region
        _
      $region64: #{rendering_engine_forward.1} parent=11 // pred_fallthru
        _
      // Predicated region
      $region65: #{rendering_engine_forward.1} parent=11 // pred_check
        %p554 = pneg %p348
      $region66: #{rendering_engine_forward.1} parent=11 // pred_check_branch
        %556 = sbr.rel (%p554) target = $region68
      $region67: #{rendering_engine_forward.1} parent=11 // pred_region
        _
      $region68: #{rendering_engine_forward.1} parent=11 // pred_fallthru
        _
      // Predicated region
      $region69: #{rendering_engine_forward.1} parent=11 // pred_check
        %p557 = pneg %p369
      $region70: #{rendering_engine_forward.1} parent=11 // pred_check_branch
        %559 = sbr.rel (%p557) target = $region72
      $region71: #{rendering_engine_forward.1} parent=11 // pred_region
        _
      $region72: #{rendering_engine_forward.1} parent=11 // pred_fallthru
        _
      // Predicated region
      $region73: #{rendering_engine_forward.1} parent=11 // pred_check
        %p560 = pneg %p390
      $region74: #{rendering_engine_forward.1} parent=11 // pred_check_branch
        %562 = sbr.rel (%p560) target = $region76
      $region75: #{rendering_engine_forward.1} parent=11 // pred_region
        _
      $region76: #{rendering_engine_forward.1} parent=11 // pred_fallthru
        _
      // Predicated region
      $region77: #{rendering_engine_forward.1} parent=11 // pred_check
        %p563 = pneg %p411
      $region78: #{rendering_engine_forward.1} parent=11 // pred_check_branch
        %565 = sbr.rel (%p563) target = $region80
      $region79: #{rendering_engine_forward.1} parent=11 // pred_region
        _
      $region80: #{rendering_engine_forward.1} parent=11 // pred_fallthru
        _
      // Predicated region
      $region81: #{rendering_engine_forward.1} parent=11 // pred_check
        %p566 = pneg %p432
      $region82: #{rendering_engine_forward.1} parent=11 // pred_check_branch
        %568 = sbr.rel (%p566) target = $region84
      $region83: #{rendering_engine_forward.1} parent=11 // pred_region
        _
      $region84: #{rendering_engine_forward.1} parent=11 // pred_fallthru
        _
      // Predicated region
      $region85: #{rendering_engine_forward.1} parent=11 // pred_check
        %p569 = pneg %p453
      $region86: #{rendering_engine_forward.1} parent=11 // pred_check_branch
        %571 = sbr.rel (%p569) target = $region88
      $region87: #{rendering_engine_forward.1} parent=11 // pred_region
        _
      $region88: #{rendering_engine_forward.1} parent=11 // pred_fallthru
        _
      // Predicated region
      $region89: #{rendering_engine_forward.1} parent=11 // pred_check
        %p572 = pneg %p474
      $region90: #{rendering_engine_forward.1} parent=11 // pred_check_branch
        %574 = sbr.rel (%p572) target = $region92
      $region91: #{rendering_engine_forward.1} parent=11 // pred_region
        _
      $region92: #{rendering_engine_forward.1} parent=11 // pred_fallthru
        _
    $region12: #{rendering_engine_forward.1} parent=5 // pred_fallthru
      _
    %p575 = scmp.lt.s32.totalorder %s28, 2
    // Predicated region
    $region93: #{rendering_engine_forward.1} parent=5 // pred_check
      %p576 = pneg %p575
    $region94: #{rendering_engine_forward.1} parent=5 // pred_check_branch
      %578 = sbr.rel (%p576) target = $region96
    $region95: #{rendering_engine_forward.1} parent=5 // pred_region
      // Predicated region
      $region97: #{rendering_engine_forward.1} parent=95 // pred_check
        %p579 = pneg %p48
      $region98: #{rendering_engine_forward.1} parent=95 // pred_check_branch
        %581 = sbr.rel (%p579) target = $region100
      $region99: #{rendering_engine_forward.1} parent=95 // pred_region
        %p582 = scmp.lt.s32.totalorder %s28, 1
        %s583 = scalar_select %p582, %s28, 1
        %s584 = smul.addr %s583, 8
        %s585 = smul.addr %s584, 8
        %s586 = scalar_lea.vmem %s0, %s585
      $region100: #{rendering_engine_forward.1} parent=95 // pred_fallthru
        _
    $region96: #{rendering_engine_forward.1} parent=5 // pred_fallthru
      _
    %p587 = scmp.le.s32.totalorder 1, %s28
    %p588 = scmp.lt.s32.totalorder %s28, 3
    %p589 = pnand %p587, %p588
    %p590 = pneg %p589
    // Predicated region
    $region101: #{rendering_engine_forward.1} parent=5 // pred_check
      _
    $region102: #{rendering_engine_forward.1} parent=5 // pred_check_branch
      %592 = sbr.rel (%p589) target = $region104
    $region103: #{rendering_engine_forward.1} parent=5 // pred_region
      %s593 = ssub.s32 %s28, 1
      %p594 = scmp.lt.s32.totalorder %s33, 1
      %s595 = scalar_select %p594, %s33, 1
      %s596 = smul.addr %s595, 8
      %s597 = smul.addr %s596, 8
      %s598 = scalar_lea.vmem %s0, %s597
      %p599 = pneg %p54
      %p600 = pneg %p51
      %p601 = pneg %p75
      %p602 = pneg %p72
      %p603 = pneg %p96
      %p604 = pneg %p93
      %p605 = pneg %p117
      %p606 = pneg %p114
      %p607 = pneg %p138
      %p608 = pneg %p135
      %p609 = pneg %p159
      %p610 = pneg %p156
      %p611 = pneg %p180
      %p612 = pneg %p177
      %p613 = pneg %p201
      %p614 = pneg %p198
      %p615 = pneg %p222
      %p616 = pneg %p219
      %p617 = pneg %p243
      %p618 = pneg %p240
      %p619 = pneg %p264
      %p620 = pneg %p261
      %p621 = pneg %p285
      %p622 = pneg %p282
      %p623 = pneg %p306
      %p624 = pneg %p303
      %p625 = pneg %p327
      %p626 = pneg %p324
      %p627 = pneg %p348
      %p628 = pneg %p345
      %p629 = pneg %p369
      %p630 = pneg %p366
      %p631 = pneg %p390
      %p632 = pneg %p387
      %p633 = pneg %p411
      %p634 = pneg %p408
      %p635 = pneg %p432
      %p636 = pneg %p429
      %p637 = pneg %p453
      %p638 = pneg %p450
      %p639 = pneg %p474
      %p640 = pneg %p471
      %p641 = pneg %p500
      %p642 = pneg %p497
      %p643 = scmp.lt.s32.totalorder %s33, 1
      %s644 = scalar_select %p643, %s33, 1
      %s645 = smul.addr %s644, 2
      %s646 = smul.addr %s645, 4
      %s647 = scalar_lea.vmem %s21, %s646
      %p648 = scmp.lt.s32.totalorder %s33, 1
      %s649 = scalar_select %p648, %s33, 1
      %s650 = smul.addr %s649, 8
      %s651 = smul.addr %s650, 8
      %s652 = scalar_lea.vmem %s0, %s651
      %p653 = scmp.lt.s32.totalorder %s33, 1
      %s654 = scalar_select %p653, %s33, 1
      %s655 = smul.addr %s654, 2
      %s656 = smul.addr %s655, 4
      %s657 = scalar_lea.vmem %s21, %s656
      %v659 = vld [vmem:[%s652] sm:$0xff]
      %v660 = vld [vmem:[%s652 + $0x8] sm:$0xff]
      %v661 = vld [vmem:[%s652 + $0x10] sm:$0xff]
      %v662 = vld [vmem:[%s652 + $0x18] sm:$0xff]
      %v663 = vld [vmem:[%s652 + $0x20] sm:$0xff]
      %v664 = vld [vmem:[%s652 + $0x28] sm:$0xff]
      %v665 = vld [vmem:[%s652 + $0x30] sm:$0xff]
      %v666 = vld [vmem:[%s652 + $0x38] sm:$0xff]
      %v667 = vpack.c.bf16 %v660, %v659
      %v668 = vpack.c.bf16 %v662, %v661
      %v669 = vpack.c.bf16 %v664, %v663
      %v670 = vpack.c.bf16 %v666, %v665
      %v671 = vld [vmem:[%s1] sm:$0xf]
      %v672 = vld [vmem:[%s1 + $0x4] sm:$0xf]
      %v675 = vunpack.c.l.b16 %v671
      %v676 = vunpack.c.l.b16 %v672
      %v677 = vpack.c.b16 %v676, %v675
      %vm679 = vcmask 130048
      %v681 = vsel %vm679, %v667, 0
      %v684 = vsel %vm679, %v668, 0
      %v687 = vsel %vm679, %v669, 0
      %v690 = vsel %vm679, %v670, 0
      %692 = vmatprep.subr.bf16.mxu0 0
      %693 = vmatpush1.bf16.msra.mxu0 %v677
      %694 = vmatprep.subr.bf16.mxu0 0
      %695 = vmatpush1.bf16.msra.mxu0 0
      %696 = vmatprep.subr.bf16.mxu0 0
      %697 = vmatpush1.bf16.msra.mxu0 0
      %698 = vmatprep.subr.bf16.mxu0 0
      %699 = vmatpush1.bf16.msra.mxu0 0
      %700 = vmatprep.subr.bf16.mxu0 0
      %701 = vmatpush1.bf16.msra.mxu0 0
      %702 = vmatprep.subr.bf16.mxu0 0
      %703 = vmatpush1.bf16.msra.mxu0 0
      %704 = vmatprep.subr.bf16.mxu0 0
      %705 = vmatpush1.bf16.msra.mxu0 0
      %706 = vmatprep.subr.bf16.mxu0 0
      %707 = vmatpush1.bf16.msra.mxu0 0
      %708 = vmatprep.subr.bf16.mxu0 0
      %709 = vmatpush1.bf16.msra.mxu0 0
      %710 = vmatprep.subr.bf16.mxu0 0
      %711 = vmatpush1.bf16.msra.mxu0 0
      %712 = vmatprep.subr.bf16.mxu0 0
      %713 = vmatpush1.bf16.msra.mxu0 0
      %714 = vmatprep.subr.bf16.mxu0 0
      %715 = vmatpush1.bf16.msra.mxu0 0
      %716 = vmatprep.subr.bf16.mxu0 0
      %717 = vmatpush1.bf16.msra.mxu0 0
      %718 = vmatprep.subr.bf16.mxu0 0
      %719 = vmatpush1.bf16.msra.mxu0 0
      %720 = vmatprep.subr.bf16.mxu0 0
      %721 = vmatpush1.bf16.msra.mxu0 0
      %722 = vmatprep.subr.bf16.mxu0 0
      %723 = vmatpush1.bf16.msra.mxu0 0
      %724 = vmatprep.mubr.bf16.mxu0 0
      %725 = vmatmul.mubr.bf16.gmra.mrb[0].mxu0 %v681
      %v726 = vpop.f32.mrb[0].mxu0
      %v727 = vadd.f32 0.0, %v726
      %v728 = vpop.f32.mrb[0].mxu0
      %v729 = vpop.f32.mrb[0].mxu0
      %v730 = vadd.f32 0.0, %v729
      %v731 = vpop.f32.mrb[0].mxu0
      %732 = vmatprep.mubr.bf16.mxu0 0
      %733 = vmatmul.mubr.bf16.gmra.mrb[0].mxu0 %v684
      %v734 = vpop.f32.mrb[0].mxu0
      %v735 = vadd.f32 0.0, %v734
      %v736 = vpop.f32.mrb[0].mxu0
      %v737 = vpop.f32.mrb[0].mxu0
      %v738 = vadd.f32 0.0, %v737
      %v739 = vpop.f32.mrb[0].mxu0
      %740 = vmatprep.mubr.bf16.mxu0 0
      %741 = vmatmul.mubr.bf16.gmra.mrb[0].mxu0 %v687
      %v742 = vpop.f32.mrb[0].mxu0
      %v743 = vadd.f32 0.0, %v742
      %v744 = vpop.f32.mrb[0].mxu0
      %v745 = vpop.f32.mrb[0].mxu0
      %v746 = vadd.f32 0.0, %v745
      %v747 = vpop.f32.mrb[0].mxu0
      %748 = vmatprep.mubr.bf16.mxu0 0
      %749 = vmatmul.mubr.bf16.gmra.mrb[0].mxu0 %v690
      %v750 = vpop.f32.mrb[0].mxu0
      %v751 = vadd.f32 0.0, %v750
      %v752 = vpop.f32.mrb[0].mxu0
      %v753 = vpop.f32.mrb[0].mxu0
      %v754 = vadd.f32 0.0, %v753
      %v755 = vpop.f32.mrb[0].mxu0
      %756 = vdwg.mxu0
      %v757 = vld [vmem:[%s6] sm:$0xf]
      %v758 = vld [vmem:[%s6 + $0x4] sm:$0xf]
      %v759 = vld [vmem:[%s6 + $0x8] sm:$0xf]
      %v760 = vld [vmem:[%s6 + $0xc] sm:$0xf]
      %v761 = vpack.c.bf16 %v730, %v727
      %v762 = vpack.c.bf16 %v738, %v735
      %v763 = vpack.c.bf16 %v746, %v743
      %v764 = vpack.c.bf16 %v754, %v751
      %v765 = vld [vmem:[%s7] sm:$0xff]
      %v766 = vld [vmem:[%s7 + $0x8] sm:$0xff]
      %v767 = vld [vmem:[%s7 + $0x10] sm:$0xff]
      %v768 = vld [vmem:[%s7 + $0x18] sm:$0xff]
      %770 = vset.pattern.permute.xlu0 0
      %771 = vperm.xlu0 %770, %v765
      %v772 = vpop.permute.xlu0 %771
      %775 = vset.pattern.permute.xlu0 0
      %776 = vperm.xlu0 %775, %v766
      %v777 = vpop.permute.xlu0 %776
      %780 = vset.pattern.permute.xlu0 0
      %781 = vperm.xlu0 %780, %v767
      %v782 = vpop.permute.xlu0 %781
      %785 = vset.pattern.permute.xlu0 0
      %786 = vperm.xlu0 %785, %v768
      %v787 = vpop.permute.xlu0 %786
      %v793 = vunpack.c.l.b16 %v757
      %v794 = vunpack.c.l.b16 %v758
      %v795 = vunpack.c.l.b16 %v759
      %v796 = vunpack.c.l.b16 %v760
      %v797 = vpack.c.b16 %v794, %v793
      %v798 = vpack.c.b16 %v796, %v795
      %vm799 = vcmask 523264
      %v801 = vsel %vm799, %v797, 0
      %v804 = vsel %vm799, %v798, 0
      %806 = vmatprep.subr.bf16.mxu0 0
      %807 = vmatpush1.bf16.msra.mxu0 %v761
      %808 = vmatprep.subr.bf16.mxu0 0
      %809 = vmatpush1.bf16.msra.mxu0 %v762
      %810 = vmatprep.subr.bf16.mxu0 0
      %811 = vmatpush1.bf16.msra.mxu0 %v763
      %812 = vmatprep.subr.bf16.mxu0 0
      %813 = vmatpush1.bf16.msra.mxu0 %v764
      %814 = vmatprep.subr.bf16.mxu0 0
      %815 = vmatpush1.bf16.msra.mxu0 0
      %816 = vmatprep.subr.bf16.mxu0 0
      %817 = vmatpush1.bf16.msra.mxu0 0
      %818 = vmatprep.subr.bf16.mxu0 0
      %819 = vmatpush1.bf16.msra.mxu0 0
      %820 = vmatprep.subr.bf16.mxu0 0
      %821 = vmatpush1.bf16.msra.mxu0 0
      %822 = vmatprep.subr.bf16.mxu0 0
      %823 = vmatpush1.bf16.msra.mxu0 0
      %824 = vmatprep.subr.bf16.mxu0 0
      %825 = vmatpush1.bf16.msra.mxu0 0
      %826 = vmatprep.subr.bf16.mxu0 0
      %827 = vmatpush1.bf16.msra.mxu0 0
      %828 = vmatprep.subr.bf16.mxu0 0
      %829 = vmatpush1.bf16.msra.mxu0 0
      %830 = vmatprep.subr.bf16.mxu0 0
      %831 = vmatpush1.bf16.msra.mxu0 0
      %832 = vmatprep.subr.bf16.mxu0 0
      %833 = vmatpush1.bf16.msra.mxu0 0
      %834 = vmatprep.subr.bf16.mxu0 0
      %835 = vmatpush1.bf16.msra.mxu0 0
      %836 = vmatprep.subr.bf16.mxu0 0
      %837 = vmatpush1.bf16.msra.mxu0 0
      %838 = vmatprep.mubr.bf16.mxu0 0
      %839 = vmatmul.mubr.bf16.gmra.mrb[0].mxu0 %v801
      %v840 = vpop.f32.mrb[0].mxu0
      %v841 = vadd.f32 %v772, %v840
      %v842 = vpop.f32.mrb[0].mxu0
      %v843 = vpop.f32.mrb[0].mxu0
      %v844 = vadd.f32 %v777, %v843
      %v845 = vpop.f32.mrb[0].mxu0
      %846 = vmatprep.mubr.bf16.mxu0 0
      %847 = vmatmul.mubr.bf16.gmra.mrb[0].mxu0 %v804
      %v848 = vpop.f32.mrb[0].mxu0
      %v849 = vadd.f32 %v782, %v848
      %v850 = vpop.f32.mrb[0].mxu0
      %v851 = vpop.f32.mrb[0].mxu0
      %v852 = vadd.f32 %v787, %v851
      %v853 = vpop.f32.mrb[0].mxu0
      %854 = vdwg.mxu0
      %v855 = vmax.f32 %v727, 0.0
      %v856 = vmax.f32 %v730, 0.0
      %v857 = vmax.f32 %v735, 0.0
      %v858 = vmax.f32 %v738, 0.0
      %v859 = vmax.f32 %v743, 0.0
      %v860 = vmax.f32 %v746, 0.0
      %v861 = vmax.f32 %v751, 0.0
      %v862 = vmax.f32 %v754, 0.0
      %v863 = vlaneseq
      %v864 = vand.u32 %v863, 127
      %v865 = vand.u32 %v864, 7
      %v866 = vshra.s32 %v864, 3
      %vm867 = vcmask 1048064
      %868 = vrot.lane.b32.xlu0 %v855, 64
      %v869 = vpop.permute.xlu0 %868
      %v870 = vsel %vm867, %v869, %v855
      %871 = vrot.lane.b32.xlu0 %v856, 64
      %v872 = vpop.permute.xlu0 %871
      %v873 = vsel %vm867, %v872, %v856
      %874 = vrot.lane.b32.xlu0 %v857, 64
      %v875 = vpop.permute.xlu0 %874
      %v876 = vsel %vm867, %v875, %v857
      %877 = vrot.lane.b32.xlu0 %v858, 64
      %v878 = vpop.permute.xlu0 %877
      %v879 = vsel %vm867, %v878, %v858
      %880 = vrot.lane.b32.xlu0 %v859, 64
      %v881 = vpop.permute.xlu0 %880
      %v882 = vsel %vm867, %v881, %v859
      %883 = vrot.lane.b32.xlu0 %v860, 64
      %v884 = vpop.permute.xlu0 %883
      %v885 = vsel %vm867, %v884, %v860
      %886 = vrot.lane.b32.xlu0 %v861, 64
      %v887 = vpop.permute.xlu0 %886
      %v888 = vsel %vm867, %v887, %v861
      %889 = vrot.lane.b32.xlu0 %v862, 64
      %v890 = vpop.permute.xlu0 %889
      %v891 = vsel %vm867, %v890, %v862
      %892 = vrot.lane.b32.xlu0 %v870, 64
      %v893 = vpop.permute.xlu0 %892
      %894 = vrot.lane.b32.xlu0 %v873, 64
      %v895 = vpop.permute.xlu0 %894
      %896 = vrot.lane.b32.xlu0 %v876, 64
      %v897 = vpop.permute.xlu0 %896
      %898 = vrot.lane.b32.xlu0 %v879, 64
      %v899 = vpop.permute.xlu0 %898
      %900 = vrot.lane.b32.xlu0 %v882, 64
      %v901 = vpop.permute.xlu0 %900
      %902 = vrot.lane.b32.xlu0 %v885, 64
      %v903 = vpop.permute.xlu0 %902
      %904 = vrot.lane.b32.xlu0 %v888, 64
      %v905 = vpop.permute.xlu0 %904
      %906 = vrot.lane.b32.xlu0 %v891, 64
      %v907 = vpop.permute.xlu0 %906
      %v908 = vsel %vm867, %v893, %v855
      %v909 = vsel %vm867, %v895, %v856
      %v910 = vsel %vm867, %v897, %v857
      %v911 = vsel %vm867, %v899, %v858
      %v912 = vsel %vm867, %v901, %v859
      %v913 = vsel %vm867, %v903, %v860
      %v914 = vsel %vm867, %v905, %v861
      %v915 = vsel %vm867, %v907, %v862
      %vm916 = vcmp.ge.s32.totalorder %v865, 1
      %vm917 = vcmp.ge.s32.totalorder %v866, 1
      %vm918 = vmand %vm916, %vm917
      %v919 = vsel %vm918, 1, 0
      %vm920 = vcmp.eq.s32.totalorder %v919, 1
      %929 = vrot.lane.b32.xlu0 %v908, 73
      %v930 = vpop.permute.xlu0 %929
      %931 = vrot.lane.b32.xlu0 %v909, 73
      %v932 = vpop.permute.xlu0 %931
      %933 = vrot.lane.b32.xlu0 %v910, 73
      %v934 = vpop.permute.xlu0 %933
      %935 = vrot.lane.b32.xlu0 %v911, 73
      %v936 = vpop.permute.xlu0 %935
      %937 = vrot.lane.b32.xlu0 %v912, 73
      %v938 = vpop.permute.xlu0 %937
      %939 = vrot.lane.b32.xlu0 %v913, 73
      %v940 = vpop.permute.xlu0 %939
      %941 = vrot.lane.b32.xlu0 %v914, 73
      %v942 = vpop.permute.xlu0 %941
      %943 = vrot.lane.b32.xlu0 %v915, 73
      %v944 = vpop.permute.xlu0 %943
      %v953 = vsel %vm920, %v930, 0.0
      %v954 = vsel %vm920, %v932, 0.0
      %v955 = vsel %vm920, %v934, 0.0
      %v956 = vsel %vm920, %v936, 0.0
      %v957 = vsel %vm920, %v938, 0.0
      %v958 = vsel %vm920, %v940, 0.0
      %v959 = vsel %vm920, %v942, 0.0
      %v960 = vsel %vm920, %v944, 0.0
      %v961 = vld [vmem:[%s2] sm:$0xf]
      %v962 = vld [vmem:[%s2 + $0x4] sm:$0xf]
      %v963 = vld [vmem:[%s2 + $0x8] sm:$0xf]
      %v964 = vld [vmem:[%s2 + $0xc] sm:$0xf]
      %v965 = vpack.c.bf16 %v954, %v953
      %v966 = vpack.c.bf16 %v956, %v955
      %v967 = vpack.c.bf16 %v958, %v957
      %v968 = vpack.c.bf16 %v960, %v959
      %v969 = vsel %vm917, 1, 0
      %vm970 = vcmp.eq.s32.totalorder %v969, 1
      %971 = vrot.lane.b32.xlu0 %v908, 72
      %v972 = vpop.permute.xlu0 %971
      %973 = vrot.lane.b32.xlu0 %v909, 72
      %v974 = vpop.permute.xlu0 %973
      %975 = vrot.lane.b32.xlu0 %v910, 72
      %v976 = vpop.permute.xlu0 %975
      %977 = vrot.lane.b32.xlu0 %v911, 72
      %v978 = vpop.permute.xlu0 %977
      %979 = vrot.lane.b32.xlu0 %v912, 72
      %v980 = vpop.permute.xlu0 %979
      %981 = vrot.lane.b32.xlu0 %v913, 72
      %v982 = vpop.permute.xlu0 %981
      %983 = vrot.lane.b32.xlu0 %v914, 72
      %v984 = vpop.permute.xlu0 %983
      %985 = vrot.lane.b32.xlu0 %v915, 72
      %v986 = vpop.permute.xlu0 %985
      %v995 = vsel %vm970, %v972, 0.0
      %v996 = vsel %vm970, %v974, 0.0
      %v997 = vsel %vm970, %v976, 0.0
      %v998 = vsel %vm970, %v978, 0.0
      %v999 = vsel %vm970, %v980, 0.0
      %v1000 = vsel %vm970, %v982, 0.0
      %v1001 = vsel %vm970, %v984, 0.0
      %v1002 = vsel %vm970, %v986, 0.0
      %s1003 = scalar_lea.vmem %s2, 16
      %v1004 = vld [vmem:[%s1003] sm:$0xf]
      %v1005 = vld [vmem:[%s1003 + $0x4] sm:$0xf]
      %v1006 = vld [vmem:[%s1003 + $0x8] sm:$0xf]
      %v1007 = vld [vmem:[%s1003 + $0xc] sm:$0xf]
      %v1008 = vpack.c.bf16 %v996, %v995
      %v1009 = vpack.c.bf16 %v998, %v997
      %v1010 = vpack.c.bf16 %v1000, %v999
      %v1011 = vpack.c.bf16 %v1002, %v1001
      %v1016 = vunpack.c.l.b16 %v1004
      %v1017 = vunpack.c.l.b16 %v1005
      %v1018 = vunpack.c.l.b16 %v1006
      %v1019 = vunpack.c.l.b16 %v1007
      %v1020 = vpack.c.b16 %v1017, %v1016
      %v1021 = vpack.c.b16 %v1019, %v1018
      %v1023 = vsel %vm799, %v1020, 0
      %v1026 = vsel %vm799, %v1021, 0
      %1028 = vmatprep.subr.bf16.mxu0 0
      %1029 = vmatpush1.bf16.msra.mxu0 %v1008
      %1030 = vmatprep.subr.bf16.mxu0 0
      %1031 = vmatpush1.bf16.msra.mxu0 %v1009
      %1032 = vmatprep.subr.bf16.mxu0 0
      %1033 = vmatpush1.bf16.msra.mxu0 %v1010
      %1034 = vmatprep.subr.bf16.mxu0 0
      %1035 = vmatpush1.bf16.msra.mxu0 %v1011
      %1036 = vmatprep.subr.bf16.mxu0 0
      %1037 = vmatpush1.bf16.msra.mxu0 0
      %1038 = vmatprep.subr.bf16.mxu0 0
      %1039 = vmatpush1.bf16.msra.mxu0 0
      %1040 = vmatprep.subr.bf16.mxu0 0
      %1041 = vmatpush1.bf16.msra.mxu0 0
      %1042 = vmatprep.subr.bf16.mxu0 0
      %1043 = vmatpush1.bf16.msra.mxu0 0
      %1044 = vmatprep.subr.bf16.mxu0 0
      %1045 = vmatpush1.bf16.msra.mxu0 0
      %1046 = vmatprep.subr.bf16.mxu0 0
      %1047 = vmatpush1.bf16.msra.mxu0 0
      %1048 = vmatprep.subr.bf16.mxu0 0
      %1049 = vmatpush1.bf16.msra.mxu0 0
      %1050 = vmatprep.subr.bf16.mxu0 0
      %1051 = vmatpush1.bf16.msra.mxu0 0
      %1052 = vmatprep.subr.bf16.mxu0 0
      %1053 = vmatpush1.bf16.msra.mxu0 0
      %1054 = vmatprep.subr.bf16.mxu0 0
      %1055 = vmatpush1.bf16.msra.mxu0 0
      %1056 = vmatprep.subr.bf16.mxu0 0
      %1057 = vmatpush1.bf16.msra.mxu0 0
      %1058 = vmatprep.subr.bf16.mxu0 0
      %1059 = vmatpush1.bf16.msra.mxu0 0
      %1060 = vmatprep.mubr.bf16.mxu0 0
      %1061 = vmatmul.mubr.bf16.gmra.mrb[0].mxu0 %v1023
      %v1062 = vpop.f32.mrb[0].mxu0
      %v1063 = vadd.f32 0.0, %v1062
      %v1064 = vpop.f32.mrb[0].mxu0
      %v1065 = vpop.f32.mrb[0].mxu0
      %v1066 = vadd.f32 0.0, %v1065
      %v1067 = vpop.f32.mrb[0].mxu0
      %1068 = vmatprep.mubr.bf16.mxu0 0
      %1069 = vmatmul.mubr.bf16.gmra.mrb[0].mxu0 %v1026
      %v1070 = vpop.f32.mrb[0].mxu0
      %v1071 = vadd.f32 0.0, %v1070
      %v1072 = vpop.f32.mrb[0].mxu0
      %v1073 = vpop.f32.mrb[0].mxu0
      %v1074 = vadd.f32 0.0, %v1073
      %v1075 = vpop.f32.mrb[0].mxu0
      %1076 = vdwg.mxu0
      %v1081 = vunpack.c.l.b16 %v961
      %v1082 = vunpack.c.l.b16 %v962
      %v1083 = vunpack.c.l.b16 %v963
      %v1084 = vunpack.c.l.b16 %v964
      %v1085 = vpack.c.b16 %v1082, %v1081
      %v1086 = vpack.c.b16 %v1084, %v1083
      %v1088 = vsel %vm799, %v1085, 0
      %v1091 = vsel %vm799, %v1086, 0
      %1093 = vmatprep.subr.bf16.mxu0 0
      %1094 = vmatpush1.bf16.msra.mxu0 %v965
      %1095 = vmatprep.subr.bf16.mxu0 0
      %1096 = vmatpush1.bf16.msra.mxu0 %v966
      %1097 = vmatprep.subr.bf16.mxu0 0
      %1098 = vmatpush1.bf16.msra.mxu0 %v967
      %1099 = vmatprep.subr.bf16.mxu0 0
      %1100 = vmatpush1.bf16.msra.mxu0 %v968
      %1101 = vmatprep.subr.bf16.mxu0 0
      %1102 = vmatpush1.bf16.msra.mxu0 0
      %1103 = vmatprep.subr.bf16.mxu0 0
      %1104 = vmatpush1.bf16.msra.mxu0 0
      %1105 = vmatprep.subr.bf16.mxu0 0
      %1106 = vmatpush1.bf16.msra.mxu0 0
      %1107 = vmatprep.subr.bf16.mxu0 0
      %1108 = vmatpush1.bf16.msra.mxu0 0
      %1109 = vmatprep.subr.bf16.mxu0 0
      %1110 = vmatpush1.bf16.msra.mxu0 0
      %1111 = vmatprep.subr.bf16.mxu0 0
      %1112 = vmatpush1.bf16.msra.mxu0 0
      %1113 = vmatprep.subr.bf16.mxu0 0
      %1114 = vmatpush1.bf16.msra.mxu0 0
      %1115 = vmatprep.subr.bf16.mxu0 0
      %1116 = vmatpush1.bf16.msra.mxu0 0
      %1117 = vmatprep.subr.bf16.mxu0 0
      %1118 = vmatpush1.bf16.msra.mxu0 0
      %1119 = vmatprep.subr.bf16.mxu0 0
      %1120 = vmatpush1.bf16.msra.mxu0 0
      %1121 = vmatprep.subr.bf16.mxu0 0
      %1122 = vmatpush1.bf16.msra.mxu0 0
      %1123 = vmatprep.subr.bf16.mxu0 0
      %1124 = vmatpush1.bf16.msra.mxu0 0
      %1125 = vmatprep.mubr.bf16.mxu0 0
      %1126 = vmatmul.mubr.bf16.gmra.mrb[0].mxu0 %v1088
      %v1127 = vpop.f32.mrb[0].mxu0
      %v1128 = vadd.f32 %v1063, %v1127
      %v1129 = vpop.f32.mrb[0].mxu0
      %v1130 = vpop.f32.mrb[0].mxu0
      %v1131 = vadd.f32 %v1066, %v1130
      %v1132 = vpop.f32.mrb[0].mxu0
      %1133 = vmatprep.mubr.bf16.mxu0 0
      %1134 = vmatmul.mubr.bf16.gmra.mrb[0].mxu0 %v1091
      %v1135 = vpop.f32.mrb[0].mxu0
      %v1136 = vadd.f32 %v1071, %v1135
      %v1137 = vpop.f32.mrb[0].mxu0
      %v1138 = vpop.f32.mrb[0].mxu0
      %v1139 = vadd.f32 %v1074, %v1138
      %v1140 = vpop.f32.mrb[0].mxu0
      %1141 = vdwg.mxu0
      %vm1142 = vcmp.lt.s32.totalorder %v865, 7
      %vm1143 = vmand %vm1142, %vm917
      %v1144 = vsel %vm1143, 1, 0
      %vm1145 = vcmp.eq.s32.totalorder %v1144, 1
      %1146 = vrot.lane.b32.xlu0 %v908, 71
      %v1147 = vpop.permute.xlu0 %1146
      %1148 = vrot.lane.b32.xlu0 %v909, 71
      %v1149 = vpop.permute.xlu0 %1148
      %1150 = vrot.lane.b32.xlu0 %v910, 71
      %v1151 = vpop.permute.xlu0 %1150
      %1152 = vrot.lane.b32.xlu0 %v911, 71
      %v1153 = vpop.permute.xlu0 %1152
      %1154 = vrot.lane.b32.xlu0 %v912, 71
      %v1155 = vpop.permute.xlu0 %1154
      %1156 = vrot.lane.b32.xlu0 %v913, 71
      %v1157 = vpop.permute.xlu0 %1156
      %1158 = vrot.lane.b32.xlu0 %v914, 71
      %v1159 = vpop.permute.xlu0 %1158
      %1160 = vrot.lane.b32.xlu0 %v915, 71
      %v1161 = vpop.permute.xlu0 %1160
      %v1170 = vsel %vm1145, %v1147, 0.0
      %v1171 = vsel %vm1145, %v1149, 0.0
      %v1172 = vsel %vm1145, %v1151, 0.0
      %v1173 = vsel %vm1145, %v1153, 0.0
      %v1174 = vsel %vm1145, %v1155, 0.0
      %v1175 = vsel %vm1145, %v1157, 0.0
      %v1176 = vsel %vm1145, %v1159, 0.0
      %v1177 = vsel %vm1145, %v1161, 0.0
      %s1178 = scalar_lea.vmem %s2, 32
      %v1179 = vld [vmem:[%s1178] sm:$0xf]
      %v1180 = vld [vmem:[%s1178 + $0x4] sm:$0xf]
      %v1181 = vld [vmem:[%s1178 + $0x8] sm:$0xf]
      %v1182 = vld [vmem:[%s1178 + $0xc] sm:$0xf]
      %v1183 = vpack.c.bf16 %v1171, %v1170
      %v1184 = vpack.c.bf16 %v1173, %v1172
      %v1185 = vpack.c.bf16 %v1175, %v1174
      %v1186 = vpack.c.bf16 %v1177, %v1176
      %v1191 = vunpack.c.l.b16 %v1179
      %v1192 = vunpack.c.l.b16 %v1180
      %v1193 = vunpack.c.l.b16 %v1181
      %v1194 = vunpack.c.l.b16 %v1182
      %v1195 = vpack.c.b16 %v1192, %v1191
      %v1196 = vpack.c.b16 %v1194, %v1193
      %v1198 = vsel %vm799, %v1195, 0
      %v1201 = vsel %vm799, %v1196, 0
      %1203 = vmatprep.subr.bf16.mxu0 0
      %1204 = vmatpush1.bf16.msra.mxu0 %v1183
      %1205 = vmatprep.subr.bf16.mxu0 0
      %1206 = vmatpush1.bf16.msra.mxu0 %v1184
      %1207 = vmatprep.subr.bf16.mxu0 0
      %1208 = vmatpush1.bf16.msra.mxu0 %v1185
      %1209 = vmatprep.subr.bf16.mxu0 0
      %1210 = vmatpush1.bf16.msra.mxu0 %v1186
      %1211 = vmatprep.subr.bf16.mxu0 0
      %1212 = vmatpush1.bf16.msra.mxu0 0
      %1213 = vmatprep.subr.bf16.mxu0 0
      %1214 = vmatpush1.bf16.msra.mxu0 0
      %1215 = vmatprep.subr.bf16.mxu0 0
      %1216 = vmatpush1.bf16.msra.mxu0 0
      %1217 = vmatprep.subr.bf16.mxu0 0
      %1218 = vmatpush1.bf16.msra.mxu0 0
      %1219 = vmatprep.subr.bf16.mxu0 0
      %1220 = vmatpush1.bf16.msra.mxu0 0
      %1221 = vmatprep.subr.bf16.mxu0 0
      %1222 = vmatpush1.bf16.msra.mxu0 0
      %1223 = vmatprep.subr.bf16.mxu0 0
      %1224 = vmatpush1.bf16.msra.mxu0 0
      %1225 = vmatprep.subr.bf16.mxu0 0
      %1226 = vmatpush1.bf16.msra.mxu0 0
      %1227 = vmatprep.subr.bf16.mxu0 0
      %1228 = vmatpush1.bf16.msra.mxu0 0
      %1229 = vmatprep.subr.bf16.mxu0 0
      %1230 = vmatpush1.bf16.msra.mxu0 0
      %1231 = vmatprep.subr.bf16.mxu0 0
      %1232 = vmatpush1.bf16.msra.mxu0 0
      %1233 = vmatprep.subr.bf16.mxu0 0
      %1234 = vmatpush1.bf16.msra.mxu0 0
      %1235 = vmatprep.mubr.bf16.mxu0 0
      %1236 = vmatmul.mubr.bf16.gmra.mrb[0].mxu0 %v1198
      %v1237 = vpop.f32.mrb[0].mxu0
      %v1238 = vadd.f32 0.0, %v1237
      %v1239 = vpop.f32.mrb[0].mxu0
      %v1240 = vpop.f32.mrb[0].mxu0
      %v1241 = vadd.f32 0.0, %v1240
      %v1242 = vpop.f32.mrb[0].mxu0
      %1243 = vmatprep.mubr.bf16.mxu0 0
      %1244 = vmatmul.mubr.bf16.gmra.mrb[0].mxu0 %v1201
      %v1245 = vpop.f32.mrb[0].mxu0
      %v1246 = vadd.f32 0.0, %v1245
      %v1247 = vpop.f32.mrb[0].mxu0
      %v1248 = vpop.f32.mrb[0].mxu0
      %v1249 = vadd.f32 0.0, %v1248
      %v1250 = vpop.f32.mrb[0].mxu0
      %1251 = vdwg.mxu0
      %v1252 = vadd.f32 %v1128, %v1238
      %v1253 = vadd.f32 %v1131, %v1241
      %v1254 = vadd.f32 %v1136, %v1246
      %v1255 = vadd.f32 %v1139, %v1249
      %v1256 = vsel %vm916, 1, 0
      %vm1257 = vcmp.eq.s32.totalorder %v1256, 1
      %1258 = vrot.lane.b32.xlu0 %v908, 65
      %v1259 = vpop.permute.xlu0 %1258
      %1260 = vrot.lane.b32.xlu0 %v909, 65
      %v1261 = vpop.permute.xlu0 %1260
      %1262 = vrot.lane.b32.xlu0 %v910, 65
      %v1263 = vpop.permute.xlu0 %1262
      %1264 = vrot.lane.b32.xlu0 %v911, 65
      %v1265 = vpop.permute.xlu0 %1264
      %1266 = vrot.lane.b32.xlu0 %v912, 65
      %v1267 = vpop.permute.xlu0 %1266
      %1268 = vrot.lane.b32.xlu0 %v913, 65
      %v1269 = vpop.permute.xlu0 %1268
      %1270 = vrot.lane.b32.xlu0 %v914, 65
      %v1271 = vpop.permute.xlu0 %1270
      %1272 = vrot.lane.b32.xlu0 %v915, 65
      %v1273 = vpop.permute.xlu0 %1272
      %v1282 = vsel %vm1257, %v1259, 0.0
      %v1283 = vsel %vm1257, %v1261, 0.0
      %v1284 = vsel %vm1257, %v1263, 0.0
      %v1285 = vsel %vm1257, %v1265, 0.0
      %v1286 = vsel %vm1257, %v1267, 0.0
      %v1287 = vsel %vm1257, %v1269, 0.0
      %v1288 = vsel %vm1257, %v1271, 0.0
      %v1289 = vsel %vm1257, %v1273, 0.0
      %s1290 = scalar_lea.vmem %s2, 48
      %v1291 = vld [vmem:[%s1290] sm:$0xf]
      %v1292 = vld [vmem:[%s1290 + $0x4] sm:$0xf]
      %v1293 = vld [vmem:[%s1290 + $0x8] sm:$0xf]
      %v1294 = vld [vmem:[%s1290 + $0xc] sm:$0xf]
      %v1295 = vpack.c.bf16 %v1283, %v1282
      %v1296 = vpack.c.bf16 %v1285, %v1284
      %v1297 = vpack.c.bf16 %v1287, %v1286
      %v1298 = vpack.c.bf16 %v1289, %v1288
      %v1303 = vunpack.c.l.b16 %v1291
      %v1304 = vunpack.c.l.b16 %v1292
      %v1305 = vunpack.c.l.b16 %v1293
      %v1306 = vunpack.c.l.b16 %v1294
      %v1307 = vpack.c.b16 %v1304, %v1303
      %v1308 = vpack.c.b16 %v1306, %v1305
      %v1310 = vsel %vm799, %v1307, 0
      %v1313 = vsel %vm799, %v1308, 0
      %1315 = vmatprep.subr.bf16.mxu0 0
      %1316 = vmatpush1.bf16.msra.mxu0 %v1295
      %1317 = vmatprep.subr.bf16.mxu0 0
      %1318 = vmatpush1.bf16.msra.mxu0 %v1296
      %1319 = vmatprep.subr.bf16.mxu0 0
      %1320 = vmatpush1.bf16.msra.mxu0 %v1297
      %1321 = vmatprep.subr.bf16.mxu0 0
      %1322 = vmatpush1.bf16.msra.mxu0 %v1298
      %1323 = vmatprep.subr.bf16.mxu0 0
      %1324 = vmatpush1.bf16.msra.mxu0 0
      %1325 = vmatprep.subr.bf16.mxu0 0
      %1326 = vmatpush1.bf16.msra.mxu0 0
      %1327 = vmatprep.subr.bf16.mxu0 0
      %1328 = vmatpush1.bf16.msra.mxu0 0
      %1329 = vmatprep.subr.bf16.mxu0 0
      %1330 = vmatpush1.bf16.msra.mxu0 0
      %1331 = vmatprep.subr.bf16.mxu0 0
      %1332 = vmatpush1.bf16.msra.mxu0 0
      %1333 = vmatprep.subr.bf16.mxu0 0
      %1334 = vmatpush1.bf16.msra.mxu0 0
      %1335 = vmatprep.subr.bf16.mxu0 0
      %1336 = vmatpush1.bf16.msra.mxu0 0
      %1337 = vmatprep.subr.bf16.mxu0 0
      %1338 = vmatpush1.bf16.msra.mxu0 0
      %1339 = vmatprep.subr.bf16.mxu0 0
      %1340 = vmatpush1.bf16.msra.mxu0 0
      %1341 = vmatprep.subr.bf16.mxu0 0
      %1342 = vmatpush1.bf16.msra.mxu0 0
      %1343 = vmatprep.subr.bf16.mxu0 0
      %1344 = vmatpush1.bf16.msra.mxu0 0
      %1345 = vmatprep.subr.bf16.mxu0 0
      %1346 = vmatpush1.bf16.msra.mxu0 0
      %1347 = vmatprep.mubr.bf16.mxu0 0
      %1348 = vmatmul.mubr.bf16.gmra.mrb[0].mxu0 %v1310
      %v1349 = vpop.f32.mrb[0].mxu0
      %v1350 = vadd.f32 0.0, %v1349
      %v1351 = vpop.f32.mrb[0].mxu0
      %v1352 = vpop.f32.mrb[0].mxu0
      %v1353 = vadd.f32 0.0, %v1352
      %v1354 = vpop.f32.mrb[0].mxu0
      %1355 = vmatprep.mubr.bf16.mxu0 0
      %1356 = vmatmul.mubr.bf16.gmra.mrb[0].mxu0 %v1313
      %v1357 = vpop.f32.mrb[0].mxu0
      %v1358 = vadd.f32 0.0, %v1357
      %v1359 = vpop.f32.mrb[0].mxu0
      %v1360 = vpop.f32.mrb[0].mxu0
      %v1361 = vadd.f32 0.0, %v1360
      %v1362 = vpop.f32.mrb[0].mxu0
      %1363 = vdwg.mxu0
      %v1364 = vadd.f32 %v1252, %v1350
      %v1365 = vadd.f32 %v1253, %v1353
      %v1366 = vadd.f32 %v1254, %v1358
      %v1367 = vadd.f32 %v1255, %v1361
      %s1368 = scalar_lea.vmem %s2, 64
      %v1369 = vld [vmem:[%s1368] sm:$0xf]
      %v1370 = vld [vmem:[%s1368 + $0x4] sm:$0xf]
      %v1371 = vld [vmem:[%s1368 + $0x8] sm:$0xf]
      %v1372 = vld [vmem:[%s1368 + $0xc] sm:$0xf]
      %v1373 = vpack.c.bf16 %v856, %v855
      %v1374 = vpack.c.bf16 %v858, %v857
      %v1375 = vpack.c.bf16 %v860, %v859
      %v1376 = vpack.c.bf16 %v862, %v861
      %v1381 = vunpack.c.l.b16 %v1369
      %v1382 = vunpack.c.l.b16 %v1370
      %v1383 = vunpack.c.l.b16 %v1371
      %v1384 = vunpack.c.l.b16 %v1372
      %v1385 = vpack.c.b16 %v1382, %v1381
      %v1386 = vpack.c.b16 %v1384, %v1383
      %v1388 = vsel %vm799, %v1385, 0
      %v1391 = vsel %vm799, %v1386, 0
      %1393 = vmatprep.subr.bf16.mxu0 0
      %1394 = vmatpush1.bf16.msra.mxu0 %v1373
      %1395 = vmatprep.subr.bf16.mxu0 0
      %1396 = vmatpush1.bf16.msra.mxu0 %v1374
      %1397 = vmatprep.subr.bf16.mxu0 0
      %1398 = vmatpush1.bf16.msra.mxu0 %v1375
      %1399 = vmatprep.subr.bf16.mxu0 0
      %1400 = vmatpush1.bf16.msra.mxu0 %v1376
      %1401 = vmatprep.subr.bf16.mxu0 0
      %1402 = vmatpush1.bf16.msra.mxu0 0
      %1403 = vmatprep.subr.bf16.mxu0 0
      %1404 = vmatpush1.bf16.msra.mxu0 0
      %1405 = vmatprep.subr.bf16.mxu0 0
      %1406 = vmatpush1.bf16.msra.mxu0 0
      %1407 = vmatprep.subr.bf16.mxu0 0
      %1408 = vmatpush1.bf16.msra.mxu0 0
      %1409 = vmatprep.subr.bf16.mxu0 0
      %1410 = vmatpush1.bf16.msra.mxu0 0
      %1411 = vmatprep.subr.bf16.mxu0 0
      %1412 = vmatpush1.bf16.msra.mxu0 0
      %1413 = vmatprep.subr.bf16.mxu0 0
      %1414 = vmatpush1.bf16.msra.mxu0 0
      %1415 = vmatprep.subr.bf16.mxu0 0
      %1416 = vmatpush1.bf16.msra.mxu0 0
      %1417 = vmatprep.subr.bf16.mxu0 0
      %1418 = vmatpush1.bf16.msra.mxu0 0
      %1419 = vmatprep.subr.bf16.mxu0 0
      %1420 = vmatpush1.bf16.msra.mxu0 0
      %1421 = vmatprep.subr.bf16.mxu0 0
      %1422 = vmatpush1.bf16.msra.mxu0 0
      %1423 = vmatprep.subr.bf16.mxu0 0
      %1424 = vmatpush1.bf16.msra.mxu0 0
      %1425 = vmatprep.mubr.bf16.mxu0 0
      %1426 = vmatmul.mubr.bf16.gmra.mrb[0].mxu0 %v1388
      %v1427 = vpop.f32.mrb[0].mxu0
      %v1428 = vadd.f32 0.0, %v1427
      %v1429 = vpop.f32.mrb[0].mxu0
      %v1430 = vpop.f32.mrb[0].mxu0
      %v1431 = vadd.f32 0.0, %v1430
      %v1432 = vpop.f32.mrb[0].mxu0
      %1433 = vmatprep.mubr.bf16.mxu0 0
      %1434 = vmatmul.mubr.bf16.gmra.mrb[0].mxu0 %v1391
      %v1435 = vpop.f32.mrb[0].mxu0
      %v1436 = vadd.f32 0.0, %v1435
      %v1437 = vpop.f32.mrb[0].mxu0
      %v1438 = vpop.f32.mrb[0].mxu0
      %v1439 = vadd.f32 0.0, %v1438
      %v1440 = vpop.f32.mrb[0].mxu0
      %1441 = vdwg.mxu0
      %v1442 = vadd.f32 %v1364, %v1428
      %v1443 = vadd.f32 %v1365, %v1431
      %v1444 = vadd.f32 %v1366, %v1436
      %v1445 = vadd.f32 %v1367, %v1439
      %v1446 = vsel %vm1142, 1, 0
      %vm1447 = vcmp.eq.s32.totalorder %v1446, 1
      %1448 = vrot.lane.b32.xlu0 %v908, 127
      %v1449 = vpop.permute.xlu0 %1448
      %1450 = vrot.lane.b32.xlu0 %v909, 127
      %v1451 = vpop.permute.xlu0 %1450
      %1452 = vrot.lane.b32.xlu0 %v910, 127
      %v1453 = vpop.permute.xlu0 %1452
      %1454 = vrot.lane.b32.xlu0 %v911, 127
      %v1455 = vpop.permute.xlu0 %1454
      %1456 = vrot.lane.b32.xlu0 %v912, 127
      %v1457 = vpop.permute.xlu0 %1456
      %1458 = vrot.lane.b32.xlu0 %v913, 127
      %v1459 = vpop.permute.xlu0 %1458
      %1460 = vrot.lane.b32.xlu0 %v914, 127
      %v1461 = vpop.permute.xlu0 %1460
      %1462 = vrot.lane.b32.xlu0 %v915, 127
      %v1463 = vpop.permute.xlu0 %1462
      %v1472 = vsel %vm1447, %v1449, 0.0
      %v1473 = vsel %vm1447, %v1451, 0.0
      %v1474 = vsel %vm1447, %v1453, 0.0
      %v1475 = vsel %vm1447, %v1455, 0.0
      %v1476 = vsel %vm1447, %v1457, 0.0
      %v1477 = vsel %vm1447, %v1459, 0.0
      %v1478 = vsel %vm1447, %v1461, 0.0
      %v1479 = vsel %vm1447, %v1463, 0.0
      %s1480 = scalar_lea.vmem %s2, 80
      %v1481 = vld [vmem:[%s1480] sm:$0xf]
      %v1482 = vld [vmem:[%s1480 + $0x4] sm:$0xf]
      %v1483 = vld [vmem:[%s1480 + $0x8] sm:$0xf]
      %v1484 = vld [vmem:[%s1480 + $0xc] sm:$0xf]
      %v1485 = vpack.c.bf16 %v1473, %v1472
      %v1486 = vpack.c.bf16 %v1475, %v1474
      %v1487 = vpack.c.bf16 %v1477, %v1476
      %v1488 = vpack.c.bf16 %v1479, %v1478
      %v1493 = vunpack.c.l.b16 %v1481
      %v1494 = vunpack.c.l.b16 %v1482
      %v1495 = vunpack.c.l.b16 %v1483
      %v1496 = vunpack.c.l.b16 %v1484
      %v1497 = vpack.c.b16 %v1494, %v1493
      %v1498 = vpack.c.b16 %v1496, %v1495
      %v1500 = vsel %vm799, %v1497, 0
      %v1503 = vsel %vm799, %v1498, 0
      %1505 = vmatprep.subr.bf16.mxu0 0
      %1506 = vmatpush1.bf16.msra.mxu0 %v1485
      %1507 = vmatprep.subr.bf16.mxu0 0
      %1508 = vmatpush1.bf16.msra.mxu0 %v1486
      %1509 = vmatprep.subr.bf16.mxu0 0
      %1510 = vmatpush1.bf16.msra.mxu0 %v1487
      %1511 = vmatprep.subr.bf16.mxu0 0
      %1512 = vmatpush1.bf16.msra.mxu0 %v1488
      %1513 = vmatprep.subr.bf16.mxu0 0
      %1514 = vmatpush1.bf16.msra.mxu0 0
      %1515 = vmatprep.subr.bf16.mxu0 0
      %1516 = vmatpush1.bf16.msra.mxu0 0
      %1517 = vmatprep.subr.bf16.mxu0 0
      %1518 = vmatpush1.bf16.msra.mxu0 0
      %1519 = vmatprep.subr.bf16.mxu0 0
      %1520 = vmatpush1.bf16.msra.mxu0 0
      %1521 = vmatprep.subr.bf16.mxu0 0
      %1522 = vmatpush1.bf16.msra.mxu0 0
      %1523 = vmatprep.subr.bf16.mxu0 0
      %1524 = vmatpush1.bf16.msra.mxu0 0
      %1525 = vmatprep.subr.bf16.mxu0 0
      %1526 = vmatpush1.bf16.msra.mxu0 0
      %1527 = vmatprep.subr.bf16.mxu0 0
      %1528 = vmatpush1.bf16.msra.mxu0 0
      %1529 = vmatprep.subr.bf16.mxu0 0
      %1530 = vmatpush1.bf16.msra.mxu0 0
      %1531 = vmatprep.subr.bf16.mxu0 0
      %1532 = vmatpush1.bf16.msra.mxu0 0
      %1533 = vmatprep.subr.bf16.mxu0 0
      %1534 = vmatpush1.bf16.msra.mxu0 0
      %1535 = vmatprep.subr.bf16.mxu0 0
      %1536 = vmatpush1.bf16.msra.mxu0 0
      %1537 = vmatprep.mubr.bf16.mxu0 0
      %1538 = vmatmul.mubr.bf16.gmra.mrb[0].mxu0 %v1500
      %v1539 = vpop.f32.mrb[0].mxu0
      %v1540 = vadd.f32 0.0, %v1539
      %v1541 = vpop.f32.mrb[0].mxu0
      %v1542 = vpop.f32.mrb[0].mxu0
      %v1543 = vadd.f32 0.0, %v1542
      %v1544 = vpop.f32.mrb[0].mxu0
      %1545 = vmatprep.mubr.bf16.mxu0 0
      %1546 = vmatmul.mubr.bf16.gmra.mrb[0].mxu0 %v1503
      %v1547 = vpop.f32.mrb[0].mxu0
      %v1548 = vadd.f32 0.0, %v1547
      %v1549 = vpop.f32.mrb[0].mxu0
      %v1550 = vpop.f32.mrb[0].mxu0
      %v1551 = vadd.f32 0.0, %v1550
      %v1552 = vpop.f32.mrb[0].mxu0
      %1553 = vdwg.mxu0
      %v1554 = vadd.f32 %v1442, %v1540
      %v1555 = vadd.f32 %v1443, %v1543
      %v1556 = vadd.f32 %v1444, %v1548
      %v1557 = vadd.f32 %v1445, %v1551
      %vm1558 = vcmp.lt.s32.totalorder %v866, 7
      %vm1559 = vmand %vm916, %vm1558
      %v1560 = vsel %vm1559, 1, 0
      %vm1561 = vcmp.eq.s32.totalorder %v1560, 1
      %1562 = vrot.lane.b32.xlu0 %v908, 121
      %v1563 = vpop.permute.xlu0 %1562
      %1564 = vrot.lane.b32.xlu0 %v909, 121
      %v1565 = vpop.permute.xlu0 %1564
      %1566 = vrot.lane.b32.xlu0 %v910, 121
      %v1567 = vpop.permute.xlu0 %1566
      %1568 = vrot.lane.b32.xlu0 %v911, 121
      %v1569 = vpop.permute.xlu0 %1568
      %1570 = vrot.lane.b32.xlu0 %v912, 121
      %v1571 = vpop.permute.xlu0 %1570
      %1572 = vrot.lane.b32.xlu0 %v913, 121
      %v1573 = vpop.permute.xlu0 %1572
      %1574 = vrot.lane.b32.xlu0 %v914, 121
      %v1575 = vpop.permute.xlu0 %1574
      %1576 = vrot.lane.b32.xlu0 %v915, 121
      %v1577 = vpop.permute.xlu0 %1576
      %v1586 = vsel %vm1561, %v1563, 0.0
      %v1587 = vsel %vm1561, %v1565, 0.0
      %v1588 = vsel %vm1561, %v1567, 0.0
      %v1589 = vsel %vm1561, %v1569, 0.0
      %v1590 = vsel %vm1561, %v1571, 0.0
      %v1591 = vsel %vm1561, %v1573, 0.0
      %v1592 = vsel %vm1561, %v1575, 0.0
      %v1593 = vsel %vm1561, %v1577, 0.0
      %s1594 = scalar_lea.vmem %s2, 96
      %v1595 = vld [vmem:[%s1594] sm:$0xf]
      %v1596 = vld [vmem:[%s1594 + $0x4] sm:$0xf]
      %v1597 = vld [vmem:[%s1594 + $0x8] sm:$0xf]
      %v1598 = vld [vmem:[%s1594 + $0xc] sm:$0xf]
      %v1599 = vpack.c.bf16 %v1587, %v1586
      %v1600 = vpack.c.bf16 %v1589, %v1588
      %v1601 = vpack.c.bf16 %v1591, %v1590
      %v1602 = vpack.c.bf16 %v1593, %v1592
      %v1607 = vunpack.c.l.b16 %v1595
      %v1608 = vunpack.c.l.b16 %v1596
      %v1609 = vunpack.c.l.b16 %v1597
      %v1610 = vunpack.c.l.b16 %v1598
      %v1611 = vpack.c.b16 %v1608, %v1607
      %v1612 = vpack.c.b16 %v1610, %v1609
      %v1614 = vsel %vm799, %v1611, 0
      %v1617 = vsel %vm799, %v1612, 0
      %1619 = vmatprep.subr.bf16.mxu0 0
      %1620 = vmatpush1.bf16.msra.mxu0 %v1599
      %1621 = vmatprep.subr.bf16.mxu0 0
      %1622 = vmatpush1.bf16.msra.mxu0 %v1600
      %1623 = vmatprep.subr.bf16.mxu0 0
      %1624 = vmatpush1.bf16.msra.mxu0 %v1601
      %1625 = vmatprep.subr.bf16.mxu0 0
      %1626 = vmatpush1.bf16.msra.mxu0 %v1602
      %1627 = vmatprep.subr.bf16.mxu0 0
      %1628 = vmatpush1.bf16.msra.mxu0 0
      %1629 = vmatprep.subr.bf16.mxu0 0
      %1630 = vmatpush1.bf16.msra.mxu0 0
      %1631 = vmatprep.subr.bf16.mxu0 0
      %1632 = vmatpush1.bf16.msra.mxu0 0
      %1633 = vmatprep.subr.bf16.mxu0 0
      %1634 = vmatpush1.bf16.msra.mxu0 0
      %1635 = vmatprep.subr.bf16.mxu0 0
      %1636 = vmatpush1.bf16.msra.mxu0 0
      %1637 = vmatprep.subr.bf16.mxu0 0
      %1638 = vmatpush1.bf16.msra.mxu0 0
      %1639 = vmatprep.subr.bf16.mxu0 0
      %1640 = vmatpush1.bf16.msra.mxu0 0
      %1641 = vmatprep.subr.bf16.mxu0 0
      %1642 = vmatpush1.bf16.msra.mxu0 0
      %1643 = vmatprep.subr.bf16.mxu0 0
      %1644 = vmatpush1.bf16.msra.mxu0 0
      %1645 = vmatprep.subr.bf16.mxu0 0
      %1646 = vmatpush1.bf16.msra.mxu0 0
      %1647 = vmatprep.subr.bf16.mxu0 0
      %1648 = vmatpush1.bf16.msra.mxu0 0
      %1649 = vmatprep.subr.bf16.mxu0 0
      %1650 = vmatpush1.bf16.msra.mxu0 0
      %1651 = vmatprep.mubr.bf16.mxu0 0
      %1652 = vmatmul.mubr.bf16.gmra.mrb[0].mxu0 %v1614
      %v1653 = vpop.f32.mrb[0].mxu0
      %v1654 = vadd.f32 0.0, %v1653
      %v1655 = vpop.f32.mrb[0].mxu0
      %v1656 = vpop.f32.mrb[0].mxu0
      %v1657 = vadd.f32 0.0, %v1656
      %v1658 = vpop.f32.mrb[0].mxu0
      %1659 = vmatprep.mubr.bf16.mxu0 0
      %1660 = vmatmul.mubr.bf16.gmra.mrb[0].mxu0 %v1617
      %v1661 = vpop.f32.mrb[0].mxu0
      %v1662 = vadd.f32 0.0, %v1661
      %v1663 = vpop.f32.mrb[0].mxu0
      %v1664 = vpop.f32.mrb[0].mxu0
      %v1665 = vadd.f32 0.0, %v1664
      %v1666 = vpop.f32.mrb[0].mxu0
      %1667 = vdwg.mxu0
      %v1668 = vadd.f32 %v1554, %v1654
      %v1669 = vadd.f32 %v1555, %v1657
      %v1670 = vadd.f32 %v1556, %v1662
      %v1671 = vadd.f32 %v1557, %v1665
      %v1672 = vsel %vm1558, 1, 0
      %vm1673 = vcmp.eq.s32.totalorder %v1672, 1
      %1674 = vrot.lane.b32.xlu0 %v908, 120
      %v1675 = vpop.permute.xlu0 %1674
      %1676 = vrot.lane.b32.xlu0 %v909, 120
      %v1677 = vpop.permute.xlu0 %1676
      %1678 = vrot.lane.b32.xlu0 %v910, 120
      %v1679 = vpop.permute.xlu0 %1678
      %1680 = vrot.lane.b32.xlu0 %v911, 120
      %v1681 = vpop.permute.xlu0 %1680
      %1682 = vrot.lane.b32.xlu0 %v912, 120
      %v1683 = vpop.permute.xlu0 %1682
      %1684 = vrot.lane.b32.xlu0 %v913, 120
      %v1685 = vpop.permute.xlu0 %1684
      %1686 = vrot.lane.b32.xlu0 %v914, 120
      %v1687 = vpop.permute.xlu0 %1686
      %1688 = vrot.lane.b32.xlu0 %v915, 120
      %v1689 = vpop.permute.xlu0 %1688
      %v1698 = vsel %vm1673, %v1675, 0.0
      %v1699 = vsel %vm1673, %v1677, 0.0
      %v1700 = vsel %vm1673, %v1679, 0.0
      %v1701 = vsel %vm1673, %v1681, 0.0
      %v1702 = vsel %vm1673, %v1683, 0.0
      %v1703 = vsel %vm1673, %v1685, 0.0
      %v1704 = vsel %vm1673, %v1687, 0.0
      %v1705 = vsel %vm1673, %v1689, 0.0
      %s1706 = scalar_lea.vmem %s2, 112
      %v1707 = vld [vmem:[%s1706] sm:$0xf]
      %v1708 = vld [vmem:[%s1706 + $0x4] sm:$0xf]
      %v1709 = vld [vmem:[%s1706 + $0x8] sm:$0xf]
      %v1710 = vld [vmem:[%s1706 + $0xc] sm:$0xf]
      %v1711 = vpack.c.bf16 %v1699, %v1698
      %v1712 = vpack.c.bf16 %v1701, %v1700
      %v1713 = vpack.c.bf16 %v1703, %v1702
      %v1714 = vpack.c.bf16 %v1705, %v1704
      %v1719 = vunpack.c.l.b16 %v1707
      %v1720 = vunpack.c.l.b16 %v1708
      %v1721 = vunpack.c.l.b16 %v1709
      %v1722 = vunpack.c.l.b16 %v1710
      %v1723 = vpack.c.b16 %v1720, %v1719
      %v1724 = vpack.c.b16 %v1722, %v1721
      %v1726 = vsel %vm799, %v1723, 0
      %v1729 = vsel %vm799, %v1724, 0
      %1731 = vmatprep.subr.bf16.mxu0 0
      %1732 = vmatpush1.bf16.msra.mxu0 %v1711
      %1733 = vmatprep.subr.bf16.mxu0 0
      %1734 = vmatpush1.bf16.msra.mxu0 %v1712
      %1735 = vmatprep.subr.bf16.mxu0 0
      %1736 = vmatpush1.bf16.msra.mxu0 %v1713
      %1737 = vmatprep.subr.bf16.mxu0 0
      %1738 = vmatpush1.bf16.msra.mxu0 %v1714
      %1739 = vmatprep.subr.bf16.mxu0 0
      %1740 = vmatpush1.bf16.msra.mxu0 0
      %1741 = vmatprep.subr.bf16.mxu0 0
      %1742 = vmatpush1.bf16.msra.mxu0 0
      %1743 = vmatprep.subr.bf16.mxu0 0
      %1744 = vmatpush1.bf16.msra.mxu0 0
      %1745 = vmatprep.subr.bf16.mxu0 0
      %1746 = vmatpush1.bf16.msra.mxu0 0
      %1747 = vmatprep.subr.bf16.mxu0 0
      %1748 = vmatpush1.bf16.msra.mxu0 0
      %1749 = vmatprep.subr.bf16.mxu0 0
      %1750 = vmatpush1.bf16.msra.mxu0 0
      %1751 = vmatprep.subr.bf16.mxu0 0
      %1752 = vmatpush1.bf16.msra.mxu0 0
      %1753 = vmatprep.subr.bf16.mxu0 0
      %1754 = vmatpush1.bf16.msra.mxu0 0
      %1755 = vmatprep.subr.bf16.mxu0 0
      %1756 = vmatpush1.bf16.msra.mxu0 0
      %1757 = vmatprep.subr.bf16.mxu0 0
      %1758 = vmatpush1.bf16.msra.mxu0 0
      %1759 = vmatprep.subr.bf16.mxu0 0
      %1760 = vmatpush1.bf16.msra.mxu0 0
      %1761 = vmatprep.subr.bf16.mxu0 0
      %1762 = vmatpush1.bf16.msra.mxu0 0
      %1763 = vmatprep.mubr.bf16.mxu0 0
      %1764 = vmatmul.mubr.bf16.gmra.mrb[0].mxu0 %v1726
      %v1765 = vpop.f32.mrb[0].mxu0
      %v1766 = vadd.f32 0.0, %v1765
      %v1767 = vpop.f32.mrb[0].mxu0
      %v1768 = vpop.f32.mrb[0].mxu0
      %v1769 = vadd.f32 0.0, %v1768
      %v1770 = vpop.f32.mrb[0].mxu0
      %1771 = vmatprep.mubr.bf16.mxu0 0
      %1772 = vmatmul.mubr.bf16.gmra.mrb[0].mxu0 %v1729
      %v1773 = vpop.f32.mrb[0].mxu0
      %v1774 = vadd.f32 0.0, %v1773
      %v1775 = vpop.f32.mrb[0].mxu0
      %v1776 = vpop.f32.mrb[0].mxu0
      %v1777 = vadd.f32 0.0, %v1776
      %v1778 = vpop.f32.mrb[0].mxu0
      %1779 = vdwg.mxu0
      %v1780 = vadd.f32 %v1668, %v1766
      %v1781 = vadd.f32 %v1669, %v1769
      %v1782 = vadd.f32 %v1670, %v1774
      %v1783 = vadd.f32 %v1671, %v1777
      %vm1784 = vmand %vm1142, %vm1558
      %v1785 = vsel %vm1784, 1, 0
      %vm1786 = vcmp.eq.s32.totalorder %v1785, 1
      %1787 = vrot.lane.b32.xlu0 %v908, 119
      %v1788 = vpop.permute.xlu0 %1787
      %1789 = vrot.lane.b32.xlu0 %v909, 119
      %v1790 = vpop.permute.xlu0 %1789
      %1791 = vrot.lane.b32.xlu0 %v910, 119
      %v1792 = vpop.permute.xlu0 %1791
      %1793 = vrot.lane.b32.xlu0 %v911, 119
      %v1794 = vpop.permute.xlu0 %1793
      %1795 = vrot.lane.b32.xlu0 %v912, 119
      %v1796 = vpop.permute.xlu0 %1795
      %1797 = vrot.lane.b32.xlu0 %v913, 119
      %v1798 = vpop.permute.xlu0 %1797
      %1799 = vrot.lane.b32.xlu0 %v914, 119
      %v1800 = vpop.permute.xlu0 %1799
      %1801 = vrot.lane.b32.xlu0 %v915, 119
      %v1802 = vpop.permute.xlu0 %1801
      %v1811 = vsel %vm1786, %v1788, 0.0
      %v1812 = vsel %vm1786, %v1790, 0.0
      %v1813 = vsel %vm1786, %v1792, 0.0
      %v1814 = vsel %vm1786, %v1794, 0.0
      %v1815 = vsel %vm1786, %v1796, 0.0
      %v1816 = vsel %vm1786, %v1798, 0.0
      %v1817 = vsel %vm1786, %v1800, 0.0
      %v1818 = vsel %vm1786, %v1802, 0.0
      %s1819 = scalar_lea.vmem %s2, 128
      %v1820 = vld [vmem:[%s1819] sm:$0xf]
      %v1821 = vld [vmem:[%s1819 + $0x4] sm:$0xf]
      %v1822 = vld [vmem:[%s1819 + $0x8] sm:$0xf]
      %v1823 = vld [vmem:[%s1819 + $0xc] sm:$0xf]
      %v1824 = vpack.c.bf16 %v1812, %v1811
      %v1825 = vpack.c.bf16 %v1814, %v1813
      %v1826 = vpack.c.bf16 %v1816, %v1815
      %v1827 = vpack.c.bf16 %v1818, %v1817
      %v1832 = vunpack.c.l.b16 %v1820
      %v1833 = vunpack.c.l.b16 %v1821
      %v1834 = vunpack.c.l.b16 %v1822
      %v1835 = vunpack.c.l.b16 %v1823
      %v1836 = vpack.c.b16 %v1833, %v1832
      %v1837 = vpack.c.b16 %v1835, %v1834
      %v1839 = vsel %vm799, %v1836, 0
      %v1842 = vsel %vm799, %v1837, 0
      %1844 = vmatprep.subr.bf16.mxu0 0
      %1845 = vmatpush1.bf16.msra.mxu0 %v1824
      %1846 = vmatprep.subr.bf16.mxu0 0
      %1847 = vmatpush1.bf16.msra.mxu0 %v1825
      %1848 = vmatprep.subr.bf16.mxu0 0
      %1849 = vmatpush1.bf16.msra.mxu0 %v1826
      %1850 = vmatprep.subr.bf16.mxu0 0
      %1851 = vmatpush1.bf16.msra.mxu0 %v1827
      %1852 = vmatprep.subr.bf16.mxu0 0
      %1853 = vmatpush1.bf16.msra.mxu0 0
      %1854 = vmatprep.subr.bf16.mxu0 0
      %1855 = vmatpush1.bf16.msra.mxu0 0
      %1856 = vmatprep.subr.bf16.mxu0 0
      %1857 = vmatpush1.bf16.msra.mxu0 0
      %1858 = vmatprep.subr.bf16.mxu0 0
      %1859 = vmatpush1.bf16.msra.mxu0 0
      %1860 = vmatprep.subr.bf16.mxu0 0
      %1861 = vmatpush1.bf16.msra.mxu0 0
      %1862 = vmatprep.subr.bf16.mxu0 0
      %1863 = vmatpush1.bf16.msra.mxu0 0
      %1864 = vmatprep.subr.bf16.mxu0 0
      %1865 = vmatpush1.bf16.msra.mxu0 0
      %1866 = vmatprep.subr.bf16.mxu0 0
      %1867 = vmatpush1.bf16.msra.mxu0 0
      %1868 = vmatprep.subr.bf16.mxu0 0
      %1869 = vmatpush1.bf16.msra.mxu0 0
      %1870 = vmatprep.subr.bf16.mxu0 0
      %1871 = vmatpush1.bf16.msra.mxu0 0
      %1872 = vmatprep.subr.bf16.mxu0 0
      %1873 = vmatpush1.bf16.msra.mxu0 0
      %1874 = vmatprep.subr.bf16.mxu0 0
      %1875 = vmatpush1.bf16.msra.mxu0 0
      %1876 = vmatprep.mubr.bf16.mxu0 0
      %1877 = vmatmul.mubr.bf16.gmra.mrb[0].mxu0 %v1839
      %v1878 = vpop.f32.mrb[0].mxu0
      %v1879 = vadd.f32 0.0, %v1878
      %v1880 = vpop.f32.mrb[0].mxu0
      %v1881 = vpop.f32.mrb[0].mxu0
      %v1882 = vadd.f32 0.0, %v1881
      %v1883 = vpop.f32.mrb[0].mxu0
      %1884 = vmatprep.mubr.bf16.mxu0 0
      %1885 = vmatmul.mubr.bf16.gmra.mrb[0].mxu0 %v1842
      %v1886 = vpop.f32.mrb[0].mxu0
      %v1887 = vadd.f32 0.0, %v1886
      %v1888 = vpop.f32.mrb[0].mxu0
      %v1889 = vpop.f32.mrb[0].mxu0
      %v1890 = vadd.f32 0.0, %v1889
      %v1891 = vpop.f32.mrb[0].mxu0
      %1892 = vdwg.mxu0
      %v1893 = vadd.f32 %v1780, %v1879
      %v1894 = vadd.f32 %v1781, %v1882
      %v1895 = vadd.f32 %v1782, %v1887
      %v1896 = vadd.f32 %v1783, %v1890
      %v1897 = vld [vmem:[%s3] sm:$0xff]
      %v1898 = vld [vmem:[%s3 + $0x8] sm:$0xff]
      %v1899 = vld [vmem:[%s3 + $0x10] sm:$0xff]
      %v1900 = vld [vmem:[%s3 + $0x18] sm:$0xff]
      %1902 = vset.pattern.permute.xlu0 0
      %1903 = vperm.xlu0 %1902, %v1897
      %v1904 = vpop.permute.xlu0 %1903
      %1907 = vset.pattern.permute.xlu0 0
      %1908 = vperm.xlu0 %1907, %v1898
      %v1909 = vpop.permute.xlu0 %1908
      %1912 = vset.pattern.permute.xlu0 0
      %1913 = vperm.xlu0 %1912, %v1899
      %v1914 = vpop.permute.xlu0 %1913
      %1917 = vset.pattern.permute.xlu0 0
      %1918 = vperm.xlu0 %1917, %v1900
      %v1919 = vpop.permute.xlu0 %1918
      %v1921 = vadd.f32 %v1893, %v1904
      %v1922 = vadd.f32 %v1894, %v1909
      %v1923 = vadd.f32 %v1895, %v1914
      %v1924 = vadd.f32 %v1896, %v1919
      %v1925 = vmax.f32 %v1921, 0.0
      %v1926 = vmax.f32 %v1922, 0.0
      %v1927 = vmax.f32 %v1923, 0.0
      %v1928 = vmax.f32 %v1924, 0.0
      %1929 = vrot.lane.b32.xlu0 %v1925, 64
      %v1930 = vpop.permute.xlu0 %1929
      %v1931 = vsel %vm867, %v1930, %v1925
      %1932 = vrot.lane.b32.xlu0 %v1926, 64
      %v1933 = vpop.permute.xlu0 %1932
      %v1934 = vsel %vm867, %v1933, %v1926
      %1935 = vrot.lane.b32.xlu0 %v1927, 64
      %v1936 = vpop.permute.xlu0 %1935
      %v1937 = vsel %vm867, %v1936, %v1927
      %1938 = vrot.lane.b32.xlu0 %v1928, 64
      %v1939 = vpop.permute.xlu0 %1938
      %v1940 = vsel %vm867, %v1939, %v1928
      %1941 = vrot.lane.b32.xlu0 %v1931, 64
      %v1942 = vpop.permute.xlu0 %1941
      %1943 = vrot.lane.b32.xlu0 %v1934, 64
      %v1944 = vpop.permute.xlu0 %1943
      %1945 = vrot.lane.b32.xlu0 %v1937, 64
      %v1946 = vpop.permute.xlu0 %1945
      %1947 = vrot.lane.b32.xlu0 %v1940, 64
      %v1948 = vpop.permute.xlu0 %1947
      %v1949 = vsel %vm867, %v1942, %v1925
      %v1950 = vsel %vm867, %v1944, %v1926
      %v1951 = vsel %vm867, %v1946, %v1927
      %v1952 = vsel %vm867, %v1948, %v1928
      %1957 = vrot.lane.b32.xlu0 %v1949, 73
      %v1958 = vpop.permute.xlu0 %1957
      %1959 = vrot.lane.b32.xlu0 %v1950, 73
      %v1960 = vpop.permute.xlu0 %1959
      %1961 = vrot.lane.b32.xlu0 %v1951, 73
      %v1962 = vpop.permute.xlu0 %1961
      %1963 = vrot.lane.b32.xlu0 %v1952, 73
      %v1964 = vpop.permute.xlu0 %1963
      %v1969 = vsel %vm920, %v1958, 0.0
      %v1970 = vsel %vm920, %v1960, 0.0
      %v1971 = vsel %vm920, %v1962, 0.0
      %v1972 = vsel %vm920, %v1964, 0.0
      %v1973 = vld [vmem:[%s4] sm:$0xf]
      %v1974 = vld [vmem:[%s4 + $0x4] sm:$0xf]
      %v1975 = vld [vmem:[%s4 + $0x8] sm:$0xf]
      %v1976 = vld [vmem:[%s4 + $0xc] sm:$0xf]
      %v1977 = vpack.c.bf16 %v1970, %v1969
      %v1978 = vpack.c.bf16 %v1972, %v1971
      %1979 = vrot.lane.b32.xlu0 %v1949, 72
      %v1980 = vpop.permute.xlu0 %1979
      %1981 = vrot.lane.b32.xlu0 %v1950, 72
      %v1982 = vpop.permute.xlu0 %1981
      %1983 = vrot.lane.b32.xlu0 %v1951, 72
      %v1984 = vpop.permute.xlu0 %1983
      %1985 = vrot.lane.b32.xlu0 %v1952, 72
      %v1986 = vpop.permute.xlu0 %1985
      %v1991 = vsel %vm970, %v1980, 0.0
      %v1992 = vsel %vm970, %v1982, 0.0
      %v1993 = vsel %vm970, %v1984, 0.0
      %v1994 = vsel %vm970, %v1986, 0.0
      %s1995 = scalar_lea.vmem %s4, 16
      %v1996 = vld [vmem:[%s1995] sm:$0xf]
      %v1997 = vld [vmem:[%s1995 + $0x4] sm:$0xf]
      %v1998 = vld [vmem:[%s1995 + $0x8] sm:$0xf]
      %v1999 = vld [vmem:[%s1995 + $0xc] sm:$0xf]
      %v2000 = vpack.c.bf16 %v1992, %v1991
      %v2001 = vpack.c.bf16 %v1994, %v1993
      %v2006 = vunpack.c.l.b16 %v1996
      %v2007 = vunpack.c.l.b16 %v1997
      %v2008 = vunpack.c.l.b16 %v1998
      %v2009 = vunpack.c.l.b16 %v1999
      %v2010 = vpack.c.b16 %v2007, %v2006
      %v2011 = vpack.c.b16 %v2009, %v2008
      %vm2012 = vcmask 261120
      %v2014 = vsel %vm2012, %v2010, 0
      %v2017 = vsel %vm2012, %v2011, 0
      %2019 = vmatprep.subr.bf16.mxu0 0
      %2020 = vmatpush1.bf16.msra.mxu0 %v2000
      %2021 = vmatprep.subr.bf16.mxu0 0
      %2022 = vmatpush1.bf16.msra.mxu0 %v2001
      %2023 = vmatprep.subr.bf16.mxu0 0
      %2024 = vmatpush1.bf16.msra.mxu0 0
      %2025 = vmatprep.subr.bf16.mxu0 0
      %2026 = vmatpush1.bf16.msra.mxu0 0
      %2027 = vmatprep.subr.bf16.mxu0 0
      %2028 = vmatpush1.bf16.msra.mxu0 0
      %2029 = vmatprep.subr.bf16.mxu0 0
      %2030 = vmatpush1.bf16.msra.mxu0 0
      %2031 = vmatprep.subr.bf16.mxu0 0
      %2032 = vmatpush1.bf16.msra.mxu0 0
      %2033 = vmatprep.subr.bf16.mxu0 0
      %2034 = vmatpush1.bf16.msra.mxu0 0
      %2035 = vmatprep.subr.bf16.mxu0 0
      %2036 = vmatpush1.bf16.msra.mxu0 0
      %2037 = vmatprep.subr.bf16.mxu0 0
      %2038 = vmatpush1.bf16.msra.mxu0 0
      %2039 = vmatprep.subr.bf16.mxu0 0
      %2040 = vmatpush1.bf16.msra.mxu0 0
      %2041 = vmatprep.subr.bf16.mxu0 0
      %2042 = vmatpush1.bf16.msra.mxu0 0
      %2043 = vmatprep.subr.bf16.mxu0 0
      %2044 = vmatpush1.bf16.msra.mxu0 0
      %2045 = vmatprep.subr.bf16.mxu0 0
      %2046 = vmatpush1.bf16.msra.mxu0 0
      %2047 = vmatprep.subr.bf16.mxu0 0
      %2048 = vmatpush1.bf16.msra.mxu0 0
      %2049 = vmatprep.subr.bf16.mxu0 0
      %2050 = vmatpush1.bf16.msra.mxu0 0
      %2051 = vmatprep.mubr.bf16.mxu0 0
      %2052 = vmatmul.mubr.bf16.gmra.mrb[0].mxu0 %v2014
      %v2053 = vpop.f32.mrb[0].mxu0
      %v2054 = vadd.f32 0.0, %v2053
      %v2055 = vpop.f32.mrb[0].mxu0
      %v2056 = vpop.f32.mrb[0].mxu0
      %v2057 = vadd.f32 0.0, %v2056
      %v2058 = vpop.f32.mrb[0].mxu0
      %2059 = vmatprep.mubr.bf16.mxu0 0
      %2060 = vmatmul.mubr.bf16.gmra.mrb[0].mxu0 %v2017
      %v2061 = vpop.f32.mrb[0].mxu0
      %v2062 = vadd.f32 0.0, %v2061
      %v2063 = vpop.f32.mrb[0].mxu0
      %v2064 = vpop.f32.mrb[0].mxu0
      %v2065 = vadd.f32 0.0, %v2064
      %v2066 = vpop.f32.mrb[0].mxu0
      %2067 = vdwg.mxu0
      %v2072 = vunpack.c.l.b16 %v1973
      %v2073 = vunpack.c.l.b16 %v1974
      %v2074 = vunpack.c.l.b16 %v1975
      %v2075 = vunpack.c.l.b16 %v1976
      %v2076 = vpack.c.b16 %v2073, %v2072
      %v2077 = vpack.c.b16 %v2075, %v2074
      %v2079 = vsel %vm2012, %v2076, 0
      %v2082 = vsel %vm2012, %v2077, 0
      %2084 = vmatprep.subr.bf16.mxu0 0
      %2085 = vmatpush1.bf16.msra.mxu0 %v1977
      %2086 = vmatprep.subr.bf16.mxu0 0
      %2087 = vmatpush1.bf16.msra.mxu0 %v1978
      %2088 = vmatprep.subr.bf16.mxu0 0
      %2089 = vmatpush1.bf16.msra.mxu0 0
      %2090 = vmatprep.subr.bf16.mxu0 0
      %2091 = vmatpush1.bf16.msra.mxu0 0
      %2092 = vmatprep.subr.bf16.mxu0 0
      %2093 = vmatpush1.bf16.msra.mxu0 0
      %2094 = vmatprep.subr.bf16.mxu0 0
      %2095 = vmatpush1.bf16.msra.mxu0 0
      %2096 = vmatprep.subr.bf16.mxu0 0
      %2097 = vmatpush1.bf16.msra.mxu0 0
      %2098 = vmatprep.subr.bf16.mxu0 0
      %2099 = vmatpush1.bf16.msra.mxu0 0
      %2100 = vmatprep.subr.bf16.mxu0 0
      %2101 = vmatpush1.bf16.msra.mxu0 0
      %2102 = vmatprep.subr.bf16.mxu0 0
      %2103 = vmatpush1.bf16.msra.mxu0 0
      %2104 = vmatprep.subr.bf16.mxu0 0
      %2105 = vmatpush1.bf16.msra.mxu0 0
      %2106 = vmatprep.subr.bf16.mxu0 0
      %2107 = vmatpush1.bf16.msra.mxu0 0
      %2108 = vmatprep.subr.bf16.mxu0 0
      %2109 = vmatpush1.bf16.msra.mxu0 0
      %2110 = vmatprep.subr.bf16.mxu0 0
      %2111 = vmatpush1.bf16.msra.mxu0 0
      %2112 = vmatprep.subr.bf16.mxu0 0
      %2113 = vmatpush1.bf16.msra.mxu0 0
      %2114 = vmatprep.subr.bf16.mxu0 0
      %2115 = vmatpush1.bf16.msra.mxu0 0
      %2116 = vmatprep.mubr.bf16.mxu0 0
      %2117 = vmatmul.mubr.bf16.gmra.mrb[0].mxu0 %v2079
      %v2118 = vpop.f32.mrb[0].mxu0
      %v2119 = vadd.f32 %v2054, %v2118
      %v2120 = vpop.f32.mrb[0].mxu0
      %v2121 = vpop.f32.mrb[0].mxu0
      %v2122 = vadd.f32 %v2057, %v2121
      %v2123 = vpop.f32.mrb[0].mxu0
      %2124 = vmatprep.mubr.bf16.mxu0 0
      %2125 = vmatmul.mubr.bf16.gmra.mrb[0].mxu0 %v2082
      %v2126 = vpop.f32.mrb[0].mxu0
      %v2127 = vadd.f32 %v2062, %v2126
      %v2128 = vpop.f32.mrb[0].mxu0
      %v2129 = vpop.f32.mrb[0].mxu0
      %v2130 = vadd.f32 %v2065, %v2129
      %v2131 = vpop.f32.mrb[0].mxu0
      %2132 = vdwg.mxu0
      %2133 = vrot.lane.b32.xlu0 %v1949, 71
      %v2134 = vpop.permute.xlu0 %2133
      %2135 = vrot.lane.b32.xlu0 %v1950, 71
      %v2136 = vpop.permute.xlu0 %2135
      %2137 = vrot.lane.b32.xlu0 %v1951, 71
      %v2138 = vpop.permute.xlu0 %2137
      %2139 = vrot.lane.b32.xlu0 %v1952, 71
      %v2140 = vpop.permute.xlu0 %2139
      %v2145 = vsel %vm1145, %v2134, 0.0
      %v2146 = vsel %vm1145, %v2136, 0.0
      %v2147 = vsel %vm1145, %v2138, 0.0
      %v2148 = vsel %vm1145, %v2140, 0.0
      %s2149 = scalar_lea.vmem %s4, 32
      %v2150 = vld [vmem:[%s2149] sm:$0xf]
      %v2151 = vld [vmem:[%s2149 + $0x4] sm:$0xf]
      %v2152 = vld [vmem:[%s2149 + $0x8] sm:$0xf]
      %v2153 = vld [vmem:[%s2149 + $0xc] sm:$0xf]
      %v2154 = vpack.c.bf16 %v2146, %v2145
      %v2155 = vpack.c.bf16 %v2148, %v2147
      %v2160 = vunpack.c.l.b16 %v2150
      %v2161 = vunpack.c.l.b16 %v2151
      %v2162 = vunpack.c.l.b16 %v2152
      %v2163 = vunpack.c.l.b16 %v2153
      %v2164 = vpack.c.b16 %v2161, %v2160
      %v2165 = vpack.c.b16 %v2163, %v2162
      %v2167 = vsel %vm2012, %v2164, 0
      %v2170 = vsel %vm2012, %v2165, 0
      %2172 = vmatprep.subr.bf16.mxu0 0
      %2173 = vmatpush1.bf16.msra.mxu0 %v2154
      %2174 = vmatprep.subr.bf16.mxu0 0
      %2175 = vmatpush1.bf16.msra.mxu0 %v2155
      %2176 = vmatprep.subr.bf16.mxu0 0
      %2177 = vmatpush1.bf16.msra.mxu0 0
      %2178 = vmatprep.subr.bf16.mxu0 0
      %2179 = vmatpush1.bf16.msra.mxu0 0
      %2180 = vmatprep.subr.bf16.mxu0 0
      %2181 = vmatpush1.bf16.msra.mxu0 0
      %2182 = vmatprep.subr.bf16.mxu0 0
      %2183 = vmatpush1.bf16.msra.mxu0 0
      %2184 = vmatprep.subr.bf16.mxu0 0
      %2185 = vmatpush1.bf16.msra.mxu0 0
      %2186 = vmatprep.subr.bf16.mxu0 0
      %2187 = vmatpush1.bf16.msra.mxu0 0
      %2188 = vmatprep.subr.bf16.mxu0 0
      %2189 = vmatpush1.bf16.msra.mxu0 0
      %2190 = vmatprep.subr.bf16.mxu0 0
      %2191 = vmatpush1.bf16.msra.mxu0 0
      %2192 = vmatprep.subr.bf16.mxu0 0
      %2193 = vmatpush1.bf16.msra.mxu0 0
      %2194 = vmatprep.subr.bf16.mxu0 0
      %2195 = vmatpush1.bf16.msra.mxu0 0
      %2196 = vmatprep.subr.bf16.mxu0 0
      %2197 = vmatpush1.bf16.msra.mxu0 0
      %2198 = vmatprep.subr.bf16.mxu0 0
      %2199 = vmatpush1.bf16.msra.mxu0 0
      %2200 = vmatprep.subr.bf16.mxu0 0
      %2201 = vmatpush1.bf16.msra.mxu0 0
      %2202 = vmatprep.subr.bf16.mxu0 0
      %2203 = vmatpush1.bf16.msra.mxu0 0
      %2204 = vmatprep.mubr.bf16.mxu0 0
      %2205 = vmatmul.mubr.bf16.gmra.mrb[0].mxu0 %v2167
      %v2206 = vpop.f32.mrb[0].mxu0
      %v2207 = vadd.f32 0.0, %v2206
      %v2208 = vpop.f32.mrb[0].mxu0
      %v2209 = vpop.f32.mrb[0].mxu0
      %v2210 = vadd.f32 0.0, %v2209
      %v2211 = vpop.f32.mrb[0].mxu0
      %2212 = vmatprep.mubr.bf16.mxu0 0
      %2213 = vmatmul.mubr.bf16.gmra.mrb[0].mxu0 %v2170
      %v2214 = vpop.f32.mrb[0].mxu0
      %v2215 = vadd.f32 0.0, %v2214
      %v2216 = vpop.f32.mrb[0].mxu0
      %v2217 = vpop.f32.mrb[0].mxu0
      %v2218 = vadd.f32 0.0, %v2217
      %v2219 = vpop.f32.mrb[0].mxu0
      %2220 = vdwg.mxu0
      %v2221 = vadd.f32 %v2119, %v2207
      %v2222 = vadd.f32 %v2122, %v2210
      %v2223 = vadd.f32 %v2127, %v2215
      %v2224 = vadd.f32 %v2130, %v2218
      %2225 = vrot.lane.b32.xlu0 %v1949, 65
      %v2226 = vpop.permute.xlu0 %2225
      %2227 = vrot.lane.b32.xlu0 %v1950, 65
      %v2228 = vpop.permute.xlu0 %2227
      %2229 = vrot.lane.b32.xlu0 %v1951, 65
      %v2230 = vpop.permute.xlu0 %2229
      %2231 = vrot.lane.b32.xlu0 %v1952, 65
      %v2232 = vpop.permute.xlu0 %2231
      %v2237 = vsel %vm1257, %v2226, 0.0
      %v2238 = vsel %vm1257, %v2228, 0.0
      %v2239 = vsel %vm1257, %v2230, 0.0
      %v2240 = vsel %vm1257, %v2232, 0.0
      %s2241 = scalar_lea.vmem %s4, 48
      %v2242 = vld [vmem:[%s2241] sm:$0xf]
      %v2243 = vld [vmem:[%s2241 + $0x4] sm:$0xf]
      %v2244 = vld [vmem:[%s2241 + $0x8] sm:$0xf]
      %v2245 = vld [vmem:[%s2241 + $0xc] sm:$0xf]
      %v2246 = vpack.c.bf16 %v2238, %v2237
      %v2247 = vpack.c.bf16 %v2240, %v2239
      %v2252 = vunpack.c.l.b16 %v2242
      %v2253 = vunpack.c.l.b16 %v2243
      %v2254 = vunpack.c.l.b16 %v2244
      %v2255 = vunpack.c.l.b16 %v2245
      %v2256 = vpack.c.b16 %v2253, %v2252
      %v2257 = vpack.c.b16 %v2255, %v2254
      %v2259 = vsel %vm2012, %v2256, 0
      %v2262 = vsel %vm2012, %v2257, 0
      %2264 = vmatprep.subr.bf16.mxu0 0
      %2265 = vmatpush1.bf16.msra.mxu0 %v2246
      %2266 = vmatprep.subr.bf16.mxu0 0
      %2267 = vmatpush1.bf16.msra.mxu0 %v2247
      %2268 = vmatprep.subr.bf16.mxu0 0
      %2269 = vmatpush1.bf16.msra.mxu0 0
      %2270 = vmatprep.subr.bf16.mxu0 0
      %2271 = vmatpush1.bf16.msra.mxu0 0
      %2272 = vmatprep.subr.bf16.mxu0 0
      %2273 = vmatpush1.bf16.msra.mxu0 0
      %2274 = vmatprep.subr.bf16.mxu0 0
      %2275 = vmatpush1.bf16.msra.mxu0 0
      %2276 = vmatprep.subr.bf16.mxu0 0
      %2277 = vmatpush1.bf16.msra.mxu0 0
      %2278 = vmatprep.subr.bf16.mxu0 0
      %2279 = vmatpush1.bf16.msra.mxu0 0
      %2280 = vmatprep.subr.bf16.mxu0 0
      %2281 = vmatpush1.bf16.msra.mxu0 0
      %2282 = vmatprep.subr.bf16.mxu0 0
      %2283 = vmatpush1.bf16.msra.mxu0 0
      %2284 = vmatprep.subr.bf16.mxu0 0
      %2285 = vmatpush1.bf16.msra.mxu0 0
      %2286 = vmatprep.subr.bf16.mxu0 0
      %2287 = vmatpush1.bf16.msra.mxu0 0
      %2288 = vmatprep.subr.bf16.mxu0 0
      %2289 = vmatpush1.bf16.msra.mxu0 0
      %2290 = vmatprep.subr.bf16.mxu0 0
      %2291 = vmatpush1.bf16.msra.mxu0 0
      %2292 = vmatprep.subr.bf16.mxu0 0
      %2293 = vmatpush1.bf16.msra.mxu0 0
      %2294 = vmatprep.subr.bf16.mxu0 0
      %2295 = vmatpush1.bf16.msra.mxu0 0
      %2296 = vmatprep.mubr.bf16.mxu0 0
      %2297 = vmatmul.mubr.bf16.gmra.mrb[0].mxu0 %v2259
      %v2298 = vpop.f32.mrb[0].mxu0
      %v2299 = vadd.f32 0.0, %v2298
      %v2300 = vpop.f32.mrb[0].mxu0
      %v2301 = vpop.f32.mrb[0].mxu0
      %v2302 = vadd.f32 0.0, %v2301
      %v2303 = vpop.f32.mrb[0].mxu0
      %2304 = vmatprep.mubr.bf16.mxu0 0
      %2305 = vmatmul.mubr.bf16.gmra.mrb[0].mxu0 %v2262
      %v2306 = vpop.f32.mrb[0].mxu0
      %v2307 = vadd.f32 0.0, %v2306
      %v2308 = vpop.f32.mrb[0].mxu0
      %v2309 = vpop.f32.mrb[0].mxu0
      %v2310 = vadd.f32 0.0, %v2309
      %v2311 = vpop.f32.mrb[0].mxu0
      %2312 = vdwg.mxu0
      %v2313 = vadd.f32 %v2221, %v2299
      %v2314 = vadd.f32 %v2222, %v2302
      %v2315 = vadd.f32 %v2223, %v2307
      %v2316 = vadd.f32 %v2224, %v2310
      %s2317 = scalar_lea.vmem %s4, 64
      %v2318 = vld [vmem:[%s2317] sm:$0xf]
      %v2319 = vld [vmem:[%s2317 + $0x4] sm:$0xf]
      %v2320 = vld [vmem:[%s2317 + $0x8] sm:$0xf]
      %v2321 = vld [vmem:[%s2317 + $0xc] sm:$0xf]
      %v2322 = vpack.c.bf16 %v1926, %v1925
      %v2323 = vpack.c.bf16 %v1928, %v1927
      %v2328 = vunpack.c.l.b16 %v2318
      %v2329 = vunpack.c.l.b16 %v2319
      %v2330 = vunpack.c.l.b16 %v2320
      %v2331 = vunpack.c.l.b16 %v2321
      %v2332 = vpack.c.b16 %v2329, %v2328
      %v2333 = vpack.c.b16 %v2331, %v2330
      %v2335 = vsel %vm2012, %v2332, 0
      %v2338 = vsel %vm2012, %v2333, 0
      %2340 = vmatprep.subr.bf16.mxu0 0
      %2341 = vmatpush1.bf16.msra.mxu0 %v2322
      %2342 = vmatprep.subr.bf16.mxu0 0
      %2343 = vmatpush1.bf16.msra.mxu0 %v2323
      %2344 = vmatprep.subr.bf16.mxu0 0
      %2345 = vmatpush1.bf16.msra.mxu0 0
      %2346 = vmatprep.subr.bf16.mxu0 0
      %2347 = vmatpush1.bf16.msra.mxu0 0
      %2348 = vmatprep.subr.bf16.mxu0 0
      %2349 = vmatpush1.bf16.msra.mxu0 0
      %2350 = vmatprep.subr.bf16.mxu0 0
      %2351 = vmatpush1.bf16.msra.mxu0 0
      %2352 = vmatprep.subr.bf16.mxu0 0
      %2353 = vmatpush1.bf16.msra.mxu0 0
      %2354 = vmatprep.subr.bf16.mxu0 0
      %2355 = vmatpush1.bf16.msra.mxu0 0
      %2356 = vmatprep.subr.bf16.mxu0 0
      %2357 = vmatpush1.bf16.msra.mxu0 0
      %2358 = vmatprep.subr.bf16.mxu0 0
      %2359 = vmatpush1.bf16.msra.mxu0 0
      %2360 = vmatprep.subr.bf16.mxu0 0
      %2361 = vmatpush1.bf16.msra.mxu0 0
      %2362 = vmatprep.subr.bf16.mxu0 0
      %2363 = vmatpush1.bf16.msra.mxu0 0
      %2364 = vmatprep.subr.bf16.mxu0 0
      %2365 = vmatpush1.bf16.msra.mxu0 0
      %2366 = vmatprep.subr.bf16.mxu0 0
      %2367 = vmatpush1.bf16.msra.mxu0 0
      %2368 = vmatprep.subr.bf16.mxu0 0
      %2369 = vmatpush1.bf16.msra.mxu0 0
      %2370 = vmatprep.subr.bf16.mxu0 0
      %2371 = vmatpush1.bf16.msra.mxu0 0
      %2372 = vmatprep.mubr.bf16.mxu0 0
      %2373 = vmatmul.mubr.bf16.gmra.mrb[0].mxu0 %v2335
      %v2374 = vpop.f32.mrb[0].mxu0
      %v2375 = vadd.f32 0.0, %v2374
      %v2376 = vpop.f32.mrb[0].mxu0
      %v2377 = vpop.f32.mrb[0].mxu0
      %v2378 = vadd.f32 0.0, %v2377
      %v2379 = vpop.f32.mrb[0].mxu0
      %2380 = vmatprep.mubr.bf16.mxu0 0
      %2381 = vmatmul.mubr.bf16.gmra.mrb[0].mxu0 %v2338
      %v2382 = vpop.f32.mrb[0].mxu0
      %v2383 = vadd.f32 0.0, %v2382
      %v2384 = vpop.f32.mrb[0].mxu0
      %v2385 = vpop.f32.mrb[0].mxu0
      %v2386 = vadd.f32 0.0, %v2385
      %v2387 = vpop.f32.mrb[0].mxu0
      %2388 = vdwg.mxu0
      %v2389 = vadd.f32 %v2313, %v2375
      %v2390 = vadd.f32 %v2314, %v2378
      %v2391 = vadd.f32 %v2315, %v2383
      %v2392 = vadd.f32 %v2316, %v2386
      %2393 = vrot.lane.b32.xlu0 %v1949, 127
      %v2394 = vpop.permute.xlu0 %2393
      %2395 = vrot.lane.b32.xlu0 %v1950, 127
      %v2396 = vpop.permute.xlu0 %2395
      %2397 = vrot.lane.b32.xlu0 %v1951, 127
      %v2398 = vpop.permute.xlu0 %2397
      %2399 = vrot.lane.b32.xlu0 %v1952, 127
      %v2400 = vpop.permute.xlu0 %2399
      %v2405 = vsel %vm1447, %v2394, 0.0
      %v2406 = vsel %vm1447, %v2396, 0.0
      %v2407 = vsel %vm1447, %v2398, 0.0
      %v2408 = vsel %vm1447, %v2400, 0.0
      %s2409 = scalar_lea.vmem %s4, 80
      %v2410 = vld [vmem:[%s2409] sm:$0xf]
      %v2411 = vld [vmem:[%s2409 + $0x4] sm:$0xf]
      %v2412 = vld [vmem:[%s2409 + $0x8] sm:$0xf]
      %v2413 = vld [vmem:[%s2409 + $0xc] sm:$0xf]
      %v2414 = vpack.c.bf16 %v2406, %v2405
      %v2415 = vpack.c.bf16 %v2408, %v2407
      %v2420 = vunpack.c.l.b16 %v2410
      %v2421 = vunpack.c.l.b16 %v2411
      %v2422 = vunpack.c.l.b16 %v2412
      %v2423 = vunpack.c.l.b16 %v2413
      %v2424 = vpack.c.b16 %v2421, %v2420
      %v2425 = vpack.c.b16 %v2423, %v2422
      %v2427 = vsel %vm2012, %v2424, 0
      %v2430 = vsel %vm2012, %v2425, 0
      %2432 = vmatprep.subr.bf16.mxu0 0
      %2433 = vmatpush1.bf16.msra.mxu0 %v2414
      %2434 = vmatprep.subr.bf16.mxu0 0
      %2435 = vmatpush1.bf16.msra.mxu0 %v2415
      %2436 = vmatprep.subr.bf16.mxu0 0
      %2437 = vmatpush1.bf16.msra.mxu0 0
      %2438 = vmatprep.subr.bf16.mxu0 0
      %2439 = vmatpush1.bf16.msra.mxu0 0
      %2440 = vmatprep.subr.bf16.mxu0 0
      %2441 = vmatpush1.bf16.msra.mxu0 0
      %2442 = vmatprep.subr.bf16.mxu0 0
      %2443 = vmatpush1.bf16.msra.mxu0 0
      %2444 = vmatprep.subr.bf16.mxu0 0
      %2445 = vmatpush1.bf16.msra.mxu0 0
      %2446 = vmatprep.subr.bf16.mxu0 0
      %2447 = vmatpush1.bf16.msra.mxu0 0
      %2448 = vmatprep.subr.bf16.mxu0 0
      %2449 = vmatpush1.bf16.msra.mxu0 0
      %2450 = vmatprep.subr.bf16.mxu0 0
      %2451 = vmatpush1.bf16.msra.mxu0 0
      %2452 = vmatprep.subr.bf16.mxu0 0
      %2453 = vmatpush1.bf16.msra.mxu0 0
      %2454 = vmatprep.subr.bf16.mxu0 0
      %2455 = vmatpush1.bf16.msra.mxu0 0
      %2456 = vmatprep.subr.bf16.mxu0 0
      %2457 = vmatpush1.bf16.msra.mxu0 0
      %2458 = vmatprep.subr.bf16.mxu0 0
      %2459 = vmatpush1.bf16.msra.mxu0 0
      %2460 = vmatprep.subr.bf16.mxu0 0
      %2461 = vmatpush1.bf16.msra.mxu0 0
      %2462 = vmatprep.subr.bf16.mxu0 0
      %2463 = vmatpush1.bf16.msra.mxu0 0
      %2464 = vmatprep.mubr.bf16.mxu0 0
      %2465 = vmatmul.mubr.bf16.gmra.mrb[0].mxu0 %v2427
      %v2466 = vpop.f32.mrb[0].mxu0
      %v2467 = vadd.f32 0.0, %v2466
      %v2468 = vpop.f32.mrb[0].mxu0
      %v2469 = vpop.f32.mrb[0].mxu0
      %v2470 = vadd.f32 0.0, %v2469
      %v2471 = vpop.f32.mrb[0].mxu0
      %2472 = vmatprep.mubr.bf16.mxu0 0
      %2473 = vmatmul.mubr.bf16.gmra.mrb[0].mxu0 %v2430
      %v2474 = vpop.f32.mrb[0].mxu0
      %v2475 = vadd.f32 0.0, %v2474
      %v2476 = vpop.f32.mrb[0].mxu0
      %v2477 = vpop.f32.mrb[0].mxu0
      %v2478 = vadd.f32 0.0, %v2477
      %v2479 = vpop.f32.mrb[0].mxu0
      %2480 = vdwg.mxu0
      %v2481 = vadd.f32 %v2389, %v2467
      %v2482 = vadd.f32 %v2390, %v2470
      %v2483 = vadd.f32 %v2391, %v2475
      %v2484 = vadd.f32 %v2392, %v2478
      %2485 = vrot.lane.b32.xlu0 %v1949, 121
      %v2486 = vpop.permute.xlu0 %2485
      %2487 = vrot.lane.b32.xlu0 %v1950, 121
      %v2488 = vpop.permute.xlu0 %2487
      %2489 = vrot.lane.b32.xlu0 %v1951, 121
      %v2490 = vpop.permute.xlu0 %2489
      %2491 = vrot.lane.b32.xlu0 %v1952, 121
      %v2492 = vpop.permute.xlu0 %2491
      %v2497 = vsel %vm1561, %v2486, 0.0
      %v2498 = vsel %vm1561, %v2488, 0.0
      %v2499 = vsel %vm1561, %v2490, 0.0
      %v2500 = vsel %vm1561, %v2492, 0.0
      %s2501 = scalar_lea.vmem %s4, 96
      %v2502 = vld [vmem:[%s2501] sm:$0xf]
      %v2503 = vld [vmem:[%s2501 + $0x4] sm:$0xf]
      %v2504 = vld [vmem:[%s2501 + $0x8] sm:$0xf]
      %v2505 = vld [vmem:[%s2501 + $0xc] sm:$0xf]
      %v2506 = vpack.c.bf16 %v2498, %v2497
      %v2507 = vpack.c.bf16 %v2500, %v2499
      %v2512 = vunpack.c.l.b16 %v2502
      %v2513 = vunpack.c.l.b16 %v2503
      %v2514 = vunpack.c.l.b16 %v2504
      %v2515 = vunpack.c.l.b16 %v2505
      %v2516 = vpack.c.b16 %v2513, %v2512
      %v2517 = vpack.c.b16 %v2515, %v2514
      %v2519 = vsel %vm2012, %v2516, 0
      %v2522 = vsel %vm2012, %v2517, 0
      %2524 = vmatprep.subr.bf16.mxu0 0
      %2525 = vmatpush1.bf16.msra.mxu0 %v2506
      %2526 = vmatprep.subr.bf16.mxu0 0
      %2527 = vmatpush1.bf16.msra.mxu0 %v2507
      %2528 = vmatprep.subr.bf16.mxu0 0
      %2529 = vmatpush1.bf16.msra.mxu0 0
      %2530 = vmatprep.subr.bf16.mxu0 0
      %2531 = vmatpush1.bf16.msra.mxu0 0
      %2532 = vmatprep.subr.bf16.mxu0 0
      %2533 = vmatpush1.bf16.msra.mxu0 0
      %2534 = vmatprep.subr.bf16.mxu0 0
      %2535 = vmatpush1.bf16.msra.mxu0 0
      %2536 = vmatprep.subr.bf16.mxu0 0
      %2537 = vmatpush1.bf16.msra.mxu0 0
      %2538 = vmatprep.subr.bf16.mxu0 0
      %2539 = vmatpush1.bf16.msra.mxu0 0
      %2540 = vmatprep.subr.bf16.mxu0 0
      %2541 = vmatpush1.bf16.msra.mxu0 0
      %2542 = vmatprep.subr.bf16.mxu0 0
      %2543 = vmatpush1.bf16.msra.mxu0 0
      %2544 = vmatprep.subr.bf16.mxu0 0
      %2545 = vmatpush1.bf16.msra.mxu0 0
      %2546 = vmatprep.subr.bf16.mxu0 0
      %2547 = vmatpush1.bf16.msra.mxu0 0
      %2548 = vmatprep.subr.bf16.mxu0 0
      %2549 = vmatpush1.bf16.msra.mxu0 0
      %2550 = vmatprep.subr.bf16.mxu0 0
      %2551 = vmatpush1.bf16.msra.mxu0 0
      %2552 = vmatprep.subr.bf16.mxu0 0
      %2553 = vmatpush1.bf16.msra.mxu0 0
      %2554 = vmatprep.subr.bf16.mxu0 0
      %2555 = vmatpush1.bf16.msra.mxu0 0
      %2556 = vmatprep.mubr.bf16.mxu0 0
      %2557 = vmatmul.mubr.bf16.gmra.mrb[0].mxu0 %v2519
      %v2558 = vpop.f32.mrb[0].mxu0
      %v2559 = vadd.f32 0.0, %v2558
      %v2560 = vpop.f32.mrb[0].mxu0
      %v2561 = vpop.f32.mrb[0].mxu0
      %v2562 = vadd.f32 0.0, %v2561
      %v2563 = vpop.f32.mrb[0].mxu0
      %2564 = vmatprep.mubr.bf16.mxu0 0
      %2565 = vmatmul.mubr.bf16.gmra.mrb[0].mxu0 %v2522
      %v2566 = vpop.f32.mrb[0].mxu0
      %v2567 = vadd.f32 0.0, %v2566
      %v2568 = vpop.f32.mrb[0].mxu0
      %v2569 = vpop.f32.mrb[0].mxu0
      %v2570 = vadd.f32 0.0, %v2569
      %v2571 = vpop.f32.mrb[0].mxu0
      %2572 = vdwg.mxu0
      %v2573 = vadd.f32 %v2481, %v2559
      %v2574 = vadd.f32 %v2482, %v2562
      %v2575 = vadd.f32 %v2483, %v2567
      %v2576 = vadd.f32 %v2484, %v2570
      %2577 = vrot.lane.b32.xlu0 %v1949, 120
      %v2578 = vpop.permute.xlu0 %2577
      %2579 = vrot.lane.b32.xlu0 %v1950, 120
      %v2580 = vpop.permute.xlu0 %2579
      %2581 = vrot.lane.b32.xlu0 %v1951, 120
      %v2582 = vpop.permute.xlu0 %2581
      %2583 = vrot.lane.b32.xlu0 %v1952, 120
      %v2584 = vpop.permute.xlu0 %2583
      %v2589 = vsel %vm1673, %v2578, 0.0
      %v2590 = vsel %vm1673, %v2580, 0.0
      %v2591 = vsel %vm1673, %v2582, 0.0
      %v2592 = vsel %vm1673, %v2584, 0.0
      %s2593 = scalar_lea.vmem %s4, 112
      %v2594 = vld [vmem:[%s2593] sm:$0xf]
      %v2595 = vld [vmem:[%s2593 + $0x4] sm:$0xf]
      %v2596 = vld [vmem:[%s2593 + $0x8] sm:$0xf]
      %v2597 = vld [vmem:[%s2593 + $0xc] sm:$0xf]
      %v2598 = vpack.c.bf16 %v2590, %v2589
      %v2599 = vpack.c.bf16 %v2592, %v2591
      %v2604 = vunpack.c.l.b16 %v2594
      %v2605 = vunpack.c.l.b16 %v2595
      %v2606 = vunpack.c.l.b16 %v2596
      %v2607 = vunpack.c.l.b16 %v2597
      %v2608 = vpack.c.b16 %v2605, %v2604
      %v2609 = vpack.c.b16 %v2607, %v2606
      %v2611 = vsel %vm2012, %v2608, 0
      %v2614 = vsel %vm2012, %v2609, 0
      %2616 = vmatprep.subr.bf16.mxu0 0
      %2617 = vmatpush1.bf16.msra.mxu0 %v2598
      %2618 = vmatprep.subr.bf16.mxu0 0
      %2619 = vmatpush1.bf16.msra.mxu0 %v2599
      %2620 = vmatprep.subr.bf16.mxu0 0
      %2621 = vmatpush1.bf16.msra.mxu0 0
      %2622 = vmatprep.subr.bf16.mxu0 0
      %2623 = vmatpush1.bf16.msra.mxu0 0
      %2624 = vmatprep.subr.bf16.mxu0 0
      %2625 = vmatpush1.bf16.msra.mxu0 0
      %2626 = vmatprep.subr.bf16.mxu0 0
      %2627 = vmatpush1.bf16.msra.mxu0 0
      %2628 = vmatprep.subr.bf16.mxu0 0
      %2629 = vmatpush1.bf16.msra.mxu0 0
      %2630 = vmatprep.subr.bf16.mxu0 0
      %2631 = vmatpush1.bf16.msra.mxu0 0
      %2632 = vmatprep.subr.bf16.mxu0 0
      %2633 = vmatpush1.bf16.msra.mxu0 0
      %2634 = vmatprep.subr.bf16.mxu0 0
      %2635 = vmatpush1.bf16.msra.mxu0 0
      %2636 = vmatprep.subr.bf16.mxu0 0
      %2637 = vmatpush1.bf16.msra.mxu0 0
      %2638 = vmatprep.subr.bf16.mxu0 0
      %2639 = vmatpush1.bf16.msra.mxu0 0
      %2640 = vmatprep.subr.bf16.mxu0 0
      %2641 = vmatpush1.bf16.msra.mxu0 0
      %2642 = vmatprep.subr.bf16.mxu0 0
      %2643 = vmatpush1.bf16.msra.mxu0 0
      %2644 = vmatprep.subr.bf16.mxu0 0
      %2645 = vmatpush1.bf16.msra.mxu0 0
      %2646 = vmatprep.subr.bf16.mxu0 0
      %2647 = vmatpush1.bf16.msra.mxu0 0
      %2648 = vmatprep.mubr.bf16.mxu0 0
      %2649 = vmatmul.mubr.bf16.gmra.mrb[0].mxu0 %v2611
      %v2650 = vpop.f32.mrb[0].mxu0
      %v2651 = vadd.f32 0.0, %v2650
      %v2652 = vpop.f32.mrb[0].mxu0
      %v2653 = vpop.f32.mrb[0].mxu0
      %v2654 = vadd.f32 0.0, %v2653
      %v2655 = vpop.f32.mrb[0].mxu0
      %2656 = vmatprep.mubr.bf16.mxu0 0
      %2657 = vmatmul.mubr.bf16.gmra.mrb[0].mxu0 %v2614
      %v2658 = vpop.f32.mrb[0].mxu0
      %v2659 = vadd.f32 0.0, %v2658
      %v2660 = vpop.f32.mrb[0].mxu0
      %v2661 = vpop.f32.mrb[0].mxu0
      %v2662 = vadd.f32 0.0, %v2661
      %v2663 = vpop.f32.mrb[0].mxu0
      %2664 = vdwg.mxu0
      %v2665 = vadd.f32 %v2573, %v2651
      %v2666 = vadd.f32 %v2574, %v2654
      %v2667 = vadd.f32 %v2575, %v2659
      %v2668 = vadd.f32 %v2576, %v2662
      %2669 = vrot.lane.b32.xlu0 %v1949, 119
      %v2670 = vpop.permute.xlu0 %2669
      %2671 = vrot.lane.b32.xlu0 %v1950, 119
      %v2672 = vpop.permute.xlu0 %2671
      %2673 = vrot.lane.b32.xlu0 %v1951, 119
      %v2674 = vpop.permute.xlu0 %2673
      %2675 = vrot.lane.b32.xlu0 %v1952, 119
      %v2676 = vpop.permute.xlu0 %2675
      %v2681 = vsel %vm1786, %v2670, 0.0
      %v2682 = vsel %vm1786, %v2672, 0.0
      %v2683 = vsel %vm1786, %v2674, 0.0
      %v2684 = vsel %vm1786, %v2676, 0.0
      %s2685 = scalar_lea.vmem %s4, 128
      %v2686 = vld [vmem:[%s2685] sm:$0xf]
      %v2687 = vld [vmem:[%s2685 + $0x4] sm:$0xf]
      %v2688 = vld [vmem:[%s2685 + $0x8] sm:$0xf]
      %v2689 = vld [vmem:[%s2685 + $0xc] sm:$0xf]
      %v2690 = vpack.c.bf16 %v2682, %v2681
      %v2691 = vpack.c.bf16 %v2684, %v2683
      %v2696 = vunpack.c.l.b16 %v2686
      %v2697 = vunpack.c.l.b16 %v2687
      %v2698 = vunpack.c.l.b16 %v2688
      %v2699 = vunpack.c.l.b16 %v2689
      %v2700 = vpack.c.b16 %v2697, %v2696
      %v2701 = vpack.c.b16 %v2699, %v2698
      %v2703 = vsel %vm2012, %v2700, 0
      %v2706 = vsel %vm2012, %v2701, 0
      %2708 = vmatprep.subr.bf16.mxu0 0
      %2709 = vmatpush1.bf16.msra.mxu0 %v2690
      %2710 = vmatprep.subr.bf16.mxu0 0
      %2711 = vmatpush1.bf16.msra.mxu0 %v2691
      %2712 = vmatprep.subr.bf16.mxu0 0
      %2713 = vmatpush1.bf16.msra.mxu0 0
      %2714 = vmatprep.subr.bf16.mxu0 0
      %2715 = vmatpush1.bf16.msra.mxu0 0
      %2716 = vmatprep.subr.bf16.mxu0 0
      %2717 = vmatpush1.bf16.msra.mxu0 0
      %2718 = vmatprep.subr.bf16.mxu0 0
      %2719 = vmatpush1.bf16.msra.mxu0 0
      %2720 = vmatprep.subr.bf16.mxu0 0
      %2721 = vmatpush1.bf16.msra.mxu0 0
      %2722 = vmatprep.subr.bf16.mxu0 0
      %2723 = vmatpush1.bf16.msra.mxu0 0
      %2724 = vmatprep.subr.bf16.mxu0 0
      %2725 = vmatpush1.bf16.msra.mxu0 0
      %2726 = vmatprep.subr.bf16.mxu0 0
      %2727 = vmatpush1.bf16.msra.mxu0 0
      %2728 = vmatprep.subr.bf16.mxu0 0
      %2729 = vmatpush1.bf16.msra.mxu0 0
      %2730 = vmatprep.subr.bf16.mxu0 0
      %2731 = vmatpush1.bf16.msra.mxu0 0
      %2732 = vmatprep.subr.bf16.mxu0 0
      %2733 = vmatpush1.bf16.msra.mxu0 0
      %2734 = vmatprep.subr.bf16.mxu0 0
      %2735 = vmatpush1.bf16.msra.mxu0 0
      %2736 = vmatprep.subr.bf16.mxu0 0
      %2737 = vmatpush1.bf16.msra.mxu0 0
      %2738 = vmatprep.subr.bf16.mxu0 0
      %2739 = vmatpush1.bf16.msra.mxu0 0
      %2740 = vmatprep.mubr.bf16.mxu0 0
      %2741 = vmatmul.mubr.bf16.gmra.mrb[0].mxu0 %v2703
      %v2742 = vpop.f32.mrb[0].mxu0
      %v2743 = vadd.f32 0.0, %v2742
      %v2744 = vpop.f32.mrb[0].mxu0
      %v2745 = vpop.f32.mrb[0].mxu0
      %v2746 = vadd.f32 0.0, %v2745
      %v2747 = vpop.f32.mrb[0].mxu0
      %2748 = vmatprep.mubr.bf16.mxu0 0
      %2749 = vmatmul.mubr.bf16.gmra.mrb[0].mxu0 %v2706
      %v2750 = vpop.f32.mrb[0].mxu0
      %v2751 = vadd.f32 0.0, %v2750
      %v2752 = vpop.f32.mrb[0].mxu0
      %v2753 = vpop.f32.mrb[0].mxu0
      %v2754 = vadd.f32 0.0, %v2753
      %v2755 = vpop.f32.mrb[0].mxu0
      %2756 = vdwg.mxu0
      %v2757 = vadd.f32 %v2665, %v2743
      %v2758 = vadd.f32 %v2666, %v2746
      %v2759 = vadd.f32 %v2667, %v2751
      %v2760 = vadd.f32 %v2668, %v2754
      %v2761 = vld [vmem:[%s5] sm:$0xff]
      %v2762 = vld [vmem:[%s5 + $0x8] sm:$0xff]
      %v2763 = vld [vmem:[%s5 + $0x10] sm:$0xff]
      %v2764 = vld [vmem:[%s5 + $0x18] sm:$0xff]
      %2766 = vset.pattern.permute.xlu0 0
      %2767 = vperm.xlu0 %2766, %v2761
      %v2768 = vpop.permute.xlu0 %2767
      %2771 = vset.pattern.permute.xlu0 0
      %2772 = vperm.xlu0 %2771, %v2762
      %v2773 = vpop.permute.xlu0 %2772
      %2776 = vset.pattern.permute.xlu0 0
      %2777 = vperm.xlu0 %2776, %v2763
      %v2778 = vpop.permute.xlu0 %2777
      %2781 = vset.pattern.permute.xlu0 0
      %2782 = vperm.xlu0 %2781, %v2764
      %v2783 = vpop.permute.xlu0 %2782
      %v2785 = vadd.f32 %v2757, %v2768
      %v2786 = vadd.f32 %v2758, %v2773
      %v2787 = vadd.f32 %v2759, %v2778
      %v2788 = vadd.f32 %v2760, %v2783
      %v2789 = vadd.f32 %v2785, %v841
      %v2790 = vadd.f32 %v2786, %v844
      %v2791 = vadd.f32 %v2787, %v849
      %v2792 = vadd.f32 %v2788, %v852
      %v2793 = vpack.c.bf16 %v2790, %v2789
      %v2794 = vpack.c.bf16 %v2792, %v2791
      %v2795 = vld [vmem:[%s8] sm:$0xff]
      %v2796 = vld [vmem:[%s8 + $0x8] sm:$0xff]
      %v2797 = vld [vmem:[%s8 + $0x10] sm:$0xff]
      %v2798 = vld [vmem:[%s8 + $0x18] sm:$0xff]
      %v2799 = vld [vmem:[%s8 + $0x20] sm:$0xff]
      %v2800 = vld [vmem:[%s8 + $0x28] sm:$0xff]
      %v2801 = vld [vmem:[%s8 + $0x30] sm:$0xff]
      %v2802 = vld [vmem:[%s8 + $0x38] sm:$0xff]
      %v2811 = vunpack.c.l.b16 %v2795
      %v2812 = vunpack.c.h.b16 %v2795
      %v2813 = vunpack.c.l.b16 %v2796
      %v2814 = vunpack.c.h.b16 %v2796
      %v2815 = vunpack.c.l.b16 %v2797
      %v2816 = vunpack.c.h.b16 %v2797
      %v2817 = vunpack.c.l.b16 %v2798
      %v2818 = vunpack.c.h.b16 %v2798
      %v2819 = vunpack.c.l.b16 %v2799
      %v2820 = vunpack.c.h.b16 %v2799
      %v2821 = vunpack.c.l.b16 %v2800
      %v2822 = vunpack.c.h.b16 %v2800
      %v2823 = vunpack.c.l.b16 %v2801
      %v2824 = vunpack.c.h.b16 %v2801
      %v2825 = vunpack.c.l.b16 %v2802
      %v2826 = vunpack.c.h.b16 %v2802
      %v2827 = vpack.c.b16 %v2813, %v2811
      %v2828 = vpack.c.b16 %v2814, %v2812
      %v2829 = vpack.c.b16 %v2817, %v2815
      %v2830 = vpack.c.b16 %v2818, %v2816
      %v2831 = vpack.c.b16 %v2821, %v2819
      %v2832 = vpack.c.b16 %v2822, %v2820
      %v2833 = vpack.c.b16 %v2825, %v2823
      %v2834 = vpack.c.b16 %v2826, %v2824
      %v2844 = vsel %vm799, %v2793, 0
      %v2847 = vsel %vm799, %v2794, 0
      %2849 = vmatprep.subr.bf16.mxu0 %v2828
      %2850 = vmatpush1.bf16.msra.mxu0 %v2827
      %2851 = vmatprep.subr.bf16.mxu0 %v2830
      %2852 = vmatpush1.bf16.msra.mxu0 %v2829
      %2853 = vmatprep.subr.bf16.mxu0 %v2832
      %2854 = vmatpush1.bf16.msra.mxu0 %v2831
      %2855 = vmatprep.subr.bf16.mxu0 %v2834
      %2856 = vmatpush1.bf16.msra.mxu0 %v2833
      %2857 = vmatprep.subr.bf16.mxu0 0
      %2858 = vmatpush1.bf16.msra.mxu0 0
      %2859 = vmatprep.subr.bf16.mxu0 0
      %2860 = vmatpush1.bf16.msra.mxu0 0
      %2861 = vmatprep.subr.bf16.mxu0 0
      %2862 = vmatpush1.bf16.msra.mxu0 0
      %2863 = vmatprep.subr.bf16.mxu0 0
      %2864 = vmatpush1.bf16.msra.mxu0 0
      %2865 = vmatprep.subr.bf16.mxu0 0
      %2866 = vmatpush1.bf16.msra.mxu0 0
      %2867 = vmatprep.subr.bf16.mxu0 0
      %2868 = vmatpush1.bf16.msra.mxu0 0
      %2869 = vmatprep.subr.bf16.mxu0 0
      %2870 = vmatpush1.bf16.msra.mxu0 0
      %2871 = vmatprep.subr.bf16.mxu0 0
      %2872 = vmatpush1.bf16.msra.mxu0 0
      %2873 = vmatprep.subr.bf16.mxu0 0
      %2874 = vmatpush1.bf16.msra.mxu0 0
      %2875 = vmatprep.subr.bf16.mxu0 0
      %2876 = vmatpush1.bf16.msra.mxu0 0
      %2877 = vmatprep.subr.bf16.mxu0 0
      %2878 = vmatpush1.bf16.msra.mxu0 0
      %2879 = vmatprep.subr.bf16.mxu0 0
      %2880 = vmatpush1.bf16.msra.mxu0 0
      %2881 = vmatprep.mubr.bf16.mxu0 0
      %2882 = vmatmul.mubr.bf16.gmra.mrb[0].mxu0 %v2844
      %v2883 = vpop.f32.mrb[0].mxu0
      %v2884 = vadd.f32 0.0, %v2883
      %v2885 = vpop.f32.mrb[0].mxu0
      %v2886 = vadd.f32 0.0, %v2885
      %v2887 = vpop.f32.mrb[0].mxu0
      %v2888 = vadd.f32 0.0, %v2887
      %v2889 = vpop.f32.mrb[0].mxu0
      %v2890 = vadd.f32 0.0, %v2889
      %2891 = vmatprep.mubr.bf16.mxu0 0
      %2892 = vmatmul.mubr.bf16.gmra.mrb[0].mxu0 %v2847
      %v2893 = vpop.f32.mrb[0].mxu0
      %v2894 = vadd.f32 0.0, %v2893
      %v2895 = vpop.f32.mrb[0].mxu0
      %v2896 = vadd.f32 0.0, %v2895
      %v2897 = vpop.f32.mrb[0].mxu0
      %v2898 = vadd.f32 0.0, %v2897
      %v2899 = vpop.f32.mrb[0].mxu0
      %v2900 = vadd.f32 0.0, %v2899
      %2901 = vdwg.mxu0
      %v2902 = vld [vmem:[%s13] sm:$0xf]
      %v2903 = vld [vmem:[%s13 + $0x4] sm:$0xf]
      %v2904 = vpack.c.bf16 %v2888, %v2884
      %v2905 = vpack.c.bf16 %v2890, %v2886
      %v2906 = vpack.c.bf16 %v2898, %v2894
      %v2907 = vpack.c.bf16 %v2900, %v2896
      %v2908 = vld [vmem:[%s14] sm:$0xff]
      %v2909 = vld [vmem:[%s14 + $0x8] sm:$0xff]
      %2911 = vset.pattern.permute.xlu0 0
      %2912 = vperm.xlu0 %2911, %v2908
      %v2913 = vpop.permute.xlu0 %2912
      %2916 = vset.pattern.permute.xlu0 0
      %2917 = vperm.xlu0 %2916, %v2909
      %v2918 = vpop.permute.xlu0 %2917
      %v2922 = vunpack.c.l.b16 %v2902
      %v2923 = vunpack.c.l.b16 %v2903
      %v2924 = vpack.c.b16 %v2923, %v2922
      %v2926 = vsel %vm2012, %v2924, 0
      %2928 = vmatprep.subr.bf16.mxu0 %v2905
      %2929 = vmatpush1.bf16.msra.mxu0 %v2904
      %2930 = vmatprep.subr.bf16.mxu0 %v2907
      %2931 = vmatpush1.bf16.msra.mxu0 %v2906
      %2932 = vmatprep.subr.bf16.mxu0 0
      %2933 = vmatpush1.bf16.msra.mxu0 0
      %2934 = vmatprep.subr.bf16.mxu0 0
      %2935 = vmatpush1.bf16.msra.mxu0 0
      %2936 = vmatprep.subr.bf16.mxu0 0
      %2937 = vmatpush1.bf16.msra.mxu0 0
      %2938 = vmatprep.subr.bf16.mxu0 0
      %2939 = vmatpush1.bf16.msra.mxu0 0
      %2940 = vmatprep.subr.bf16.mxu0 0
      %2941 = vmatpush1.bf16.msra.mxu0 0
      %2942 = vmatprep.subr.bf16.mxu0 0
      %2943 = vmatpush1.bf16.msra.mxu0 0
      %2944 = vmatprep.subr.bf16.mxu0 0
      %2945 = vmatpush1.bf16.msra.mxu0 0
      %2946 = vmatprep.subr.bf16.mxu0 0
      %2947 = vmatpush1.bf16.msra.mxu0 0
      %2948 = vmatprep.subr.bf16.mxu0 0
      %2949 = vmatpush1.bf16.msra.mxu0 0
      %2950 = vmatprep.subr.bf16.mxu0 0
      %2951 = vmatpush1.bf16.msra.mxu0 0
      %2952 = vmatprep.subr.bf16.mxu0 0
      %2953 = vmatpush1.bf16.msra.mxu0 0
      %2954 = vmatprep.subr.bf16.mxu0 0
      %2955 = vmatpush1.bf16.msra.mxu0 0
      %2956 = vmatprep.subr.bf16.mxu0 0
      %2957 = vmatpush1.bf16.msra.mxu0 0
      %2958 = vmatprep.subr.bf16.mxu0 0
      %2959 = vmatpush1.bf16.msra.mxu0 0
      %2960 = vmatprep.mubr.bf16.mxu0 0
      %2961 = vmatmul.mubr.bf16.gmra.mrb[0].mxu0 %v2926
      %v2962 = vpop.f32.mrb[0].mxu0
      %v2963 = vadd.f32 %v2913, %v2962
      %v2964 = vpop.f32.mrb[0].mxu0
      %v2965 = vadd.f32 %v2913, %v2964
      %v2966 = vpop.f32.mrb[0].mxu0
      %v2967 = vadd.f32 %v2918, %v2966
      %v2968 = vpop.f32.mrb[0].mxu0
      %v2969 = vadd.f32 %v2918, %v2968
      %2970 = vdwg.mxu0
      %v2971 = vmax.f32 %v2884, 0.0
      %v2972 = vmax.f32 %v2886, 0.0
      %v2973 = vmax.f32 %v2888, 0.0
      %v2974 = vmax.f32 %v2890, 0.0
      %v2975 = vmax.f32 %v2894, 0.0
      %v2976 = vmax.f32 %v2896, 0.0
      %v2977 = vmax.f32 %v2898, 0.0
      %v2978 = vmax.f32 %v2900, 0.0
      %v2979 = vadd.s32 %v864, 128
      %v2980 = vand.u32 %v864, 15
      %v2981 = vand.u32 %v2979, 15
      %v2982 = vshra.s32 %v864, 4
      %v2983 = vshra.s32 %v2979, 4
      %2984 = vrot.lane.b32.xlu0 %v2971, 17
      %v2985 = vpop.permute.xlu0 %2984
      %2986 = vrot.lane.b32.xlu0 %v2973, 17
      %v2987 = vpop.permute.xlu0 %2986
      %2988 = vrot.lane.b32.xlu0 %v2975, 17
      %v2989 = vpop.permute.xlu0 %2988
      %2990 = vrot.lane.b32.xlu0 %v2977, 17
      %v2991 = vpop.permute.xlu0 %2990
      %2992 = vrot.lane.b32.xlu0 %v2972, 17
      %v2993 = vpop.permute.xlu0 %2992
      %2994 = vrot.lane.b32.xlu0 %v2974, 17
      %v2995 = vpop.permute.xlu0 %2994
      %2996 = vrot.lane.b32.xlu0 %v2976, 17
      %v2997 = vpop.permute.xlu0 %2996
      %2998 = vrot.lane.b32.xlu0 %v2978, 17
      %v2999 = vpop.permute.xlu0 %2998
      %vm3000 = vcmp.lt.s32.totalorder %v864, 17
      %v3001 = vsel %vm3000, %v2985, %v2993
      %v3002 = vsel %vm3000, %v2987, %v2995
      %v3003 = vsel %vm3000, %v2989, %v2997
      %v3004 = vsel %vm3000, %v2991, %v2999
      %v3005 = vsel %vm3000, %v2993, %v2985
      %v3006 = vsel %vm3000, %v2995, %v2987
      %v3007 = vsel %vm3000, %v2997, %v2989
      %v3008 = vsel %vm3000, %v2999, %v2991
      %vm3009 = vcmp.ge.s32.totalorder %v2980, 1
      %vm3010 = vcmp.ge.s32.totalorder %v2981, 1
      %vm3011 = vcmp.ge.s32.totalorder %v2982, 1
      %vm3012 = vcmp.ge.s32.totalorder %v2983, 1
      %vm3013 = vmand %vm3009, %vm3011
      %vm3014 = vmand %vm3010, %vm3012
      %v3015 = vsel %vm3013, 1, 0
      %v3016 = vsel %vm3014, 1, 0
      %vm3017 = vcmp.eq.s32.totalorder %v3015, 1
      %vm3018 = vcmp.eq.s32.totalorder %v3016, 1
      %v3019 = vsel %vm3017, %v3005, 0.0
      %v3020 = vsel %vm3018, %v3001, 0.0
      %v3021 = vsel %vm3017, %v3006, 0.0
      %v3022 = vsel %vm3018, %v3002, 0.0
      %v3023 = vsel %vm3017, %v3007, 0.0
      %v3024 = vsel %vm3018, %v3003, 0.0
      %v3025 = vsel %vm3017, %v3008, 0.0
      %v3026 = vsel %vm3018, %v3004, 0.0
      %v3027 = vld [vmem:[%s9] sm:$0xf]
      %v3028 = vld [vmem:[%s9 + $0x4] sm:$0xf]
      %v3029 = vpack.c.bf16 %v3021, %v3019
      %v3030 = vpack.c.bf16 %v3022, %v3020
      %v3031 = vpack.c.bf16 %v3025, %v3023
      %v3032 = vpack.c.bf16 %v3026, %v3024
      %3033 = vrot.lane.b32.xlu0 %v2971, 16
      %v3034 = vpop.permute.xlu0 %3033
      %3035 = vrot.lane.b32.xlu0 %v2973, 16
      %v3036 = vpop.permute.xlu0 %3035
      %3037 = vrot.lane.b32.xlu0 %v2975, 16
      %v3038 = vpop.permute.xlu0 %3037
      %3039 = vrot.lane.b32.xlu0 %v2977, 16
      %v3040 = vpop.permute.xlu0 %3039
      %3041 = vrot.lane.b32.xlu0 %v2972, 16
      %v3042 = vpop.permute.xlu0 %3041
      %3043 = vrot.lane.b32.xlu0 %v2974, 16
      %v3044 = vpop.permute.xlu0 %3043
      %3045 = vrot.lane.b32.xlu0 %v2976, 16
      %v3046 = vpop.permute.xlu0 %3045
      %3047 = vrot.lane.b32.xlu0 %v2978, 16
      %v3048 = vpop.permute.xlu0 %3047
      %vm3049 = vcmp.lt.s32.totalorder %v864, 16
      %v3050 = vsel %vm3049, %v3034, %v3042
      %v3051 = vsel %vm3049, %v3036, %v3044
      %v3052 = vsel %vm3049, %v3038, %v3046
      %v3053 = vsel %vm3049, %v3040, %v3048
      %v3054 = vsel %vm3049, %v3042, %v3034
      %v3055 = vsel %vm3049, %v3044, %v3036
      %v3056 = vsel %vm3049, %v3046, %v3038
      %v3057 = vsel %vm3049, %v3048, %v3040
      %v3058 = vsel %vm3011, 1, 0
      %v3059 = vsel %vm3012, 1, 0
      %vm3060 = vcmp.eq.s32.totalorder %v3058, 1
      %vm3061 = vcmp.eq.s32.totalorder %v3059, 1
      %v3062 = vsel %vm3060, %v3054, 0.0
      %v3063 = vsel %vm3061, %v3050, 0.0
      %v3064 = vsel %vm3060, %v3055, 0.0
      %v3065 = vsel %vm3061, %v3051, 0.0
      %v3066 = vsel %vm3060, %v3056, 0.0
      %v3067 = vsel %vm3061, %v3052, 0.0
      %v3068 = vsel %vm3060, %v3057, 0.0
      %v3069 = vsel %vm3061, %v3053, 0.0
      %s3070 = scalar_lea.vmem %s9, 8
      %v3071 = vld [vmem:[%s3070] sm:$0xf]
      %v3072 = vld [vmem:[%s3070 + $0x4] sm:$0xf]
      %v3073 = vpack.c.bf16 %v3064, %v3062
      %v3074 = vpack.c.bf16 %v3065, %v3063
      %v3075 = vpack.c.bf16 %v3068, %v3066
      %v3076 = vpack.c.bf16 %v3069, %v3067
      %v3079 = vunpack.c.l.b16 %v3071
      %v3080 = vunpack.c.l.b16 %v3072
      %v3081 = vpack.c.b16 %v3080, %v3079
      %v3083 = vsel %vm2012, %v3081, 0
      %3085 = vmatprep.subr.bf16.mxu0 %v3074
      %3086 = vmatpush1.bf16.msra.mxu0 %v3073
      %3087 = vmatprep.subr.bf16.mxu0 %v3076
      %3088 = vmatpush1.bf16.msra.mxu0 %v3075
      %3089 = vmatprep.subr.bf16.mxu0 0
      %3090 = vmatpush1.bf16.msra.mxu0 0
      %3091 = vmatprep.subr.bf16.mxu0 0
      %3092 = vmatpush1.bf16.msra.mxu0 0
      %3093 = vmatprep.subr.bf16.mxu0 0
      %3094 = vmatpush1.bf16.msra.mxu0 0
      %3095 = vmatprep.subr.bf16.mxu0 0
      %3096 = vmatpush1.bf16.msra.mxu0 0
      %3097 = vmatprep.subr.bf16.mxu0 0
      %3098 = vmatpush1.bf16.msra.mxu0 0
      %3099 = vmatprep.subr.bf16.mxu0 0
      %3100 = vmatpush1.bf16.msra.mxu0 0
      %3101 = vmatprep.subr.bf16.mxu0 0
      %3102 = vmatpush1.bf16.msra.mxu0 0
      %3103 = vmatprep.subr.bf16.mxu0 0
      %3104 = vmatpush1.bf16.msra.mxu0 0
      %3105 = vmatprep.subr.bf16.mxu0 0
      %3106 = vmatpush1.bf16.msra.mxu0 0
      %3107 = vmatprep.subr.bf16.mxu0 0
      %3108 = vmatpush1.bf16.msra.mxu0 0
      %3109 = vmatprep.subr.bf16.mxu0 0
      %3110 = vmatpush1.bf16.msra.mxu0 0
      %3111 = vmatprep.subr.bf16.mxu0 0
      %3112 = vmatpush1.bf16.msra.mxu0 0
      %3113 = vmatprep.subr.bf16.mxu0 0
      %3114 = vmatpush1.bf16.msra.mxu0 0
      %3115 = vmatprep.subr.bf16.mxu0 0
      %3116 = vmatpush1.bf16.msra.mxu0 0
      %3117 = vmatprep.mubr.bf16.mxu0 0
      %3118 = vmatmul.mubr.bf16.gmra.mrb[0].mxu0 %v3083
      %v3119 = vpop.f32.mrb[0].mxu0
      %v3120 = vadd.f32 0.0, %v3119
      %v3121 = vpop.f32.mrb[0].mxu0
      %v3122 = vadd.f32 0.0, %v3121
      %v3123 = vpop.f32.mrb[0].mxu0
      %v3124 = vadd.f32 0.0, %v3123
      %v3125 = vpop.f32.mrb[0].mxu0
      %v3126 = vadd.f32 0.0, %v3125
      %3127 = vdwg.mxu0
      %v3130 = vunpack.c.l.b16 %v3027
      %v3131 = vunpack.c.l.b16 %v3028
      %v3132 = vpack.c.b16 %v3131, %v3130
      %v3134 = vsel %vm2012, %v3132, 0
      %3136 = vmatprep.subr.bf16.mxu0 %v3030
      %3137 = vmatpush1.bf16.msra.mxu0 %v3029
      %3138 = vmatprep.subr.bf16.mxu0 %v3032
      %3139 = vmatpush1.bf16.msra.mxu0 %v3031
      %3140 = vmatprep.subr.bf16.mxu0 0
      %3141 = vmatpush1.bf16.msra.mxu0 0
      %3142 = vmatprep.subr.bf16.mxu0 0
      %3143 = vmatpush1.bf16.msra.mxu0 0
      %3144 = vmatprep.subr.bf16.mxu0 0
      %3145 = vmatpush1.bf16.msra.mxu0 0
      %3146 = vmatprep.subr.bf16.mxu0 0
      %3147 = vmatpush1.bf16.msra.mxu0 0
      %3148 = vmatprep.subr.bf16.mxu0 0
      %3149 = vmatpush1.bf16.msra.mxu0 0
      %3150 = vmatprep.subr.bf16.mxu0 0
      %3151 = vmatpush1.bf16.msra.mxu0 0
      %3152 = vmatprep.subr.bf16.mxu0 0
      %3153 = vmatpush1.bf16.msra.mxu0 0
      %3154 = vmatprep.subr.bf16.mxu0 0
      %3155 = vmatpush1.bf16.msra.mxu0 0
      %3156 = vmatprep.subr.bf16.mxu0 0
      %3157 = vmatpush1.bf16.msra.mxu0 0
      %3158 = vmatprep.subr.bf16.mxu0 0
      %3159 = vmatpush1.bf16.msra.mxu0 0
      %3160 = vmatprep.subr.bf16.mxu0 0
      %3161 = vmatpush1.bf16.msra.mxu0 0
      %3162 = vmatprep.subr.bf16.mxu0 0
      %3163 = vmatpush1.bf16.msra.mxu0 0
      %3164 = vmatprep.subr.bf16.mxu0 0
      %3165 = vmatpush1.bf16.msra.mxu0 0
      %3166 = vmatprep.subr.bf16.mxu0 0
      %3167 = vmatpush1.bf16.msra.mxu0 0
      %3168 = vmatprep.mubr.bf16.mxu0 0
      %3169 = vmatmul.mubr.bf16.gmra.mrb[0].mxu0 %v3134
      %v3170 = vpop.f32.mrb[0].mxu0
      %v3171 = vadd.f32 %v3120, %v3170
      %v3172 = vpop.f32.mrb[0].mxu0
      %v3173 = vadd.f32 %v3122, %v3172
      %v3174 = vpop.f32.mrb[0].mxu0
      %v3175 = vadd.f32 %v3124, %v3174
      %v3176 = vpop.f32.mrb[0].mxu0
      %v3177 = vadd.f32 %v3126, %v3176
      %3178 = vdwg.mxu0
      %3179 = vrot.lane.b32.xlu0 %v2971, 15
      %v3180 = vpop.permute.xlu0 %3179
      %3181 = vrot.lane.b32.xlu0 %v2973, 15
      %v3182 = vpop.permute.xlu0 %3181
      %3183 = vrot.lane.b32.xlu0 %v2975, 15
      %v3184 = vpop.permute.xlu0 %3183
      %3185 = vrot.lane.b32.xlu0 %v2977, 15
      %v3186 = vpop.permute.xlu0 %3185
      %3187 = vrot.lane.b32.xlu0 %v2972, 15
      %v3188 = vpop.permute.xlu0 %3187
      %3189 = vrot.lane.b32.xlu0 %v2974, 15
      %v3190 = vpop.permute.xlu0 %3189
      %3191 = vrot.lane.b32.xlu0 %v2976, 15
      %v3192 = vpop.permute.xlu0 %3191
      %3193 = vrot.lane.b32.xlu0 %v2978, 15
      %v3194 = vpop.permute.xlu0 %3193
      %vm3195 = vcmp.lt.s32.totalorder %v864, 15
      %v3196 = vsel %vm3195, %v3180, %v3188
      %v3197 = vsel %vm3195, %v3182, %v3190
      %v3198 = vsel %vm3195, %v3184, %v3192
      %v3199 = vsel %vm3195, %v3186, %v3194
      %v3200 = vsel %vm3195, %v3188, %v3180
      %v3201 = vsel %vm3195, %v3190, %v3182
      %v3202 = vsel %vm3195, %v3192, %v3184
      %v3203 = vsel %vm3195, %v3194, %v3186
      %vm3204 = vcmp.lt.s32.totalorder %v2980, 15
      %vm3205 = vcmp.lt.s32.totalorder %v2981, 15
      %vm3206 = vmand %vm3204, %vm3011
      %vm3207 = vmand %vm3205, %vm3012
      %v3208 = vsel %vm3206, 1, 0
      %v3209 = vsel %vm3207, 1, 0
      %vm3210 = vcmp.eq.s32.totalorder %v3208, 1
      %vm3211 = vcmp.eq.s32.totalorder %v3209, 1
      %v3212 = vsel %vm3210, %v3200, 0.0
      %v3213 = vsel %vm3211, %v3196, 0.0
      %v3214 = vsel %vm3210, %v3201, 0.0
      %v3215 = vsel %vm3211, %v3197, 0.0
      %v3216 = vsel %vm3210, %v3202, 0.0
      %v3217 = vsel %vm3211, %v3198, 0.0
      %v3218 = vsel %vm3210, %v3203, 0.0
      %v3219 = vsel %vm3211, %v3199, 0.0
      %s3220 = scalar_lea.vmem %s9, 16
      %v3221 = vld [vmem:[%s3220] sm:$0xf]
      %v3222 = vld [vmem:[%s3220 + $0x4] sm:$0xf]
      %v3223 = vpack.c.bf16 %v3214, %v3212
      %v3224 = vpack.c.bf16 %v3215, %v3213
      %v3225 = vpack.c.bf16 %v3218, %v3216
      %v3226 = vpack.c.bf16 %v3219, %v3217
      %v3229 = vunpack.c.l.b16 %v3221
      %v3230 = vunpack.c.l.b16 %v3222
      %v3231 = vpack.c.b16 %v3230, %v3229
      %v3233 = vsel %vm2012, %v3231, 0
      %3235 = vmatprep.subr.bf16.mxu0 %v3224
      %3236 = vmatpush1.bf16.msra.mxu0 %v3223
      %3237 = vmatprep.subr.bf16.mxu0 %v3226
      %3238 = vmatpush1.bf16.msra.mxu0 %v3225
      %3239 = vmatprep.subr.bf16.mxu0 0
      %3240 = vmatpush1.bf16.msra.mxu0 0
      %3241 = vmatprep.subr.bf16.mxu0 0
      %3242 = vmatpush1.bf16.msra.mxu0 0
      %3243 = vmatprep.subr.bf16.mxu0 0
      %3244 = vmatpush1.bf16.msra.mxu0 0
      %3245 = vmatprep.subr.bf16.mxu0 0
      %3246 = vmatpush1.bf16.msra.mxu0 0
      %3247 = vmatprep.subr.bf16.mxu0 0
      %3248 = vmatpush1.bf16.msra.mxu0 0
      %3249 = vmatprep.subr.bf16.mxu0 0
      %3250 = vmatpush1.bf16.msra.mxu0 0
      %3251 = vmatprep.subr.bf16.mxu0 0
      %3252 = vmatpush1.bf16.msra.mxu0 0
      %3253 = vmatprep.subr.bf16.mxu0 0
      %3254 = vmatpush1.bf16.msra.mxu0 0
      %3255 = vmatprep.subr.bf16.mxu0 0
      %3256 = vmatpush1.bf16.msra.mxu0 0
      %3257 = vmatprep.subr.bf16.mxu0 0
      %3258 = vmatpush1.bf16.msra.mxu0 0
      %3259 = vmatprep.subr.bf16.mxu0 0
      %3260 = vmatpush1.bf16.msra.mxu0 0
      %3261 = vmatprep.subr.bf16.mxu0 0
      %3262 = vmatpush1.bf16.msra.mxu0 0
      %3263 = vmatprep.subr.bf16.mxu0 0
      %3264 = vmatpush1.bf16.msra.mxu0 0
      %3265 = vmatprep.subr.bf16.mxu0 0
      %3266 = vmatpush1.bf16.msra.mxu0 0
      %3267 = vmatprep.mubr.bf16.mxu0 0
      %3268 = vmatmul.mubr.bf16.gmra.mrb[0].mxu0 %v3233
      %v3269 = vpop.f32.mrb[0].mxu0
      %v3270 = vadd.f32 0.0, %v3269
      %v3271 = vpop.f32.mrb[0].mxu0
      %v3272 = vadd.f32 0.0, %v3271
      %v3273 = vpop.f32.mrb[0].mxu0
      %v3274 = vadd.f32 0.0, %v3273
      %v3275 = vpop.f32.mrb[0].mxu0
      %v3276 = vadd.f32 0.0, %v3275
      %3277 = vdwg.mxu0
      %v3278 = vadd.f32 %v3171, %v3270
      %v3279 = vadd.f32 %v3173, %v3272
      %v3280 = vadd.f32 %v3175, %v3274
      %v3281 = vadd.f32 %v3177, %v3276
      %3282 = vrot.lane.b32.xlu0 %v2971, 1
      %v3283 = vpop.permute.xlu0 %3282
      %3284 = vrot.lane.b32.xlu0 %v2973, 1
      %v3285 = vpop.permute.xlu0 %3284
      %3286 = vrot.lane.b32.xlu0 %v2975, 1
      %v3287 = vpop.permute.xlu0 %3286
      %3288 = vrot.lane.b32.xlu0 %v2977, 1
      %v3289 = vpop.permute.xlu0 %3288
      %3290 = vrot.lane.b32.xlu0 %v2972, 1
      %v3291 = vpop.permute.xlu0 %3290
      %3292 = vrot.lane.b32.xlu0 %v2974, 1
      %v3293 = vpop.permute.xlu0 %3292
      %3294 = vrot.lane.b32.xlu0 %v2976, 1
      %v3295 = vpop.permute.xlu0 %3294
      %3296 = vrot.lane.b32.xlu0 %v2978, 1
      %v3297 = vpop.permute.xlu0 %3296
      %vm3298 = vcmp.lt.s32.totalorder %v864, 1
      %v3299 = vsel %vm3298, %v3283, %v3291
      %v3300 = vsel %vm3298, %v3285, %v3293
      %v3301 = vsel %vm3298, %v3287, %v3295
      %v3302 = vsel %vm3298, %v3289, %v3297
      %v3303 = vsel %vm3298, %v3291, %v3283
      %v3304 = vsel %vm3298, %v3293, %v3285
      %v3305 = vsel %vm3298, %v3295, %v3287
      %v3306 = vsel %vm3298, %v3297, %v3289
      %v3307 = vsel %vm3009, 1, 0
      %v3308 = vsel %vm3010, 1, 0
      %vm3309 = vcmp.eq.s32.totalorder %v3307, 1
      %vm3310 = vcmp.eq.s32.totalorder %v3308, 1
      %v3311 = vsel %vm3309, %v3303, 0.0
      %v3312 = vsel %vm3310, %v3299, 0.0
      %v3313 = vsel %vm3309, %v3304, 0.0
      %v3314 = vsel %vm3310, %v3300, 0.0
      %v3315 = vsel %vm3309, %v3305, 0.0
      %v3316 = vsel %vm3310, %v3301, 0.0
      %v3317 = vsel %vm3309, %v3306, 0.0
      %v3318 = vsel %vm3310, %v3302, 0.0
      %s3319 = scalar_lea.vmem %s9, 24
      %v3320 = vld [vmem:[%s3319] sm:$0xf]
      %v3321 = vld [vmem:[%s3319 + $0x4] sm:$0xf]
      %v3322 = vpack.c.bf16 %v3313, %v3311
      %v3323 = vpack.c.bf16 %v3314, %v3312
      %v3324 = vpack.c.bf16 %v3317, %v3315
      %v3325 = vpack.c.bf16 %v3318, %v3316
      %v3328 = vunpack.c.l.b16 %v3320
      %v3329 = vunpack.c.l.b16 %v3321
      %v3330 = vpack.c.b16 %v3329, %v3328
      %v3332 = vsel %vm2012, %v3330, 0
      %3334 = vmatprep.subr.bf16.mxu0 %v3323
      %3335 = vmatpush1.bf16.msra.mxu0 %v3322
      %3336 = vmatprep.subr.bf16.mxu0 %v3325
      %3337 = vmatpush1.bf16.msra.mxu0 %v3324
      %3338 = vmatprep.subr.bf16.mxu0 0
      %3339 = vmatpush1.bf16.msra.mxu0 0
      %3340 = vmatprep.subr.bf16.mxu0 0
      %3341 = vmatpush1.bf16.msra.mxu0 0
      %3342 = vmatprep.subr.bf16.mxu0 0
      %3343 = vmatpush1.bf16.msra.mxu0 0
      %3344 = vmatprep.subr.bf16.mxu0 0
      %3345 = vmatpush1.bf16.msra.mxu0 0
      %3346 = vmatprep.subr.bf16.mxu0 0
      %3347 = vmatpush1.bf16.msra.mxu0 0
      %3348 = vmatprep.subr.bf16.mxu0 0
      %3349 = vmatpush1.bf16.msra.mxu0 0
      %3350 = vmatprep.subr.bf16.mxu0 0
      %3351 = vmatpush1.bf16.msra.mxu0 0
      %3352 = vmatprep.subr.bf16.mxu0 0
      %3353 = vmatpush1.bf16.msra.mxu0 0
      %3354 = vmatprep.subr.bf16.mxu0 0
      %3355 = vmatpush1.bf16.msra.mxu0 0
      %3356 = vmatprep.subr.bf16.mxu0 0
      %3357 = vmatpush1.bf16.msra.mxu0 0
      %3358 = vmatprep.subr.bf16.mxu0 0
      %3359 = vmatpush1.bf16.msra.mxu0 0
      %3360 = vmatprep.subr.bf16.mxu0 0
      %3361 = vmatpush1.bf16.msra.mxu0 0
      %3362 = vmatprep.subr.bf16.mxu0 0
      %3363 = vmatpush1.bf16.msra.mxu0 0
      %3364 = vmatprep.subr.bf16.mxu0 0
      %3365 = vmatpush1.bf16.msra.mxu0 0
      %3366 = vmatprep.mubr.bf16.mxu0 0
      %3367 = vmatmul.mubr.bf16.gmra.mrb[0].mxu0 %v3332
      %v3368 = vpop.f32.mrb[0].mxu0
      %v3369 = vadd.f32 0.0, %v3368
      %v3370 = vpop.f32.mrb[0].mxu0
      %v3371 = vadd.f32 0.0, %v3370
      %v3372 = vpop.f32.mrb[0].mxu0
      %v3373 = vadd.f32 0.0, %v3372
      %v3374 = vpop.f32.mrb[0].mxu0
      %v3375 = vadd.f32 0.0, %v3374
      %3376 = vdwg.mxu0
      %v3377 = vadd.f32 %v3278, %v3369
      %v3378 = vadd.f32 %v3279, %v3371
      %v3379 = vadd.f32 %v3280, %v3373
      %v3380 = vadd.f32 %v3281, %v3375
      %s3381 = scalar_lea.vmem %s9, 32
      %v3382 = vld [vmem:[%s3381] sm:$0xf]
      %v3383 = vld [vmem:[%s3381 + $0x4] sm:$0xf]
      %v3384 = vpack.c.bf16 %v2973, %v2971
      %v3385 = vpack.c.bf16 %v2974, %v2972
      %v3386 = vpack.c.bf16 %v2977, %v2975
      %v3387 = vpack.c.bf16 %v2978, %v2976
      %v3390 = vunpack.c.l.b16 %v3382
      %v3391 = vunpack.c.l.b16 %v3383
      %v3392 = vpack.c.b16 %v3391, %v3390
      %v3394 = vsel %vm2012, %v3392, 0
      %3396 = vmatprep.subr.bf16.mxu0 %v3385
      %3397 = vmatpush1.bf16.msra.mxu0 %v3384
      %3398 = vmatprep.subr.bf16.mxu0 %v3387
      %3399 = vmatpush1.bf16.msra.mxu0 %v3386
      %3400 = vmatprep.subr.bf16.mxu0 0
      %3401 = vmatpush1.bf16.msra.mxu0 0
      %3402 = vmatprep.subr.bf16.mxu0 0
      %3403 = vmatpush1.bf16.msra.mxu0 0
      %3404 = vmatprep.subr.bf16.mxu0 0
      %3405 = vmatpush1.bf16.msra.mxu0 0
      %3406 = vmatprep.subr.bf16.mxu0 0
      %3407 = vmatpush1.bf16.msra.mxu0 0
      %3408 = vmatprep.subr.bf16.mxu0 0
      %3409 = vmatpush1.bf16.msra.mxu0 0
      %3410 = vmatprep.subr.bf16.mxu0 0
      %3411 = vmatpush1.bf16.msra.mxu0 0
      %3412 = vmatprep.subr.bf16.mxu0 0
      %3413 = vmatpush1.bf16.msra.mxu0 0
      %3414 = vmatprep.subr.bf16.mxu0 0
      %3415 = vmatpush1.bf16.msra.mxu0 0
      %3416 = vmatprep.subr.bf16.mxu0 0
      %3417 = vmatpush1.bf16.msra.mxu0 0
      %3418 = vmatprep.subr.bf16.mxu0 0
      %3419 = vmatpush1.bf16.msra.mxu0 0
      %3420 = vmatprep.subr.bf16.mxu0 0
      %3421 = vmatpush1.bf16.msra.mxu0 0
      %3422 = vmatprep.subr.bf16.mxu0 0
      %3423 = vmatpush1.bf16.msra.mxu0 0
      %3424 = vmatprep.subr.bf16.mxu0 0
      %3425 = vmatpush1.bf16.msra.mxu0 0
      %3426 = vmatprep.subr.bf16.mxu0 0
      %3427 = vmatpush1.bf16.msra.mxu0 0
      %3428 = vmatprep.mubr.bf16.mxu0 0
      %3429 = vmatmul.mubr.bf16.gmra.mrb[0].mxu0 %v3394
      %v3430 = vpop.f32.mrb[0].mxu0
      %v3431 = vadd.f32 0.0, %v3430
      %v3432 = vpop.f32.mrb[0].mxu0
      %v3433 = vadd.f32 0.0, %v3432
      %v3434 = vpop.f32.mrb[0].mxu0
      %v3435 = vadd.f32 0.0, %v3434
      %v3436 = vpop.f32.mrb[0].mxu0
      %v3437 = vadd.f32 0.0, %v3436
      %3438 = vdwg.mxu0
      %v3439 = vadd.f32 %v3377, %v3431
      %v3440 = vadd.f32 %v3378, %v3433
      %v3441 = vadd.f32 %v3379, %v3435
      %v3442 = vadd.f32 %v3380, %v3437
      %3443 = vrot.lane.b32.xlu0 %v2971, 127
      %v3444 = vpop.permute.xlu0 %3443
      %3445 = vrot.lane.b32.xlu0 %v2973, 127
      %v3446 = vpop.permute.xlu0 %3445
      %3447 = vrot.lane.b32.xlu0 %v2975, 127
      %v3448 = vpop.permute.xlu0 %3447
      %3449 = vrot.lane.b32.xlu0 %v2977, 127
      %v3450 = vpop.permute.xlu0 %3449
      %3451 = vrot.lane.b32.xlu0 %v2972, 127
      %v3452 = vpop.permute.xlu0 %3451
      %3453 = vrot.lane.b32.xlu0 %v2974, 127
      %v3454 = vpop.permute.xlu0 %3453
      %3455 = vrot.lane.b32.xlu0 %v2976, 127
      %v3456 = vpop.permute.xlu0 %3455
      %3457 = vrot.lane.b32.xlu0 %v2978, 127
      %v3458 = vpop.permute.xlu0 %3457
      %vm3459 = vcmp.lt.s32.totalorder %v864, 127
      %v3460 = vsel %vm3459, %v3444, %v3452
      %v3461 = vsel %vm3459, %v3446, %v3454
      %v3462 = vsel %vm3459, %v3448, %v3456
      %v3463 = vsel %vm3459, %v3450, %v3458
      %v3464 = vsel %vm3459, %v3452, %v3444
      %v3465 = vsel %vm3459, %v3454, %v3446
      %v3466 = vsel %vm3459, %v3456, %v3448
      %v3467 = vsel %vm3459, %v3458, %v3450
      %v3468 = vsel %vm3204, 1, 0
      %v3469 = vsel %vm3205, 1, 0
      %vm3470 = vcmp.eq.s32.totalorder %v3468, 1
      %vm3471 = vcmp.eq.s32.totalorder %v3469, 1
      %v3472 = vsel %vm3470, %v3460, 0.0
      %v3473 = vsel %vm3471, %v3464, 0.0
      %v3474 = vsel %vm3470, %v3461, 0.0
      %v3475 = vsel %vm3471, %v3465, 0.0
      %v3476 = vsel %vm3470, %v3462, 0.0
      %v3477 = vsel %vm3471, %v3466, 0.0
      %v3478 = vsel %vm3470, %v3463, 0.0
      %v3479 = vsel %vm3471, %v3467, 0.0
      %s3480 = scalar_lea.vmem %s9, 40
      %v3481 = vld [vmem:[%s3480] sm:$0xf]
      %v3482 = vld [vmem:[%s3480 + $0x4] sm:$0xf]
      %v3483 = vpack.c.bf16 %v3474, %v3472
      %v3484 = vpack.c.bf16 %v3475, %v3473
      %v3485 = vpack.c.bf16 %v3478, %v3476
      %v3486 = vpack.c.bf16 %v3479, %v3477
      %v3489 = vunpack.c.l.b16 %v3481
      %v3490 = vunpack.c.l.b16 %v3482
      %v3491 = vpack.c.b16 %v3490, %v3489
      %v3493 = vsel %vm2012, %v3491, 0
      %3495 = vmatprep.subr.bf16.mxu0 %v3484
      %3496 = vmatpush1.bf16.msra.mxu0 %v3483
      %3497 = vmatprep.subr.bf16.mxu0 %v3486
      %3498 = vmatpush1.bf16.msra.mxu0 %v3485
      %3499 = vmatprep.subr.bf16.mxu0 0
      %3500 = vmatpush1.bf16.msra.mxu0 0
      %3501 = vmatprep.subr.bf16.mxu0 0
      %3502 = vmatpush1.bf16.msra.mxu0 0
      %3503 = vmatprep.subr.bf16.mxu0 0
      %3504 = vmatpush1.bf16.msra.mxu0 0
      %3505 = vmatprep.subr.bf16.mxu0 0
      %3506 = vmatpush1.bf16.msra.mxu0 0
      %3507 = vmatprep.subr.bf16.mxu0 0
      %3508 = vmatpush1.bf16.msra.mxu0 0
      %3509 = vmatprep.subr.bf16.mxu0 0
      %3510 = vmatpush1.bf16.msra.mxu0 0
      %3511 = vmatprep.subr.bf16.mxu0 0
      %3512 = vmatpush1.bf16.msra.mxu0 0
      %3513 = vmatprep.subr.bf16.mxu0 0
      %3514 = vmatpush1.bf16.msra.mxu0 0
      %3515 = vmatprep.subr.bf16.mxu0 0
      %3516 = vmatpush1.bf16.msra.mxu0 0
      %3517 = vmatprep.subr.bf16.mxu0 0
      %3518 = vmatpush1.bf16.msra.mxu0 0
      %3519 = vmatprep.subr.bf16.mxu0 0
      %3520 = vmatpush1.bf16.msra.mxu0 0
      %3521 = vmatprep.subr.bf16.mxu0 0
      %3522 = vmatpush1.bf16.msra.mxu0 0
      %3523 = vmatprep.subr.bf16.mxu0 0
      %3524 = vmatpush1.bf16.msra.mxu0 0
      %3525 = vmatprep.subr.bf16.mxu0 0
      %3526 = vmatpush1.bf16.msra.mxu0 0
      %3527 = vmatprep.mubr.bf16.mxu0 0
      %3528 = vmatmul.mubr.bf16.gmra.mrb[0].mxu0 %v3493
      %v3529 = vpop.f32.mrb[0].mxu0
      %v3530 = vadd.f32 0.0, %v3529
      %v3531 = vpop.f32.mrb[0].mxu0
      %v3532 = vadd.f32 0.0, %v3531
      %v3533 = vpop.f32.mrb[0].mxu0
      %v3534 = vadd.f32 0.0, %v3533
      %v3535 = vpop.f32.mrb[0].mxu0
      %v3536 = vadd.f32 0.0, %v3535
      %3537 = vdwg.mxu0
      %v3538 = vadd.f32 %v3439, %v3530
      %v3539 = vadd.f32 %v3440, %v3532
      %v3540 = vadd.f32 %v3441, %v3534
      %v3541 = vadd.f32 %v3442, %v3536
      %3542 = vrot.lane.b32.xlu0 %v2971, 113
      %v3543 = vpop.permute.xlu0 %3542
      %3544 = vrot.lane.b32.xlu0 %v2973, 113
      %v3545 = vpop.permute.xlu0 %3544
      %3546 = vrot.lane.b32.xlu0 %v2975, 113
      %v3547 = vpop.permute.xlu0 %3546
      %3548 = vrot.lane.b32.xlu0 %v2977, 113
      %v3549 = vpop.permute.xlu0 %3548
      %3550 = vrot.lane.b32.xlu0 %v2972, 113
      %v3551 = vpop.permute.xlu0 %3550
      %3552 = vrot.lane.b32.xlu0 %v2974, 113
      %v3553 = vpop.permute.xlu0 %3552
      %3554 = vrot.lane.b32.xlu0 %v2976, 113
      %v3555 = vpop.permute.xlu0 %3554
      %3556 = vrot.lane.b32.xlu0 %v2978, 113
      %v3557 = vpop.permute.xlu0 %3556
      %vm3558 = vcmp.lt.s32.totalorder %v864, 113
      %v3559 = vsel %vm3558, %v3543, %v3551
      %v3560 = vsel %vm3558, %v3545, %v3553
      %v3561 = vsel %vm3558, %v3547, %v3555
      %v3562 = vsel %vm3558, %v3549, %v3557
      %v3563 = vsel %vm3558, %v3551, %v3543
      %v3564 = vsel %vm3558, %v3553, %v3545
      %v3565 = vsel %vm3558, %v3555, %v3547
      %v3566 = vsel %vm3558, %v3557, %v3549
      %vm3567 = vcmp.lt.s32.totalorder %v2982, 15
      %vm3568 = vcmp.lt.s32.totalorder %v2983, 15
      %vm3569 = vmand %vm3009, %vm3567
      %vm3570 = vmand %vm3010, %vm3568
      %v3571 = vsel %vm3569, 1, 0
      %v3572 = vsel %vm3570, 1, 0
      %vm3573 = vcmp.eq.s32.totalorder %v3571, 1
      %vm3574 = vcmp.eq.s32.totalorder %v3572, 1
      %v3575 = vsel %vm3573, %v3559, 0.0
      %v3576 = vsel %vm3574, %v3563, 0.0
      %v3577 = vsel %vm3573, %v3560, 0.0
      %v3578 = vsel %vm3574, %v3564, 0.0
      %v3579 = vsel %vm3573, %v3561, 0.0
      %v3580 = vsel %vm3574, %v3565, 0.0
      %v3581 = vsel %vm3573, %v3562, 0.0
      %v3582 = vsel %vm3574, %v3566, 0.0
      %s3583 = scalar_lea.vmem %s9, 48
      %v3584 = vld [vmem:[%s3583] sm:$0xf]
      %v3585 = vld [vmem:[%s3583 + $0x4] sm:$0xf]
      %v3586 = vpack.c.bf16 %v3577, %v3575
      %v3587 = vpack.c.bf16 %v3578, %v3576
      %v3588 = vpack.c.bf16 %v3581, %v3579
      %v3589 = vpack.c.bf16 %v3582, %v3580
      %v3592 = vunpack.c.l.b16 %v3584
      %v3593 = vunpack.c.l.b16 %v3585
      %v3594 = vpack.c.b16 %v3593, %v3592
      %v3596 = vsel %vm2012, %v3594, 0
      %3598 = vmatprep.subr.bf16.mxu0 %v3587
      %3599 = vmatpush1.bf16.msra.mxu0 %v3586
      %3600 = vmatprep.subr.bf16.mxu0 %v3589
      %3601 = vmatpush1.bf16.msra.mxu0 %v3588
      %3602 = vmatprep.subr.bf16.mxu0 0
      %3603 = vmatpush1.bf16.msra.mxu0 0
      %3604 = vmatprep.subr.bf16.mxu0 0
      %3605 = vmatpush1.bf16.msra.mxu0 0
      %3606 = vmatprep.subr.bf16.mxu0 0
      %3607 = vmatpush1.bf16.msra.mxu0 0
      %3608 = vmatprep.subr.bf16.mxu0 0
      %3609 = vmatpush1.bf16.msra.mxu0 0
      %3610 = vmatprep.subr.bf16.mxu0 0
      %3611 = vmatpush1.bf16.msra.mxu0 0
      %3612 = vmatprep.subr.bf16.mxu0 0
      %3613 = vmatpush1.bf16.msra.mxu0 0
      %3614 = vmatprep.subr.bf16.mxu0 0
      %3615 = vmatpush1.bf16.msra.mxu0 0
      %3616 = vmatprep.subr.bf16.mxu0 0
      %3617 = vmatpush1.bf16.msra.mxu0 0
      %3618 = vmatprep.subr.bf16.mxu0 0
      %3619 = vmatpush1.bf16.msra.mxu0 0
      %3620 = vmatprep.subr.bf16.mxu0 0
      %3621 = vmatpush1.bf16.msra.mxu0 0
      %3622 = vmatprep.subr.bf16.mxu0 0
      %3623 = vmatpush1.bf16.msra.mxu0 0
      %3624 = vmatprep.subr.bf16.mxu0 0
      %3625 = vmatpush1.bf16.msra.mxu0 0
      %3626 = vmatprep.subr.bf16.mxu0 0
      %3627 = vmatpush1.bf16.msra.mxu0 0
      %3628 = vmatprep.subr.bf16.mxu0 0
      %3629 = vmatpush1.bf16.msra.mxu0 0
      %3630 = vmatprep.mubr.bf16.mxu0 0
      %3631 = vmatmul.mubr.bf16.gmra.mrb[0].mxu0 %v3596
      %v3632 = vpop.f32.mrb[0].mxu0
      %v3633 = vadd.f32 0.0, %v3632
      %v3634 = vpop.f32.mrb[0].mxu0
      %v3635 = vadd.f32 0.0, %v3634
      %v3636 = vpop.f32.mrb[0].mxu0
      %v3637 = vadd.f32 0.0, %v3636
      %v3638 = vpop.f32.mrb[0].mxu0
      %v3639 = vadd.f32 0.0, %v3638
      %3640 = vdwg.mxu0
      %v3641 = vadd.f32 %v3538, %v3633
      %v3642 = vadd.f32 %v3539, %v3635
      %v3643 = vadd.f32 %v3540, %v3637
      %v3644 = vadd.f32 %v3541, %v3639
      %3645 = vrot.lane.b32.xlu0 %v2971, 112
      %v3646 = vpop.permute.xlu0 %3645
      %3647 = vrot.lane.b32.xlu0 %v2973, 112
      %v3648 = vpop.permute.xlu0 %3647
      %3649 = vrot.lane.b32.xlu0 %v2975, 112
      %v3650 = vpop.permute.xlu0 %3649
      %3651 = vrot.lane.b32.xlu0 %v2977, 112
      %v3652 = vpop.permute.xlu0 %3651
      %3653 = vrot.lane.b32.xlu0 %v2972, 112
      %v3654 = vpop.permute.xlu0 %3653
      %3655 = vrot.lane.b32.xlu0 %v2974, 112
      %v3656 = vpop.permute.xlu0 %3655
      %3657 = vrot.lane.b32.xlu0 %v2976, 112
      %v3658 = vpop.permute.xlu0 %3657
      %3659 = vrot.lane.b32.xlu0 %v2978, 112
      %v3660 = vpop.permute.xlu0 %3659
      %vm3661 = vcmp.lt.s32.totalorder %v864, 112
      %v3662 = vsel %vm3661, %v3646, %v3654
      %v3663 = vsel %vm3661, %v3648, %v3656
      %v3664 = vsel %vm3661, %v3650, %v3658
      %v3665 = vsel %vm3661, %v3652, %v3660
      %v3666 = vsel %vm3661, %v3654, %v3646
      %v3667 = vsel %vm3661, %v3656, %v3648
      %v3668 = vsel %vm3661, %v3658, %v3650
      %v3669 = vsel %vm3661, %v3660, %v3652
      %v3670 = vsel %vm3567, 1, 0
      %v3671 = vsel %vm3568, 1, 0
      %vm3672 = vcmp.eq.s32.totalorder %v3670, 1
      %vm3673 = vcmp.eq.s32.totalorder %v3671, 1
      %v3674 = vsel %vm3672, %v3662, 0.0
      %v3675 = vsel %vm3673, %v3666, 0.0
      %v3676 = vsel %vm3672, %v3663, 0.0
      %v3677 = vsel %vm3673, %v3667, 0.0
      %v3678 = vsel %vm3672, %v3664, 0.0
      %v3679 = vsel %vm3673, %v3668, 0.0
      %v3680 = vsel %vm3672, %v3665, 0.0
      %v3681 = vsel %vm3673, %v3669, 0.0
      %s3682 = scalar_lea.vmem %s9, 56
      %v3683 = vld [vmem:[%s3682] sm:$0xf]
      %v3684 = vld [vmem:[%s3682 + $0x4] sm:$0xf]
      %v3685 = vpack.c.bf16 %v3676, %v3674
      %v3686 = vpack.c.bf16 %v3677, %v3675
      %v3687 = vpack.c.bf16 %v3680, %v3678
      %v3688 = vpack.c.bf16 %v3681, %v3679
      %v3691 = vunpack.c.l.b16 %v3683
      %v3692 = vunpack.c.l.b16 %v3684
      %v3693 = vpack.c.b16 %v3692, %v3691
      %v3695 = vsel %vm2012, %v3693, 0
      %3697 = vmatprep.subr.bf16.mxu0 %v3686
      %3698 = vmatpush1.bf16.msra.mxu0 %v3685
      %3699 = vmatprep.subr.bf16.mxu0 %v3688
      %3700 = vmatpush1.bf16.msra.mxu0 %v3687
      %3701 = vmatprep.subr.bf16.mxu0 0
      %3702 = vmatpush1.bf16.msra.mxu0 0
      %3703 = vmatprep.subr.bf16.mxu0 0
      %3704 = vmatpush1.bf16.msra.mxu0 0
      %3705 = vmatprep.subr.bf16.mxu0 0
      %3706 = vmatpush1.bf16.msra.mxu0 0
      %3707 = vmatprep.subr.bf16.mxu0 0
      %3708 = vmatpush1.bf16.msra.mxu0 0
      %3709 = vmatprep.subr.bf16.mxu0 0
      %3710 = vmatpush1.bf16.msra.mxu0 0
      %3711 = vmatprep.subr.bf16.mxu0 0
      %3712 = vmatpush1.bf16.msra.mxu0 0
      %3713 = vmatprep.subr.bf16.mxu0 0
      %3714 = vmatpush1.bf16.msra.mxu0 0
      %3715 = vmatprep.subr.bf16.mxu0 0
      %3716 = vmatpush1.bf16.msra.mxu0 0
      %3717 = vmatprep.subr.bf16.mxu0 0
      %3718 = vmatpush1.bf16.msra.mxu0 0
      %3719 = vmatprep.subr.bf16.mxu0 0
      %3720 = vmatpush1.bf16.msra.mxu0 0
      %3721 = vmatprep.subr.bf16.mxu0 0
      %3722 = vmatpush1.bf16.msra.mxu0 0
      %3723 = vmatprep.subr.bf16.mxu0 0
      %3724 = vmatpush1.bf16.msra.mxu0 0
      %3725 = vmatprep.subr.bf16.mxu0 0
      %3726 = vmatpush1.bf16.msra.mxu0 0
      %3727 = vmatprep.subr.bf16.mxu0 0
      %3728 = vmatpush1.bf16.msra.mxu0 0
      %3729 = vmatprep.mubr.bf16.mxu0 0
      %3730 = vmatmul.mubr.bf16.gmra.mrb[0].mxu0 %v3695
      %v3731 = vpop.f32.mrb[0].mxu0
      %v3732 = vadd.f32 0.0, %v3731
      %v3733 = vpop.f32.mrb[0].mxu0
      %v3734 = vadd.f32 0.0, %v3733
      %v3735 = vpop.f32.mrb[0].mxu0
      %v3736 = vadd.f32 0.0, %v3735
      %v3737 = vpop.f32.mrb[0].mxu0
      %v3738 = vadd.f32 0.0, %v3737
      %3739 = vdwg.mxu0
      %v3740 = vadd.f32 %v3641, %v3732
      %v3741 = vadd.f32 %v3642, %v3734
      %v3742 = vadd.f32 %v3643, %v3736
      %v3743 = vadd.f32 %v3644, %v3738
      %3744 = vrot.lane.b32.xlu0 %v2971, 111
      %v3745 = vpop.permute.xlu0 %3744
      %3746 = vrot.lane.b32.xlu0 %v2973, 111
      %v3747 = vpop.permute.xlu0 %3746
      %3748 = vrot.lane.b32.xlu0 %v2975, 111
      %v3749 = vpop.permute.xlu0 %3748
      %3750 = vrot.lane.b32.xlu0 %v2977, 111
      %v3751 = vpop.permute.xlu0 %3750
      %3752 = vrot.lane.b32.xlu0 %v2972, 111
      %v3753 = vpop.permute.xlu0 %3752
      %3754 = vrot.lane.b32.xlu0 %v2974, 111
      %v3755 = vpop.permute.xlu0 %3754
      %3756 = vrot.lane.b32.xlu0 %v2976, 111
      %v3757 = vpop.permute.xlu0 %3756
      %3758 = vrot.lane.b32.xlu0 %v2978, 111
      %v3759 = vpop.permute.xlu0 %3758
      %vm3760 = vcmp.lt.s32.totalorder %v864, 111
      %v3761 = vsel %vm3760, %v3745, %v3753
      %v3762 = vsel %vm3760, %v3747, %v3755
      %v3763 = vsel %vm3760, %v3749, %v3757
      %v3764 = vsel %vm3760, %v3751, %v3759
      %v3765 = vsel %vm3760, %v3753, %v3745
      %v3766 = vsel %vm3760, %v3755, %v3747
      %v3767 = vsel %vm3760, %v3757, %v3749
      %v3768 = vsel %vm3760, %v3759, %v3751
      %vm3769 = vmand %vm3204, %vm3567
      %vm3770 = vmand %vm3205, %vm3568
      %v3771 = vsel %vm3769, 1, 0
      %v3772 = vsel %vm3770, 1, 0
      %vm3773 = vcmp.eq.s32.totalorder %v3771, 1
      %vm3774 = vcmp.eq.s32.totalorder %v3772, 1
      %v3775 = vsel %vm3773, %v3761, 0.0
      %v3776 = vsel %vm3774, %v3765, 0.0
      %v3777 = vsel %vm3773, %v3762, 0.0
      %v3778 = vsel %vm3774, %v3766, 0.0
      %v3779 = vsel %vm3773, %v3763, 0.0
      %v3780 = vsel %vm3774, %v3767, 0.0
      %v3781 = vsel %vm3773, %v3764, 0.0
      %v3782 = vsel %vm3774, %v3768, 0.0
      %s3783 = scalar_lea.vmem %s9, 64
      %v3784 = vld [vmem:[%s3783] sm:$0xf]
      %v3785 = vld [vmem:[%s3783 + $0x4] sm:$0xf]
      %v3786 = vpack.c.bf16 %v3777, %v3775
      %v3787 = vpack.c.bf16 %v3778, %v3776
      %v3788 = vpack.c.bf16 %v3781, %v3779
      %v3789 = vpack.c.bf16 %v3782, %v3780
      %v3792 = vunpack.c.l.b16 %v3784
      %v3793 = vunpack.c.l.b16 %v3785
      %v3794 = vpack.c.b16 %v3793, %v3792
      %v3796 = vsel %vm2012, %v3794, 0
      %3798 = vmatprep.subr.bf16.mxu0 %v3787
      %3799 = vmatpush1.bf16.msra.mxu0 %v3786
      %3800 = vmatprep.subr.bf16.mxu0 %v3789
      %3801 = vmatpush1.bf16.msra.mxu0 %v3788
      %3802 = vmatprep.subr.bf16.mxu0 0
      %3803 = vmatpush1.bf16.msra.mxu0 0
      %3804 = vmatprep.subr.bf16.mxu0 0
      %3805 = vmatpush1.bf16.msra.mxu0 0
      %3806 = vmatprep.subr.bf16.mxu0 0
      %3807 = vmatpush1.bf16.msra.mxu0 0
      %3808 = vmatprep.subr.bf16.mxu0 0
      %3809 = vmatpush1.bf16.msra.mxu0 0
      %3810 = vmatprep.subr.bf16.mxu0 0
      %3811 = vmatpush1.bf16.msra.mxu0 0
      %3812 = vmatprep.subr.bf16.mxu0 0
      %3813 = vmatpush1.bf16.msra.mxu0 0
      %3814 = vmatprep.subr.bf16.mxu0 0
      %3815 = vmatpush1.bf16.msra.mxu0 0
      %3816 = vmatprep.subr.bf16.mxu0 0
      %3817 = vmatpush1.bf16.msra.mxu0 0
      %3818 = vmatprep.subr.bf16.mxu0 0
      %3819 = vmatpush1.bf16.msra.mxu0 0
      %3820 = vmatprep.subr.bf16.mxu0 0
      %3821 = vmatpush1.bf16.msra.mxu0 0
      %3822 = vmatprep.subr.bf16.mxu0 0
      %3823 = vmatpush1.bf16.msra.mxu0 0
      %3824 = vmatprep.subr.bf16.mxu0 0
      %3825 = vmatpush1.bf16.msra.mxu0 0
      %3826 = vmatprep.subr.bf16.mxu0 0
      %3827 = vmatpush1.bf16.msra.mxu0 0
      %3828 = vmatprep.subr.bf16.mxu0 0
      %3829 = vmatpush1.bf16.msra.mxu0 0
      %3830 = vmatprep.mubr.bf16.mxu0 0
      %3831 = vmatmul.mubr.bf16.gmra.mrb[0].mxu0 %v3796
      %v3832 = vpop.f32.mrb[0].mxu0
      %v3833 = vadd.f32 0.0, %v3832
      %v3834 = vpop.f32.mrb[0].mxu0
      %v3835 = vadd.f32 0.0, %v3834
      %v3836 = vpop.f32.mrb[0].mxu0
      %v3837 = vadd.f32 0.0, %v3836
      %v3838 = vpop.f32.mrb[0].mxu0
      %v3839 = vadd.f32 0.0, %v3838
      %3840 = vdwg.mxu0
      %v3841 = vadd.f32 %v3740, %v3833
      %v3842 = vadd.f32 %v3741, %v3835
      %v3843 = vadd.f32 %v3742, %v3837
      %v3844 = vadd.f32 %v3743, %v3839
      %v3845 = vld [vmem:[%s10] sm:$0xff]
      %v3846 = vld [vmem:[%s10 + $0x8] sm:$0xff]
      %3848 = vset.pattern.permute.xlu0 0
      %3849 = vperm.xlu0 %3848, %v3845
      %v3850 = vpop.permute.xlu0 %3849
      %3853 = vset.pattern.permute.xlu0 0
      %3854 = vperm.xlu0 %3853, %v3846
      %v3855 = vpop.permute.xlu0 %3854
      %v3857 = vadd.f32 %v3841, %v3850
      %v3858 = vadd.f32 %v3842, %v3850
      %v3859 = vadd.f32 %v3843, %v3855
      %v3860 = vadd.f32 %v3844, %v3855
      %v3861 = vmax.f32 %v3857, 0.0
      %v3862 = vmax.f32 %v3858, 0.0
      %v3863 = vmax.f32 %v3859, 0.0
      %v3864 = vmax.f32 %v3860, 0.0
      %3865 = vrot.lane.b32.xlu0 %v3861, 17
      %v3866 = vpop.permute.xlu0 %3865
      %3867 = vrot.lane.b32.xlu0 %v3863, 17
      %v3868 = vpop.permute.xlu0 %3867
      %3869 = vrot.lane.b32.xlu0 %v3862, 17
      %v3870 = vpop.permute.xlu0 %3869
      %3871 = vrot.lane.b32.xlu0 %v3864, 17
      %v3872 = vpop.permute.xlu0 %3871
      %v3873 = vsel %vm3000, %v3866, %v3870
      %v3874 = vsel %vm3000, %v3868, %v3872
      %v3875 = vsel %vm3000, %v3870, %v3866
      %v3876 = vsel %vm3000, %v3872, %v3868
      %v3877 = vsel %vm3017, %v3875, 0.0
      %v3878 = vsel %vm3018, %v3873, 0.0
      %v3879 = vsel %vm3017, %v3876, 0.0
      %v3880 = vsel %vm3018, %v3874, 0.0
      %v3881 = vld [vmem:[%s11] sm:$0xf]
      %v3882 = vld [vmem:[%s11 + $0x4] sm:$0xf]
      %v3883 = vpack.c.bf16 %v3879, %v3877
      %v3884 = vpack.c.bf16 %v3880, %v3878
      %3885 = vrot.lane.b32.xlu0 %v3861, 16
      %v3886 = vpop.permute.xlu0 %3885
      %3887 = vrot.lane.b32.xlu0 %v3863, 16
      %v3888 = vpop.permute.xlu0 %3887
      %3889 = vrot.lane.b32.xlu0 %v3862, 16
      %v3890 = vpop.permute.xlu0 %3889
      %3891 = vrot.lane.b32.xlu0 %v3864, 16
      %v3892 = vpop.permute.xlu0 %3891
      %v3893 = vsel %vm3049, %v3886, %v3890
      %v3894 = vsel %vm3049, %v3888, %v3892
      %v3895 = vsel %vm3049, %v3890, %v3886
      %v3896 = vsel %vm3049, %v3892, %v3888
      %v3897 = vsel %vm3060, %v3895, 0.0
      %v3898 = vsel %vm3061, %v3893, 0.0
      %v3899 = vsel %vm3060, %v3896, 0.0
      %v3900 = vsel %vm3061, %v3894, 0.0
      %s3901 = scalar_lea.vmem %s11, 8
      %v3902 = vld [vmem:[%s3901] sm:$0xf]
      %v3903 = vld [vmem:[%s3901 + $0x4] sm:$0xf]
      %v3904 = vpack.c.bf16 %v3899, %v3897
      %v3905 = vpack.c.bf16 %v3900, %v3898
      %v3908 = vunpack.c.l.b16 %v3902
      %v3909 = vunpack.c.l.b16 %v3903
      %v3910 = vpack.c.b16 %v3909, %v3908
      %v3912 = vsel %vm679, %v3910, 0
      %3914 = vmatprep.subr.bf16.mxu0 %v3905
      %3915 = vmatpush1.bf16.msra.mxu0 %v3904
      %3916 = vmatprep.subr.bf16.mxu0 0
      %3917 = vmatpush1.bf16.msra.mxu0 0
      %3918 = vmatprep.subr.bf16.mxu0 0
      %3919 = vmatpush1.bf16.msra.mxu0 0
      %3920 = vmatprep.subr.bf16.mxu0 0
      %3921 = vmatpush1.bf16.msra.mxu0 0
      %3922 = vmatprep.subr.bf16.mxu0 0
      %3923 = vmatpush1.bf16.msra.mxu0 0
      %3924 = vmatprep.subr.bf16.mxu0 0
      %3925 = vmatpush1.bf16.msra.mxu0 0
      %3926 = vmatprep.subr.bf16.mxu0 0
      %3927 = vmatpush1.bf16.msra.mxu0 0
      %3928 = vmatprep.subr.bf16.mxu0 0
      %3929 = vmatpush1.bf16.msra.mxu0 0
      %3930 = vmatprep.subr.bf16.mxu0 0
      %3931 = vmatpush1.bf16.msra.mxu0 0
      %3932 = vmatprep.subr.bf16.mxu0 0
      %3933 = vmatpush1.bf16.msra.mxu0 0
      %3934 = vmatprep.subr.bf16.mxu0 0
      %3935 = vmatpush1.bf16.msra.mxu0 0
      %3936 = vmatprep.subr.bf16.mxu0 0
      %3937 = vmatpush1.bf16.msra.mxu0 0
      %3938 = vmatprep.subr.bf16.mxu0 0
      %3939 = vmatpush1.bf16.msra.mxu0 0
      %3940 = vmatprep.subr.bf16.mxu0 0
      %3941 = vmatpush1.bf16.msra.mxu0 0
      %3942 = vmatprep.subr.bf16.mxu0 0
      %3943 = vmatpush1.bf16.msra.mxu0 0
      %3944 = vmatprep.subr.bf16.mxu0 0
      %3945 = vmatpush1.bf16.msra.mxu0 0
      %3946 = vmatprep.mubr.bf16.mxu0 0
      %3947 = vmatmul.mubr.bf16.gmra.mrb[0].mxu0 %v3912
      %v3948 = vpop.f32.mrb[0].mxu0
      %v3949 = vadd.f32 0.0, %v3948
      %v3950 = vpop.f32.mrb[0].mxu0
      %v3951 = vadd.f32 0.0, %v3950
      %v3952 = vpop.f32.mrb[0].mxu0
      %v3953 = vadd.f32 0.0, %v3952
      %v3954 = vpop.f32.mrb[0].mxu0
      %v3955 = vadd.f32 0.0, %v3954
      %3956 = vdwg.mxu0
      %v3959 = vunpack.c.l.b16 %v3881
      %v3960 = vunpack.c.l.b16 %v3882
      %v3961 = vpack.c.b16 %v3960, %v3959
      %v3963 = vsel %vm679, %v3961, 0
      %3965 = vmatprep.subr.bf16.mxu0 %v3884
      %3966 = vmatpush1.bf16.msra.mxu0 %v3883
      %3967 = vmatprep.subr.bf16.mxu0 0
      %3968 = vmatpush1.bf16.msra.mxu0 0
      %3969 = vmatprep.subr.bf16.mxu0 0
      %3970 = vmatpush1.bf16.msra.mxu0 0
      %3971 = vmatprep.subr.bf16.mxu0 0
      %3972 = vmatpush1.bf16.msra.mxu0 0
      %3973 = vmatprep.subr.bf16.mxu0 0
      %3974 = vmatpush1.bf16.msra.mxu0 0
      %3975 = vmatprep.subr.bf16.mxu0 0
      %3976 = vmatpush1.bf16.msra.mxu0 0
      %3977 = vmatprep.subr.bf16.mxu0 0
      %3978 = vmatpush1.bf16.msra.mxu0 0
      %3979 = vmatprep.subr.bf16.mxu0 0
      %3980 = vmatpush1.bf16.msra.mxu0 0
      %3981 = vmatprep.subr.bf16.mxu0 0
      %3982 = vmatpush1.bf16.msra.mxu0 0
      %3983 = vmatprep.subr.bf16.mxu0 0
      %3984 = vmatpush1.bf16.msra.mxu0 0
      %3985 = vmatprep.subr.bf16.mxu0 0
      %3986 = vmatpush1.bf16.msra.mxu0 0
      %3987 = vmatprep.subr.bf16.mxu0 0
      %3988 = vmatpush1.bf16.msra.mxu0 0
      %3989 = vmatprep.subr.bf16.mxu0 0
      %3990 = vmatpush1.bf16.msra.mxu0 0
      %3991 = vmatprep.subr.bf16.mxu0 0
      %3992 = vmatpush1.bf16.msra.mxu0 0
      %3993 = vmatprep.subr.bf16.mxu0 0
      %3994 = vmatpush1.bf16.msra.mxu0 0
      %3995 = vmatprep.subr.bf16.mxu0 0
      %3996 = vmatpush1.bf16.msra.mxu0 0
      %3997 = vmatprep.mubr.bf16.mxu0 0
      %3998 = vmatmul.mubr.bf16.gmra.mrb[0].mxu0 %v3963
      %v3999 = vpop.f32.mrb[0].mxu0
      %v4000 = vadd.f32 %v3949, %v3999
      %v4001 = vpop.f32.mrb[0].mxu0
      %v4002 = vadd.f32 %v3951, %v4001
      %v4003 = vpop.f32.mrb[0].mxu0
      %v4004 = vadd.f32 %v3953, %v4003
      %v4005 = vpop.f32.mrb[0].mxu0
      %v4006 = vadd.f32 %v3955, %v4005
      %4007 = vdwg.mxu0
      %4008 = vrot.lane.b32.xlu0 %v3861, 15
      %v4009 = vpop.permute.xlu0 %4008
      %4010 = vrot.lane.b32.xlu0 %v3863, 15
      %v4011 = vpop.permute.xlu0 %4010
      %4012 = vrot.lane.b32.xlu0 %v3862, 15
      %v4013 = vpop.permute.xlu0 %4012
      %4014 = vrot.lane.b32.xlu0 %v3864, 15
      %v4015 = vpop.permute.xlu0 %4014
      %v4016 = vsel %vm3195, %v4009, %v4013
      %v4017 = vsel %vm3195, %v4011, %v4015
      %v4018 = vsel %vm3195, %v4013, %v4009
      %v4019 = vsel %vm3195, %v4015, %v4011
      %v4020 = vsel %vm3210, %v4018, 0.0
      %v4021 = vsel %vm3211, %v4016, 0.0
      %v4022 = vsel %vm3210, %v4019, 0.0
      %v4023 = vsel %vm3211, %v4017, 0.0
      %s4024 = scalar_lea.vmem %s11, 16
      %v4025 = vld [vmem:[%s4024] sm:$0xf]
      %v4026 = vld [vmem:[%s4024 + $0x4] sm:$0xf]
      %v4027 = vpack.c.bf16 %v4022, %v4020
      %v4028 = vpack.c.bf16 %v4023, %v4021
      %v4031 = vunpack.c.l.b16 %v4025
      %v4032 = vunpack.c.l.b16 %v4026
      %v4033 = vpack.c.b16 %v4032, %v4031
      %v4035 = vsel %vm679, %v4033, 0
      %4037 = vmatprep.subr.bf16.mxu0 %v4028
      %4038 = vmatpush1.bf16.msra.mxu0 %v4027
      %4039 = vmatprep.subr.bf16.mxu0 0
      %4040 = vmatpush1.bf16.msra.mxu0 0
      %4041 = vmatprep.subr.bf16.mxu0 0
      %4042 = vmatpush1.bf16.msra.mxu0 0
      %4043 = vmatprep.subr.bf16.mxu0 0
      %4044 = vmatpush1.bf16.msra.mxu0 0
      %4045 = vmatprep.subr.bf16.mxu0 0
      %4046 = vmatpush1.bf16.msra.mxu0 0
      %4047 = vmatprep.subr.bf16.mxu0 0
      %4048 = vmatpush1.bf16.msra.mxu0 0
      %4049 = vmatprep.subr.bf16.mxu0 0
      %4050 = vmatpush1.bf16.msra.mxu0 0
      %4051 = vmatprep.subr.bf16.mxu0 0
      %4052 = vmatpush1.bf16.msra.mxu0 0
      %4053 = vmatprep.subr.bf16.mxu0 0
      %4054 = vmatpush1.bf16.msra.mxu0 0
      %4055 = vmatprep.subr.bf16.mxu0 0
      %4056 = vmatpush1.bf16.msra.mxu0 0
      %4057 = vmatprep.subr.bf16.mxu0 0
      %4058 = vmatpush1.bf16.msra.mxu0 0
      %4059 = vmatprep.subr.bf16.mxu0 0
      %4060 = vmatpush1.bf16.msra.mxu0 0
      %4061 = vmatprep.subr.bf16.mxu0 0
      %4062 = vmatpush1.bf16.msra.mxu0 0
      %4063 = vmatprep.subr.bf16.mxu0 0
      %4064 = vmatpush1.bf16.msra.mxu0 0
      %4065 = vmatprep.subr.bf16.mxu0 0
      %4066 = vmatpush1.bf16.msra.mxu0 0
      %4067 = vmatprep.subr.bf16.mxu0 0
      %4068 = vmatpush1.bf16.msra.mxu0 0
      %4069 = vmatprep.mubr.bf16.mxu0 0
      %4070 = vmatmul.mubr.bf16.gmra.mrb[0].mxu0 %v4035
      %v4071 = vpop.f32.mrb[0].mxu0
      %v4072 = vadd.f32 0.0, %v4071
      %v4073 = vpop.f32.mrb[0].mxu0
      %v4074 = vadd.f32 0.0, %v4073
      %v4075 = vpop.f32.mrb[0].mxu0
      %v4076 = vadd.f32 0.0, %v4075
      %v4077 = vpop.f32.mrb[0].mxu0
      %v4078 = vadd.f32 0.0, %v4077
      %4079 = vdwg.mxu0
      %v4080 = vadd.f32 %v4000, %v4072
      %v4081 = vadd.f32 %v4002, %v4074
      %v4082 = vadd.f32 %v4004, %v4076
      %v4083 = vadd.f32 %v4006, %v4078
      %4084 = vrot.lane.b32.xlu0 %v3861, 1
      %v4085 = vpop.permute.xlu0 %4084
      %4086 = vrot.lane.b32.xlu0 %v3863, 1
      %v4087 = vpop.permute.xlu0 %4086
      %4088 = vrot.lane.b32.xlu0 %v3862, 1
      %v4089 = vpop.permute.xlu0 %4088
      %4090 = vrot.lane.b32.xlu0 %v3864, 1
      %v4091 = vpop.permute.xlu0 %4090
      %v4092 = vsel %vm3298, %v4085, %v4089
      %v4093 = vsel %vm3298, %v4087, %v4091
      %v4094 = vsel %vm3298, %v4089, %v4085
      %v4095 = vsel %vm3298, %v4091, %v4087
      %v4096 = vsel %vm3309, %v4094, 0.0
      %v4097 = vsel %vm3310, %v4092, 0.0
      %v4098 = vsel %vm3309, %v4095, 0.0
      %v4099 = vsel %vm3310, %v4093, 0.0
      %s4100 = scalar_lea.vmem %s11, 24
      %v4101 = vld [vmem:[%s4100] sm:$0xf]
      %v4102 = vld [vmem:[%s4100 + $0x4] sm:$0xf]
      %v4103 = vpack.c.bf16 %v4098, %v4096
      %v4104 = vpack.c.bf16 %v4099, %v4097
      %v4107 = vunpack.c.l.b16 %v4101
      %v4108 = vunpack.c.l.b16 %v4102
      %v4109 = vpack.c.b16 %v4108, %v4107
      %v4111 = vsel %vm679, %v4109, 0
      %4113 = vmatprep.subr.bf16.mxu0 %v4104
      %4114 = vmatpush1.bf16.msra.mxu0 %v4103
      %4115 = vmatprep.subr.bf16.mxu0 0
      %4116 = vmatpush1.bf16.msra.mxu0 0
      %4117 = vmatprep.subr.bf16.mxu0 0
      %4118 = vmatpush1.bf16.msra.mxu0 0
      %4119 = vmatprep.subr.bf16.mxu0 0
      %4120 = vmatpush1.bf16.msra.mxu0 0
      %4121 = vmatprep.subr.bf16.mxu0 0
      %4122 = vmatpush1.bf16.msra.mxu0 0
      %4123 = vmatprep.subr.bf16.mxu0 0
      %4124 = vmatpush1.bf16.msra.mxu0 0
      %4125 = vmatprep.subr.bf16.mxu0 0
      %4126 = vmatpush1.bf16.msra.mxu0 0
      %4127 = vmatprep.subr.bf16.mxu0 0
      %4128 = vmatpush1.bf16.msra.mxu0 0
      %4129 = vmatprep.subr.bf16.mxu0 0
      %4130 = vmatpush1.bf16.msra.mxu0 0
      %4131 = vmatprep.subr.bf16.mxu0 0
      %4132 = vmatpush1.bf16.msra.mxu0 0
      %4133 = vmatprep.subr.bf16.mxu0 0
      %4134 = vmatpush1.bf16.msra.mxu0 0
      %4135 = vmatprep.subr.bf16.mxu0 0
      %4136 = vmatpush1.bf16.msra.mxu0 0
      %4137 = vmatprep.subr.bf16.mxu0 0
      %4138 = vmatpush1.bf16.msra.mxu0 0
      %4139 = vmatprep.subr.bf16.mxu0 0
      %4140 = vmatpush1.bf16.msra.mxu0 0
      %4141 = vmatprep.subr.bf16.mxu0 0
      %4142 = vmatpush1.bf16.msra.mxu0 0
      %4143 = vmatprep.subr.bf16.mxu0 0
      %4144 = vmatpush1.bf16.msra.mxu0 0
      %4145 = vmatprep.mubr.bf16.mxu0 0
      %4146 = vmatmul.mubr.bf16.gmra.mrb[0].mxu0 %v4111
      %v4147 = vpop.f32.mrb[0].mxu0
      %v4148 = vadd.f32 0.0, %v4147
      %v4149 = vpop.f32.mrb[0].mxu0
      %v4150 = vadd.f32 0.0, %v4149
      %v4151 = vpop.f32.mrb[0].mxu0
      %v4152 = vadd.f32 0.0, %v4151
      %v4153 = vpop.f32.mrb[0].mxu0
      %v4154 = vadd.f32 0.0, %v4153
      %4155 = vdwg.mxu0
      %v4156 = vadd.f32 %v4080, %v4148
      %v4157 = vadd.f32 %v4081, %v4150
      %v4158 = vadd.f32 %v4082, %v4152
      %v4159 = vadd.f32 %v4083, %v4154
      %s4160 = scalar_lea.vmem %s11, 32
      %v4161 = vld [vmem:[%s4160] sm:$0xf]
      %v4162 = vld [vmem:[%s4160 + $0x4] sm:$0xf]
      %v4163 = vpack.c.bf16 %v3863, %v3861
      %v4164 = vpack.c.bf16 %v3864, %v3862
      %v4167 = vunpack.c.l.b16 %v4161
      %v4168 = vunpack.c.l.b16 %v4162
      %v4169 = vpack.c.b16 %v4168, %v4167
      %v4171 = vsel %vm679, %v4169, 0
      %4173 = vmatprep.subr.bf16.mxu0 %v4164
      %4174 = vmatpush1.bf16.msra.mxu0 %v4163
      %4175 = vmatprep.subr.bf16.mxu0 0
      %4176 = vmatpush1.bf16.msra.mxu0 0
      %4177 = vmatprep.subr.bf16.mxu0 0
      %4178 = vmatpush1.bf16.msra.mxu0 0
      %4179 = vmatprep.subr.bf16.mxu0 0
      %4180 = vmatpush1.bf16.msra.mxu0 0
      %4181 = vmatprep.subr.bf16.mxu0 0
      %4182 = vmatpush1.bf16.msra.mxu0 0
      %4183 = vmatprep.subr.bf16.mxu0 0
      %4184 = vmatpush1.bf16.msra.mxu0 0
      %4185 = vmatprep.subr.bf16.mxu0 0
      %4186 = vmatpush1.bf16.msra.mxu0 0
      %4187 = vmatprep.subr.bf16.mxu0 0
      %4188 = vmatpush1.bf16.msra.mxu0 0
      %4189 = vmatprep.subr.bf16.mxu0 0
      %4190 = vmatpush1.bf16.msra.mxu0 0
      %4191 = vmatprep.subr.bf16.mxu0 0
      %4192 = vmatpush1.bf16.msra.mxu0 0
      %4193 = vmatprep.subr.bf16.mxu0 0
      %4194 = vmatpush1.bf16.msra.mxu0 0
      %4195 = vmatprep.subr.bf16.mxu0 0
      %4196 = vmatpush1.bf16.msra.mxu0 0
      %4197 = vmatprep.subr.bf16.mxu0 0
      %4198 = vmatpush1.bf16.msra.mxu0 0
      %4199 = vmatprep.subr.bf16.mxu0 0
      %4200 = vmatpush1.bf16.msra.mxu0 0
      %4201 = vmatprep.subr.bf16.mxu0 0
      %4202 = vmatpush1.bf16.msra.mxu0 0
      %4203 = vmatprep.subr.bf16.mxu0 0
      %4204 = vmatpush1.bf16.msra.mxu0 0
      %4205 = vmatprep.mubr.bf16.mxu0 0
      %4206 = vmatmul.mubr.bf16.gmra.mrb[0].mxu0 %v4171
      %v4207 = vpop.f32.mrb[0].mxu0
      %v4208 = vadd.f32 0.0, %v4207
      %v4209 = vpop.f32.mrb[0].mxu0
      %v4210 = vadd.f32 0.0, %v4209
      %v4211 = vpop.f32.mrb[0].mxu0
      %v4212 = vadd.f32 0.0, %v4211
      %v4213 = vpop.f32.mrb[0].mxu0
      %v4214 = vadd.f32 0.0, %v4213
      %4215 = vdwg.mxu0
      %v4216 = vadd.f32 %v4156, %v4208
      %v4217 = vadd.f32 %v4157, %v4210
      %v4218 = vadd.f32 %v4158, %v4212
      %v4219 = vadd.f32 %v4159, %v4214
      %4220 = vrot.lane.b32.xlu0 %v3861, 127
      %v4221 = vpop.permute.xlu0 %4220
      %4222 = vrot.lane.b32.xlu0 %v3863, 127
      %v4223 = vpop.permute.xlu0 %4222
      %4224 = vrot.lane.b32.xlu0 %v3862, 127
      %v4225 = vpop.permute.xlu0 %4224
      %4226 = vrot.lane.b32.xlu0 %v3864, 127
      %v4227 = vpop.permute.xlu0 %4226
      %v4228 = vsel %vm3459, %v4221, %v4225
      %v4229 = vsel %vm3459, %v4223, %v4227
      %v4230 = vsel %vm3459, %v4225, %v4221
      %v4231 = vsel %vm3459, %v4227, %v4223
      %v4232 = vsel %vm3470, %v4228, 0.0
      %v4233 = vsel %vm3471, %v4230, 0.0
      %v4234 = vsel %vm3470, %v4229, 0.0
      %v4235 = vsel %vm3471, %v4231, 0.0
      %s4236 = scalar_lea.vmem %s11, 40
      %v4237 = vld [vmem:[%s4236] sm:$0xf]
      %v4238 = vld [vmem:[%s4236 + $0x4] sm:$0xf]
      %v4239 = vpack.c.bf16 %v4234, %v4232
      %v4240 = vpack.c.bf16 %v4235, %v4233
      %v4243 = vunpack.c.l.b16 %v4237
      %v4244 = vunpack.c.l.b16 %v4238
      %v4245 = vpack.c.b16 %v4244, %v4243
      %v4247 = vsel %vm679, %v4245, 0
      %4249 = vmatprep.subr.bf16.mxu0 %v4240
      %4250 = vmatpush1.bf16.msra.mxu0 %v4239
      %4251 = vmatprep.subr.bf16.mxu0 0
      %4252 = vmatpush1.bf16.msra.mxu0 0
      %4253 = vmatprep.subr.bf16.mxu0 0
      %4254 = vmatpush1.bf16.msra.mxu0 0
      %4255 = vmatprep.subr.bf16.mxu0 0
      %4256 = vmatpush1.bf16.msra.mxu0 0
      %4257 = vmatprep.subr.bf16.mxu0 0
      %4258 = vmatpush1.bf16.msra.mxu0 0
      %4259 = vmatprep.subr.bf16.mxu0 0
      %4260 = vmatpush1.bf16.msra.mxu0 0
      %4261 = vmatprep.subr.bf16.mxu0 0
      %4262 = vmatpush1.bf16.msra.mxu0 0
      %4263 = vmatprep.subr.bf16.mxu0 0
      %4264 = vmatpush1.bf16.msra.mxu0 0
      %4265 = vmatprep.subr.bf16.mxu0 0
      %4266 = vmatpush1.bf16.msra.mxu0 0
      %4267 = vmatprep.subr.bf16.mxu0 0
      %4268 = vmatpush1.bf16.msra.mxu0 0
      %4269 = vmatprep.subr.bf16.mxu0 0
      %4270 = vmatpush1.bf16.msra.mxu0 0
      %4271 = vmatprep.subr.bf16.mxu0 0
      %4272 = vmatpush1.bf16.msra.mxu0 0
      %4273 = vmatprep.subr.bf16.mxu0 0
      %4274 = vmatpush1.bf16.msra.mxu0 0
      %4275 = vmatprep.subr.bf16.mxu0 0
      %4276 = vmatpush1.bf16.msra.mxu0 0
      %4277 = vmatprep.subr.bf16.mxu0 0
      %4278 = vmatpush1.bf16.msra.mxu0 0
      %4279 = vmatprep.subr.bf16.mxu0 0
      %4280 = vmatpush1.bf16.msra.mxu0 0
      %4281 = vmatprep.mubr.bf16.mxu0 0
      %4282 = vmatmul.mubr.bf16.gmra.mrb[0].mxu0 %v4247
      %v4283 = vpop.f32.mrb[0].mxu0
      %v4284 = vadd.f32 0.0, %v4283
      %v4285 = vpop.f32.mrb[0].mxu0
      %v4286 = vadd.f32 0.0, %v4285
      %v4287 = vpop.f32.mrb[0].mxu0
      %v4288 = vadd.f32 0.0, %v4287
      %v4289 = vpop.f32.mrb[0].mxu0
      %v4290 = vadd.f32 0.0, %v4289
      %4291 = vdwg.mxu0
      %v4292 = vadd.f32 %v4216, %v4284
      %v4293 = vadd.f32 %v4217, %v4286
      %v4294 = vadd.f32 %v4218, %v4288
      %v4295 = vadd.f32 %v4219, %v4290
      %4296 = vrot.lane.b32.xlu0 %v3861, 113
      %v4297 = vpop.permute.xlu0 %4296
      %4298 = vrot.lane.b32.xlu0 %v3863, 113
      %v4299 = vpop.permute.xlu0 %4298
      %4300 = vrot.lane.b32.xlu0 %v3862, 113
      %v4301 = vpop.permute.xlu0 %4300
      %4302 = vrot.lane.b32.xlu0 %v3864, 113
      %v4303 = vpop.permute.xlu0 %4302
      %v4304 = vsel %vm3558, %v4297, %v4301
      %v4305 = vsel %vm3558, %v4299, %v4303
      %v4306 = vsel %vm3558, %v4301, %v4297
      %v4307 = vsel %vm3558, %v4303, %v4299
      %v4308 = vsel %vm3573, %v4304, 0.0
      %v4309 = vsel %vm3574, %v4306, 0.0
      %v4310 = vsel %vm3573, %v4305, 0.0
      %v4311 = vsel %vm3574, %v4307, 0.0
      %s4312 = scalar_lea.vmem %s11, 48
      %v4313 = vld [vmem:[%s4312] sm:$0xf]
      %v4314 = vld [vmem:[%s4312 + $0x4] sm:$0xf]
      %v4315 = vpack.c.bf16 %v4310, %v4308
      %v4316 = vpack.c.bf16 %v4311, %v4309
      %v4319 = vunpack.c.l.b16 %v4313
      %v4320 = vunpack.c.l.b16 %v4314
      %v4321 = vpack.c.b16 %v4320, %v4319
      %v4323 = vsel %vm679, %v4321, 0
      %4325 = vmatprep.subr.bf16.mxu0 %v4316
      %4326 = vmatpush1.bf16.msra.mxu0 %v4315
      %4327 = vmatprep.subr.bf16.mxu0 0
      %4328 = vmatpush1.bf16.msra.mxu0 0
      %4329 = vmatprep.subr.bf16.mxu0 0
      %4330 = vmatpush1.bf16.msra.mxu0 0
      %4331 = vmatprep.subr.bf16.mxu0 0
      %4332 = vmatpush1.bf16.msra.mxu0 0
      %4333 = vmatprep.subr.bf16.mxu0 0
      %4334 = vmatpush1.bf16.msra.mxu0 0
      %4335 = vmatprep.subr.bf16.mxu0 0
      %4336 = vmatpush1.bf16.msra.mxu0 0
      %4337 = vmatprep.subr.bf16.mxu0 0
      %4338 = vmatpush1.bf16.msra.mxu0 0
      %4339 = vmatprep.subr.bf16.mxu0 0
      %4340 = vmatpush1.bf16.msra.mxu0 0
      %4341 = vmatprep.subr.bf16.mxu0 0
      %4342 = vmatpush1.bf16.msra.mxu0 0
      %4343 = vmatprep.subr.bf16.mxu0 0
      %4344 = vmatpush1.bf16.msra.mxu0 0
      %4345 = vmatprep.subr.bf16.mxu0 0
      %4346 = vmatpush1.bf16.msra.mxu0 0
      %4347 = vmatprep.subr.bf16.mxu0 0
      %4348 = vmatpush1.bf16.msra.mxu0 0
      %4349 = vmatprep.subr.bf16.mxu0 0
      %4350 = vmatpush1.bf16.msra.mxu0 0
      %4351 = vmatprep.subr.bf16.mxu0 0
      %4352 = vmatpush1.bf16.msra.mxu0 0
      %4353 = vmatprep.subr.bf16.mxu0 0
      %4354 = vmatpush1.bf16.msra.mxu0 0
      %4355 = vmatprep.subr.bf16.mxu0 0
      %4356 = vmatpush1.bf16.msra.mxu0 0
      %4357 = vmatprep.mubr.bf16.mxu0 0
      %4358 = vmatmul.mubr.bf16.gmra.mrb[0].mxu0 %v4323
      %v4359 = vpop.f32.mrb[0].mxu0
      %v4360 = vadd.f32 0.0, %v4359
      %v4361 = vpop.f32.mrb[0].mxu0
      %v4362 = vadd.f32 0.0, %v4361
      %v4363 = vpop.f32.mrb[0].mxu0
      %v4364 = vadd.f32 0.0, %v4363
      %v4365 = vpop.f32.mrb[0].mxu0
      %v4366 = vadd.f32 0.0, %v4365
      %4367 = vdwg.mxu0
      %v4368 = vadd.f32 %v4292, %v4360
      %v4369 = vadd.f32 %v4293, %v4362
      %v4370 = vadd.f32 %v4294, %v4364
      %v4371 = vadd.f32 %v4295, %v4366
      %4372 = vrot.lane.b32.xlu0 %v3861, 112
      %v4373 = vpop.permute.xlu0 %4372
      %4374 = vrot.lane.b32.xlu0 %v3863, 112
      %v4375 = vpop.permute.xlu0 %4374
      %4376 = vrot.lane.b32.xlu0 %v3862, 112
      %v4377 = vpop.permute.xlu0 %4376
      %4378 = vrot.lane.b32.xlu0 %v3864, 112
      %v4379 = vpop.permute.xlu0 %4378
      %v4380 = vsel %vm3661, %v4373, %v4377
      %v4381 = vsel %vm3661, %v4375, %v4379
      %v4382 = vsel %vm3661, %v4377, %v4373
      %v4383 = vsel %vm3661, %v4379, %v4375
      %v4384 = vsel %vm3672, %v4380, 0.0
      %v4385 = vsel %vm3673, %v4382, 0.0
      %v4386 = vsel %vm3672, %v4381, 0.0
      %v4387 = vsel %vm3673, %v4383, 0.0
      %s4388 = scalar_lea.vmem %s11, 56
      %v4389 = vld [vmem:[%s4388] sm:$0xf]
      %v4390 = vld [vmem:[%s4388 + $0x4] sm:$0xf]
      %v4391 = vpack.c.bf16 %v4386, %v4384
      %v4392 = vpack.c.bf16 %v4387, %v4385
      %v4395 = vunpack.c.l.b16 %v4389
      %v4396 = vunpack.c.l.b16 %v4390
      %v4397 = vpack.c.b16 %v4396, %v4395
      %v4399 = vsel %vm679, %v4397, 0
      %4401 = vmatprep.subr.bf16.mxu0 %v4392
      %4402 = vmatpush1.bf16.msra.mxu0 %v4391
      %4403 = vmatprep.subr.bf16.mxu0 0
      %4404 = vmatpush1.bf16.msra.mxu0 0
      %4405 = vmatprep.subr.bf16.mxu0 0
      %4406 = vmatpush1.bf16.msra.mxu0 0
      %4407 = vmatprep.subr.bf16.mxu0 0
      %4408 = vmatpush1.bf16.msra.mxu0 0
      %4409 = vmatprep.subr.bf16.mxu0 0
      %4410 = vmatpush1.bf16.msra.mxu0 0
      %4411 = vmatprep.subr.bf16.mxu0 0
      %4412 = vmatpush1.bf16.msra.mxu0 0
      %4413 = vmatprep.subr.bf16.mxu0 0
      %4414 = vmatpush1.bf16.msra.mxu0 0
      %4415 = vmatprep.subr.bf16.mxu0 0
      %4416 = vmatpush1.bf16.msra.mxu0 0
      %4417 = vmatprep.subr.bf16.mxu0 0
      %4418 = vmatpush1.bf16.msra.mxu0 0
      %4419 = vmatprep.subr.bf16.mxu0 0
      %4420 = vmatpush1.bf16.msra.mxu0 0
      %4421 = vmatprep.subr.bf16.mxu0 0
      %4422 = vmatpush1.bf16.msra.mxu0 0
      %4423 = vmatprep.subr.bf16.mxu0 0
      %4424 = vmatpush1.bf16.msra.mxu0 0
      %4425 = vmatprep.subr.bf16.mxu0 0
      %4426 = vmatpush1.bf16.msra.mxu0 0
      %4427 = vmatprep.subr.bf16.mxu0 0
      %4428 = vmatpush1.bf16.msra.mxu0 0
      %4429 = vmatprep.subr.bf16.mxu0 0
      %4430 = vmatpush1.bf16.msra.mxu0 0
      %4431 = vmatprep.subr.bf16.mxu0 0
      %4432 = vmatpush1.bf16.msra.mxu0 0
      %4433 = vmatprep.mubr.bf16.mxu0 0
      %4434 = vmatmul.mubr.bf16.gmra.mrb[0].mxu0 %v4399
      %v4435 = vpop.f32.mrb[0].mxu0
      %v4436 = vadd.f32 0.0, %v4435
      %v4437 = vpop.f32.mrb[0].mxu0
      %v4438 = vadd.f32 0.0, %v4437
      %v4439 = vpop.f32.mrb[0].mxu0
      %v4440 = vadd.f32 0.0, %v4439
      %v4441 = vpop.f32.mrb[0].mxu0
      %v4442 = vadd.f32 0.0, %v4441
      %4443 = vdwg.mxu0
      %v4444 = vadd.f32 %v4368, %v4436
      %v4445 = vadd.f32 %v4369, %v4438
      %v4446 = vadd.f32 %v4370, %v4440
      %v4447 = vadd.f32 %v4371, %v4442
      %4448 = vrot.lane.b32.xlu0 %v3861, 111
      %v4449 = vpop.permute.xlu0 %4448
      %4450 = vrot.lane.b32.xlu0 %v3863, 111
      %v4451 = vpop.permute.xlu0 %4450
      %4452 = vrot.lane.b32.xlu0 %v3862, 111
      %v4453 = vpop.permute.xlu0 %4452
      %4454 = vrot.lane.b32.xlu0 %v3864, 111
      %v4455 = vpop.permute.xlu0 %4454
      %v4456 = vsel %vm3760, %v4449, %v4453
      %v4457 = vsel %vm3760, %v4451, %v4455
      %v4458 = vsel %vm3760, %v4453, %v4449
      %v4459 = vsel %vm3760, %v4455, %v4451
      %v4460 = vsel %vm3773, %v4456, 0.0
      %v4461 = vsel %vm3774, %v4458, 0.0
      %v4462 = vsel %vm3773, %v4457, 0.0
      %v4463 = vsel %vm3774, %v4459, 0.0
      %s4464 = scalar_lea.vmem %s11, 64
      %v4465 = vld [vmem:[%s4464] sm:$0xf]
      %v4466 = vld [vmem:[%s4464 + $0x4] sm:$0xf]
      %v4467 = vpack.c.bf16 %v4462, %v4460
      %v4468 = vpack.c.bf16 %v4463, %v4461
      %v4471 = vunpack.c.l.b16 %v4465
      %v4472 = vunpack.c.l.b16 %v4466
      %v4473 = vpack.c.b16 %v4472, %v4471
      %v4475 = vsel %vm679, %v4473, 0
      %4477 = vmatprep.subr.bf16.mxu0 %v4468
      %4478 = vmatpush1.bf16.msra.mxu0 %v4467
      %4479 = vmatprep.subr.bf16.mxu0 0
      %4480 = vmatpush1.bf16.msra.mxu0 0
      %4481 = vmatprep.subr.bf16.mxu0 0
      %4482 = vmatpush1.bf16.msra.mxu0 0
      %4483 = vmatprep.subr.bf16.mxu0 0
      %4484 = vmatpush1.bf16.msra.mxu0 0
      %4485 = vmatprep.subr.bf16.mxu0 0
      %4486 = vmatpush1.bf16.msra.mxu0 0
      %4487 = vmatprep.subr.bf16.mxu0 0
      %4488 = vmatpush1.bf16.msra.mxu0 0
      %4489 = vmatprep.subr.bf16.mxu0 0
      %4490 = vmatpush1.bf16.msra.mxu0 0
      %4491 = vmatprep.subr.bf16.mxu0 0
      %4492 = vmatpush1.bf16.msra.mxu0 0
      %4493 = vmatprep.subr.bf16.mxu0 0
      %4494 = vmatpush1.bf16.msra.mxu0 0
      %4495 = vmatprep.subr.bf16.mxu0 0
      %4496 = vmatpush1.bf16.msra.mxu0 0
      %4497 = vmatprep.subr.bf16.mxu0 0
      %4498 = vmatpush1.bf16.msra.mxu0 0
      %4499 = vmatprep.subr.bf16.mxu0 0
      %4500 = vmatpush1.bf16.msra.mxu0 0
      %4501 = vmatprep.subr.bf16.mxu0 0
      %4502 = vmatpush1.bf16.msra.mxu0 0
      %4503 = vmatprep.subr.bf16.mxu0 0
      %4504 = vmatpush1.bf16.msra.mxu0 0
      %4505 = vmatprep.subr.bf16.mxu0 0
      %4506 = vmatpush1.bf16.msra.mxu0 0
      %4507 = vmatprep.subr.bf16.mxu0 0
      %4508 = vmatpush1.bf16.msra.mxu0 0
      %4509 = vmatprep.mubr.bf16.mxu0 0
      %4510 = vmatmul.mubr.bf16.gmra.mrb[0].mxu0 %v4475
      %v4511 = vpop.f32.mrb[0].mxu0
      %v4512 = vadd.f32 0.0, %v4511
      %v4513 = vpop.f32.mrb[0].mxu0
      %v4514 = vadd.f32 0.0, %v4513
      %v4515 = vpop.f32.mrb[0].mxu0
      %v4516 = vadd.f32 0.0, %v4515
      %v4517 = vpop.f32.mrb[0].mxu0
      %v4518 = vadd.f32 0.0, %v4517
      %4519 = vdwg.mxu0
      %v4520 = vadd.f32 %v4444, %v4512
      %v4521 = vadd.f32 %v4445, %v4514
      %v4522 = vadd.f32 %v4446, %v4516
      %v4523 = vadd.f32 %v4447, %v4518
      %v4524 = vld [vmem:[%s12] sm:$0xff]
      %v4525 = vld [vmem:[%s12 + $0x8] sm:$0xff]
      %4527 = vset.pattern.permute.xlu0 0
      %4528 = vperm.xlu0 %4527, %v4524
      %v4529 = vpop.permute.xlu0 %4528
      %4532 = vset.pattern.permute.xlu0 0
      %4533 = vperm.xlu0 %4532, %v4525
      %v4534 = vpop.permute.xlu0 %4533
      %v4536 = vadd.f32 %v4520, %v4529
      %v4537 = vadd.f32 %v4521, %v4529
      %v4538 = vadd.f32 %v4522, %v4534
      %v4539 = vadd.f32 %v4523, %v4534
      %v4540 = vadd.f32 %v4536, %v2963
      %v4541 = vadd.f32 %v4537, %v2965
      %v4542 = vadd.f32 %v4538, %v2967
      %v4543 = vadd.f32 %v4539, %v2969
      %v4544 = vld [vmem:[%s15] sm:$0xf]
      %v4545 = vld [vmem:[%s15 + $0x4] sm:$0xf]
      %v4546 = vld [vmem:[%s15 + $0x8] sm:$0xf]
      %v4547 = vpack.c.bf16 %v4542, %v4540
      %v4548 = vpack.c.bf16 %v4543, %v4541
      %v4552 = vunpack.c.l.b16 %v4544
      %v4553 = vunpack.c.l.b16 %v4545
      %v4554 = vunpack.c.l.b16 %v4546
      %v4555 = vpack.c.b16 %v4553, %v4552
      %v4556 = vpack.c.b16 %v4554, %v4554
      %v4558 = vsel %vm679, %v4555, 0
      %v4561 = vsel %vm679, %v4556, 0
      %4563 = vmatprep.subr.bf16.mxu0 %v4548
      %4564 = vmatpush1.bf16.msra.mxu0 %v4547
      %4565 = vmatprep.subr.bf16.mxu0 0
      %4566 = vmatpush1.bf16.msra.mxu0 0
      %4567 = vmatprep.subr.bf16.mxu0 0
      %4568 = vmatpush1.bf16.msra.mxu0 0
      %4569 = vmatprep.subr.bf16.mxu0 0
      %4570 = vmatpush1.bf16.msra.mxu0 0
      %4571 = vmatprep.subr.bf16.mxu0 0
      %4572 = vmatpush1.bf16.msra.mxu0 0
      %4573 = vmatprep.subr.bf16.mxu0 0
      %4574 = vmatpush1.bf16.msra.mxu0 0
      %4575 = vmatprep.subr.bf16.mxu0 0
      %4576 = vmatpush1.bf16.msra.mxu0 0
      %4577 = vmatprep.subr.bf16.mxu0 0
      %4578 = vmatpush1.bf16.msra.mxu0 0
      %4579 = vmatprep.subr.bf16.mxu0 0
      %4580 = vmatpush1.bf16.msra.mxu0 0
      %4581 = vmatprep.subr.bf16.mxu0 0
      %4582 = vmatpush1.bf16.msra.mxu0 0
      %4583 = vmatprep.subr.bf16.mxu0 0
      %4584 = vmatpush1.bf16.msra.mxu0 0
      %4585 = vmatprep.subr.bf16.mxu0 0
      %4586 = vmatpush1.bf16.msra.mxu0 0
      %4587 = vmatprep.subr.bf16.mxu0 0
      %4588 = vmatpush1.bf16.msra.mxu0 0
      %4589 = vmatprep.subr.bf16.mxu0 0
      %4590 = vmatpush1.bf16.msra.mxu0 0
      %4591 = vmatprep.subr.bf16.mxu0 0
      %4592 = vmatpush1.bf16.msra.mxu0 0
      %4593 = vmatprep.subr.bf16.mxu0 0
      %4594 = vmatpush1.bf16.msra.mxu0 0
      %4595 = vmatprep.mubr.bf16.mxu0 0
      %4596 = vmatmul.mubr.bf16.gmra.mrb[0].mxu0 %v4558
      %v4597 = vpop.f32.mrb[0].mxu0
      %v4598 = vadd.f32 0.0, %v4597
      %v4599 = vpop.f32.mrb[0].mxu0
      %v4600 = vadd.f32 0.0, %v4599
      %v4601 = vpop.f32.mrb[0].mxu0
      %v4602 = vadd.f32 0.0, %v4601
      %v4603 = vpop.f32.mrb[0].mxu0
      %v4604 = vadd.f32 0.0, %v4603
      %4605 = vmatprep.mubr.bf16.mxu0 0
      %4606 = vmatmul.mubr.bf16.gmra.mrb[0].mxu0 %v4561
      %v4607 = vpop.f32.mrb[0].mxu0
      %v4608 = vadd.f32 0.0, %v4607
      %v4609 = vpop.f32.mrb[0].mxu0
      %v4610 = vadd.f32 0.0, %v4609
      %v4611 = vpop.f32.mrb[0].mxu0
      %v4612 = vpop.f32.mrb[0].mxu0
      %4613 = vdwg.mxu0
      %4614 = vrot.lane.b32.xlu0 %v4602, 127
      %v4615 = vpop.permute.xlu0 %4614
      %4616 = vrot.lane.b32.xlu0 %v4604, 127
      %v4617 = vpop.permute.xlu0 %4616
      %v4618 = vsel %vm3459, %v4615, %v4617
      %v4619 = vsel %vm3459, %v4617, %v4615
      %v4620 = vmax.f32 %v4602, %v4618
      %v4621 = vmax.f32 %v4604, %v4619
      %4622 = vrot.lane.b32.xlu0 %v4620, 112
      %v4623 = vpop.permute.xlu0 %4622
      %4624 = vrot.lane.b32.xlu0 %v4621, 112
      %v4625 = vpop.permute.xlu0 %4624
      %v4626 = vsel %vm3661, %v4623, %v4625
      %v4627 = vsel %vm3661, %v4625, %v4623
      %v4628 = vmax.f32 %v4620, %v4626
      %v4629 = vmax.f32 %v4621, %v4627
      %4630 = vrot.lane.b32.xlu0 %v4608, 127
      %v4631 = vpop.permute.xlu0 %4630
      %4632 = vrot.lane.b32.xlu0 %v4610, 127
      %v4633 = vpop.permute.xlu0 %4632
      %v4634 = vsel %vm3459, %v4631, %v4633
      %v4635 = vsel %vm3459, %v4633, %v4631
      %v4636 = vmax.f32 %v4608, %v4634
      %v4637 = vmax.f32 %v4610, %v4635
      %4638 = vrot.lane.b32.xlu0 %v4636, 112
      %v4639 = vpop.permute.xlu0 %4638
      %4640 = vrot.lane.b32.xlu0 %v4637, 112
      %v4641 = vpop.permute.xlu0 %4640
      %v4642 = vsel %vm3661, %v4639, %v4641
      %v4643 = vsel %vm3661, %v4641, %v4639
      %v4644 = vmax.f32 %v4636, %v4642
      %v4645 = vmax.f32 %v4637, %v4643
      %v4646 = vld [vmem:[%s17] sm:$0xff]
      %v4647 = vld [vmem:[%s17 + $0x8] sm:$0xff]
      %v4648 = vld [vmem:[%s17 + $0x10] sm:$0xff]
      %v4649 = vld [vmem:[%s17 + $0x18] sm:$0xff]
      %v4650 = vld [vmem:[%s17 + $0x20] sm:$0xff]
      %v4651 = vld [vmem:[%s17 + $0x28] sm:$0xff]
      %v4652 = vld [vmem:[%s17 + $0x30] sm:$0xff]
      %v4653 = vld [vmem:[%s17 + $0x38] sm:$0xff]
      %v4654 = vpack.c.bf16 %v4628, %v4628
      %v4655 = vpack.c.bf16 %v4629, %v4629
      %v4664 = vunpack.c.l.b16 %v4646
      %v4665 = vunpack.c.h.b16 %v4646
      %v4666 = vunpack.c.l.b16 %v4647
      %v4667 = vunpack.c.h.b16 %v4647
      %v4668 = vunpack.c.l.b16 %v4648
      %v4669 = vunpack.c.h.b16 %v4648
      %v4670 = vunpack.c.l.b16 %v4649
      %v4671 = vunpack.c.h.b16 %v4649
      %v4672 = vunpack.c.l.b16 %v4650
      %v4673 = vunpack.c.h.b16 %v4650
      %v4674 = vunpack.c.l.b16 %v4651
      %v4675 = vunpack.c.h.b16 %v4651
      %v4676 = vunpack.c.l.b16 %v4652
      %v4677 = vunpack.c.h.b16 %v4652
      %v4678 = vunpack.c.l.b16 %v4653
      %v4679 = vunpack.c.h.b16 %v4653
      %v4680 = vpack.c.b16 %v4666, %v4664
      %v4681 = vpack.c.b16 %v4667, %v4665
      %v4682 = vpack.c.b16 %v4670, %v4668
      %v4683 = vpack.c.b16 %v4671, %v4669
      %v4684 = vpack.c.b16 %v4674, %v4672
      %v4685 = vpack.c.b16 %v4675, %v4673
      %v4686 = vpack.c.b16 %v4678, %v4676
      %v4687 = vpack.c.b16 %v4679, %v4677
      %4696 = vmatprep.subr.bf16.mxu0 %v4655
      %4697 = vmatpush1.bf16.xpose.msra.mxu0 %v4654
      %4698 = vmatprep.subr.bf16.mxu0 0
      %4699 = vmatpush1.bf16.xpose.msra.mxu0 0
      %4700 = vmatprep.subr.bf16.mxu0 0
      %4701 = vmatpush1.bf16.xpose.msra.mxu0 0
      %4702 = vmatprep.subr.bf16.mxu0 0
      %4703 = vmatpush1.bf16.xpose.msra.mxu0 0
      %4704 = vmatprep.subr.bf16.mxu0 0
      %4705 = vmatpush1.bf16.xpose.msra.mxu0 0
      %4706 = vmatprep.subr.bf16.mxu0 0
      %4707 = vmatpush1.bf16.xpose.msra.mxu0 0
      %4708 = vmatprep.subr.bf16.mxu0 0
      %4709 = vmatpush1.bf16.xpose.msra.mxu0 0
      %4710 = vmatprep.subr.bf16.mxu0 0
      %4711 = vmatpush1.bf16.xpose.msra.mxu0 0
      %4712 = vmatprep.subr.bf16.mxu0 0
      %4713 = vmatpush1.bf16.xpose.msra.mxu0 0
      %4714 = vmatprep.subr.bf16.mxu0 0
      %4715 = vmatpush1.bf16.xpose.msra.mxu0 0
      %4716 = vmatprep.subr.bf16.mxu0 0
      %4717 = vmatpush1.bf16.xpose.msra.mxu0 0
      %4718 = vmatprep.subr.bf16.mxu0 0
      %4719 = vmatpush1.bf16.xpose.msra.mxu0 0
      %4720 = vmatprep.subr.bf16.mxu0 0
      %4721 = vmatpush1.bf16.xpose.msra.mxu0 0
      %4722 = vmatprep.subr.bf16.mxu0 0
      %4723 = vmatpush1.bf16.xpose.msra.mxu0 0
      %4724 = vmatprep.subr.bf16.mxu0 0
      %4725 = vmatpush1.bf16.xpose.msra.mxu0 0
      %4726 = vmatprep.subr.bf16.mxu0 0
      %4727 = vmatpush1.bf16.xpose.msra.mxu0 0
      %4728 = vmatprep.mubr.bf16.mxu0 %v4681
      %4729 = vmatmul.mubr.bf16.gmra.mrb[0].mxu0 %v4680
      %v4730 = vpop.f32.mrb[0].mxu0
      %v4731 = vadd.f32 0.0, %v4730
      %v4732 = vpop.f32.mrb[0].mxu0
      %v4733 = vpop.f32.mrb[0].mxu0
      %v4734 = vadd.f32 0.0, %v4733
      %v4735 = vpop.f32.mrb[0].mxu0
      %4736 = vmatprep.mubr.bf16.mxu0 %v4683
      %4737 = vmatmul.mubr.bf16.gmra.mrb[0].mxu0 %v4682
      %v4738 = vpop.f32.mrb[0].mxu0
      %v4739 = vadd.f32 0.0, %v4738
      %v4740 = vpop.f32.mrb[0].mxu0
      %v4741 = vpop.f32.mrb[0].mxu0
      %v4742 = vadd.f32 0.0, %v4741
      %v4743 = vpop.f32.mrb[0].mxu0
      %4744 = vmatprep.mubr.bf16.mxu0 %v4685
      %4745 = vmatmul.mubr.bf16.gmra.mrb[0].mxu0 %v4684
      %v4746 = vpop.f32.mrb[0].mxu0
      %v4747 = vadd.f32 0.0, %v4746
      %v4748 = vpop.f32.mrb[0].mxu0
      %v4749 = vpop.f32.mrb[0].mxu0
      %v4750 = vadd.f32 0.0, %v4749
      %v4751 = vpop.f32.mrb[0].mxu0
      %4752 = vmatprep.mubr.bf16.mxu0 %v4687
      %4753 = vmatmul.mubr.bf16.gmra.mrb[0].mxu0 %v4686
      %v4754 = vpop.f32.mrb[0].mxu0
      %v4755 = vadd.f32 0.0, %v4754
      %v4756 = vpop.f32.mrb[0].mxu0
      %v4757 = vpop.f32.mrb[0].mxu0
      %v4758 = vadd.f32 0.0, %v4757
      %v4759 = vpop.f32.mrb[0].mxu0
      %4760 = vdwg.mxu0
      %v4761 = vpack.c.bf16 %v4644, %v4644
      %v4762 = vpack.c.bf16 %v4645, %v4645
      %4763 = vmatprep.subr.bf16.mxu0 %v4681
      %4764 = vmatpush1.bf16.xpose.msra.mxu0 %v4680
      %4765 = vmatprep.subr.bf16.mxu0 %v4683
      %4766 = vmatpush1.bf16.xpose.msra.mxu0 %v4682
      %4767 = vmatprep.subr.bf16.mxu0 %v4685
      %4768 = vmatpush1.bf16.xpose.msra.mxu0 %v4684
      %4769 = vmatprep.subr.bf16.mxu0 %v4687
      %4770 = vmatpush1.bf16.xpose.msra.mxu0 %v4686
      %4771 = vmatprep.subr.bf16.mxu0 0
      %4772 = vmatpush1.bf16.xpose.msra.mxu0 0
      %4773 = vmatprep.subr.bf16.mxu0 0
      %4774 = vmatpush1.bf16.xpose.msra.mxu0 0
      %4775 = vmatprep.subr.bf16.mxu0 0
      %4776 = vmatpush1.bf16.xpose.msra.mxu0 0
      %4777 = vmatprep.subr.bf16.mxu0 0
      %4778 = vmatpush1.bf16.xpose.msra.mxu0 0
      %4779 = vmatprep.subr.bf16.mxu0 0
      %4780 = vmatpush1.bf16.xpose.msra.mxu0 0
      %4781 = vmatprep.subr.bf16.mxu0 0
      %4782 = vmatpush1.bf16.xpose.msra.mxu0 0
      %4783 = vmatprep.subr.bf16.mxu0 0
      %4784 = vmatpush1.bf16.xpose.msra.mxu0 0
      %4785 = vmatprep.subr.bf16.mxu0 0
      %4786 = vmatpush1.bf16.xpose.msra.mxu0 0
      %4787 = vmatprep.subr.bf16.mxu0 0
      %4788 = vmatpush1.bf16.xpose.msra.mxu0 0
      %4789 = vmatprep.subr.bf16.mxu0 0
      %4790 = vmatpush1.bf16.xpose.msra.mxu0 0
      %4791 = vmatprep.subr.bf16.mxu0 0
      %4792 = vmatpush1.bf16.xpose.msra.mxu0 0
      %4793 = vmatprep.subr.bf16.mxu0 0
      %4794 = vmatpush1.bf16.xpose.msra.mxu0 0
      %4795 = vmatprep.mubr.bf16.mxu0 %v4762
      %4796 = vmatmul.mubr.bf16.gmra.mrb[0].mxu0 %v4761
      %v4797 = vpop.f32.mrb[0].mxu0
      %v4798 = vadd.f32 0.0, %v4797
      %v4799 = vpop.f32.mrb[0].mxu0
      %v4800 = vpop.f32.mrb[0].mxu0
      %v4801 = vpop.f32.mrb[0].mxu0
      %4802 = vdwg.mxu0
      %v4803 = vpack.c.bf16 %v4734, %v4731
      %v4804 = vpack.c.bf16 %v4742, %v4739
      %v4805 = vpack.c.bf16 %v4750, %v4747
      %v4806 = vpack.c.bf16 %v4758, %v4755
      %v4807 = vpack.c.bf16 %v4598, %v4598
      %v4808 = vpack.c.bf16 %v4600, %v4600
      %vm4809 = vcmask 64512
      %v4811 = vsel %vm4809, %v4803, 0
      %v4814 = vsel %vm4809, %v4804, 0
      %v4817 = vsel %vm4809, %v4805, 0
      %v4820 = vsel %vm4809, %v4806, 0
      %vm4822 = vcmask 1043456
      %v4824 = vsel %vm4822, %v4807, 0
      %v4827 = vsel %vm4822, %v4808, 0
      %4829 = vmatprep.subr.bf16.mxu0 %v4827
      %4830 = vmatpush1.bf16.msra.mxu0 %v4824
      %4831 = vmatprep.subr.bf16.mxu0 0
      %4832 = vmatpush1.bf16.msra.mxu0 0
      %4833 = vmatprep.subr.bf16.mxu0 0
      %4834 = vmatpush1.bf16.msra.mxu0 0
      %4835 = vmatprep.subr.bf16.mxu0 0
      %4836 = vmatpush1.bf16.msra.mxu0 0
      %4837 = vmatprep.subr.bf16.mxu0 0
      %4838 = vmatpush1.bf16.msra.mxu0 0
      %4839 = vmatprep.subr.bf16.mxu0 0
      %4840 = vmatpush1.bf16.msra.mxu0 0
      %4841 = vmatprep.subr.bf16.mxu0 0
      %4842 = vmatpush1.bf16.msra.mxu0 0
      %4843 = vmatprep.subr.bf16.mxu0 0
      %4844 = vmatpush1.bf16.msra.mxu0 0
      %4845 = vmatprep.subr.bf16.mxu0 0
      %4846 = vmatpush1.bf16.msra.mxu0 0
      %4847 = vmatprep.subr.bf16.mxu0 0
      %4848 = vmatpush1.bf16.msra.mxu0 0
      %4849 = vmatprep.subr.bf16.mxu0 0
      %4850 = vmatpush1.bf16.msra.mxu0 0
      %4851 = vmatprep.subr.bf16.mxu0 0
      %4852 = vmatpush1.bf16.msra.mxu0 0
      %4853 = vmatprep.subr.bf16.mxu0 0
      %4854 = vmatpush1.bf16.msra.mxu0 0
      %4855 = vmatprep.subr.bf16.mxu0 0
      %4856 = vmatpush1.bf16.msra.mxu0 0
      %4857 = vmatprep.subr.bf16.mxu0 0
      %4858 = vmatpush1.bf16.msra.mxu0 0
      %4859 = vmatprep.subr.bf16.mxu0 0
      %4860 = vmatpush1.bf16.msra.mxu0 0
      %4861 = vmatprep.mubr.bf16.mxu0 0
      %4862 = vmatmul.mubr.bf16.gmra.mrb[0].mxu0 %v4811
      %v4863 = vpop.f32.mrb[0].mxu0
      %v4864 = vadd.f32 0.0, %v4863
      %v4865 = vpop.f32.mrb[0].mxu0
      %v4866 = vadd.f32 0.0, %v4865
      %v4867 = vpop.f32.mrb[0].mxu0
      %v4868 = vadd.f32 0.0, %v4867
      %v4869 = vpop.f32.mrb[0].mxu0
      %v4870 = vadd.f32 0.0, %v4869
      %4871 = vmatprep.mubr.bf16.mxu0 0
      %4872 = vmatmul.mubr.bf16.gmra.mrb[0].mxu0 %v4814
      %v4873 = vpop.f32.mrb[0].mxu0
      %v4874 = vadd.f32 0.0, %v4873
      %v4875 = vpop.f32.mrb[0].mxu0
      %v4876 = vadd.f32 0.0, %v4875
      %v4877 = vpop.f32.mrb[0].mxu0
      %v4878 = vadd.f32 0.0, %v4877
      %v4879 = vpop.f32.mrb[0].mxu0
      %v4880 = vadd.f32 0.0, %v4879
      %4881 = vmatprep.mubr.bf16.mxu0 0
      %4882 = vmatmul.mubr.bf16.gmra.mrb[0].mxu0 %v4817
      %v4883 = vpop.f32.mrb[0].mxu0
      %v4884 = vadd.f32 0.0, %v4883
      %v4885 = vpop.f32.mrb[0].mxu0
      %v4886 = vadd.f32 0.0, %v4885
      %v4887 = vpop.f32.mrb[0].mxu0
      %v4888 = vadd.f32 0.0, %v4887
      %v4889 = vpop.f32.mrb[0].mxu0
      %v4890 = vadd.f32 0.0, %v4889
      %4891 = vmatprep.mubr.bf16.mxu0 0
      %4892 = vmatmul.mubr.bf16.gmra.mrb[0].mxu0 %v4820
      %v4893 = vpop.f32.mrb[0].mxu0
      %v4894 = vadd.f32 0.0, %v4893
      %v4895 = vpop.f32.mrb[0].mxu0
      %v4896 = vadd.f32 0.0, %v4895
      %v4897 = vpop.f32.mrb[0].mxu0
      %v4898 = vadd.f32 0.0, %v4897
      %v4899 = vpop.f32.mrb[0].mxu0
      %v4900 = vadd.f32 0.0, %v4899
      %4901 = vdwg.mxu0
      %v4902 = vmax.f32 %v4864, %v4874
      %v4903 = vmax.f32 %v4868, %v4878
      %v4904 = vmax.f32 %v4902, %v4884
      %v4905 = vmax.f32 %v4903, %v4888
      %v4906 = vmax.f32 %v4904, %v4894
      %v4907 = vmax.f32 %v4905, %v4898
      %v4908 = vmax.f32 %v4906, %v4907
      %v4909 = vrot.slane %v4908, 4
      %v4910 = vmax.f32 %v4908, %v4909
      %v4911 = vrot.slane %v4910, 2
      %v4912 = vmax.f32 %v4910, %v4911
      %v4913 = vrot.slane %v4912, 1
      %v4914 = vmax.f32 %v4912, %v4913
      %v4915 = vmax.f32 %v4866, %v4876
      %v4916 = vmax.f32 %v4870, %v4880
      %v4917 = vmax.f32 %v4915, %v4886
      %v4918 = vmax.f32 %v4916, %v4890
      %v4919 = vmax.f32 %v4917, %v4896
      %v4920 = vmax.f32 %v4918, %v4900
      %v4921 = vmax.f32 %v4919, %v4920
      %v4922 = vrot.slane %v4921, 4
      %v4923 = vmax.f32 %v4921, %v4922
      %v4924 = vrot.slane %v4923, 2
      %v4925 = vmax.f32 %v4923, %v4924
      %v4926 = vrot.slane %v4925, 1
      %v4927 = vmax.f32 %v4925, %v4926
      %v4928 = vsub.f32 %v4864, %v4914
      %v4929 = vsub.f32 %v4866, %v4927
      %v4930 = vsub.f32 %v4868, %v4914
      %v4931 = vsub.f32 %v4870, %v4927
      %v4932 = vsub.f32 %v4874, %v4914
      %v4933 = vsub.f32 %v4876, %v4927
      %v4934 = vsub.f32 %v4878, %v4914
      %v4935 = vsub.f32 %v4880, %v4927
      %v4936 = vsub.f32 %v4884, %v4914
      %v4937 = vsub.f32 %v4886, %v4927
      %v4938 = vsub.f32 %v4888, %v4914
      %v4939 = vsub.f32 %v4890, %v4927
      %v4940 = vsub.f32 %v4894, %v4914
      %v4941 = vsub.f32 %v4896, %v4927
      %v4942 = vsub.f32 %v4898, %v4914
      %v4943 = vsub.f32 %v4900, %v4927
      %v4944 = vmul.f32 %v4928, 1.442695
      %v4945 = vpow.pop %v4944
      %v4946 = vmul.f32 %v4929, 1.442695
      %v4947 = vpow.pop %v4946
      %v4948 = vmul.f32 %v4930, 1.442695
      %v4949 = vpow.pop %v4948
      %v4950 = vmul.f32 %v4931, 1.442695
      %v4951 = vpow.pop %v4950
      %v4952 = vmul.f32 %v4932, 1.442695
      %v4953 = vpow.pop %v4952
      %v4954 = vmul.f32 %v4933, 1.442695
      %v4955 = vpow.pop %v4954
      %v4956 = vmul.f32 %v4934, 1.442695
      %v4957 = vpow.pop %v4956
      %v4958 = vmul.f32 %v4935, 1.442695
      %v4959 = vpow.pop %v4958
      %v4960 = vmul.f32 %v4936, 1.442695
      %v4961 = vpow.pop %v4960
      %v4962 = vmul.f32 %v4937, 1.442695
      %v4963 = vpow.pop %v4962
      %v4964 = vmul.f32 %v4938, 1.442695
      %v4965 = vpow.pop %v4964
      %v4966 = vmul.f32 %v4939, 1.442695
      %v4967 = vpow.pop %v4966
      %v4968 = vmul.f32 %v4940, 1.442695
      %v4969 = vpow.pop %v4968
      %v4970 = vmul.f32 %v4941, 1.442695
      %v4971 = vpow.pop %v4970
      %v4972 = vmul.f32 %v4942, 1.442695
      %v4973 = vpow.pop %v4972
      %v4974 = vmul.f32 %v4943, 1.442695
      %v4975 = vpow.pop %v4974
      %v4976 = vadd.f32 %v4945, %v4949
      %v4977 = vadd.f32 %v4976, %v4953
      %v4978 = vadd.f32 %v4977, %v4957
      %v4979 = vadd.f32 %v4978, %v4961
      %v4980 = vadd.f32 %v4979, %v4965
      %v4981 = vadd.f32 %v4980, %v4969
      %v4982 = vadd.f32 %v4981, %v4973
      %v4983 = vrot.slane %v4982, 4
      %v4984 = vadd.f32 %v4982, %v4983
      %v4985 = vrot.slane %v4984, 2
      %v4986 = vadd.f32 %v4984, %v4985
      %v4987 = vrot.slane %v4986, 1
      %v4988 = vadd.f32 %v4986, %v4987
      %v4989 = vadd.f32 %v4947, %v4951
      %v4990 = vadd.f32 %v4989, %v4955
      %v4991 = vadd.f32 %v4990, %v4959
      %v4992 = vadd.f32 %v4991, %v4963
      %v4993 = vadd.f32 %v4992, %v4967
      %v4994 = vadd.f32 %v4993, %v4971
      %v4995 = vadd.f32 %v4994, %v4975
      %v4996 = vrot.slane %v4995, 4
      %v4997 = vadd.f32 %v4995, %v4996
      %v4998 = vrot.slane %v4997, 2
      %v4999 = vadd.f32 %v4997, %v4998
      %v5000 = vrot.slane %v4999, 1
      %v5001 = vadd.f32 %v4999, %v5000
      %v5002 = vrcp.pop %v4988
      %v5003 = vmul.f32 %v4945, %v5002
      %v5004 = vrcp.pop %v5001
      %v5005 = vmul.f32 %v4947, %v5004
      %v5006 = vmul.f32 %v4949, %v5002
      %v5007 = vmul.f32 %v4951, %v5004
      %v5008 = vmul.f32 %v4953, %v5002
      %v5009 = vmul.f32 %v4955, %v5004
      %v5010 = vmul.f32 %v4957, %v5002
      %v5011 = vmul.f32 %v4959, %v5004
      %v5012 = vmul.f32 %v4961, %v5002
      %v5013 = vmul.f32 %v4963, %v5004
      %v5014 = vmul.f32 %v4965, %v5002
      %v5015 = vmul.f32 %v4967, %v5004
      %v5016 = vmul.f32 %v4969, %v5002
      %v5017 = vmul.f32 %v4971, %v5004
      %v5018 = vmul.f32 %v4973, %v5002
      %v5019 = vmul.f32 %v4975, %v5004
      %v5020 = vpack.c.bf16 %v4798, %v4798
      %v5021 = vpack.c.bf16 %v5006, %v5003
      %v5022 = vpack.c.bf16 %v5007, %v5005
      %v5023 = vpack.c.bf16 %v5010, %v5008
      %v5024 = vpack.c.bf16 %v5011, %v5009
      %v5025 = vpack.c.bf16 %v5014, %v5012
      %v5026 = vpack.c.bf16 %v5015, %v5013
      %v5027 = vpack.c.bf16 %v5018, %v5016
      %v5028 = vpack.c.bf16 %v5019, %v5017
      %v5030 = vsel %vm799, %v5020, 0
      %5032 = vmatprep.subr.bf16.mxu0 %v5022
      %5033 = vmatpush1.bf16.msra.mxu0 %v5021
      %5034 = vmatprep.subr.bf16.mxu0 %v5024
      %5035 = vmatpush1.bf16.msra.mxu0 %v5023
      %5036 = vmatprep.subr.bf16.mxu0 %v5026
      %5037 = vmatpush1.bf16.msra.mxu0 %v5025
      %5038 = vmatprep.subr.bf16.mxu0 %v5028
      %5039 = vmatpush1.bf16.msra.mxu0 %v5027
      %5040 = vmatprep.subr.bf16.mxu0 0
      %5041 = vmatpush1.bf16.msra.mxu0 0
      %5042 = vmatprep.subr.bf16.mxu0 0
      %5043 = vmatpush1.bf16.msra.mxu0 0
      %5044 = vmatprep.subr.bf16.mxu0 0
      %5045 = vmatpush1.bf16.msra.mxu0 0
      %5046 = vmatprep.subr.bf16.mxu0 0
      %5047 = vmatpush1.bf16.msra.mxu0 0
      %5048 = vmatprep.subr.bf16.mxu0 0
      %5049 = vmatpush1.bf16.msra.mxu0 0
      %5050 = vmatprep.subr.bf16.mxu0 0
      %5051 = vmatpush1.bf16.msra.mxu0 0
      %5052 = vmatprep.subr.bf16.mxu0 0
      %5053 = vmatpush1.bf16.msra.mxu0 0
      %5054 = vmatprep.subr.bf16.mxu0 0
      %5055 = vmatpush1.bf16.msra.mxu0 0
      %5056 = vmatprep.subr.bf16.mxu0 0
      %5057 = vmatpush1.bf16.msra.mxu0 0
      %5058 = vmatprep.subr.bf16.mxu0 0
      %5059 = vmatpush1.bf16.msra.mxu0 0
      %5060 = vmatprep.subr.bf16.mxu0 0
      %5061 = vmatpush1.bf16.msra.mxu0 0
      %5062 = vmatprep.subr.bf16.mxu0 0
      %5063 = vmatpush1.bf16.msra.mxu0 0
      %5064 = vmatprep.mubr.bf16.mxu0 0
      %5065 = vmatmul.mubr.bf16.gmra.mrb[0].mxu0 %v5030
      %v5066 = vpop.f32.mrb[0].mxu0
      %v5067 = vadd.f32 0.0, %v5066
      %v5068 = vpop.f32.mrb[0].mxu0
      %v5069 = vadd.f32 0.0, %v5068
      %v5070 = vpop.f32.mrb[0].mxu0
      %v5071 = vpop.f32.mrb[0].mxu0
      %5072 = vdwg.mxu0
      %v5073 = vld [vmem:[%s16] sm:$0xf]
      %v5074 = vld [vmem:[%s16 + $0x4] sm:$0xf]
      %v5075 = vpack.c.bf16 %v5067, %v5067
      %v5076 = vpack.c.bf16 %v5069, %v5069
      %v5079 = vunpack.c.l.b16 %v5073
      %v5080 = vunpack.c.l.b16 %v5074
      %v5081 = vpack.c.b16 %v5080, %v5079
      %v5083 = vsel %vm4809, %v5081, 0
      %v5086 = vsel %vm4822, %v5075, 0
      %v5089 = vsel %vm4822, %v5076, 0
      %5091 = vmatprep.subr.bf16.mxu0 %v5089
      %5092 = vmatpush1.bf16.msra.mxu0 %v5086
      %5093 = vmatprep.subr.bf16.mxu0 0
      %5094 = vmatpush1.bf16.msra.mxu0 0
      %5095 = vmatprep.subr.bf16.mxu0 0
      %5096 = vmatpush1.bf16.msra.mxu0 0
      %5097 = vmatprep.subr.bf16.mxu0 0
      %5098 = vmatpush1.bf16.msra.mxu0 0
      %5099 = vmatprep.subr.bf16.mxu0 0
      %5100 = vmatpush1.bf16.msra.mxu0 0
      %5101 = vmatprep.subr.bf16.mxu0 0
      %5102 = vmatpush1.bf16.msra.mxu0 0
      %5103 = vmatprep.subr.bf16.mxu0 0
      %5104 = vmatpush1.bf16.msra.mxu0 0
      %5105 = vmatprep.subr.bf16.mxu0 0
      %5106 = vmatpush1.bf16.msra.mxu0 0
      %5107 = vmatprep.subr.bf16.mxu0 0
      %5108 = vmatpush1.bf16.msra.mxu0 0
      %5109 = vmatprep.subr.bf16.mxu0 0
      %5110 = vmatpush1.bf16.msra.mxu0 0
      %5111 = vmatprep.subr.bf16.mxu0 0
      %5112 = vmatpush1.bf16.msra.mxu0 0
      %5113 = vmatprep.subr.bf16.mxu0 0
      %5114 = vmatpush1.bf16.msra.mxu0 0
      %5115 = vmatprep.subr.bf16.mxu0 0
      %5116 = vmatpush1.bf16.msra.mxu0 0
      %5117 = vmatprep.subr.bf16.mxu0 0
      %5118 = vmatpush1.bf16.msra.mxu0 0
      %5119 = vmatprep.subr.bf16.mxu0 0
      %5120 = vmatpush1.bf16.msra.mxu0 0
      %5121 = vmatprep.subr.bf16.mxu0 0
      %5122 = vmatpush1.bf16.msra.mxu0 0
      %5123 = vmatprep.mubr.bf16.mxu0 0
      %5124 = vmatmul.mubr.bf16.gmra.mrb[0].mxu0 %v5083
      %v5125 = vpop.f32.mrb[0].mxu0
      %v5126 = vadd.f32 0.0, %v5125
      %v5127 = vpop.f32.mrb[0].mxu0
      %v5128 = vadd.f32 0.0, %v5127
      %v5129 = vpop.f32.mrb[0].mxu0
      %v5130 = vadd.f32 0.0, %v5129
      %v5131 = vpop.f32.mrb[0].mxu0
      %v5132 = vadd.f32 0.0, %v5131
      %5133 = vdwg.mxu0
      %s5134 = sld [smem:[#allocation2]]
      %v5135 = vstv %s5134
      %v5136 = vmul.f32 %v5135, %v5126
      %v5137 = vmul.f32 %v5135, %v5128
      %v5138 = vmul.f32 %v5135, %v5130
      %v5139 = vmul.f32 %v5135, %v5132
      %v5140 = vadd.f32 %v4540, %v5136
      %v5141 = vadd.f32 %v4541, %v5137
      %v5142 = vadd.f32 %v4542, %v5138
      %v5143 = vadd.f32 %v4543, %v5139
      %v5144 = vmax.f32 %v5140, 0.0
      %v5145 = vmax.f32 %v5141, 0.0
      %v5146 = vmax.f32 %v5142, 0.0
      %v5147 = vmax.f32 %v5143, 0.0
      %5148 = vrot.lane.b32.xlu0 %v5144, 17
      %v5149 = vpop.permute.xlu0 %5148
      %5150 = vrot.lane.b32.xlu0 %v5146, 17
      %v5151 = vpop.permute.xlu0 %5150
      %5152 = vrot.lane.b32.xlu0 %v5145, 17
      %v5153 = vpop.permute.xlu0 %5152
      %5154 = vrot.lane.b32.xlu0 %v5147, 17
      %v5155 = vpop.permute.xlu0 %5154
      %v5156 = vsel %vm3000, %v5149, %v5153
      %v5157 = vsel %vm3000, %v5151, %v5155
      %v5158 = vsel %vm3000, %v5153, %v5149
      %v5159 = vsel %vm3000, %v5155, %v5151
      %v5160 = vsel %vm3017, %v5158, 0.0
      %v5161 = vsel %vm3018, %v5156, 0.0
      %v5162 = vsel %vm3017, %v5159, 0.0
      %v5163 = vsel %vm3018, %v5157, 0.0
      %v5164 = vld [vmem:[%s19] sm:$0x3]
      %v5165 = vpack.c.bf16 %v5162, %v5160
      %v5166 = vpack.c.bf16 %v5163, %v5161
      %5167 = vrot.lane.b32.xlu0 %v5144, 16
      %v5168 = vpop.permute.xlu0 %5167
      %5169 = vrot.lane.b32.xlu0 %v5146, 16
      %v5170 = vpop.permute.xlu0 %5169
      %5171 = vrot.lane.b32.xlu0 %v5145, 16
      %v5172 = vpop.permute.xlu0 %5171
      %5173 = vrot.lane.b32.xlu0 %v5147, 16
      %v5174 = vpop.permute.xlu0 %5173
      %v5175 = vsel %vm3049, %v5168, %v5172
      %v5176 = vsel %vm3049, %v5170, %v5174
      %v5177 = vsel %vm3049, %v5172, %v5168
      %v5178 = vsel %vm3049, %v5174, %v5170
      %v5179 = vsel %vm3060, %v5177, 0.0
      %v5180 = vsel %vm3061, %v5175, 0.0
      %v5181 = vsel %vm3060, %v5178, 0.0
      %v5182 = vsel %vm3061, %v5176, 0.0
      %s5183 = scalar_lea.vmem %s19, 2
      %v5184 = vld [vmem:[%s5183] sm:$0x3]
      %v5185 = vpack.c.bf16 %v5181, %v5179
      %v5186 = vpack.c.bf16 %v5182, %v5180
      %v5188 = vsel %vm679, %v5184, 0
      %5190 = vmatprep.subr.bf16.mxu0 %v5186
      %5191 = vmatpush1.bf16.msra.mxu0 %v5185
      %5192 = vmatprep.subr.bf16.mxu0 0
      %5193 = vmatpush1.bf16.msra.mxu0 0
      %5194 = vmatprep.subr.bf16.mxu0 0
      %5195 = vmatpush1.bf16.msra.mxu0 0
      %5196 = vmatprep.subr.bf16.mxu0 0
      %5197 = vmatpush1.bf16.msra.mxu0 0
      %5198 = vmatprep.subr.bf16.mxu0 0
      %5199 = vmatpush1.bf16.msra.mxu0 0
      %5200 = vmatprep.subr.bf16.mxu0 0
      %5201 = vmatpush1.bf16.msra.mxu0 0
      %5202 = vmatprep.subr.bf16.mxu0 0
      %5203 = vmatpush1.bf16.msra.mxu0 0
      %5204 = vmatprep.subr.bf16.mxu0 0
      %5205 = vmatpush1.bf16.msra.mxu0 0
      %5206 = vmatprep.subr.bf16.mxu0 0
      %5207 = vmatpush1.bf16.msra.mxu0 0
      %5208 = vmatprep.subr.bf16.mxu0 0
      %5209 = vmatpush1.bf16.msra.mxu0 0
      %5210 = vmatprep.subr.bf16.mxu0 0
      %5211 = vmatpush1.bf16.msra.mxu0 0
      %5212 = vmatprep.subr.bf16.mxu0 0
      %5213 = vmatpush1.bf16.msra.mxu0 0
      %5214 = vmatprep.subr.bf16.mxu0 0
      %5215 = vmatpush1.bf16.msra.mxu0 0
      %5216 = vmatprep.subr.bf16.mxu0 0
      %5217 = vmatpush1.bf16.msra.mxu0 0
      %5218 = vmatprep.subr.bf16.mxu0 0
      %5219 = vmatpush1.bf16.msra.mxu0 0
      %5220 = vmatprep.subr.bf16.mxu0 0
      %5221 = vmatpush1.bf16.msra.mxu0 0
      %5222 = vmatprep.mubr.bf16.mxu0 0
      %5223 = vmatmul.mubr.bf16.gmra.mrb[0].mxu0 %v5188
      %v5224 = vpop.f32.mrb[0].mxu0
      %v5225 = vadd.f32 0.0, %v5224
      %v5226 = vpop.f32.mrb[0].mxu0
      %v5227 = vadd.f32 0.0, %v5226
      %v5228 = vpop.f32.mrb[0].mxu0
      %v5229 = vpop.f32.mrb[0].mxu0
      %5230 = vdwg.mxu0
      %v5232 = vsel %vm679, %v5164, 0
      %5234 = vmatprep.subr.bf16.mxu0 %v5166
      %5235 = vmatpush1.bf16.msra.mxu0 %v5165
      %5236 = vmatprep.subr.bf16.mxu0 0
      %5237 = vmatpush1.bf16.msra.mxu0 0
      %5238 = vmatprep.subr.bf16.mxu0 0
      %5239 = vmatpush1.bf16.msra.mxu0 0
      %5240 = vmatprep.subr.bf16.mxu0 0
      %5241 = vmatpush1.bf16.msra.mxu0 0
      %5242 = vmatprep.subr.bf16.mxu0 0
      %5243 = vmatpush1.bf16.msra.mxu0 0
      %5244 = vmatprep.subr.bf16.mxu0 0
      %5245 = vmatpush1.bf16.msra.mxu0 0
      %5246 = vmatprep.subr.bf16.mxu0 0
      %5247 = vmatpush1.bf16.msra.mxu0 0
      %5248 = vmatprep.subr.bf16.mxu0 0
      %5249 = vmatpush1.bf16.msra.mxu0 0
      %5250 = vmatprep.subr.bf16.mxu0 0
      %5251 = vmatpush1.bf16.msra.mxu0 0
      %5252 = vmatprep.subr.bf16.mxu0 0
      %5253 = vmatpush1.bf16.msra.mxu0 0
      %5254 = vmatprep.subr.bf16.mxu0 0
      %5255 = vmatpush1.bf16.msra.mxu0 0
      %5256 = vmatprep.subr.bf16.mxu0 0
      %5257 = vmatpush1.bf16.msra.mxu0 0
      %5258 = vmatprep.subr.bf16.mxu0 0
      %5259 = vmatpush1.bf16.msra.mxu0 0
      %5260 = vmatprep.subr.bf16.mxu0 0
      %5261 = vmatpush1.bf16.msra.mxu0 0
      %5262 = vmatprep.subr.bf16.mxu0 0
      %5263 = vmatpush1.bf16.msra.mxu0 0
      %5264 = vmatprep.subr.bf16.mxu0 0
      %5265 = vmatpush1.bf16.msra.mxu0 0
      %5266 = vmatprep.mubr.bf16.mxu0 0
      %5267 = vmatmul.mubr.bf16.gmra.mrb[0].mxu0 %v5232
      %v5268 = vpop.f32.mrb[0].mxu0
      %v5269 = vadd.f32 %v5225, %v5268
      %v5270 = vpop.f32.mrb[0].mxu0
      %v5271 = vadd.f32 %v5227, %v5270
      %v5272 = vpop.f32.mrb[0].mxu0
      %v5273 = vpop.f32.mrb[0].mxu0
      %5274 = vdwg.mxu0
      %5275 = vrot.lane.b32.xlu0 %v5144, 15
      %v5276 = vpop.permute.xlu0 %5275
      %5277 = vrot.lane.b32.xlu0 %v5146, 15
      %v5278 = vpop.permute.xlu0 %5277
      %5279 = vrot.lane.b32.xlu0 %v5145, 15
      %v5280 = vpop.permute.xlu0 %5279
      %5281 = vrot.lane.b32.xlu0 %v5147, 15
      %v5282 = vpop.permute.xlu0 %5281
      %v5283 = vsel %vm3195, %v5276, %v5280
      %v5284 = vsel %vm3195, %v5278, %v5282
      %v5285 = vsel %vm3195, %v5280, %v5276
      %v5286 = vsel %vm3195, %v5282, %v5278
      %v5287 = vsel %vm3210, %v5285, 0.0
      %v5288 = vsel %vm3211, %v5283, 0.0
      %v5289 = vsel %vm3210, %v5286, 0.0
      %v5290 = vsel %vm3211, %v5284, 0.0
      %s5291 = scalar_lea.vmem %s19, 4
      %v5292 = vld [vmem:[%s5291] sm:$0x3]
      %v5293 = vpack.c.bf16 %v5289, %v5287
      %v5294 = vpack.c.bf16 %v5290, %v5288
      %v5296 = vsel %vm679, %v5292, 0
      %5298 = vmatprep.subr.bf16.mxu0 %v5294
      %5299 = vmatpush1.bf16.msra.mxu0 %v5293
      %5300 = vmatprep.subr.bf16.mxu0 0
      %5301 = vmatpush1.bf16.msra.mxu0 0
      %5302 = vmatprep.subr.bf16.mxu0 0
      %5303 = vmatpush1.bf16.msra.mxu0 0
      %5304 = vmatprep.subr.bf16.mxu0 0
      %5305 = vmatpush1.bf16.msra.mxu0 0
      %5306 = vmatprep.subr.bf16.mxu0 0
      %5307 = vmatpush1.bf16.msra.mxu0 0
      %5308 = vmatprep.subr.bf16.mxu0 0
      %5309 = vmatpush1.bf16.msra.mxu0 0
      %5310 = vmatprep.subr.bf16.mxu0 0
      %5311 = vmatpush1.bf16.msra.mxu0 0
      %5312 = vmatprep.subr.bf16.mxu0 0
      %5313 = vmatpush1.bf16.msra.mxu0 0
      %5314 = vmatprep.subr.bf16.mxu0 0
      %5315 = vmatpush1.bf16.msra.mxu0 0
      %5316 = vmatprep.subr.bf16.mxu0 0
      %5317 = vmatpush1.bf16.msra.mxu0 0
      %5318 = vmatprep.subr.bf16.mxu0 0
      %5319 = vmatpush1.bf16.msra.mxu0 0
      %5320 = vmatprep.subr.bf16.mxu0 0
      %5321 = vmatpush1.bf16.msra.mxu0 0
      %5322 = vmatprep.subr.bf16.mxu0 0
      %5323 = vmatpush1.bf16.msra.mxu0 0
      %5324 = vmatprep.subr.bf16.mxu0 0
      %5325 = vmatpush1.bf16.msra.mxu0 0
      %5326 = vmatprep.subr.bf16.mxu0 0
      %5327 = vmatpush1.bf16.msra.mxu0 0
      %5328 = vmatprep.subr.bf16.mxu0 0
      %5329 = vmatpush1.bf16.msra.mxu0 0
      %5330 = vmatprep.mubr.bf16.mxu0 0
      %5331 = vmatmul.mubr.bf16.gmra.mrb[0].mxu0 %v5296
      %v5332 = vpop.f32.mrb[0].mxu0
      %v5333 = vadd.f32 0.0, %v5332
      %v5334 = vpop.f32.mrb[0].mxu0
      %v5335 = vadd.f32 0.0, %v5334
      %v5336 = vpop.f32.mrb[0].mxu0
      %v5337 = vpop.f32.mrb[0].mxu0
      %5338 = vdwg.mxu0
      %v5339 = vadd.f32 %v5269, %v5333
      %v5340 = vadd.f32 %v5271, %v5335
      %5341 = vrot.lane.b32.xlu0 %v5144, 1
      %v5342 = vpop.permute.xlu0 %5341
      %5343 = vrot.lane.b32.xlu0 %v5146, 1
      %v5344 = vpop.permute.xlu0 %5343
      %5345 = vrot.lane.b32.xlu0 %v5145, 1
      %v5346 = vpop.permute.xlu0 %5345
      %5347 = vrot.lane.b32.xlu0 %v5147, 1
      %v5348 = vpop.permute.xlu0 %5347
      %v5349 = vsel %vm3298, %v5342, %v5346
      %v5350 = vsel %vm3298, %v5344, %v5348
      %v5351 = vsel %vm3298, %v5346, %v5342
      %v5352 = vsel %vm3298, %v5348, %v5344
      %v5353 = vsel %vm3309, %v5351, 0.0
      %v5354 = vsel %vm3310, %v5349, 0.0
      %v5355 = vsel %vm3309, %v5352, 0.0
      %v5356 = vsel %vm3310, %v5350, 0.0
      %s5357 = scalar_lea.vmem %s19, 6
      %v5358 = vld [vmem:[%s5357] sm:$0x3]
      %v5359 = vpack.c.bf16 %v5355, %v5353
      %v5360 = vpack.c.bf16 %v5356, %v5354
      %v5362 = vsel %vm679, %v5358, 0
      %5364 = vmatprep.subr.bf16.mxu0 %v5360
      %5365 = vmatpush1.bf16.msra.mxu0 %v5359
      %5366 = vmatprep.subr.bf16.mxu0 0
      %5367 = vmatpush1.bf16.msra.mxu0 0
      %5368 = vmatprep.subr.bf16.mxu0 0
      %5369 = vmatpush1.bf16.msra.mxu0 0
      %5370 = vmatprep.subr.bf16.mxu0 0
      %5371 = vmatpush1.bf16.msra.mxu0 0
      %5372 = vmatprep.subr.bf16.mxu0 0
      %5373 = vmatpush1.bf16.msra.mxu0 0
      %5374 = vmatprep.subr.bf16.mxu0 0
      %5375 = vmatpush1.bf16.msra.mxu0 0
      %5376 = vmatprep.subr.bf16.mxu0 0
      %5377 = vmatpush1.bf16.msra.mxu0 0
      %5378 = vmatprep.subr.bf16.mxu0 0
      %5379 = vmatpush1.bf16.msra.mxu0 0
      %5380 = vmatprep.subr.bf16.mxu0 0
      %5381 = vmatpush1.bf16.msra.mxu0 0
      %5382 = vmatprep.subr.bf16.mxu0 0
      %5383 = vmatpush1.bf16.msra.mxu0 0
      %5384 = vmatprep.subr.bf16.mxu0 0
      %5385 = vmatpush1.bf16.msra.mxu0 0
      %5386 = vmatprep.subr.bf16.mxu0 0
      %5387 = vmatpush1.bf16.msra.mxu0 0
      %5388 = vmatprep.subr.bf16.mxu0 0
      %5389 = vmatpush1.bf16.msra.mxu0 0
      %5390 = vmatprep.subr.bf16.mxu0 0
      %5391 = vmatpush1.bf16.msra.mxu0 0
      %5392 = vmatprep.subr.bf16.mxu0 0
      %5393 = vmatpush1.bf16.msra.mxu0 0
      %5394 = vmatprep.subr.bf16.mxu0 0
      %5395 = vmatpush1.bf16.msra.mxu0 0
      %5396 = vmatprep.mubr.bf16.mxu0 0
      %5397 = vmatmul.mubr.bf16.gmra.mrb[0].mxu0 %v5362
      %v5398 = vpop.f32.mrb[0].mxu0
      %v5399 = vadd.f32 0.0, %v5398
      %v5400 = vpop.f32.mrb[0].mxu0
      %v5401 = vadd.f32 0.0, %v5400
      %v5402 = vpop.f32.mrb[0].mxu0
      %v5403 = vpop.f32.mrb[0].mxu0
      %5404 = vdwg.mxu0
      %v5405 = vadd.f32 %v5339, %v5399
      %v5406 = vadd.f32 %v5340, %v5401
      %s5407 = scalar_lea.vmem %s19, 8
      %v5408 = vld [vmem:[%s5407] sm:$0x3]
      %v5409 = vpack.c.bf16 %v5146, %v5144
      %v5410 = vpack.c.bf16 %v5147, %v5145
      %v5412 = vsel %vm679, %v5408, 0
      %5414 = vmatprep.subr.bf16.mxu0 %v5410
      %5415 = vmatpush1.bf16.msra.mxu0 %v5409
      %5416 = vmatprep.subr.bf16.mxu0 0
      %5417 = vmatpush1.bf16.msra.mxu0 0
      %5418 = vmatprep.subr.bf16.mxu0 0
      %5419 = vmatpush1.bf16.msra.mxu0 0
      %5420 = vmatprep.subr.bf16.mxu0 0
      %5421 = vmatpush1.bf16.msra.mxu0 0
      %5422 = vmatprep.subr.bf16.mxu0 0
      %5423 = vmatpush1.bf16.msra.mxu0 0
      %5424 = vmatprep.subr.bf16.mxu0 0
      %5425 = vmatpush1.bf16.msra.mxu0 0
      %5426 = vmatprep.subr.bf16.mxu0 0
      %5427 = vmatpush1.bf16.msra.mxu0 0
      %5428 = vmatprep.subr.bf16.mxu0 0
      %5429 = vmatpush1.bf16.msra.mxu0 0
      %5430 = vmatprep.subr.bf16.mxu0 0
      %5431 = vmatpush1.bf16.msra.mxu0 0
      %5432 = vmatprep.subr.bf16.mxu0 0
      %5433 = vmatpush1.bf16.msra.mxu0 0
      %5434 = vmatprep.subr.bf16.mxu0 0
      %5435 = vmatpush1.bf16.msra.mxu0 0
      %5436 = vmatprep.subr.bf16.mxu0 0
      %5437 = vmatpush1.bf16.msra.mxu0 0
      %5438 = vmatprep.subr.bf16.mxu0 0
      %5439 = vmatpush1.bf16.msra.mxu0 0
      %5440 = vmatprep.subr.bf16.mxu0 0
      %5441 = vmatpush1.bf16.msra.mxu0 0
      %5442 = vmatprep.subr.bf16.mxu0 0
      %5443 = vmatpush1.bf16.msra.mxu0 0
      %5444 = vmatprep.subr.bf16.mxu0 0
      %5445 = vmatpush1.bf16.msra.mxu0 0
      %5446 = vmatprep.mubr.bf16.mxu0 0
      %5447 = vmatmul.mubr.bf16.gmra.mrb[0].mxu0 %v5412
      %v5448 = vpop.f32.mrb[0].mxu0
      %v5449 = vadd.f32 0.0, %v5448
      %v5450 = vpop.f32.mrb[0].mxu0
      %v5451 = vadd.f32 0.0, %v5450
      %v5452 = vpop.f32.mrb[0].mxu0
      %v5453 = vpop.f32.mrb[0].mxu0
      %5454 = vdwg.mxu0
      %v5455 = vadd.f32 %v5405, %v5449
      %v5456 = vadd.f32 %v5406, %v5451
      %5457 = vrot.lane.b32.xlu0 %v5144, 127
      %v5458 = vpop.permute.xlu0 %5457
      %5459 = vrot.lane.b32.xlu0 %v5146, 127
      %v5460 = vpop.permute.xlu0 %5459
      %5461 = vrot.lane.b32.xlu0 %v5145, 127
      %v5462 = vpop.permute.xlu0 %5461
      %5463 = vrot.lane.b32.xlu0 %v5147, 127
      %v5464 = vpop.permute.xlu0 %5463
      %v5465 = vsel %vm3459, %v5458, %v5462
      %v5466 = vsel %vm3459, %v5460, %v5464
      %v5467 = vsel %vm3459, %v5462, %v5458
      %v5468 = vsel %vm3459, %v5464, %v5460
      %v5469 = vsel %vm3470, %v5465, 0.0
      %v5470 = vsel %vm3471, %v5467, 0.0
      %v5471 = vsel %vm3470, %v5466, 0.0
      %v5472 = vsel %vm3471, %v5468, 0.0
      %s5473 = scalar_lea.vmem %s19, 10
      %v5474 = vld [vmem:[%s5473] sm:$0x3]
      %v5475 = vpack.c.bf16 %v5471, %v5469
      %v5476 = vpack.c.bf16 %v5472, %v5470
      %v5478 = vsel %vm679, %v5474, 0
      %5480 = vmatprep.subr.bf16.mxu0 %v5476
      %5481 = vmatpush1.bf16.msra.mxu0 %v5475
      %5482 = vmatprep.subr.bf16.mxu0 0
      %5483 = vmatpush1.bf16.msra.mxu0 0
      %5484 = vmatprep.subr.bf16.mxu0 0
      %5485 = vmatpush1.bf16.msra.mxu0 0
      %5486 = vmatprep.subr.bf16.mxu0 0
      %5487 = vmatpush1.bf16.msra.mxu0 0
      %5488 = vmatprep.subr.bf16.mxu0 0
      %5489 = vmatpush1.bf16.msra.mxu0 0
      %5490 = vmatprep.subr.bf16.mxu0 0
      %5491 = vmatpush1.bf16.msra.mxu0 0
      %5492 = vmatprep.subr.bf16.mxu0 0
      %5493 = vmatpush1.bf16.msra.mxu0 0
      %5494 = vmatprep.subr.bf16.mxu0 0
      %5495 = vmatpush1.bf16.msra.mxu0 0
      %5496 = vmatprep.subr.bf16.mxu0 0
      %5497 = vmatpush1.bf16.msra.mxu0 0
      %5498 = vmatprep.subr.bf16.mxu0 0
      %5499 = vmatpush1.bf16.msra.mxu0 0
      %5500 = vmatprep.subr.bf16.mxu0 0
      %5501 = vmatpush1.bf16.msra.mxu0 0
      %5502 = vmatprep.subr.bf16.mxu0 0
      %5503 = vmatpush1.bf16.msra.mxu0 0
      %5504 = vmatprep.subr.bf16.mxu0 0
      %5505 = vmatpush1.bf16.msra.mxu0 0
      %5506 = vmatprep.subr.bf16.mxu0 0
      %5507 = vmatpush1.bf16.msra.mxu0 0
      %5508 = vmatprep.subr.bf16.mxu0 0
      %5509 = vmatpush1.bf16.msra.mxu0 0
      %5510 = vmatprep.subr.bf16.mxu0 0
      %5511 = vmatpush1.bf16.msra.mxu0 0
      %5512 = vmatprep.mubr.bf16.mxu0 0
      %5513 = vmatmul.mubr.bf16.gmra.mrb[0].mxu0 %v5478
      %v5514 = vpop.f32.mrb[0].mxu0
      %v5515 = vadd.f32 0.0, %v5514
      %v5516 = vpop.f32.mrb[0].mxu0
      %v5517 = vadd.f32 0.0, %v5516
      %v5518 = vpop.f32.mrb[0].mxu0
      %v5519 = vpop.f32.mrb[0].mxu0
      %5520 = vdwg.mxu0
      %v5521 = vadd.f32 %v5455, %v5515
      %v5522 = vadd.f32 %v5456, %v5517
      %5523 = vrot.lane.b32.xlu0 %v5144, 113
      %v5524 = vpop.permute.xlu0 %5523
      %5525 = vrot.lane.b32.xlu0 %v5146, 113
      %v5526 = vpop.permute.xlu0 %5525
      %5527 = vrot.lane.b32.xlu0 %v5145, 113
      %v5528 = vpop.permute.xlu0 %5527
      %5529 = vrot.lane.b32.xlu0 %v5147, 113
      %v5530 = vpop.permute.xlu0 %5529
      %v5531 = vsel %vm3558, %v5524, %v5528
      %v5532 = vsel %vm3558, %v5526, %v5530
      %v5533 = vsel %vm3558, %v5528, %v5524
      %v5534 = vsel %vm3558, %v5530, %v5526
      %v5535 = vsel %vm3573, %v5531, 0.0
      %v5536 = vsel %vm3574, %v5533, 0.0
      %v5537 = vsel %vm3573, %v5532, 0.0
      %v5538 = vsel %vm3574, %v5534, 0.0
      %s5539 = scalar_lea.vmem %s19, 12
      %v5540 = vld [vmem:[%s5539] sm:$0x3]
      %v5541 = vpack.c.bf16 %v5537, %v5535
      %v5542 = vpack.c.bf16 %v5538, %v5536
      %v5544 = vsel %vm679, %v5540, 0
      %5546 = vmatprep.subr.bf16.mxu0 %v5542
      %5547 = vmatpush1.bf16.msra.mxu0 %v5541
      %5548 = vmatprep.subr.bf16.mxu0 0
      %5549 = vmatpush1.bf16.msra.mxu0 0
      %5550 = vmatprep.subr.bf16.mxu0 0
      %5551 = vmatpush1.bf16.msra.mxu0 0
      %5552 = vmatprep.subr.bf16.mxu0 0
      %5553 = vmatpush1.bf16.msra.mxu0 0
      %5554 = vmatprep.subr.bf16.mxu0 0
      %5555 = vmatpush1.bf16.msra.mxu0 0
      %5556 = vmatprep.subr.bf16.mxu0 0
      %5557 = vmatpush1.bf16.msra.mxu0 0
      %5558 = vmatprep.subr.bf16.mxu0 0
      %5559 = vmatpush1.bf16.msra.mxu0 0
      %5560 = vmatprep.subr.bf16.mxu0 0
      %5561 = vmatpush1.bf16.msra.mxu0 0
      %5562 = vmatprep.subr.bf16.mxu0 0
      %5563 = vmatpush1.bf16.msra.mxu0 0
      %5564 = vmatprep.subr.bf16.mxu0 0
      %5565 = vmatpush1.bf16.msra.mxu0 0
      %5566 = vmatprep.subr.bf16.mxu0 0
      %5567 = vmatpush1.bf16.msra.mxu0 0
      %5568 = vmatprep.subr.bf16.mxu0 0
      %5569 = vmatpush1.bf16.msra.mxu0 0
      %5570 = vmatprep.subr.bf16.mxu0 0
      %5571 = vmatpush1.bf16.msra.mxu0 0
      %5572 = vmatprep.subr.bf16.mxu0 0
      %5573 = vmatpush1.bf16.msra.mxu0 0
      %5574 = vmatprep.subr.bf16.mxu0 0
      %5575 = vmatpush1.bf16.msra.mxu0 0
      %5576 = vmatprep.subr.bf16.mxu0 0
      %5577 = vmatpush1.bf16.msra.mxu0 0
      %5578 = vmatprep.mubr.bf16.mxu0 0
      %5579 = vmatmul.mubr.bf16.gmra.mrb[0].mxu0 %v5544
      %v5580 = vpop.f32.mrb[0].mxu0
      %v5581 = vadd.f32 0.0, %v5580
      %v5582 = vpop.f32.mrb[0].mxu0
      %v5583 = vadd.f32 0.0, %v5582
      %v5584 = vpop.f32.mrb[0].mxu0
      %v5585 = vpop.f32.mrb[0].mxu0
      %5586 = vdwg.mxu0
      %v5587 = vadd.f32 %v5521, %v5581
      %v5588 = vadd.f32 %v5522, %v5583
      %5589 = vrot.lane.b32.xlu0 %v5144, 112
      %v5590 = vpop.permute.xlu0 %5589
      %5591 = vrot.lane.b32.xlu0 %v5146, 112
      %v5592 = vpop.permute.xlu0 %5591
      %5593 = vrot.lane.b32.xlu0 %v5145, 112
      %v5594 = vpop.permute.xlu0 %5593
      %5595 = vrot.lane.b32.xlu0 %v5147, 112
      %v5596 = vpop.permute.xlu0 %5595
      %v5597 = vsel %vm3661, %v5590, %v5594
      %v5598 = vsel %vm3661, %v5592, %v5596
      %v5599 = vsel %vm3661, %v5594, %v5590
      %v5600 = vsel %vm3661, %v5596, %v5592
      %v5601 = vsel %vm3672, %v5597, 0.0
      %v5602 = vsel %vm3673, %v5599, 0.0
      %v5603 = vsel %vm3672, %v5598, 0.0
      %v5604 = vsel %vm3673, %v5600, 0.0
      %s5605 = scalar_lea.vmem %s19, 14
      %v5606 = vld [vmem:[%s5605] sm:$0x3]
      %v5607 = vpack.c.bf16 %v5603, %v5601
      %v5608 = vpack.c.bf16 %v5604, %v5602
      %v5610 = vsel %vm679, %v5606, 0
      %5612 = vmatprep.subr.bf16.mxu0 %v5608
      %5613 = vmatpush1.bf16.msra.mxu0 %v5607
      %5614 = vmatprep.subr.bf16.mxu0 0
      %5615 = vmatpush1.bf16.msra.mxu0 0
      %5616 = vmatprep.subr.bf16.mxu0 0
      %5617 = vmatpush1.bf16.msra.mxu0 0
      %5618 = vmatprep.subr.bf16.mxu0 0
      %5619 = vmatpush1.bf16.msra.mxu0 0
      %5620 = vmatprep.subr.bf16.mxu0 0
      %5621 = vmatpush1.bf16.msra.mxu0 0
      %5622 = vmatprep.subr.bf16.mxu0 0
      %5623 = vmatpush1.bf16.msra.mxu0 0
      %5624 = vmatprep.subr.bf16.mxu0 0
      %5625 = vmatpush1.bf16.msra.mxu0 0
      %5626 = vmatprep.subr.bf16.mxu0 0
      %5627 = vmatpush1.bf16.msra.mxu0 0
      %5628 = vmatprep.subr.bf16.mxu0 0
      %5629 = vmatpush1.bf16.msra.mxu0 0
      %5630 = vmatprep.subr.bf16.mxu0 0
      %5631 = vmatpush1.bf16.msra.mxu0 0
      %5632 = vmatprep.subr.bf16.mxu0 0
      %5633 = vmatpush1.bf16.msra.mxu0 0
      %5634 = vmatprep.subr.bf16.mxu0 0
      %5635 = vmatpush1.bf16.msra.mxu0 0
      %5636 = vmatprep.subr.bf16.mxu0 0
      %5637 = vmatpush1.bf16.msra.mxu0 0
      %5638 = vmatprep.subr.bf16.mxu0 0
      %5639 = vmatpush1.bf16.msra.mxu0 0
      %5640 = vmatprep.subr.bf16.mxu0 0
      %5641 = vmatpush1.bf16.msra.mxu0 0
      %5642 = vmatprep.subr.bf16.mxu0 0
      %5643 = vmatpush1.bf16.msra.mxu0 0
      %5644 = vmatprep.mubr.bf16.mxu0 0
      %5645 = vmatmul.mubr.bf16.gmra.mrb[0].mxu0 %v5610
      %v5646 = vpop.f32.mrb[0].mxu0
      %v5647 = vadd.f32 0.0, %v5646
      %v5648 = vpop.f32.mrb[0].mxu0
      %v5649 = vadd.f32 0.0, %v5648
      %v5650 = vpop.f32.mrb[0].mxu0
      %v5651 = vpop.f32.mrb[0].mxu0
      %5652 = vdwg.mxu0
      %v5653 = vadd.f32 %v5587, %v5647
      %v5654 = vadd.f32 %v5588, %v5649
      %5655 = vrot.lane.b32.xlu0 %v5144, 111
      %v5656 = vpop.permute.xlu0 %5655
      %5657 = vrot.lane.b32.xlu0 %v5146, 111
      %v5658 = vpop.permute.xlu0 %5657
      %5659 = vrot.lane.b32.xlu0 %v5145, 111
      %v5660 = vpop.permute.xlu0 %5659
      %5661 = vrot.lane.b32.xlu0 %v5147, 111
      %v5662 = vpop.permute.xlu0 %5661
      %v5663 = vsel %vm3760, %v5656, %v5660
      %v5664 = vsel %vm3760, %v5658, %v5662
      %v5665 = vsel %vm3760, %v5660, %v5656
      %v5666 = vsel %vm3760, %v5662, %v5658
      %v5667 = vsel %vm3773, %v5663, 0.0
      %v5668 = vsel %vm3774, %v5665, 0.0
      %v5669 = vsel %vm3773, %v5664, 0.0
      %v5670 = vsel %vm3774, %v5666, 0.0
      %s5671 = scalar_lea.vmem %s19, 16
      %v5672 = vld [vmem:[%s5671] sm:$0x3]
      %v5673 = vpack.c.bf16 %v5669, %v5667
      %v5674 = vpack.c.bf16 %v5670, %v5668
      %v5676 = vsel %vm679, %v5672, 0
      %5678 = vmatprep.subr.bf16.mxu0 %v5674
      %5679 = vmatpush1.bf16.msra.mxu0 %v5673
      %5680 = vmatprep.subr.bf16.mxu0 0
      %5681 = vmatpush1.bf16.msra.mxu0 0
      %5682 = vmatprep.subr.bf16.mxu0 0
      %5683 = vmatpush1.bf16.msra.mxu0 0
      %5684 = vmatprep.subr.bf16.mxu0 0
      %5685 = vmatpush1.bf16.msra.mxu0 0
      %5686 = vmatprep.subr.bf16.mxu0 0
      %5687 = vmatpush1.bf16.msra.mxu0 0
      %5688 = vmatprep.subr.bf16.mxu0 0
      %5689 = vmatpush1.bf16.msra.mxu0 0
      %5690 = vmatprep.subr.bf16.mxu0 0
      %5691 = vmatpush1.bf16.msra.mxu0 0
      %5692 = vmatprep.subr.bf16.mxu0 0
      %5693 = vmatpush1.bf16.msra.mxu0 0
      %5694 = vmatprep.subr.bf16.mxu0 0
      %5695 = vmatpush1.bf16.msra.mxu0 0
      %5696 = vmatprep.subr.bf16.mxu0 0
      %5697 = vmatpush1.bf16.msra.mxu0 0
      %5698 = vmatprep.subr.bf16.mxu0 0
      %5699 = vmatpush1.bf16.msra.mxu0 0
      %5700 = vmatprep.subr.bf16.mxu0 0
      %5701 = vmatpush1.bf16.msra.mxu0 0
      %5702 = vmatprep.subr.bf16.mxu0 0
      %5703 = vmatpush1.bf16.msra.mxu0 0
      %5704 = vmatprep.subr.bf16.mxu0 0
      %5705 = vmatpush1.bf16.msra.mxu0 0
      %5706 = vmatprep.subr.bf16.mxu0 0
      %5707 = vmatpush1.bf16.msra.mxu0 0
      %5708 = vmatprep.subr.bf16.mxu0 0
      %5709 = vmatpush1.bf16.msra.mxu0 0
      %5710 = vmatprep.mubr.bf16.mxu0 0
      %5711 = vmatmul.mubr.bf16.gmra.mrb[0].mxu0 %v5676
      %v5712 = vpop.f32.mrb[0].mxu0
      %v5713 = vadd.f32 0.0, %v5712
      %v5714 = vpop.f32.mrb[0].mxu0
      %v5715 = vadd.f32 0.0, %v5714
      %v5716 = vpop.f32.mrb[0].mxu0
      %v5717 = vpop.f32.mrb[0].mxu0
      %5718 = vdwg.mxu0
      %v5719 = vadd.f32 %v5653, %v5713
      %v5720 = vadd.f32 %v5654, %v5715
      %v5721 = vld [vmem:[%s20] sm:$0x7]
      %5723 = vset.pattern.permute.xlu0 0
      %5724 = vperm.xlu0 %5723, %v5721
      %v5725 = vpop.permute.xlu0 %5724
      %v5727 = vadd.f32 %v5719, %v5725
      %v5728 = vadd.f32 %v5720, %v5725
      %v5729 = vtanh.pop %v5727
      %v5730 = vtanh.pop %v5728
      %v5733 = vcombine.low %v5729, %v5730
      %5735 = vst [vmem:[%s657] sm:$0x77] %v5733
      %p5736 = scmp.lt.s32.totalorder %s33, 1
      %s5737 = scalar_select %p5736, %s33, 1
      %s5738 = smul.addr %s5737, 2
      %s5739 = smul.addr %s5738, 4
      %s5740 = scalar_lea.vmem %s21, %s5739
      // Predicated region
      $region105: #{rendering_engine_forward.1} parent=103 // pred_check
        %p5741 = pneg %p497
      $region106: #{rendering_engine_forward.1} parent=103 // pred_check_branch
        %5743 = sbr.rel (%p5741) target = $region108
      $region107: #{rendering_engine_forward.1} parent=103 // pred_region
        _
      $region108: #{rendering_engine_forward.1} parent=103 // pred_fallthru
        _
    $region104: #{rendering_engine_forward.1} parent=5 // pred_fallthru
      _
    %p5744 = scmp.le.s32.totalorder 2, %s28
    // Predicated region
    $region109: #{rendering_engine_forward.1} parent=5 // pred_check
      %p5745 = pneg %p5744
    $region110: #{rendering_engine_forward.1} parent=5 // pred_check_branch
      %5747 = sbr.rel (%p5745) target = $region112
    $region111: #{rendering_engine_forward.1} parent=5 // pred_region
      %s5748 = ssub.s32 %s28, 2
      // Predicated region
      $region113: #{rendering_engine_forward.1} parent=111 // pred_check
        %p5749 = pneg %p503
      $region114: #{rendering_engine_forward.1} parent=111 // pred_check_branch
        %5751 = sbr.rel (%p5749) target = $region116
      $region115: #{rendering_engine_forward.1} parent=111 // pred_region
        %p5752 = scmp.lt.s32.totalorder %s34, 1
        %s5753 = scalar_select %p5752, %s34, 1
        %s5754 = smul.addr %s5753, 2
        %s5755 = smul.addr %s5754, 4
        %s5756 = scalar_lea.vmem %s21, %s5755
      $region116: #{rendering_engine_forward.1} parent=111 // pred_fallthru
        _
    $region112: #{rendering_engine_forward.1} parent=5 // pred_fallthru
      _
  $region6: #{rendering_engine_forward.1} parent=0 // loop_footer
    %s32 = sadd.s32 1, %s28
  $region7: #{rendering_engine_forward.1} parent=0 // loop_footer_branch
    %27 = sbr.rel target = $region3
  $region8: #{rendering_engine_forward.1} parent=0 // loop_exit
    _

</llo_original>
